<compile_context>
chip_gen: v7x
topology: tpu7x:2x2x1
jax: 0.10.0
libtpu: 0.0.40
codegen_flags: <defaults>
</compile_context>

<pallas_src>
import functools

import jax
import jax.numpy as jnp
from jax.experimental import pallas as pl
from jax.experimental.pallas import tpu as pltpu


_SELU_ALPHA = 1.6732632423543772
_SELU_SCALE = 1.0507009873554805


def _selu(x):
    # Shared by kernel and reference so both paths match bit-for-bit-ish.
    return _SELU_SCALE * jnp.where(x > 0, x, _SELU_ALPHA * (jnp.exp(x) - 1.0))


# --------------------------- Kernel 1: conv encoder --------------------------
def _conv_encoder_kernel(x_ref, w1_ref, b1_ref, w2_ref, b2_ref, w3_ref, b3_ref,
                         out_ref):
    """3x (Conv1d + ReLU), channel-last, per-tap 2-D matmuls, static loops."""

    def conv_relu(a, w_ref, b_ref):
        k = w_ref.shape[0]
        l_out = a.shape[0] - k + 1
        acc = jnp.dot(a[0:l_out, :], w_ref[0],
                      preferred_element_type=jnp.float32)
        for t in range(1, k):
            acc = acc + jnp.dot(a[t:t + l_out, :], w_ref[t],
                                preferred_element_type=jnp.float32)
        return jnp.maximum(acc + b_ref[...], 0.0)

    for b in range(x_ref.shape[0]):          # tiny static batch loop
        a = x_ref[b]                         # [L0, C0]
        a = conv_relu(a, w1_ref, b1_ref)     # [L1, C1]
        a = conv_relu(a, w2_ref, b2_ref)     # [L2, C2]
        a = conv_relu(a, w3_ref, b3_ref)     # [L3, C3]
        out_ref[b] = a


# ----------------------- Kernel 2: dense head + GRU --------------------------
def _make_head_gru_kernel(num_layers):
    def kernel(*refs):
        (flat_ref, eps_ref, r_ref, w0_ref, b0_ref, wm_ref, bm_ref,
         wv_ref, bv_ref, w3z_ref, w3r_ref, b3_ref) = refs[:12]
        idx = 12
        layer_refs = []
        for _ in range(num_layers):
            layer_refs.append(tuple(refs[idx:idx + 4]))   # (w_ih, w_hh, b_ih, b_hh)
            idx += 4
        zmean_ref, zlogvar_ref, hist_ref = refs[idx], refs[idx + 1], refs[idx + 2]

        T, B, HP = hist_ref.shape            # HP = hidden padded to 128 lanes

        # ---- encoder dense head: linear_0 + selu, linear_1/2 ----------------
        flat = flat_ref[...]
        h0 = _selu(jnp.dot(flat, w0_ref[...],
                           preferred_element_type=jnp.float32) + b0_ref[...])
        z_mean = jnp.dot(h0, wm_ref[...],
                         preferred_element_type=jnp.float32) + bm_ref[...]
        z_logvar = jnp.dot(h0, wv_ref[...],
                           preferred_element_type=jnp.float32) + bv_ref[...]
        zmean_ref[...] = z_mean
        zlogvar_ref[...] = z_logvar

        # ---- sampling + linear_3 (the [z, r] concat is folded into split
        #      weights: z @ W3_z + r * W3_r, avoiding an in-kernel concat) ----
        z = jnp.exp(0.5 * z_logvar) * (0.01 * eps_ref[...]) + z_mean
        g = _selu(jnp.dot(z, w3z_ref[...], preferred_element_type=jnp.float32)
                  + r_ref[...] * w3r_ref[...] + b3_ref[...])   # [B, D3]

        # ---- GRU: load every weight/bias ONCE, before the time loop ---------
        w_ih = [lr[0][...] for lr in layer_refs]
        w_hh = [lr[1][...] for lr in layer_refs]
        b_ih = [lr[2][...] for lr in layer_refs]
        b_hh = [lr[3][...] for lr in layer_refs]

        # layer-0 input projection is constant over time (input is repeated):
        # hoisted completely out of the recurrence.
        gx0 = jnp.dot(g, w_ih[0], preferred_element_type=jnp.float32) + b_ih[0]

        def gru_cell(gx, gh, h_prev):
            # PyTorch gate order r, z, n; each gate in its own 128-lane block.
            r_g = jax.nn.sigmoid(gx[:, 0:HP] + gh[:, 0:HP])
            z_g = jax.nn.sigmoid(gx[:, HP:2 * HP] + gh[:, HP:2 * HP])
            n_g = jnp.tanh(gx[:, 2 * HP:3 * HP] + r_g * gh[:, 2 * HP:3 * HP])
            return (1.0 - z_g) * n_g + z_g * h_prev

        # Fully unrolled time loop; hidden states stay in vreg carries.
        # TODO(synk): for long T (MAX_TOX21_LEN=120) switch to
        # lax.fori_loop(..., unroll=k) instead of full Python unrolling.
        hs = [jnp.zeros((B, HP), jnp.float32) for _ in range(num_layers)]
        for t in range(T):
            x_l = None
            for l in range(num_layers):
                if l == 0:
                    gx = gx0
                else:
                    gx = jnp.dot(x_l, w_ih[l],
                                 preferred_element_type=jnp.float32) + b_ih[l]
                gh = jnp.dot(hs[l], w_hh[l],
                             preferred_element_type=jnp.float32) + b_hh[l]
                hs[l] = gru_cell(gx, gh, hs[l])
                x_l = hs[l]
            hist_ref[t] = x_l                # last layer's h_t, [B, HP]

    return kernel


# ------------------- Kernel 3: output projection + softmax -------------------
def _out_softmax_kernel(h_ref, w_ref, b_ref, o_ref):
    """One [T*B, H] @ [H, V] matmul + bias + row softmax (hoisted FC)."""
    logits = jnp.dot(h_ref[...], w_ref[...],
                     preferred_element_type=jnp.float32) + b_ref[...]
    m = jnp.max(logits, axis=-1, keepdims=True)
    e = jnp.exp(logits - m)
    o_ref[...] = (e / jnp.sum(e, axis=-1, keepdims=True)).astype(o_ref.dtype)


# ------------------------------- JAX wrapper ---------------------------------
def mvae_forward(x, r, eps, kp, cfg):
    B = x.shape[0]
    T, HP, V, LAT = cfg["seq_len"], cfg["hp"], cfg["vocab"], cfg["latent"]
    L3, C3 = cfg["l3"], cfg["c3"]

    vmem = pl.BlockSpec(memory_space=pltpu.MemorySpace.VMEM)

    # layout glue (free XLA ops): channel-last input for the conv kernel
    x_lc = jnp.transpose(x, (0, 2, 1)).astype(jnp.float32)      # [B, L0, C0]

    conv_in = [x_lc, kp["conv1_w"], kp["conv1_b"], kp["conv2_w"], kp["conv2_b"],
               kp["conv3_w"], kp["conv3_b"]]
    conv_out = pl.pallas_call(
        _conv_encoder_kernel,
        out_shape=jax.ShapeDtypeStruct((B, L3, C3), jnp.float32),
        in_specs=[vmem] * len(conv_in),
        out_specs=vmem,
    )(*conv_in)

    flat = conv_out.reshape(B, L3 * C3)                          # [B, F0]

    head_in = [flat, eps.astype(jnp.float32), r.astype(jnp.float32),
               kp["w0"], kp["b0"], kp["wm"], kp["bm"], kp["wv"], kp["bv"],
               kp["w3z"], kp["w3r"], kp["b3"]]
    for l in range(cfg["layers"]):
        head_in += [kp[f"w_ih_{l}"], kp[f"w_hh_{l}"],
                    kp[f"b_ih_{l}"], kp[f"b_hh_{l}"]]

    z_mean, z_logvar, hist = pl.pallas_call(
        _make_head_gru_kernel(cfg["layers"]),
        out_shape=(jax.ShapeDtypeStruct((B, LAT), jnp.float32),
                   jax.ShapeDtypeStruct((B, LAT), jnp.float32),
                   jax.ShapeDtypeStruct((T, B, HP), jnp.float32)),
        in_specs=[vmem] * len(head_in),
        out_specs=(vmem, vmem, vmem),
    )(*head_in)

    # hoisted final FC + softmax on all T*B rows at once
    h_flat = hist.reshape(T * B, HP)
    probs = pl.pallas_call(
        _out_softmax_kernel,
        out_shape=jax.ShapeDtypeStruct((T * B, V), jnp.float32),
        in_specs=[vmem] * 3,
        out_specs=vmem,
    )(h_flat, kp["w4"], kp["b4"])

    y = jnp.transpose(probs.reshape(T, B, V), (1, 0, 2))         # [B, T, V]
    return y, z_mean, z_logvar


# --------------------------- parameters & kernel prep ------------------------
def init_params(key, cfg):
    """Math-layout params (x @ W convention, channel-last conv weights)."""
    keys = iter(jax.random.split(key, 32))

    def rnd(shape, scale):
        return scale * jax.random.normal(next(keys), shape, jnp.float32)

    C0, C1, C2, C3 = cfg["c0"], cfg["c1"], cfg["c2"], cfg["c3"]
    K1, K2, K3 = cfg["k1"], cfg["k2"], cfg["k3"]
    D0, LAT, D3 = cfg["d0"], cfg["latent"], cfg["d3"]
    H, V = cfg["hidden"], cfg["vocab"]
    F0 = cfg["l3"] * C3

    p = {}
    p["conv1_w"] = rnd((K1, C0, C1), 0.3); p["conv1_b"] = rnd((C1,), 0.1)
    p["conv2_w"] = rnd((K2, C1, C2), 0.3); p["conv2_b"] = rnd((C2,), 0.1)
    p["conv3_w"] = rnd((K3, C2, C3), 0.3); p["conv3_b"] = rnd((C3,), 0.1)
    # TODO(synk): the PyTorch spec has linear_0: 400->435 feeding linear_1/2:
    # 250->LATENT, which cannot run as written; here linear_1/2 consume
    # linear_0's output width so the forward pass is well-formed.
    p["w0"] = rnd((F0, D0), 0.15); p["b0"] = rnd((D0,), 0.1)
    p["wm"] = rnd((D0, LAT), 0.15); p["bm"] = rnd((LAT,), 0.1)
    p["wv"] = rnd((D0, LAT), 0.15); p["bv"] = rnd((LAT,), 0.1)
    p["w3"] = rnd((LAT + 1, D3), 0.2); p["b3"] = rnd((D3,), 0.1)
    for l in range(cfg["layers"]):
        din = D3 if l == 0 else H
        p[f"w_ih_{l}"] = rnd((din, 3 * H), 0.2)     # gate order r, z, n
        p[f"w_hh_{l}"] = rnd((H, 3 * H), 0.2)
        p[f"b_ih_{l}"] = rnd((3 * H,), 0.1)
        p[f"b_hh_{l}"] = rnd((3 * H,), 0.1)
    p["w4"] = rnd((H, V), 0.2); p["b4"] = rnd((V,), 0.1)
    return p


def _pad_gru_w(w, H, HP, pad_rows):
    """[Din, 3H] -> [Din(or HP), 3*HP]; each gate in its own 128-lane block."""
    din = HP if pad_rows else w.shape[0]
    out = jnp.zeros((din, 3 * HP), w.dtype)
    for g in range(3):
        out = out.at[: w.shape[0], g * HP:g * HP + H].set(w[:, g * H:(g + 1) * H])
    return out


def _pad_gru_b(b, H, HP):
    out = jnp.zeros((1, 3 * HP), b.dtype)
    for g in range(3):
        out = out.at[0, g * HP:g * HP + H].set(b[g * H:(g + 1) * H])
    return out


def prep_kernel_params(p, cfg):
    H, HP, LAT, V = cfg["hidden"], cfg["hp"], cfg["latent"], cfg["vocab"]
    kp = {}
    for i in (1, 2, 3):
        kp[f"conv{i}_w"] = p[f"conv{i}_w"]
        kp[f"conv{i}_b"] = p[f"conv{i}_b"].reshape(1, -1)
    kp["w0"], kp["b0"] = p["w0"], p["b0"].reshape(1, -1)
    kp["wm"], kp["bm"] = p["wm"], p["bm"].reshape(1, -1)
    kp["wv"], kp["bv"] = p["wv"], p["bv"].reshape(1, -1)
    kp["w3z"] = p["w3"][:LAT, :]                 # concat folded into split W
    kp["w3r"] = p["w3"][LAT:LAT + 1, :]
    kp["b3"] = p["b3"].reshape(1, -1)
    for l in range(cfg["layers"]):
        kp[f"w_ih_{l}"] = _pad_gru_w(p[f"w_ih_{l}"], H, HP, pad_rows=(l > 0))
        kp[f"w_hh_{l}"] = _pad_gru_w(p[f"w_hh_{l}"], H, HP, pad_rows=True)
        kp[f"b_ih_{l}"] = _pad_gru_b(p[f"b_ih_{l}"], H, HP)
        kp[f"b_hh_{l}"] = _pad_gru_b(p[f"b_hh_{l}"], H, HP)
    kp["w4"] = jnp.zeros((HP, V), jnp.float32).at[:H].set(p["w4"])
    kp["b4"] = p["b4"].reshape(1, -1)
    return kp


# ------------------------------- pure-JAX ref --------------------------------
def _conv1d_relu_ref(a, w, b):
    k = w.shape[0]
    l_out = a.shape[1] - k + 1
    acc = jnp.zeros((a.shape[0], l_out, w.shape[2]), jnp.float32)
    for t in range(k):
        acc = acc + jnp.einsum("blc,co->blo", a[:, t:t + l_out, :], w[t])
    return jnp.maximum(acc + b, 0.0)


def mvae_ref(x, r, eps, p, cfg):
    B = x.shape[0]
    H, T, LAT = cfg["hidden"], cfg["seq_len"], cfg["latent"]

    a = jnp.transpose(x, (0, 2, 1))                      # channel-last
    for i in (1, 2, 3):
        a = _conv1d_relu_ref(a, p[f"conv{i}_w"], p[f"conv{i}_b"])
    flat = a.reshape(B, -1)

    h0 = _selu(flat @ p["w0"] + p["b0"])
    z_mean = h0 @ p["wm"] + p["bm"]
    z_logvar = h0 @ p["wv"] + p["bv"]
    z = jnp.exp(0.5 * z_logvar) * (0.01 * eps) + z_mean
    zr = jnp.concatenate([z, r], axis=1)
    g = _selu(zr @ p["w3"] + p["b3"])

    hs = [jnp.zeros((B, H), jnp.float32) for _ in range(cfg["layers"])]
    outs = []
    for _ in range(T):
        xt = g
        for l in range(cfg["layers"]):
            gx = xt @ p[f"w_ih_{l}"] + p[f"b_ih_{l}"]
            gh = hs[l] @ p[f"w_hh_{l}"] + p[f"b_hh_{l}"]
            rg = jax.nn.sigmoid(gx[:, :H] + gh[:, :H])
            zg = jax.nn.sigmoid(gx[:, H:2 * H] + gh[:, H:2 * H])
            ng = jnp.tanh(gx[:, 2 * H:] + rg * gh[:, 2 * H:])
            hs[l] = (1.0 - zg) * ng + zg * hs[l]
            xt = hs[l]
        outs.append(xt)
    hseq = jnp.stack(outs, axis=1)                       # [B, T, H]
    logits = hseq.reshape(B * T, H) @ p["w4"] + p["b4"]
    y = jax.nn.softmax(logits, axis=1).reshape(B, T, -1)
    return y, z_mean, z_logvar


# ----------------------------------- main -------------------------------------
if __name__ == "__main__":
    cfg = dict(c0=8, c1=6, c2=6, c3=4, k1=3, k2=3, k3=3, l0=16,
               d0=48, latent=16, d3=32, hidden=32, hp=128,
               layers=3, seq_len=8, vocab=16)
    cfg["l1"] = cfg["l0"] - cfg["k1"] + 1
    cfg["l2"] = cfg["l1"] - cfg["k2"] + 1
    cfg["l3"] = cfg["l2"] - cfg["k3"] + 1

    B = 2
    key = jax.random.PRNGKey(0)
    k_p, k_x, k_r, k_e = jax.random.split(key, 4)

    params = init_params(k_p, cfg)
    kparams = prep_kernel_params(params, cfg)

    x = jax.random.normal(k_x, (B, cfg["c0"], cfg["l0"]), jnp.float32)
    r = jax.random.normal(k_r, (B, 1), jnp.float32)
    eps = jax.random.normal(k_e, (B, cfg["latent"]), jnp.float32)

    fwd = jax.jit(functools.partial(mvae_forward, cfg=cfg))
    y, z_mean, z_logvar = jax.block_until_ready(fwd(x, r, eps, kparams))

    y_ref, zm_ref, zv_ref = mvae_ref(x, r, eps, params, cfg)

    assert y.shape == (B, cfg["seq_len"], cfg["vocab"])
    for got, want, name in ((y, y_ref, "y"),
                            (z_mean, zm_ref, "z_mean"),
                            (z_logvar, zv_ref, "z_logvar")):
        err = float(jnp.max(jnp.abs(got - want)))
        assert jnp.allclose(got, want, atol=2e-4, rtol=2e-4), (
            f"{name} max abs err {err}")
    print("KERNEL_OK")
</pallas_src>

<mosaic_0001>
module attributes {stable_mosaic.version = 11 : i64} {
  func.func @_conv_encoder_kernel(%arg0: memref<2x16x8xf32, #tpu.memory_space<vmem>>, %arg1: memref<3x8x6xf32, #tpu.memory_space<vmem>>, %arg2: memref<1x6xf32, #tpu.memory_space<vmem>>, %arg3: memref<3x6x6xf32, #tpu.memory_space<vmem>>, %arg4: memref<1x6xf32, #tpu.memory_space<vmem>>, %arg5: memref<3x6x4xf32, #tpu.memory_space<vmem>>, %arg6: memref<1x4xf32, #tpu.memory_space<vmem>>, %arg7: memref<2x10x4xf32, #tpu.memory_space<vmem>>) attributes {dimension_semantics = [], scalar_prefetch = 0 : i64, scratch_operands = 0 : i64, tpu.core_type = #tpu.core_type<tc>} {
    %c0 = arith.constant 0 : index
    %c0_0 = arith.constant 0 : index
    %c0_1 = arith.constant 0 : index
    %0 = vector.load %arg0[%c0, %c0_0, %c0_1] : memref<2x16x8xf32, #tpu.memory_space<vmem>>, vector<1x16x8xf32>
    %1 = vector.shape_cast %0 : vector<1x16x8xf32> to vector<16x8xf32>
    %2 = vector.extract_strided_slice %1 {offsets = [0, 0], sizes = [14, 8], strides = [1, 1]} : vector<16x8xf32> to vector<14x8xf32>
    %c0_2 = arith.constant 0 : index
    %c0_3 = arith.constant 0 : index
    %c0_4 = arith.constant 0 : index
    %3 = vector.load %arg1[%c0_2, %c0_3, %c0_4] : memref<3x8x6xf32, #tpu.memory_space<vmem>>, vector<1x8x6xf32>
    %4 = vector.shape_cast %3 : vector<1x8x6xf32> to vector<8x6xf32>
    %cst = arith.constant dense<0.000000e+00> : vector<14x6xf32>
    %5 = tpu.matmul %2, %4, %cst {dimension_numbers = #tpu.dot_dimension_numbers<[1], [0], [0], [1], [0, 0, 1, 1], [], []>} : vector<14x8xf32>, vector<8x6xf32>, vector<14x6xf32> -> vector<14x6xf32>
    %6 = vector.extract_strided_slice %1 {offsets = [1, 0], sizes = [14, 8], strides = [1, 1]} : vector<16x8xf32> to vector<14x8xf32>
    %c1 = arith.constant 1 : index
    %c0_5 = arith.constant 0 : index
    %c0_6 = arith.constant 0 : index
    %7 = vector.load %arg1[%c1, %c0_5, %c0_6] : memref<3x8x6xf32, #tpu.memory_space<vmem>>, vector<1x8x6xf32>
    %8 = vector.shape_cast %7 : vector<1x8x6xf32> to vector<8x6xf32>
    %cst_7 = arith.constant dense<0.000000e+00> : vector<14x6xf32>
    %9 = tpu.matmul %6, %8, %cst_7 {dimension_numbers = #tpu.dot_dimension_numbers<[1], [0], [0], [1], [0, 0, 1, 1], [], []>} : vector<14x8xf32>, vector<8x6xf32>, vector<14x6xf32> -> vector<14x6xf32>
    %10 = arith.addf %5, %9 : vector<14x6xf32>
    %11 = vector.extract_strided_slice %1 {offsets = [2, 0], sizes = [14, 8], strides = [1, 1]} : vector<16x8xf32> to vector<14x8xf32>
    %c2 = arith.constant 2 : index
    %c0_8 = arith.constant 0 : index
    %c0_9 = arith.constant 0 : index
    %12 = vector.load %arg1[%c2, %c0_8, %c0_9] : memref<3x8x6xf32, #tpu.memory_space<vmem>>, vector<1x8x6xf32>
    %13 = vector.shape_cast %12 : vector<1x8x6xf32> to vector<8x6xf32>
    %cst_10 = arith.constant dense<0.000000e+00> : vector<14x6xf32>
    %14 = tpu.matmul %11, %13, %cst_10 {dimension_numbers = #tpu.dot_dimension_numbers<[1], [0], [0], [1], [0, 0, 1, 1], [], []>} : vector<14x8xf32>, vector<8x6xf32>, vector<14x6xf32> -> vector<14x6xf32>
    %15 = arith.addf %10, %14 : vector<14x6xf32>
    %c0_11 = arith.constant 0 : index
    %c0_12 = arith.constant 0 : index
    %16 = vector.load %arg2[%c0_11, %c0_12] : memref<1x6xf32, #tpu.memory_space<vmem>>, vector<1x6xf32>
    %17 = vector.broadcast %16 : vector<1x6xf32> to vector<14x6xf32>
    %18 = arith.addf %15, %17 : vector<14x6xf32>
    %cst_13 = arith.constant 0.000000e+00 : f32
    %19 = vector.broadcast %cst_13 : f32 to vector<14x6xf32>
    %20 = arith.maximumf %18, %19 : vector<14x6xf32>
    %21 = vector.extract_strided_slice %20 {offsets = [0, 0], sizes = [12, 6], strides = [1, 1]} : vector<14x6xf32> to vector<12x6xf32>
    %c0_14 = arith.constant 0 : index
    %c0_15 = arith.constant 0 : index
    %c0_16 = arith.constant 0 : index
    %22 = vector.load %arg3[%c0_14, %c0_15, %c0_16] : memref<3x6x6xf32, #tpu.memory_space<vmem>>, vector<1x6x6xf32>
    %23 = vector.shape_cast %22 : vector<1x6x6xf32> to vector<6x6xf32>
    %cst_17 = arith.constant dense<0.000000e+00> : vector<12x6xf32>
    %24 = tpu.matmul %21, %23, %cst_17 {dimension_numbers = #tpu.dot_dimension_numbers<[1], [0], [0], [1], [0, 0, 1, 1], [], []>} : vector<12x6xf32>, vector<6x6xf32>, vector<12x6xf32> -> vector<12x6xf32>
    %25 = vector.extract_strided_slice %20 {offsets = [1, 0], sizes = [12, 6], strides = [1, 1]} : vector<14x6xf32> to vector<12x6xf32>
    %c1_18 = arith.constant 1 : index
    %c0_19 = arith.constant 0 : index
    %c0_20 = arith.constant 0 : index
    %26 = vector.load %arg3[%c1_18, %c0_19, %c0_20] : memref<3x6x6xf32, #tpu.memory_space<vmem>>, vector<1x6x6xf32>
    %27 = vector.shape_cast %26 : vector<1x6x6xf32> to vector<6x6xf32>
    %cst_21 = arith.constant dense<0.000000e+00> : vector<12x6xf32>
    %28 = tpu.matmul %25, %27, %cst_21 {dimension_numbers = #tpu.dot_dimension_numbers<[1], [0], [0], [1], [0, 0, 1, 1], [], []>} : vector<12x6xf32>, vector<6x6xf32>, vector<12x6xf32> -> vector<12x6xf32>
    %29 = arith.addf %24, %28 : vector<12x6xf32>
    %30 = vector.extract_strided_slice %20 {offsets = [2, 0], sizes = [12, 6], strides = [1, 1]} : vector<14x6xf32> to vector<12x6xf32>
    %c2_22 = arith.constant 2 : index
    %c0_23 = arith.constant 0 : index
    %c0_24 = arith.constant 0 : index
    %31 = vector.load %arg3[%c2_22, %c0_23, %c0_24] : memref<3x6x6xf32, #tpu.memory_space<vmem>>, vector<1x6x6xf32>
    %32 = vector.shape_cast %31 : vector<1x6x6xf32> to vector<6x6xf32>
    %cst_25 = arith.constant dense<0.000000e+00> : vector<12x6xf32>
    %33 = tpu.matmul %30, %32, %cst_25 {dimension_numbers = #tpu.dot_dimension_numbers<[1], [0], [0], [1], [0, 0, 1, 1], [], []>} : vector<12x6xf32>, vector<6x6xf32>, vector<12x6xf32> -> vector<12x6xf32>
    %34 = arith.addf %29, %33 : vector<12x6xf32>
    %c0_26 = arith.constant 0 : index
    %c0_27 = arith.constant 0 : index
    %35 = vector.load %arg4[%c0_26, %c0_27] : memref<1x6xf32, #tpu.memory_space<vmem>>, vector<1x6xf32>
    %36 = vector.broadcast %35 : vector<1x6xf32> to vector<12x6xf32>
    %37 = arith.addf %34, %36 : vector<12x6xf32>
    %cst_28 = arith.constant 0.000000e+00 : f32
    %38 = vector.broadcast %cst_28 : f32 to vector<12x6xf32>
    %39 = arith.maximumf %37, %38 : vector<12x6xf32>
    %40 = vector.extract_strided_slice %39 {offsets = [0, 0], sizes = [10, 6], strides = [1, 1]} : vector<12x6xf32> to vector<10x6xf32>
    %c0_29 = arith.constant 0 : index
    %c0_30 = arith.constant 0 : index
    %c0_31 = arith.constant 0 : index
    %41 = vector.load %arg5[%c0_29, %c0_30, %c0_31] : memref<3x6x4xf32, #tpu.memory_space<vmem>>, vector<1x6x4xf32>
    %42 = vector.shape_cast %41 : vector<1x6x4xf32> to vector<6x4xf32>
    %cst_32 = arith.constant dense<0.000000e+00> : vector<10x4xf32>
    %43 = tpu.matmul %40, %42, %cst_32 {dimension_numbers = #tpu.dot_dimension_numbers<[1], [0], [0], [1], [0, 0, 1, 1], [], []>} : vector<10x6xf32>, vector<6x4xf32>, vector<10x4xf32> -> vector<10x4xf32>
    %44 = vector.extract_strided_slice %39 {offsets = [1, 0], sizes = [10, 6], strides = [1, 1]} : vector<12x6xf32> to vector<10x6xf32>
    %c1_33 = arith.constant 1 : index
    %c0_34 = arith.constant 0 : index
    %c0_35 = arith.constant 0 : index
    %45 = vector.load %arg5[%c1_33, %c0_34, %c0_35] : memref<3x6x4xf32, #tpu.memory_space<vmem>>, vector<1x6x4xf32>
    %46 = vector.shape_cast %45 : vector<1x6x4xf32> to vector<6x4xf32>
    %cst_36 = arith.constant dense<0.000000e+00> : vector<10x4xf32>
    %47 = tpu.matmul %44, %46, %cst_36 {dimension_numbers = #tpu.dot_dimension_numbers<[1], [0], [0], [1], [0, 0, 1, 1], [], []>} : vector<10x6xf32>, vector<6x4xf32>, vector<10x4xf32> -> vector<10x4xf32>
    %48 = arith.addf %43, %47 : vector<10x4xf32>
    %49 = vector.extract_strided_slice %39 {offsets = [2, 0], sizes = [10, 6], strides = [1, 1]} : vector<12x6xf32> to vector<10x6xf32>
    %c2_37 = arith.constant 2 : index
    %c0_38 = arith.constant 0 : index
    %c0_39 = arith.constant 0 : index
    %50 = vector.load %arg5[%c2_37, %c0_38, %c0_39] : memref<3x6x4xf32, #tpu.memory_space<vmem>>, vector<1x6x4xf32>
    %51 = vector.shape_cast %50 : vector<1x6x4xf32> to vector<6x4xf32>
    %cst_40 = arith.constant dense<0.000000e+00> : vector<10x4xf32>
    %52 = tpu.matmul %49, %51, %cst_40 {dimension_numbers = #tpu.dot_dimension_numbers<[1], [0], [0], [1], [0, 0, 1, 1], [], []>} : vector<10x6xf32>, vector<6x4xf32>, vector<10x4xf32> -> vector<10x4xf32>
    %53 = arith.addf %48, %52 : vector<10x4xf32>
    %c0_41 = arith.constant 0 : index
    %c0_42 = arith.constant 0 : index
    %54 = vector.load %arg6[%c0_41, %c0_42] : memref<1x4xf32, #tpu.memory_space<vmem>>, vector<1x4xf32>
    %55 = vector.broadcast %54 : vector<1x4xf32> to vector<10x4xf32>
    %56 = arith.addf %53, %55 : vector<10x4xf32>
    %cst_43 = arith.constant 0.000000e+00 : f32
    %57 = vector.broadcast %cst_43 : f32 to vector<10x4xf32>
    %58 = arith.maximumf %56, %57 : vector<10x4xf32>
    %c0_44 = arith.constant 0 : index
    %c0_45 = arith.constant 0 : index
    %c0_46 = arith.constant 0 : index
    %59 = vector.load %arg7[%c0_44, %c0_45, %c0_46] : memref<2x10x4xf32, #tpu.memory_space<vmem>>, vector<1x10x4xf32>
    %60 = vector.shape_cast %59 : vector<1x10x4xf32> to vector<10x4xf32>
    %61 = vector.shape_cast %58 : vector<10x4xf32> to vector<1x10x4xf32>
    tpu.vector_store %arg7[%c0_44, %c0_45, %c0_46], %61 {strides = array<i32>} : memref<2x10x4xf32, #tpu.memory_space<vmem>>, vector<1x10x4xf32>,
    %c1_47 = arith.constant 1 : index
    %c0_48 = arith.constant 0 : index
    %c0_49 = arith.constant 0 : index
    %62 = vector.load %arg0[%c1_47, %c0_48, %c0_49] : memref<2x16x8xf32, #tpu.memory_space<vmem>>, vector<1x16x8xf32>
    %63 = vector.shape_cast %62 : vector<1x16x8xf32> to vector<16x8xf32>
    %64 = vector.extract_strided_slice %63 {offsets = [0, 0], sizes = [14, 8], strides = [1, 1]} : vector<16x8xf32> to vector<14x8xf32>
    %c0_50 = arith.constant 0 : index
    %c0_51 = arith.constant 0 : index
    %c0_52 = arith.constant 0 : index
    %65 = vector.load %arg1[%c0_50, %c0_51, %c0_52] : memref<3x8x6xf32, #tpu.memory_space<vmem>>, vector<1x8x6xf32>
    %66 = vector.shape_cast %65 : vector<1x8x6xf32> to vector<8x6xf32>
    %cst_53 = arith.constant dense<0.000000e+00> : vector<14x6xf32>
    %67 = tpu.matmul %64, %66, %cst_53 {dimension_numbers = #tpu.dot_dimension_numbers<[1], [0], [0], [1], [0, 0, 1, 1], [], []>} : vector<14x8xf32>, vector<8x6xf32>, vector<14x6xf32> -> vector<14x6xf32>
    %68 = vector.extract_strided_slice %63 {offsets = [1, 0], sizes = [14, 8], strides = [1, 1]} : vector<16x8xf32> to vector<14x8xf32>
    %c1_54 = arith.constant 1 : index
    %c0_55 = arith.constant 0 : index
    %c0_56 = arith.constant 0 : index
    %69 = vector.load %arg1[%c1_54, %c0_55, %c0_56] : memref<3x8x6xf32, #tpu.memory_space<vmem>>, vector<1x8x6xf32>
    %70 = vector.shape_cast %69 : vector<1x8x6xf32> to vector<8x6xf32>
    %cst_57 = arith.constant dense<0.000000e+00> : vector<14x6xf32>
    %71 = tpu.matmul %68, %70, %cst_57 {dimension_numbers = #tpu.dot_dimension_numbers<[1], [0], [0], [1], [0, 0, 1, 1], [], []>} : vector<14x8xf32>, vector<8x6xf32>, vector<14x6xf32> -> vector<14x6xf32>
    %72 = arith.addf %67, %71 : vector<14x6xf32>
    %73 = vector.extract_strided_slice %63 {offsets = [2, 0], sizes = [14, 8], strides = [1, 1]} : vector<16x8xf32> to vector<14x8xf32>
    %c2_58 = arith.constant 2 : index
    %c0_59 = arith.constant 0 : index
    %c0_60 = arith.constant 0 : index
    %74 = vector.load %arg1[%c2_58, %c0_59, %c0_60] : memref<3x8x6xf32, #tpu.memory_space<vmem>>, vector<1x8x6xf32>
    %75 = vector.shape_cast %74 : vector<1x8x6xf32> to vector<8x6xf32>
    %cst_61 = arith.constant dense<0.000000e+00> : vector<14x6xf32>
    %76 = tpu.matmul %73, %75, %cst_61 {dimension_numbers = #tpu.dot_dimension_numbers<[1], [0], [0], [1], [0, 0, 1, 1], [], []>} : vector<14x8xf32>, vector<8x6xf32>, vector<14x6xf32> -> vector<14x6xf32>
    %77 = arith.addf %72, %76 : vector<14x6xf32>
    %c0_62 = arith.constant 0 : index
    %c0_63 = arith.constant 0 : index
    %78 = vector.load %arg2[%c0_62, %c0_63] : memref<1x6xf32, #tpu.memory_space<vmem>>, vector<1x6xf32>
    %79 = vector.broadcast %78 : vector<1x6xf32> to vector<14x6xf32>
    %80 = arith.addf %77, %79 : vector<14x6xf32>
    %cst_64 = arith.constant 0.000000e+00 : f32
    %81 = vector.broadcast %cst_64 : f32 to vector<14x6xf32>
    %82 = arith.maximumf %80, %81 : vector<14x6xf32>
    %83 = vector.extract_strided_slice %82 {offsets = [0, 0], sizes = [12, 6], strides = [1, 1]} : vector<14x6xf32> to vector<12x6xf32>
    %c0_65 = arith.constant 0 : index
    %c0_66 = arith.constant 0 : index
    %c0_67 = arith.constant 0 : index
    %84 = vector.load %arg3[%c0_65, %c0_66, %c0_67] : memref<3x6x6xf32, #tpu.memory_space<vmem>>, vector<1x6x6xf32>
    %85 = vector.shape_cast %84 : vector<1x6x6xf32> to vector<6x6xf32>
    %cst_68 = arith.constant dense<0.000000e+00> : vector<12x6xf32>
    %86 = tpu.matmul %83, %85, %cst_68 {dimension_numbers = #tpu.dot_dimension_numbers<[1], [0], [0], [1], [0, 0, 1, 1], [], []>} : vector<12x6xf32>, vector<6x6xf32>, vector<12x6xf32> -> vector<12x6xf32>
    %87 = vector.extract_strided_slice %82 {offsets = [1, 0], sizes = [12, 6], strides = [1, 1]} : vector<14x6xf32> to vector<12x6xf32>
    %c1_69 = arith.constant 1 : index
    %c0_70 = arith.constant 0 : index
    %c0_71 = arith.constant 0 : index
    %88 = vector.load %arg3[%c1_69, %c0_70, %c0_71] : memref<3x6x6xf32, #tpu.memory_space<vmem>>, vector<1x6x6xf32>
    %89 = vector.shape_cast %88 : vector<1x6x6xf32> to vector<6x6xf32>
    %cst_72 = arith.constant dense<0.000000e+00> : vector<12x6xf32>
    %90 = tpu.matmul %87, %89, %cst_72 {dimension_numbers = #tpu.dot_dimension_numbers<[1], [0], [0], [1], [0, 0, 1, 1], [], []>} : vector<12x6xf32>, vector<6x6xf32>, vector<12x6xf32> -> vector<12x6xf32>
    %91 = arith.addf %86, %90 : vector<12x6xf32>
    %92 = vector.extract_strided_slice %82 {offsets = [2, 0], sizes = [12, 6], strides = [1, 1]} : vector<14x6xf32> to vector<12x6xf32>
    %c2_73 = arith.constant 2 : index
    %c0_74 = arith.constant 0 : index
    %c0_75 = arith.constant 0 : index
    %93 = vector.load %arg3[%c2_73, %c0_74, %c0_75] : memref<3x6x6xf32, #tpu.memory_space<vmem>>, vector<1x6x6xf32>
    %94 = vector.shape_cast %93 : vector<1x6x6xf32> to vector<6x6xf32>
    %cst_76 = arith.constant dense<0.000000e+00> : vector<12x6xf32>
    %95 = tpu.matmul %92, %94, %cst_76 {dimension_numbers = #tpu.dot_dimension_numbers<[1], [0], [0], [1], [0, 0, 1, 1], [], []>} : vector<12x6xf32>, vector<6x6xf32>, vector<12x6xf32> -> vector<12x6xf32>
    %96 = arith.addf %91, %95 : vector<12x6xf32>
    %c0_77 = arith.constant 0 : index
    %c0_78 = arith.constant 0 : index
    %97 = vector.load %arg4[%c0_77, %c0_78] : memref<1x6xf32, #tpu.memory_space<vmem>>, vector<1x6xf32>
    %98 = vector.broadcast %97 : vector<1x6xf32> to vector<12x6xf32>
    %99 = arith.addf %96, %98 : vector<12x6xf32>
    %cst_79 = arith.constant 0.000000e+00 : f32
    %100 = vector.broadcast %cst_79 : f32 to vector<12x6xf32>
    %101 = arith.maximumf %99, %100 : vector<12x6xf32>
    %102 = vector.extract_strided_slice %101 {offsets = [0, 0], sizes = [10, 6], strides = [1, 1]} : vector<12x6xf32> to vector<10x6xf32>
    %c0_80 = arith.constant 0 : index
    %c0_81 = arith.constant 0 : index
    %c0_82 = arith.constant 0 : index
    %103 = vector.load %arg5[%c0_80, %c0_81, %c0_82] : memref<3x6x4xf32, #tpu.memory_space<vmem>>, vector<1x6x4xf32>
    %104 = vector.shape_cast %103 : vector<1x6x4xf32> to vector<6x4xf32>
    %cst_83 = arith.constant dense<0.000000e+00> : vector<10x4xf32>
    %105 = tpu.matmul %102, %104, %cst_83 {dimension_numbers = #tpu.dot_dimension_numbers<[1], [0], [0], [1], [0, 0, 1, 1], [], []>} : vector<10x6xf32>, vector<6x4xf32>, vector<10x4xf32> -> vector<10x4xf32>
    %106 = vector.extract_strided_slice %101 {offsets = [1, 0], sizes = [10, 6], strides = [1, 1]} : vector<12x6xf32> to vector<10x6xf32>
    %c1_84 = arith.constant 1 : index
    %c0_85 = arith.constant 0 : index
    %c0_86 = arith.constant 0 : index
    %107 = vector.load %arg5[%c1_84, %c0_85, %c0_86] : memref<3x6x4xf32, #tpu.memory_space<vmem>>, vector<1x6x4xf32>
    %108 = vector.shape_cast %107 : vector<1x6x4xf32> to vector<6x4xf32>
    %cst_87 = arith.constant dense<0.000000e+00> : vector<10x4xf32>
    %109 = tpu.matmul %106, %108, %cst_87 {dimension_numbers = #tpu.dot_dimension_numbers<[1], [0], [0], [1], [0, 0, 1, 1], [], []>} : vector<10x6xf32>, vector<6x4xf32>, vector<10x4xf32> -> vector<10x4xf32>
    %110 = arith.addf %105, %109 : vector<10x4xf32>
    %111 = vector.extract_strided_slice %101 {offsets = [2, 0], sizes = [10, 6], strides = [1, 1]} : vector<12x6xf32> to vector<10x6xf32>
    %c2_88 = arith.constant 2 : index
    %c0_89 = arith.constant 0 : index
    %c0_90 = arith.constant 0 : index
    %112 = vector.load %arg5[%c2_88, %c0_89, %c0_90] : memref<3x6x4xf32, #tpu.memory_space<vmem>>, vector<1x6x4xf32>
    %113 = vector.shape_cast %112 : vector<1x6x4xf32> to vector<6x4xf32>
    %cst_91 = arith.constant dense<0.000000e+00> : vector<10x4xf32>
    %114 = tpu.matmul %111, %113, %cst_91 {dimension_numbers = #tpu.dot_dimension_numbers<[1], [0], [0], [1], [0, 0, 1, 1], [], []>} : vector<10x6xf32>, vector<6x4xf32>, vector<10x4xf32> -> vector<10x4xf32>
    %115 = arith.addf %110, %114 : vector<10x4xf32>
    %c0_92 = arith.constant 0 : index
    %c0_93 = arith.constant 0 : index
    %116 = vector.load %arg6[%c0_92, %c0_93] : memref<1x4xf32, #tpu.memory_space<vmem>>, vector<1x4xf32>
    %117 = vector.broadcast %116 : vector<1x4xf32> to vector<10x4xf32>
    %118 = arith.addf %115, %117 : vector<10x4xf32>
    %cst_94 = arith.constant 0.000000e+00 : f32
    %119 = vector.broadcast %cst_94 : f32 to vector<10x4xf32>
    %120 = arith.maximumf %118, %119 : vector<10x4xf32>
    %c1_95 = arith.constant 1 : index
    %c0_96 = arith.constant 0 : index
    %c0_97 = arith.constant 0 : index
    %121 = vector.load %arg7[%c1_95, %c0_96, %c0_97] : memref<2x10x4xf32, #tpu.memory_space<vmem>>, vector<1x10x4xf32>
    %122 = vector.shape_cast %121 : vector<1x10x4xf32> to vector<10x4xf32>
    %123 = vector.shape_cast %120 : vector<10x4xf32> to vector<1x10x4xf32>
    tpu.vector_store %arg7[%c1_95, %c0_96, %c0_97], %123 {strides = array<i32>} : memref<2x10x4xf32, #tpu.memory_space<vmem>>, vector<1x10x4xf32>,
    return
  }
}

module attributes {stable_mosaic.version = 11 : i64} {
  func.func @_out_softmax_kernel(%arg0: memref<16x128xf32, #tpu.memory_space<vmem>>, %arg1: memref<128x16xf32, #tpu.memory_space<vmem>>, %arg2: memref<1x16xf32, #tpu.memory_space<vmem>>, %arg3: memref<16x16xf32, #tpu.memory_space<vmem>>) attributes {dimension_semantics = [], scalar_prefetch = 0 : i64, scratch_operands = 0 : i64, tpu.core_type = #tpu.core_type<tc>} {
    %c0 = arith.constant 0 : index
    %c0_0 = arith.constant 0 : index
    %0 = vector.load %arg0[%c0, %c0_0] : memref<16x128xf32, #tpu.memory_space<vmem>>, vector<16x128xf32>
    %c0_1 = arith.constant 0 : index
    %c0_2 = arith.constant 0 : index
    %1 = vector.load %arg1[%c0_1, %c0_2] : memref<128x16xf32, #tpu.memory_space<vmem>>, vector<128x16xf32>
    %cst = arith.constant dense<0.000000e+00> : vector<16x16xf32>
    %2 = tpu.matmul %0, %1, %cst {dimension_numbers = #tpu.dot_dimension_numbers<[1], [0], [0], [1], [0, 0, 1, 1], [], []>} : vector<16x128xf32>, vector<128x16xf32>, vector<16x16xf32> -> vector<16x16xf32>
    %c0_3 = arith.constant 0 : index
    %c0_4 = arith.constant 0 : index
    %3 = vector.load %arg2[%c0_3, %c0_4] : memref<1x16xf32, #tpu.memory_space<vmem>>, vector<1x16xf32>
    %4 = vector.broadcast %3 : vector<1x16xf32> to vector<16x16xf32>
    %5 = arith.addf %2, %4 : vector<16x16xf32>
    %cst_5 = arith.constant dense<0xFF800000> : vector<16xf32>
    %6 = vector.multi_reduction <maximumf>, %5, %cst_5 [1] : vector<16x16xf32> to vector<16xf32>
    %7 = vector.shape_cast %6 : vector<16xf32> to vector<16x1xf32>
    %8 = vector.broadcast %7 : vector<16x1xf32> to vector<16x16xf32>
    %9 = arith.subf %5, %8 : vector<16x16xf32>
    %10 = math.exp %9 : vector<16x16xf32>
    %cst_6 = arith.constant dense<0.000000e+00> : vector<16xf32>
    %11 = vector.multi_reduction <add>, %10, %cst_6 [1] : vector<16x16xf32> to vector<16xf32>
    %12 = vector.shape_cast %11 : vector<16xf32> to vector<16x1xf32>
    %13 = vector.broadcast %12 : vector<16x1xf32> to vector<16x16xf32>
    %14 = arith.divf %10, %13 : vector<16x16xf32>
    %c0_7 = arith.constant 0 : index
    %c0_8 = arith.constant 0 : index
    %15 = vector.load %arg3[%c0_7, %c0_8] : memref<16x16xf32, #tpu.memory_space<vmem>>, vector<16x16xf32>
    tpu.vector_store %arg3[%c0_7, %c0_8], %14 {strides = array<i32>} : memref<16x16xf32, #tpu.memory_space<vmem>>, vector<16x16xf32>,
    return
  }
}

module attributes {stable_mosaic.version = 11 : i64} {
  func.func @kernel(%arg0: memref<2x40xf32, #tpu.memory_space<vmem>>, %arg1: memref<2x16xf32, #tpu.memory_space<vmem>>, %arg2: memref<2x1xf32, #tpu.memory_space<vmem>>, %arg3: memref<40x48xf32, #tpu.memory_space<vmem>>, %arg4: memref<1x48xf32, #tpu.memory_space<vmem>>, %arg5: memref<48x16xf32, #tpu.memory_space<vmem>>, %arg6: memref<1x16xf32, #tpu.memory_space<vmem>>, %arg7: memref<48x16xf32, #tpu.memory_space<vmem>>, %arg8: memref<1x16xf32, #tpu.memory_space<vmem>>, %arg9: memref<16x32xf32, #tpu.memory_space<vmem>>, %arg10: memref<1x32xf32, #tpu.memory_space<vmem>>, %arg11: memref<1x32xf32, #tpu.memory_space<vmem>>, %arg12: memref<32x384xf32, #tpu.memory_space<vmem>>, %arg13: memref<128x384xf32, #tpu.memory_space<vmem>>, %arg14: memref<1x384xf32, #tpu.memory_space<vmem>>, %arg15: memref<1x384xf32, #tpu.memory_space<vmem>>, %arg16: memref<128x384xf32, #tpu.memory_space<vmem>>, %arg17: memref<128x384xf32, #tpu.memory_space<vmem>>, %arg18: memref<1x384xf32, #tpu.memory_space<vmem>>, %arg19: memref<1x384xf32, #tpu.memory_space<vmem>>, %arg20: memref<128x384xf32, #tpu.memory_space<vmem>>, %arg21: memref<128x384xf32, #tpu.memory_space<vmem>>, %arg22: memref<1x384xf32, #tpu.memory_space<vmem>>, %arg23: memref<1x384xf32, #tpu.memory_space<vmem>>, %arg24: memref<2x16xf32, #tpu.memory_space<vmem>>, %arg25: memref<2x16xf32, #tpu.memory_space<vmem>>, %arg26: memref<8x2x128xf32, #tpu.memory_space<vmem>>) attributes {dimension_semantics = [], scalar_prefetch = 0 : i64, scratch_operands = 0 : i64, tpu.core_type = #tpu.core_type<tc>} {
    %c0 = arith.constant 0 : index
    %c0_0 = arith.constant 0 : index
    %0 = vector.load %arg0[%c0, %c0_0] : memref<2x40xf32, #tpu.memory_space<vmem>>, vector<2x40xf32>
    %c0_1 = arith.constant 0 : index
    %c0_2 = arith.constant 0 : index
    %1 = vector.load %arg3[%c0_1, %c0_2] : memref<40x48xf32, #tpu.memory_space<vmem>>, vector<40x48xf32>
    %cst = arith.constant dense<0.000000e+00> : vector<2x48xf32>
    %2 = tpu.matmul %0, %1, %cst {dimension_numbers = #tpu.dot_dimension_numbers<[1], [0], [0], [1], [0, 0, 1, 1], [], []>} : vector<2x40xf32>, vector<40x48xf32>, vector<2x48xf32> -> vector<2x48xf32>
    %c0_3 = arith.constant 0 : index
    %c0_4 = arith.constant 0 : index
    %3 = vector.load %arg4[%c0_3, %c0_4] : memref<1x48xf32, #tpu.memory_space<vmem>>, vector<1x48xf32>
    %4 = vector.broadcast %3 : vector<1x48xf32> to vector<2x48xf32>
    %5 = arith.addf %2, %4 : vector<2x48xf32>
    %cst_5 = arith.constant 0.000000e+00 : f32
    %6 = vector.broadcast %cst_5 : f32 to vector<2x48xf32>
    %7 = arith.cmpf ogt, %5, %6 : vector<2x48xf32>
    %8 = math.exp %5 : vector<2x48xf32>
    %cst_6 = arith.constant 1.000000e+00 : f32
    %9 = vector.broadcast %cst_6 : f32 to vector<2x48xf32>
    %10 = arith.subf %8, %9 : vector<2x48xf32>
    %cst_7 = arith.constant 1.67326319 : f32
    %11 = vector.broadcast %cst_7 : f32 to vector<2x48xf32>
    %12 = arith.mulf %11, %10 : vector<2x48xf32>
    %13 = arith.select %7, %5, %12 : vector<2x48xi1>, vector<2x48xf32>
    %cst_8 = arith.constant 1.05070102 : f32
    %14 = vector.broadcast %cst_8 : f32 to vector<2x48xf32>
    %15 = arith.mulf %14, %13 : vector<2x48xf32>
    %c0_9 = arith.constant 0 : index
    %c0_10 = arith.constant 0 : index
    %16 = vector.load %arg5[%c0_9, %c0_10] : memref<48x16xf32, #tpu.memory_space<vmem>>, vector<48x16xf32>
    %cst_11 = arith.constant dense<0.000000e+00> : vector<2x16xf32>
    %17 = tpu.matmul %15, %16, %cst_11 {dimension_numbers = #tpu.dot_dimension_numbers<[1], [0], [0], [1], [0, 0, 1, 1], [], []>} : vector<2x48xf32>, vector<48x16xf32>, vector<2x16xf32> -> vector<2x16xf32>
    %c0_12 = arith.constant 0 : index
    %c0_13 = arith.constant 0 : index
    %18 = vector.load %arg6[%c0_12, %c0_13] : memref<1x16xf32, #tpu.memory_space<vmem>>, vector<1x16xf32>
    %19 = vector.broadcast %18 : vector<1x16xf32> to vector<2x16xf32>
    %20 = arith.addf %17, %19 : vector<2x16xf32>
    %c0_14 = arith.constant 0 : index
    %c0_15 = arith.constant 0 : index
    %21 = vector.load %arg7[%c0_14, %c0_15] : memref<48x16xf32, #tpu.memory_space<vmem>>, vector<48x16xf32>
    %cst_16 = arith.constant dense<0.000000e+00> : vector<2x16xf32>
    %22 = tpu.matmul %15, %21, %cst_16 {dimension_numbers = #tpu.dot_dimension_numbers<[1], [0], [0], [1], [0, 0, 1, 1], [], []>} : vector<2x48xf32>, vector<48x16xf32>, vector<2x16xf32> -> vector<2x16xf32>
    %c0_17 = arith.constant 0 : index
    %c0_18 = arith.constant 0 : index
    %23 = vector.load %arg8[%c0_17, %c0_18] : memref<1x16xf32, #tpu.memory_space<vmem>>, vector<1x16xf32>
    %24 = vector.broadcast %23 : vector<1x16xf32> to vector<2x16xf32>
    %25 = arith.addf %22, %24 : vector<2x16xf32>
    %c0_19 = arith.constant 0 : index
    %c0_20 = arith.constant 0 : index
    %26 = vector.load %arg24[%c0_19, %c0_20] : memref<2x16xf32, #tpu.memory_space<vmem>>, vector<2x16xf32>
    tpu.vector_store %arg24[%c0_19, %c0_20], %20 {strides = array<i32>} : memref<2x16xf32, #tpu.memory_space<vmem>>, vector<2x16xf32>,
    %c0_21 = arith.constant 0 : index
    %c0_22 = arith.constant 0 : index
    %27 = vector.load %arg25[%c0_21, %c0_22] : memref<2x16xf32, #tpu.memory_space<vmem>>, vector<2x16xf32>
    tpu.vector_store %arg25[%c0_21, %c0_22], %25 {strides = array<i32>} : memref<2x16xf32, #tpu.memory_space<vmem>>, vector<2x16xf32>,
    %cst_23 = arith.constant 5.000000e-01 : f32
    %28 = vector.broadcast %cst_23 : f32 to vector<2x16xf32>
    %29 = arith.mulf %28, %25 : vector<2x16xf32>
    %30 = math.exp %29 : vector<2x16xf32>
    %c0_24 = arith.constant 0 : index
    %c0_25 = arith.constant 0 : index
    %31 = vector.load %arg1[%c0_24, %c0_25] : memref<2x16xf32, #tpu.memory_space<vmem>>, vector<2x16xf32>
    %cst_26 = arith.constant 0.00999999977 : f32
    %32 = vector.broadcast %cst_26 : f32 to vector<2x16xf32>
    %33 = arith.mulf %32, %31 : vector<2x16xf32>
    %34 = arith.mulf %30, %33 : vector<2x16xf32>
    %35 = arith.addf %34, %20 : vector<2x16xf32>
    %c0_27 = arith.constant 0 : index
    %c0_28 = arith.constant 0 : index
    %36 = vector.load %arg9[%c0_27, %c0_28] : memref<16x32xf32, #tpu.memory_space<vmem>>, vector<16x32xf32>
    %cst_29 = arith.constant dense<0.000000e+00> : vector<2x32xf32>
    %37 = tpu.matmul %35, %36, %cst_29 {dimension_numbers = #tpu.dot_dimension_numbers<[1], [0], [0], [1], [0, 0, 1, 1], [], []>} : vector<2x16xf32>, vector<16x32xf32>, vector<2x32xf32> -> vector<2x32xf32>
    %c0_30 = arith.constant 0 : index
    %c0_31 = arith.constant 0 : index
    %38 = vector.load %arg2[%c0_30, %c0_31] : memref<2x1xf32, #tpu.memory_space<vmem>>, vector<2x1xf32>
    %c0_32 = arith.constant 0 : index
    %c0_33 = arith.constant 0 : index
    %39 = vector.load %arg10[%c0_32, %c0_33] : memref<1x32xf32, #tpu.memory_space<vmem>>, vector<1x32xf32>
    %40 = vector.broadcast %38 : vector<2x1xf32> to vector<2x32xf32>
    %41 = vector.broadcast %39 : vector<1x32xf32> to vector<2x32xf32>
    %42 = arith.mulf %40, %41 : vector<2x32xf32>
    %43 = arith.addf %37, %42 : vector<2x32xf32>
    %c0_34 = arith.constant 0 : index
    %c0_35 = arith.constant 0 : index
    %44 = vector.load %arg11[%c0_34, %c0_35] : memref<1x32xf32, #tpu.memory_space<vmem>>, vector<1x32xf32>
    %45 = vector.broadcast %44 : vector<1x32xf32> to vector<2x32xf32>
    %46 = arith.addf %43, %45 : vector<2x32xf32>
    %cst_36 = arith.constant 0.000000e+00 : f32
    %47 = vector.broadcast %cst_36 : f32 to vector<2x32xf32>
    %48 = arith.cmpf ogt, %46, %47 : vector<2x32xf32>
    %49 = math.exp %46 : vector<2x32xf32>
    %cst_37 = arith.constant 1.000000e+00 : f32
    %50 = vector.broadcast %cst_37 : f32 to vector<2x32xf32>
    %51 = arith.subf %49, %50 : vector<2x32xf32>
    %cst_38 = arith.constant 1.67326319 : f32
    %52 = vector.broadcast %cst_38 : f32 to vector<2x32xf32>
    %53 = arith.mulf %52, %51 : vector<2x32xf32>
    %54 = arith.select %48, %46, %53 : vector<2x32xi1>, vector<2x32xf32>
    %cst_39 = arith.constant 1.05070102 : f32
    %55 = vector.broadcast %cst_39 : f32 to vector<2x32xf32>
    %56 = arith.mulf %55, %54 : vector<2x32xf32>
    %c0_40 = arith.constant 0 : index
    %c0_41 = arith.constant 0 : index
    %57 = vector.load %arg12[%c0_40, %c0_41] : memref<32x384xf32, #tpu.memory_space<vmem>>, vector<32x384xf32>
    %c0_42 = arith.constant 0 : index
    %c0_43 = arith.constant 0 : index
    %58 = vector.load %arg16[%c0_42, %c0_43] : memref<128x384xf32, #tpu.memory_space<vmem>>, vector<128x384xf32>
    %c0_44 = arith.constant 0 : index
    %c0_45 = arith.constant 0 : index
    %59 = vector.load %arg20[%c0_44, %c0_45] : memref<128x384xf32, #tpu.memory_space<vmem>>, vector<128x384xf32>
    %c0_46 = arith.constant 0 : index
    %c0_47 = arith.constant 0 : index
    %60 = vector.load %arg13[%c0_46, %c0_47] : memref<128x384xf32, #tpu.memory_space<vmem>>, vector<128x384xf32>
    %c0_48 = arith.constant 0 : index
    %c0_49 = arith.constant 0 : index
    %61 = vector.load %arg17[%c0_48, %c0_49] : memref<128x384xf32, #tpu.memory_space<vmem>>, vector<128x384xf32>
    %c0_50 = arith.constant 0 : index
    %c0_51 = arith.constant 0 : index
    %62 = vector.load %arg21[%c0_50, %c0_51] : memref<128x384xf32, #tpu.memory_space<vmem>>, vector<128x384xf32>
    %c0_52 = arith.constant 0 : index
    %c0_53 = arith.constant 0 : index
    %63 = vector.load %arg14[%c0_52, %c0_53] : memref<1x384xf32, #tpu.memory_space<vmem>>, vector<1x384xf32>
    %c0_54 = arith.constant 0 : index
    %c0_55 = arith.constant 0 : index
    %64 = vector.load %arg18[%c0_54, %c0_55] : memref<1x384xf32, #tpu.memory_space<vmem>>, vector<1x384xf32>
    %c0_56 = arith.constant 0 : index
    %c0_57 = arith.constant 0 : index
    %65 = vector.load %arg22[%c0_56, %c0_57] : memref<1x384xf32, #tpu.memory_space<vmem>>, vector<1x384xf32>
    %c0_58 = arith.constant 0 : index
    %c0_59 = arith.constant 0 : index
    %66 = vector.load %arg15[%c0_58, %c0_59] : memref<1x384xf32, #tpu.memory_space<vmem>>, vector<1x384xf32>
    %c0_60 = arith.constant 0 : index
    %c0_61 = arith.constant 0 : index
    %67 = vector.load %arg19[%c0_60, %c0_61] : memref<1x384xf32, #tpu.memory_space<vmem>>, vector<1x384xf32>
    %c0_62 = arith.constant 0 : index
    %c0_63 = arith.constant 0 : index
    %68 = vector.load %arg23[%c0_62, %c0_63] : memref<1x384xf32, #tpu.memory_space<vmem>>, vector<1x384xf32>
    %cst_64 = arith.constant dense<0.000000e+00> : vector<2x384xf32>
    %69 = tpu.matmul %56, %57, %cst_64 {dimension_numbers = #tpu.dot_dimension_numbers<[1], [0], [0], [1], [0, 0, 1, 1], [], []>} : vector<2x32xf32>, vector<32x384xf32>, vector<2x384xf32> -> vector<2x384xf32>
    %70 = vector.broadcast %63 : vector<1x384xf32> to vector<2x384xf32>
    %71 = arith.addf %69, %70 : vector<2x384xf32>
    %cst_65 = arith.constant 0.000000e+00 : f32
    %72 = vector.broadcast %cst_65 : f32 to vector<2x128xf32>
    %cst_66 = arith.constant 0.000000e+00 : f32
    %73 = vector.broadcast %cst_66 : f32 to vector<2x128xf32>
    %cst_67 = arith.constant 0.000000e+00 : f32
    %74 = vector.broadcast %cst_67 : f32 to vector<2x128xf32>
    %cst_68 = arith.constant dense<0.000000e+00> : vector<2x384xf32>
    %75 = tpu.matmul %72, %60, %cst_68 {dimension_numbers = #tpu.dot_dimension_numbers<[1], [0], [0], [1], [0, 0, 1, 1], [], []>} : vector<2x128xf32>, vector<128x384xf32>, vector<2x384xf32> -> vector<2x384xf32>
    %76 = vector.broadcast %66 : vector<1x384xf32> to vector<2x384xf32>
    %77 = arith.addf %75, %76 : vector<2x384xf32>
    %78 = vector.extract_strided_slice %71 {offsets = [0, 0], sizes = [2, 128], strides = [1, 1]} : vector<2x384xf32> to vector<2x128xf32>
    %79 = vector.extract_strided_slice %77 {offsets = [0, 0], sizes = [2, 128], strides = [1, 1]} : vector<2x384xf32> to vector<2x128xf32>
    %80 = arith.addf %78, %79 : vector<2x128xf32>
    %81 = arith.negf %80 : vector<2x128xf32>
    %82 = math.exp %81 : vector<2x128xf32>
    %cst_69 = arith.constant 1.000000e+00 : f32
    %83 = vector.broadcast %cst_69 : f32 to vector<2x128xf32>
    %84 = arith.addf %83, %82 : vector<2x128xf32>
    %85 = arith.divf %83, %84 : vector<2x128xf32>
    %86 = vector.extract_strided_slice %71 {offsets = [0, 128], sizes = [2, 128], strides = [1, 1]} : vector<2x384xf32> to vector<2x128xf32>
    %87 = vector.extract_strided_slice %77 {offsets = [0, 128], sizes = [2, 128], strides = [1, 1]} : vector<2x384xf32> to vector<2x128xf32>
    %88 = arith.addf %86, %87 : vector<2x128xf32>
    %89 = arith.negf %88 : vector<2x128xf32>
    %90 = math.exp %89 : vector<2x128xf32>
    %cst_70 = arith.constant 1.000000e+00 : f32
    %91 = vector.broadcast %cst_70 : f32 to vector<2x128xf32>
    %92 = arith.addf %91, %90 : vector<2x128xf32>
    %93 = arith.divf %91, %92 : vector<2x128xf32>
    %94 = vector.extract_strided_slice %71 {offsets = [0, 256], sizes = [2, 128], strides = [1, 1]} : vector<2x384xf32> to vector<2x128xf32>
    %95 = vector.extract_strided_slice %77 {offsets = [0, 256], sizes = [2, 128], strides = [1, 1]} : vector<2x384xf32> to vector<2x128xf32>
    %96 = arith.mulf %85, %95 : vector<2x128xf32>
    %97 = arith.addf %94, %96 : vector<2x128xf32>
    %98 = math.tanh %97 : vector<2x128xf32>
    %cst_71 = arith.constant 1.000000e+00 : f32
    %99 = vector.broadcast %cst_71 : f32 to vector<2x128xf32>
    %100 = arith.subf %99, %93 : vector<2x128xf32>
    %101 = arith.mulf %100, %98 : vector<2x128xf32>
    %102 = arith.mulf %93, %72 : vector<2x128xf32>
    %103 = arith.addf %101, %102 : vector<2x128xf32>
    %cst_72 = arith.constant dense<0.000000e+00> : vector<2x384xf32>
    %104 = tpu.matmul %103, %58, %cst_72 {dimension_numbers = #tpu.dot_dimension_numbers<[1], [0], [0], [1], [0, 0, 1, 1], [], []>} : vector<2x128xf32>, vector<128x384xf32>, vector<2x384xf32> -> vector<2x384xf32>
    %105 = vector.broadcast %64 : vector<1x384xf32> to vector<2x384xf32>
    %106 = arith.addf %104, %105 : vector<2x384xf32>
    %cst_73 = arith.constant dense<0.000000e+00> : vector<2x384xf32>
    %107 = tpu.matmul %73, %61, %cst_73 {dimension_numbers = #tpu.dot_dimension_numbers<[1], [0], [0], [1], [0, 0, 1, 1], [], []>} : vector<2x128xf32>, vector<128x384xf32>, vector<2x384xf32> -> vector<2x384xf32>
    %108 = vector.broadcast %67 : vector<1x384xf32> to vector<2x384xf32>
    %109 = arith.addf %107, %108 : vector<2x384xf32>
    %110 = vector.extract_strided_slice %106 {offsets = [0, 0], sizes = [2, 128], strides = [1, 1]} : vector<2x384xf32> to vector<2x128xf32>
    %111 = vector.extract_strided_slice %109 {offsets = [0, 0], sizes = [2, 128], strides = [1, 1]} : vector<2x384xf32> to vector<2x128xf32>
    %112 = arith.addf %110, %111 : vector<2x128xf32>
    %113 = arith.negf %112 : vector<2x128xf32>
    %114 = math.exp %113 : vector<2x128xf32>
    %cst_74 = arith.constant 1.000000e+00 : f32
    %115 = vector.broadcast %cst_74 : f32 to vector<2x128xf32>
    %116 = arith.addf %115, %114 : vector<2x128xf32>
    %117 = arith.divf %115, %116 : vector<2x128xf32>
    %118 = vector.extract_strided_slice %106 {offsets = [0, 128], sizes = [2, 128], strides = [1, 1]} : vector<2x384xf32> to vector<2x128xf32>
    %119 = vector.extract_strided_slice %109 {offsets = [0, 128], sizes = [2, 128], strides = [1, 1]} : vector<2x384xf32> to vector<2x128xf32>
    %120 = arith.addf %118, %119 : vector<2x128xf32>
    %121 = arith.negf %120 : vector<2x128xf32>
    %122 = math.exp %121 : vector<2x128xf32>
    %cst_75 = arith.constant 1.000000e+00 : f32
    %123 = vector.broadcast %cst_75 : f32 to vector<2x128xf32>
    %124 = arith.addf %123, %122 : vector<2x128xf32>
    %125 = arith.divf %123, %124 : vector<2x128xf32>
    %126 = vector.extract_strided_slice %106 {offsets = [0, 256], sizes = [2, 128], strides = [1, 1]} : vector<2x384xf32> to vector<2x128xf32>
    %127 = vector.extract_strided_slice %109 {offsets = [0, 256], sizes = [2, 128], strides = [1, 1]} : vector<2x384xf32> to vector<2x128xf32>
    %128 = arith.mulf %117, %127 : vector<2x128xf32>
    %129 = arith.addf %126, %128 : vector<2x128xf32>
    %130 = math.tanh %129 : vector<2x128xf32>
    %cst_76 = arith.constant 1.000000e+00 : f32
    %131 = vector.broadcast %cst_76 : f32 to vector<2x128xf32>
    %132 = arith.subf %131, %125 : vector<2x128xf32>
    %133 = arith.mulf %132, %130 : vector<2x128xf32>
    %134 = arith.mulf %125, %73 : vector<2x128xf32>
    %135 = arith.addf %133, %134 : vector<2x128xf32>
    %cst_77 = arith.constant dense<0.000000e+00> : vector<2x384xf32>
    %136 = tpu.matmul %135, %59, %cst_77 {dimension_numbers = #tpu.dot_dimension_numbers<[1], [0], [0], [1], [0, 0, 1, 1], [], []>} : vector<2x128xf32>, vector<128x384xf32>, vector<2x384xf32> -> vector<2x384xf32>
    %137 = vector.broadcast %65 : vector<1x384xf32> to vector<2x384xf32>
    %138 = arith.addf %136, %137 : vector<2x384xf32>
    %cst_78 = arith.constant dense<0.000000e+00> : vector<2x384xf32>
    %139 = tpu.matmul %74, %62, %cst_78 {dimension_numbers = #tpu.dot_dimension_numbers<[1], [0], [0], [1], [0, 0, 1, 1], [], []>} : vector<2x128xf32>, vector<128x384xf32>, vector<2x384xf32> -> vector<2x384xf32>
    %140 = vector.broadcast %68 : vector<1x384xf32> to vector<2x384xf32>
    %141 = arith.addf %139, %140 : vector<2x384xf32>
    %142 = vector.extract_strided_slice %138 {offsets = [0, 0], sizes = [2, 128], strides = [1, 1]} : vector<2x384xf32> to vector<2x128xf32>
    %143 = vector.extract_strided_slice %141 {offsets = [0, 0], sizes = [2, 128], strides = [1, 1]} : vector<2x384xf32> to vector<2x128xf32>
    %144 = arith.addf %142, %143 : vector<2x128xf32>
    %145 = arith.negf %144 : vector<2x128xf32>
    %146 = math.exp %145 : vector<2x128xf32>
    %cst_79 = arith.constant 1.000000e+00 : f32
    %147 = vector.broadcast %cst_79 : f32 to vector<2x128xf32>
    %148 = arith.addf %147, %146 : vector<2x128xf32>
    %149 = arith.divf %147, %148 : vector<2x128xf32>
    %150 = vector.extract_strided_slice %138 {offsets = [0, 128], sizes = [2, 128], strides = [1, 1]} : vector<2x384xf32> to vector<2x128xf32>
    %151 = vector.extract_strided_slice %141 {offsets = [0, 128], sizes = [2, 128], strides = [1, 1]} : vector<2x384xf32> to vector<2x128xf32>
    %152 = arith.addf %150, %151 : vector<2x128xf32>
    %153 = arith.negf %152 : vector<2x128xf32>
    %154 = math.exp %153 : vector<2x128xf32>
    %cst_80 = arith.constant 1.000000e+00 : f32
    %155 = vector.broadcast %cst_80 : f32 to vector<2x128xf32>
    %156 = arith.addf %155, %154 : vector<2x128xf32>
    %157 = arith.divf %155, %156 : vector<2x128xf32>
    %158 = vector.extract_strided_slice %138 {offsets = [0, 256], sizes = [2, 128], strides = [1, 1]} : vector<2x384xf32> to vector<2x128xf32>
    %159 = vector.extract_strided_slice %141 {offsets = [0, 256], sizes = [2, 128], strides = [1, 1]} : vector<2x384xf32> to vector<2x128xf32>
    %160 = arith.mulf %149, %159 : vector<2x128xf32>
    %161 = arith.addf %158, %160 : vector<2x128xf32>
    %162 = math.tanh %161 : vector<2x128xf32>
    %cst_81 = arith.constant 1.000000e+00 : f32
    %163 = vector.broadcast %cst_81 : f32 to vector<2x128xf32>
    %164 = arith.subf %163, %157 : vector<2x128xf32>
    %165 = arith.mulf %164, %162 : vector<2x128xf32>
    %166 = arith.mulf %157, %74 : vector<2x128xf32>
    %167 = arith.addf %165, %166 : vector<2x128xf32>
    %c0_82 = arith.constant 0 : index
    %c0_83 = arith.constant 0 : index
    %c0_84 = arith.constant 0 : index
    %168 = vector.load %arg26[%c0_82, %c0_83, %c0_84] : memref<8x2x128xf32, #tpu.memory_space<vmem>>, vector<1x2x128xf32>
    %169 = vector.shape_cast %168 : vector<1x2x128xf32> to vector<2x128xf32>
    %170 = vector.shape_cast %167 : vector<2x128xf32> to vector<1x2x128xf32>
    tpu.vector_store %arg26[%c0_82, %c0_83, %c0_84], %170 {strides = array<i32>} : memref<8x2x128xf32, #tpu.memory_space<vmem>>, vector<1x2x128xf32>,
    %cst_85 = arith.constant dense<0.000000e+00> : vector<2x384xf32>
    %171 = tpu.matmul %103, %60, %cst_85 {dimension_numbers = #tpu.dot_dimension_numbers<[1], [0], [0], [1], [0, 0, 1, 1], [], []>} : vector<2x128xf32>, vector<128x384xf32>, vector<2x384xf32> -> vector<2x384xf32>
    %172 = vector.broadcast %66 : vector<1x384xf32> to vector<2x384xf32>
    %173 = arith.addf %171, %172 : vector<2x384xf32>
    %174 = vector.extract_strided_slice %71 {offsets = [0, 0], sizes = [2, 128], strides = [1, 1]} : vector<2x384xf32> to vector<2x128xf32>
    %175 = vector.extract_strided_slice %173 {offsets = [0, 0], sizes = [2, 128], strides = [1, 1]} : vector<2x384xf32> to vector<2x128xf32>
    %176 = arith.addf %174, %175 : vector<2x128xf32>
    %177 = arith.negf %176 : vector<2x128xf32>
    %178 = math.exp %177 : vector<2x128xf32>
    %cst_86 = arith.constant 1.000000e+00 : f32
    %179 = vector.broadcast %cst_86 : f32 to vector<2x128xf32>
    %180 = arith.addf %179, %178 : vector<2x128xf32>
    %181 = arith.divf %179, %180 : vector<2x128xf32>
    %182 = vector.extract_strided_slice %71 {offsets = [0, 128], sizes = [2, 128], strides = [1, 1]} : vector<2x384xf32> to vector<2x128xf32>
    %183 = vector.extract_strided_slice %173 {offsets = [0, 128], sizes = [2, 128], strides = [1, 1]} : vector<2x384xf32> to vector<2x128xf32>
    %184 = arith.addf %182, %183 : vector<2x128xf32>
    %185 = arith.negf %184 : vector<2x128xf32>
    %186 = math.exp %185 : vector<2x128xf32>
    %cst_87 = arith.constant 1.000000e+00 : f32
    %187 = vector.broadcast %cst_87 : f32 to vector<2x128xf32>
    %188 = arith.addf %187, %186 : vector<2x128xf32>
    %189 = arith.divf %187, %188 : vector<2x128xf32>
    %190 = vector.extract_strided_slice %71 {offsets = [0, 256], sizes = [2, 128], strides = [1, 1]} : vector<2x384xf32> to vector<2x128xf32>
    %191 = vector.extract_strided_slice %173 {offsets = [0, 256], sizes = [2, 128], strides = [1, 1]} : vector<2x384xf32> to vector<2x128xf32>
    %192 = arith.mulf %181, %191 : vector<2x128xf32>
    %193 = arith.addf %190, %192 : vector<2x128xf32>
    %194 = math.tanh %193 : vector<2x128xf32>
    %cst_88 = arith.constant 1.000000e+00 : f32
    %195 = vector.broadcast %cst_88 : f32 to vector<2x128xf32>
    %196 = arith.subf %195, %189 : vector<2x128xf32>
    %197 = arith.mulf %196, %194 : vector<2x128xf32>
    %198 = arith.mulf %189, %103 : vector<2x128xf32>
    %199 = arith.addf %197, %198 : vector<2x128xf32>
    %cst_89 = arith.constant dense<0.000000e+00> : vector<2x384xf32>
    %200 = tpu.matmul %199, %58, %cst_89 {dimension_numbers = #tpu.dot_dimension_numbers<[1], [0], [0], [1], [0, 0, 1, 1], [], []>} : vector<2x128xf32>, vector<128x384xf32>, vector<2x384xf32> -> vector<2x384xf32>
    %201 = vector.broadcast %64 : vector<1x384xf32> to vector<2x384xf32>
    %202 = arith.addf %200, %201 : vector<2x384xf32>
    %cst_90 = arith.constant dense<0.000000e+00> : vector<2x384xf32>
    %203 = tpu.matmul %135, %61, %cst_90 {dimension_numbers = #tpu.dot_dimension_numbers<[1], [0], [0], [1], [0, 0, 1, 1], [], []>} : vector<2x128xf32>, vector<128x384xf32>, vector<2x384xf32> -> vector<2x384xf32>
    %204 = vector.broadcast %67 : vector<1x384xf32> to vector<2x384xf32>
    %205 = arith.addf %203, %204 : vector<2x384xf32>
    %206 = vector.extract_strided_slice %202 {offsets = [0, 0], sizes = [2, 128], strides = [1, 1]} : vector<2x384xf32> to vector<2x128xf32>
    %207 = vector.extract_strided_slice %205 {offsets = [0, 0], sizes = [2, 128], strides = [1, 1]} : vector<2x384xf32> to vector<2x128xf32>
    %208 = arith.addf %206, %207 : vector<2x128xf32>
    %209 = arith.negf %208 : vector<2x128xf32>
    %210 = math.exp %209 : vector<2x128xf32>
    %cst_91 = arith.constant 1.000000e+00 : f32
    %211 = vector.broadcast %cst_91 : f32 to vector<2x128xf32>
    %212 = arith.addf %211, %210 : vector<2x128xf32>
    %213 = arith.divf %211, %212 : vector<2x128xf32>
    %214 = vector.extract_strided_slice %202 {offsets = [0, 128], sizes = [2, 128], strides = [1, 1]} : vector<2x384xf32> to vector<2x128xf32>
    %215 = vector.extract_strided_slice %205 {offsets = [0, 128], sizes = [2, 128], strides = [1, 1]} : vector<2x384xf32> to vector<2x128xf32>
    %216 = arith.addf %214, %215 : vector<2x128xf32>
    %217 = arith.negf %216 : vector<2x128xf32>
    %218 = math.exp %217 : vector<2x128xf32>
    %cst_92 = arith.constant 1.000000e+00 : f32
    %219 = vector.broadcast %cst_92 : f32 to vector<2x128xf32>
    %220 = arith.addf %219, %218 : vector<2x128xf32>
    %221 = arith.divf %219, %220 : vector<2x128xf32>
    %222 = vector.extract_strided_slice %202 {offsets = [0, 256], sizes = [2, 128], strides = [1, 1]} : vector<2x384xf32> to vector<2x128xf32>
    %223 = vector.extract_strided_slice %205 {offsets = [0, 256], sizes = [2, 128], strides = [1, 1]} : vector<2x384xf32> to vector<2x128xf32>
    %224 = arith.mulf %213, %223 : vector<2x128xf32>
    %225 = arith.addf %222, %224 : vector<2x128xf32>
    %226 = math.tanh %225 : vector<2x128xf32>
    %cst_93 = arith.constant 1.000000e+00 : f32
    %227 = vector.broadcast %cst_93 : f32 to vector<2x128xf32>
    %228 = arith.subf %227, %221 : vector<2x128xf32>
    %229 = arith.mulf %228, %226 : vector<2x128xf32>
    %230 = arith.mulf %221, %135 : vector<2x128xf32>
    %231 = arith.addf %229, %230 : vector<2x128xf32>
    %cst_94 = arith.constant dense<0.000000e+00> : vector<2x384xf32>
    %232 = tpu.matmul %231, %59, %cst_94 {dimension_numbers = #tpu.dot_dimension_numbers<[1], [0], [0], [1], [0, 0, 1, 1], [], []>} : vector<2x128xf32>, vector<128x384xf32>, vector<2x384xf32> -> vector<2x384xf32>
    %233 = vector.broadcast %65 : vector<1x384xf32> to vector<2x384xf32>
    %234 = arith.addf %232, %233 : vector<2x384xf32>
    %cst_95 = arith.constant dense<0.000000e+00> : vector<2x384xf32>
    %235 = tpu.matmul %167, %62, %cst_95 {dimension_numbers = #tpu.dot_dimension_numbers<[1], [0], [0], [1], [0, 0, 1, 1], [], []>} : vector<2x128xf32>, vector<128x384xf32>, vector<2x384xf32> -> vector<2x384xf32>
    %236 = vector.broadcast %68 : vector<1x384xf32> to vector<2x384xf32>
    %237 = arith.addf %235, %236 : vector<2x384xf32>
    %238 = vector.extract_strided_slice %234 {offsets = [0, 0], sizes = [2, 128], strides = [1, 1]} : vector<2x384xf32> to vector<2x128xf32>
    %239 = vector.extract_strided_slice %237 {offsets = [0, 0], sizes = [2, 128], strides = [1, 1]} : vector<2x384xf32> to vector<2x128xf32>
    %240 = arith.addf %238, %239 : vector<2x128xf32>
    %241 = arith.negf %240 : vector<2x128xf32>
    %242 = math.exp %241 : vector<2x128xf32>
    %cst_96 = arith.constant 1.000000e+00 : f32
    %243 = vector.broadcast %cst_96 : f32 to vector<2x128xf32>
    %244 = arith.addf %243, %242 : vector<2x128xf32>
    %245 = arith.divf %243, %244 : vector<2x128xf32>
    %246 = vector.extract_strided_slice %234 {offsets = [0, 128], sizes = [2, 128], strides = [1, 1]} : vector<2x384xf32> to vector<2x128xf32>
    %247 = vector.extract_strided_slice %237 {offsets = [0, 128], sizes = [2, 128], strides = [1, 1]} : vector<2x384xf32> to vector<2x128xf32>
    %248 = arith.addf %246, %247 : vector<2x128xf32>
    %249 = arith.negf %248 : vector<2x128xf32>
    %250 = math.exp %249 : vector<2x128xf32>
    %cst_97 = arith.constant 1.000000e+00 : f32
    %251 = vector.broadcast %cst_97 : f32 to vector<2x128xf32>
    %252 = arith.addf %251, %250 : vector<2x128xf32>
    %253 = arith.divf %251, %252 : vector<2x128xf32>
    %254 = vector.extract_strided_slice %234 {offsets = [0, 256], sizes = [2, 128], strides = [1, 1]} : vector<2x384xf32> to vector<2x128xf32>
    %255 = vector.extract_strided_slice %237 {offsets = [0, 256], sizes = [2, 128], strides = [1, 1]} : vector<2x384xf32> to vector<2x128xf32>
    %256 = arith.mulf %245, %255 : vector<2x128xf32>
    %257 = arith.addf %254, %256 : vector<2x128xf32>
    %258 = math.tanh %257 : vector<2x128xf32>
    %cst_98 = arith.constant 1.000000e+00 : f32
    %259 = vector.broadcast %cst_98 : f32 to vector<2x128xf32>
    %260 = arith.subf %259, %253 : vector<2x128xf32>
    %261 = arith.mulf %260, %258 : vector<2x128xf32>
    %262 = arith.mulf %253, %167 : vector<2x128xf32>
    %263 = arith.addf %261, %262 : vector<2x128xf32>
    %c1 = arith.constant 1 : index
    %c0_99 = arith.constant 0 : index
    %c0_100 = arith.constant 0 : index
    %264 = vector.load %arg26[%c1, %c0_99, %c0_100] : memref<8x2x128xf32, #tpu.memory_space<vmem>>, vector<1x2x128xf32>
    %265 = vector.shape_cast %264 : vector<1x2x128xf32> to vector<2x128xf32>
    %266 = vector.shape_cast %263 : vector<2x128xf32> to vector<1x2x128xf32>
    tpu.vector_store %arg26[%c1, %c0_99, %c0_100], %266 {strides = array<i32>} : memref<8x2x128xf32, #tpu.memory_space<vmem>>, vector<1x2x128xf32>,
    %cst_101 = arith.constant dense<0.000000e+00> : vector<2x384xf32>
    %267 = tpu.matmul %199, %60, %cst_101 {dimension_numbers = #tpu.dot_dimension_numbers<[1], [0], [0], [1], [0, 0, 1, 1], [], []>} : vector<2x128xf32>, vector<128x384xf32>, vector<2x384xf32> -> vector<2x384xf32>
    %268 = vector.broadcast %66 : vector<1x384xf32> to vector<2x384xf32>
    %269 = arith.addf %267, %268 : vector<2x384xf32>
    %270 = vector.extract_strided_slice %71 {offsets = [0, 0], sizes = [2, 128], strides = [1, 1]} : vector<2x384xf32> to vector<2x128xf32>
    %271 = vector.extract_strided_slice %269 {offsets = [0, 0], sizes = [2, 128], strides = [1, 1]} : vector<2x384xf32> to vector<2x128xf32>
    %272 = arith.addf %270, %271 : vector<2x128xf32>
    %273 = arith.negf %272 : vector<2x128xf32>
    %274 = math.exp %273 : vector<2x128xf32>
    %cst_102 = arith.constant 1.000000e+00 : f32
    %275 = vector.broadcast %cst_102 : f32 to vector<2x128xf32>
    %276 = arith.addf %275, %274 : vector<2x128xf32>
    %277 = arith.divf %275, %276 : vector<2x128xf32>
    %278 = vector.extract_strided_slice %71 {offsets = [0, 128], sizes = [2, 128], strides = [1, 1]} : vector<2x384xf32> to vector<2x128xf32>
    %279 = vector.extract_strided_slice %269 {offsets = [0, 128], sizes = [2, 128], strides = [1, 1]} : vector<2x384xf32> to vector<2x128xf32>
    %280 = arith.addf %278, %279 : vector<2x128xf32>
    %281 = arith.negf %280 : vector<2x128xf32>
    %282 = math.exp %281 : vector<2x128xf32>
    %cst_103 = arith.constant 1.000000e+00 : f32
    %283 = vector.broadcast %cst_103 : f32 to vector<2x128xf32>
    %284 = arith.addf %283, %282 : vector<2x128xf32>
    %285 = arith.divf %283, %284 : vector<2x128xf32>
    %286 = vector.extract_strided_slice %71 {offsets = [0, 256], sizes = [2, 128], strides = [1, 1]} : vector<2x384xf32> to vector<2x128xf32>
    %287 = vector.extract_strided_slice %269 {offsets = [0, 256], sizes = [2, 128], strides = [1, 1]} : vector<2x384xf32> to vector<2x128xf32>
    %288 = arith.mulf %277, %287 : vector<2x128xf32>
    %289 = arith.addf %286, %288 : vector<2x128xf32>
    %290 = math.tanh %289 : vector<2x128xf32>
    %cst_104 = arith.constant 1.000000e+00 : f32
    %291 = vector.broadcast %cst_104 : f32 to vector<2x128xf32>
    %292 = arith.subf %291, %285 : vector<2x128xf32>
    %293 = arith.mulf %292, %290 : vector<2x128xf32>
    %294 = arith.mulf %285, %199 : vector<2x128xf32>
    %295 = arith.addf %293, %294 : vector<2x128xf32>
    %cst_105 = arith.constant dense<0.000000e+00> : vector<2x384xf32>
    %296 = tpu.matmul %295, %58, %cst_105 {dimension_numbers = #tpu.dot_dimension_numbers<[1], [0], [0], [1], [0, 0, 1, 1], [], []>} : vector<2x128xf32>, vector<128x384xf32>, vector<2x384xf32> -> vector<2x384xf32>
    %297 = vector.broadcast %64 : vector<1x384xf32> to vector<2x384xf32>
    %298 = arith.addf %296, %297 : vector<2x384xf32>
    %cst_106 = arith.constant dense<0.000000e+00> : vector<2x384xf32>
    %299 = tpu.matmul %231, %61, %cst_106 {dimension_numbers = #tpu.dot_dimension_numbers<[1], [0], [0], [1], [0, 0, 1, 1], [], []>} : vector<2x128xf32>, vector<128x384xf32>, vector<2x384xf32> -> vector<2x384xf32>
    %300 = vector.broadcast %67 : vector<1x384xf32> to vector<2x384xf32>
    %301 = arith.addf %299, %300 : vector<2x384xf32>
    %302 = vector.extract_strided_slice %298 {offsets = [0, 0], sizes = [2, 128], strides = [1, 1]} : vector<2x384xf32> to vector<2x128xf32>
    %303 = vector.extract_strided_slice %301 {offsets = [0, 0], sizes = [2, 128], strides = [1, 1]} : vector<2x384xf32> to vector<2x128xf32>
    %304 = arith.addf %302, %303 : vector<2x128xf32>
    %305 = arith.negf %304 : vector<2x128xf32>
    %306 = math.exp %305 : vector<2x128xf32>
    %cst_107 = arith.constant 1.000000e+00 : f32
    %307 = vector.broadcast %cst_107 : f32 to vector<2x128xf32>
    %308 = arith.addf %307, %306 : vector<2x128xf32>
    %309 = arith.divf %307, %308 : vector<2x128xf32>
    %310 = vector.extract_strided_slice %298 {offsets = [0, 128], sizes = [2, 128], strides = [1, 1]} : vector<2x384xf32> to vector<2x128xf32>
    %311 = vector.extract_strided_slice %301 {offsets = [0, 128], sizes = [2, 128], strides = [1, 1]} : vector<2x384xf32> to vector<2x128xf32>
    %312 = arith.addf %310, %311 : vector<2x128xf32>
    %313 = arith.negf %312 : vector<2x128xf32>
    %314 = math.exp %313 : vector<2x128xf32>
    %cst_108 = arith.constant 1.000000e+00 : f32
    %315 = vector.broadcast %cst_108 : f32 to vector<2x128xf32>
    %316 = arith.addf %315, %314 : vector<2x128xf32>
    %317 = arith.divf %315, %316 : vector<2x128xf32>
    %318 = vector.extract_strided_slice %298 {offsets = [0, 256], sizes = [2, 128], strides = [1, 1]} : vector<2x384xf32> to vector<2x128xf32>
    %319 = vector.extract_strided_slice %301 {offsets = [0, 256], sizes = [2, 128], strides = [1, 1]} : vector<2x384xf32> to vector<2x128xf32>
    %320 = arith.mulf %309, %319 : vector<2x128xf32>
    %321 = arith.addf %318, %320 : vector<2x128xf32>
    %322 = math.tanh %321 : vector<2x128xf32>
    %cst_109 = arith.constant 1.000000e+00 : f32
    %323 = vector.broadcast %cst_109 : f32 to vector<2x128xf32>
    %324 = arith.subf %323, %317 : vector<2x128xf32>
    %325 = arith.mulf %324, %322 : vector<2x128xf32>
    %326 = arith.mulf %317, %231 : vector<2x128xf32>
    %327 = arith.addf %325, %326 : vector<2x128xf32>
    %cst_110 = arith.constant dense<0.000000e+00> : vector<2x384xf32>
    %328 = tpu.matmul %327, %59, %cst_110 {dimension_numbers = #tpu.dot_dimension_numbers<[1], [0], [0], [1], [0, 0, 1, 1], [], []>} : vector<2x128xf32>, vector<128x384xf32>, vector<2x384xf32> -> vector<2x384xf32>
    %329 = vector.broadcast %65 : vector<1x384xf32> to vector<2x384xf32>
    %330 = arith.addf %328, %329 : vector<2x384xf32>
    %cst_111 = arith.constant dense<0.000000e+00> : vector<2x384xf32>
    %331 = tpu.matmul %263, %62, %cst_111 {dimension_numbers = #tpu.dot_dimension_numbers<[1], [0], [0], [1], [0, 0, 1, 1], [], []>} : vector<2x128xf32>, vector<128x384xf32>, vector<2x384xf32> -> vector<2x384xf32>
    %332 = vector.broadcast %68 : vector<1x384xf32> to vector<2x384xf32>
    %333 = arith.addf %331, %332 : vector<2x384xf32>
    %334 = vector.extract_strided_slice %330 {offsets = [0, 0], sizes = [2, 128], strides = [1, 1]} : vector<2x384xf32> to vector<2x128xf32>
    %335 = vector.extract_strided_slice %333 {offsets = [0, 0], sizes = [2, 128], strides = [1, 1]} : vector<2x384xf32> to vector<2x128xf32>
    %336 = arith.addf %334, %335 : vector<2x128xf32>
    %337 = arith.negf %336 : vector<2x128xf32>
    %338 = math.exp %337 : vector<2x128xf32>
    %cst_112 = arith.constant 1.000000e+00 : f32
    %339 = vector.broadcast %cst_112 : f32 to vector<2x128xf32>
    %340 = arith.addf %339, %338 : vector<2x128xf32>
    %341 = arith.divf %339, %340 : vector<2x128xf32>
    %342 = vector.extract_strided_slice %330 {offsets = [0, 128], sizes = [2, 128], strides = [1, 1]} : vector<2x384xf32> to vector<2x128xf32>
    %343 = vector.extract_strided_slice %333 {offsets = [0, 128], sizes = [2, 128], strides = [1, 1]} : vector<2x384xf32> to vector<2x128xf32>
    %344 = arith.addf %342, %343 : vector<2x128xf32>
    %345 = arith.negf %344 : vector<2x128xf32>
    %346 = math.exp %345 : vector<2x128xf32>
    %cst_113 = arith.constant 1.000000e+00 : f32
    %347 = vector.broadcast %cst_113 : f32 to vector<2x128xf32>
    %348 = arith.addf %347, %346 : vector<2x128xf32>
    %349 = arith.divf %347, %348 : vector<2x128xf32>
    %350 = vector.extract_strided_slice %330 {offsets = [0, 256], sizes = [2, 128], strides = [1, 1]} : vector<2x384xf32> to vector<2x128xf32>
    %351 = vector.extract_strided_slice %333 {offsets = [0, 256], sizes = [2, 128], strides = [1, 1]} : vector<2x384xf32> to vector<2x128xf32>
    %352 = arith.mulf %341, %351 : vector<2x128xf32>
    %353 = arith.addf %350, %352 : vector<2x128xf32>
    %354 = math.tanh %353 : vector<2x128xf32>
    %cst_114 = arith.constant 1.000000e+00 : f32
    %355 = vector.broadcast %cst_114 : f32 to vector<2x128xf32>
    %356 = arith.subf %355, %349 : vector<2x128xf32>
    %357 = arith.mulf %356, %354 : vector<2x128xf32>
    %358 = arith.mulf %349, %263 : vector<2x128xf32>
    %359 = arith.addf %357, %358 : vector<2x128xf32>
    %c2 = arith.constant 2 : index
    %c0_115 = arith.constant 0 : index
    %c0_116 = arith.constant 0 : index
    %360 = vector.load %arg26[%c2, %c0_115, %c0_116] : memref<8x2x128xf32, #tpu.memory_space<vmem>>, vector<1x2x128xf32>
    %361 = vector.shape_cast %360 : vector<1x2x128xf32> to vector<2x128xf32>
    %362 = vector.shape_cast %359 : vector<2x128xf32> to vector<1x2x128xf32>
    tpu.vector_store %arg26[%c2, %c0_115, %c0_116], %362 {strides = array<i32>} : memref<8x2x128xf32, #tpu.memory_space<vmem>>, vector<1x2x128xf32>,
    %cst_117 = arith.constant dense<0.000000e+00> : vector<2x384xf32>
    %363 = tpu.matmul %295, %60, %cst_117 {dimension_numbers = #tpu.dot_dimension_numbers<[1], [0], [0], [1], [0, 0, 1, 1], [], []>} : vector<2x128xf32>, vector<128x384xf32>, vector<2x384xf32> -> vector<2x384xf32>
    %364 = vector.broadcast %66 : vector<1x384xf32> to vector<2x384xf32>
    %365 = arith.addf %363, %364 : vector<2x384xf32>
    %366 = vector.extract_strided_slice %71 {offsets = [0, 0], sizes = [2, 128], strides = [1, 1]} : vector<2x384xf32> to vector<2x128xf32>
    %367 = vector.extract_strided_slice %365 {offsets = [0, 0], sizes = [2, 128], strides = [1, 1]} : vector<2x384xf32> to vector<2x128xf32>
    %368 = arith.addf %366, %367 : vector<2x128xf32>
    %369 = arith.negf %368 : vector<2x128xf32>
    %370 = math.exp %369 : vector<2x128xf32>
    %cst_118 = arith.constant 1.000000e+00 : f32
    %371 = vector.broadcast %cst_118 : f32 to vector<2x128xf32>
    %372 = arith.addf %371, %370 : vector<2x128xf32>
    %373 = arith.divf %371, %372 : vector<2x128xf32>
    %374 = vector.extract_strided_slice %71 {offsets = [0, 128], sizes = [2, 128], strides = [1, 1]} : vector<2x384xf32> to vector<2x128xf32>
    %375 = vector.extract_strided_slice %365 {offsets = [0, 128], sizes = [2, 128], strides = [1, 1]} : vector<2x384xf32> to vector<2x128xf32>
    %376 = arith.addf %374, %375 : vector<2x128xf32>
    %377 = arith.negf %376 : vector<2x128xf32>
    %378 = math.exp %377 : vector<2x128xf32>
    %cst_119 = arith.constant 1.000000e+00 : f32
    %379 = vector.broadcast %cst_119 : f32 to vector<2x128xf32>
    %380 = arith.addf %379, %378 : vector<2x128xf32>
    %381 = arith.divf %379, %380 : vector<2x128xf32>
    %382 = vector.extract_strided_slice %71 {offsets = [0, 256], sizes = [2, 128], strides = [1, 1]} : vector<2x384xf32> to vector<2x128xf32>
    %383 = vector.extract_strided_slice %365 {offsets = [0, 256], sizes = [2, 128], strides = [1, 1]} : vector<2x384xf32> to vector<2x128xf32>
    %384 = arith.mulf %373, %383 : vector<2x128xf32>
    %385 = arith.addf %382, %384 : vector<2x128xf32>
    %386 = math.tanh %385 : vector<2x128xf32>
    %cst_120 = arith.constant 1.000000e+00 : f32
    %387 = vector.broadcast %cst_120 : f32 to vector<2x128xf32>
    %388 = arith.subf %387, %381 : vector<2x128xf32>
    %389 = arith.mulf %388, %386 : vector<2x128xf32>
    %390 = arith.mulf %381, %295 : vector<2x128xf32>
    %391 = arith.addf %389, %390 : vector<2x128xf32>
    %cst_121 = arith.constant dense<0.000000e+00> : vector<2x384xf32>
    %392 = tpu.matmul %391, %58, %cst_121 {dimension_numbers = #tpu.dot_dimension_numbers<[1], [0], [0], [1], [0, 0, 1, 1], [], []>} : vector<2x128xf32>, vector<128x384xf32>, vector<2x384xf32> -> vector<2x384xf32>
    %393 = vector.broadcast %64 : vector<1x384xf32> to vector<2x384xf32>
    %394 = arith.addf %392, %393 : vector<2x384xf32>
    %cst_122 = arith.constant dense<0.000000e+00> : vector<2x384xf32>
    %395 = tpu.matmul %327, %61, %cst_122 {dimension_numbers = #tpu.dot_dimension_numbers<[1], [0], [0], [1], [0, 0, 1, 1], [], []>} : vector<2x128xf32>, vector<128x384xf32>, vector<2x384xf32> -> vector<2x384xf32>
    %396 = vector.broadcast %67 : vector<1x384xf32> to vector<2x384xf32>
    %397 = arith.addf %395, %396 : vector<2x384xf32>
    %398 = vector.extract_strided_slice %394 {offsets = [0, 0], sizes = [2, 128], strides = [1, 1]} : vector<2x384xf32> to vector<2x128xf32>
    %399 = vector.extract_strided_slice %397 {offsets = [0, 0], sizes = [2, 128], strides = [1, 1]} : vector<2x384xf32> to vector<2x128xf32>
    %400 = arith.addf %398, %399 : vector<2x128xf32>
    %401 = arith.negf %400 : vector<2x128xf32>
    %402 = math.exp %401 : vector<2x128xf32>
    %cst_123 = arith.constant 1.000000e+00 : f32
    %403 = vector.broadcast %cst_123 : f32 to vector<2x128xf32>
    %404 = arith.addf %403, %402 : vector<2x128xf32>
    %405 = arith.divf %403, %404 : vector<2x128xf32>
    %406 = vector.extract_strided_slice %394 {offsets = [0, 128], sizes = [2, 128], strides = [1, 1]} : vector<2x384xf32> to vector<2x128xf32>
    %407 = vector.extract_strided_slice %397 {offsets = [0, 128], sizes = [2, 128], strides = [1, 1]} : vector<2x384xf32> to vector<2x128xf32>
    %408 = arith.addf %406, %407 : vector<2x128xf32>
    %409 = arith.negf %408 : vector<2x128xf32>
    %410 = math.exp %409 : vector<2x128xf32>
    %cst_124 = arith.constant 1.000000e+00 : f32
    %411 = vector.broadcast %cst_124 : f32 to vector<2x128xf32>
    %412 = arith.addf %411, %410 : vector<2x128xf32>
    %413 = arith.divf %411, %412 : vector<2x128xf32>
    %414 = vector.extract_strided_slice %394 {offsets = [0, 256], sizes = [2, 128], strides = [1, 1]} : vector<2x384xf32> to vector<2x128xf32>
    %415 = vector.extract_strided_slice %397 {offsets = [0, 256], sizes = [2, 128], strides = [1, 1]} : vector<2x384xf32> to vector<2x128xf32>
    %416 = arith.mulf %405, %415 : vector<2x128xf32>
    %417 = arith.addf %414, %416 : vector<2x128xf32>
    %418 = math.tanh %417 : vector<2x128xf32>
    %cst_125 = arith.constant 1.000000e+00 : f32
    %419 = vector.broadcast %cst_125 : f32 to vector<2x128xf32>
    %420 = arith.subf %419, %413 : vector<2x128xf32>
    %421 = arith.mulf %420, %418 : vector<2x128xf32>
    %422 = arith.mulf %413, %327 : vector<2x128xf32>
    %423 = arith.addf %421, %422 : vector<2x128xf32>
    %cst_126 = arith.constant dense<0.000000e+00> : vector<2x384xf32>
    %424 = tpu.matmul %423, %59, %cst_126 {dimension_numbers = #tpu.dot_dimension_numbers<[1], [0], [0], [1], [0, 0, 1, 1], [], []>} : vector<2x128xf32>, vector<128x384xf32>, vector<2x384xf32> -> vector<2x384xf32>
    %425 = vector.broadcast %65 : vector<1x384xf32> to vector<2x384xf32>
    %426 = arith.addf %424, %425 : vector<2x384xf32>
    %cst_127 = arith.constant dense<0.000000e+00> : vector<2x384xf32>
    %427 = tpu.matmul %359, %62, %cst_127 {dimension_numbers = #tpu.dot_dimension_numbers<[1], [0], [0], [1], [0, 0, 1, 1], [], []>} : vector<2x128xf32>, vector<128x384xf32>, vector<2x384xf32> -> vector<2x384xf32>
    %428 = vector.broadcast %68 : vector<1x384xf32> to vector<2x384xf32>
    %429 = arith.addf %427, %428 : vector<2x384xf32>
    %430 = vector.extract_strided_slice %426 {offsets = [0, 0], sizes = [2, 128], strides = [1, 1]} : vector<2x384xf32> to vector<2x128xf32>
    %431 = vector.extract_strided_slice %429 {offsets = [0, 0], sizes = [2, 128], strides = [1, 1]} : vector<2x384xf32> to vector<2x128xf32>
    %432 = arith.addf %430, %431 : vector<2x128xf32>
    %433 = arith.negf %432 : vector<2x128xf32>
    %434 = math.exp %433 : vector<2x128xf32>
    %cst_128 = arith.constant 1.000000e+00 : f32
    %435 = vector.broadcast %cst_128 : f32 to vector<2x128xf32>
    %436 = arith.addf %435, %434 : vector<2x128xf32>
    %437 = arith.divf %435, %436 : vector<2x128xf32>
    %438 = vector.extract_strided_slice %426 {offsets = [0, 128], sizes = [2, 128], strides = [1, 1]} : vector<2x384xf32> to vector<2x128xf32>
    %439 = vector.extract_strided_slice %429 {offsets = [0, 128], sizes = [2, 128], strides = [1, 1]} : vector<2x384xf32> to vector<2x128xf32>
    %440 = arith.addf %438, %439 : vector<2x128xf32>
    %441 = arith.negf %440 : vector<2x128xf32>
    %442 = math.exp %441 : vector<2x128xf32>
    %cst_129 = arith.constant 1.000000e+00 : f32
    %443 = vector.broadcast %cst_129 : f32 to vector<2x128xf32>
    %444 = arith.addf %443, %442 : vector<2x128xf32>
    %445 = arith.divf %443, %444 : vector<2x128xf32>
    %446 = vector.extract_strided_slice %426 {offsets = [0, 256], sizes = [2, 128], strides = [1, 1]} : vector<2x384xf32> to vector<2x128xf32>
    %447 = vector.extract_strided_slice %429 {offsets = [0, 256], sizes = [2, 128], strides = [1, 1]} : vector<2x384xf32> to vector<2x128xf32>
    %448 = arith.mulf %437, %447 : vector<2x128xf32>
    %449 = arith.addf %446, %448 : vector<2x128xf32>
    %450 = math.tanh %449 : vector<2x128xf32>
    %cst_130 = arith.constant 1.000000e+00 : f32
    %451 = vector.broadcast %cst_130 : f32 to vector<2x128xf32>
    %452 = arith.subf %451, %445 : vector<2x128xf32>
    %453 = arith.mulf %452, %450 : vector<2x128xf32>
    %454 = arith.mulf %445, %359 : vector<2x128xf32>
    %455 = arith.addf %453, %454 : vector<2x128xf32>
    %c3 = arith.constant 3 : index
    %c0_131 = arith.constant 0 : index
    %c0_132 = arith.constant 0 : index
    %456 = vector.load %arg26[%c3, %c0_131, %c0_132] : memref<8x2x128xf32, #tpu.memory_space<vmem>>, vector<1x2x128xf32>
    %457 = vector.shape_cast %456 : vector<1x2x128xf32> to vector<2x128xf32>
    %458 = vector.shape_cast %455 : vector<2x128xf32> to vector<1x2x128xf32>
    tpu.vector_store %arg26[%c3, %c0_131, %c0_132], %458 {strides = array<i32>} : memref<8x2x128xf32, #tpu.memory_space<vmem>>, vector<1x2x128xf32>,
    %cst_133 = arith.constant dense<0.000000e+00> : vector<2x384xf32>
    %459 = tpu.matmul %391, %60, %cst_133 {dimension_numbers = #tpu.dot_dimension_numbers<[1], [0], [0], [1], [0, 0, 1, 1], [], []>} : vector<2x128xf32>, vector<128x384xf32>, vector<2x384xf32> -> vector<2x384xf32>
    %460 = vector.broadcast %66 : vector<1x384xf32> to vector<2x384xf32>
    %461 = arith.addf %459, %460 : vector<2x384xf32>
    %462 = vector.extract_strided_slice %71 {offsets = [0, 0], sizes = [2, 128], strides = [1, 1]} : vector<2x384xf32> to vector<2x128xf32>
    %463 = vector.extract_strided_slice %461 {offsets = [0, 0], sizes = [2, 128], strides = [1, 1]} : vector<2x384xf32> to vector<2x128xf32>
    %464 = arith.addf %462, %463 : vector<2x128xf32>
    %465 = arith.negf %464 : vector<2x128xf32>
    %466 = math.exp %465 : vector<2x128xf32>
    %cst_134 = arith.constant 1.000000e+00 : f32
    %467 = vector.broadcast %cst_134 : f32 to vector<2x128xf32>
    %468 = arith.addf %467, %466 : vector<2x128xf32>
    %469 = arith.divf %467, %468 : vector<2x128xf32>
    %470 = vector.extract_strided_slice %71 {offsets = [0, 128], sizes = [2, 128], strides = [1, 1]} : vector<2x384xf32> to vector<2x128xf32>
    %471 = vector.extract_strided_slice %461 {offsets = [0, 128], sizes = [2, 128], strides = [1, 1]} : vector<2x384xf32> to vector<2x128xf32>
    %472 = arith.addf %470, %471 : vector<2x128xf32>
    %473 = arith.negf %472 : vector<2x128xf32>
    %474 = math.exp %473 : vector<2x128xf32>
    %cst_135 = arith.constant 1.000000e+00 : f32
    %475 = vector.broadcast %cst_135 : f32 to vector<2x128xf32>
    %476 = arith.addf %475, %474 : vector<2x128xf32>
    %477 = arith.divf %475, %476 : vector<2x128xf32>
    %478 = vector.extract_strided_slice %71 {offsets = [0, 256], sizes = [2, 128], strides = [1, 1]} : vector<2x384xf32> to vector<2x128xf32>
    %479 = vector.extract_strided_slice %461 {offsets = [0, 256], sizes = [2, 128], strides = [1, 1]} : vector<2x384xf32> to vector<2x128xf32>
    %480 = arith.mulf %469, %479 : vector<2x128xf32>
    %481 = arith.addf %478, %480 : vector<2x128xf32>
    %482 = math.tanh %481 : vector<2x128xf32>
    %cst_136 = arith.constant 1.000000e+00 : f32
    %483 = vector.broadcast %cst_136 : f32 to vector<2x128xf32>
    %484 = arith.subf %483, %477 : vector<2x128xf32>
    %485 = arith.mulf %484, %482 : vector<2x128xf32>
    %486 = arith.mulf %477, %391 : vector<2x128xf32>
    %487 = arith.addf %485, %486 : vector<2x128xf32>
    %cst_137 = arith.constant dense<0.000000e+00> : vector<2x384xf32>
    %488 = tpu.matmul %487, %58, %cst_137 {dimension_numbers = #tpu.dot_dimension_numbers<[1], [0], [0], [1], [0, 0, 1, 1], [], []>} : vector<2x128xf32>, vector<128x384xf32>, vector<2x384xf32> -> vector<2x384xf32>
    %489 = vector.broadcast %64 : vector<1x384xf32> to vector<2x384xf32>
    %490 = arith.addf %488, %489 : vector<2x384xf32>
    %cst_138 = arith.constant dense<0.000000e+00> : vector<2x384xf32>
    %491 = tpu.matmul %423, %61, %cst_138 {dimension_numbers = #tpu.dot_dimension_numbers<[1], [0], [0], [1], [0, 0, 1, 1], [], []>} : vector<2x128xf32>, vector<128x384xf32>, vector<2x384xf32> -> vector<2x384xf32>
    %492 = vector.broadcast %67 : vector<1x384xf32> to vector<2x384xf32>
    %493 = arith.addf %491, %492 : vector<2x384xf32>
    %494 = vector.extract_strided_slice %490 {offsets = [0, 0], sizes = [2, 128], strides = [1, 1]} : vector<2x384xf32> to vector<2x128xf32>
    %495 = vector.extract_strided_slice %493 {offsets = [0, 0], sizes = [2, 128], strides = [1, 1]} : vector<2x384xf32> to vector<2x128xf32>
    %496 = arith.addf %494, %495 : vector<2x128xf32>
    %497 = arith.negf %496 : vector<2x128xf32>
    %498 = math.exp %497 : vector<2x128xf32>
    %cst_139 = arith.constant 1.000000e+00 : f32
    %499 = vector.broadcast %cst_139 : f32 to vector<2x128xf32>
    %500 = arith.addf %499, %498 : vector<2x128xf32>
    %501 = arith.divf %499, %500 : vector<2x128xf32>
    %502 = vector.extract_strided_slice %490 {offsets = [0, 128], sizes = [2, 128], strides = [1, 1]} : vector<2x384xf32> to vector<2x128xf32>
    %503 = vector.extract_strided_slice %493 {offsets = [0, 128], sizes = [2, 128], strides = [1, 1]} : vector<2x384xf32> to vector<2x128xf32>
    %504 = arith.addf %502, %503 : vector<2x128xf32>
    %505 = arith.negf %504 : vector<2x128xf32>
    %506 = math.exp %505 : vector<2x128xf32>
    %cst_140 = arith.constant 1.000000e+00 : f32
    %507 = vector.broadcast %cst_140 : f32 to vector<2x128xf32>
    %508 = arith.addf %507, %506 : vector<2x128xf32>
    %509 = arith.divf %507, %508 : vector<2x128xf32>
    %510 = vector.extract_strided_slice %490 {offsets = [0, 256], sizes = [2, 128], strides = [1, 1]} : vector<2x384xf32> to vector<2x128xf32>
    %511 = vector.extract_strided_slice %493 {offsets = [0, 256], sizes = [2, 128], strides = [1, 1]} : vector<2x384xf32> to vector<2x128xf32>
    %512 = arith.mulf %501, %511 : vector<2x128xf32>
    %513 = arith.addf %510, %512 : vector<2x128xf32>
    %514 = math.tanh %513 : vector<2x128xf32>
    %cst_141 = arith.constant 1.000000e+00 : f32
    %515 = vector.broadcast %cst_141 : f32 to vector<2x128xf32>
    %516 = arith.subf %515, %509 : vector<2x128xf32>
    %517 = arith.mulf %516, %514 : vector<2x128xf32>
    %518 = arith.mulf %509, %423 : vector<2x128xf32>
    %519 = arith.addf %517, %518 : vector<2x128xf32>
    %cst_142 = arith.constant dense<0.000000e+00> : vector<2x384xf32>
    %520 = tpu.matmul %519, %59, %cst_142 {dimension_numbers = #tpu.dot_dimension_numbers<[1], [0], [0], [1], [0, 0, 1, 1], [], []>} : vector<2x128xf32>, vector<128x384xf32>, vector<2x384xf32> -> vector<2x384xf32>
    %521 = vector.broadcast %65 : vector<1x384xf32> to vector<2x384xf32>
    %522 = arith.addf %520, %521 : vector<2x384xf32>
    %cst_143 = arith.constant dense<0.000000e+00> : vector<2x384xf32>
    %523 = tpu.matmul %455, %62, %cst_143 {dimension_numbers = #tpu.dot_dimension_numbers<[1], [0], [0], [1], [0, 0, 1, 1], [], []>} : vector<2x128xf32>, vector<128x384xf32>, vector<2x384xf32> -> vector<2x384xf32>
    %524 = vector.broadcast %68 : vector<1x384xf32> to vector<2x384xf32>
    %525 = arith.addf %523, %524 : vector<2x384xf32>
    %526 = vector.extract_strided_slice %522 {offsets = [0, 0], sizes = [2, 128], strides = [1, 1]} : vector<2x384xf32> to vector<2x128xf32>
    %527 = vector.extract_strided_slice %525 {offsets = [0, 0], sizes = [2, 128], strides = [1, 1]} : vector<2x384xf32> to vector<2x128xf32>
    %528 = arith.addf %526, %527 : vector<2x128xf32>
    %529 = arith.negf %528 : vector<2x128xf32>
    %530 = math.exp %529 : vector<2x128xf32>
    %cst_144 = arith.constant 1.000000e+00 : f32
    %531 = vector.broadcast %cst_144 : f32 to vector<2x128xf32>
    %532 = arith.addf %531, %530 : vector<2x128xf32>
    %533 = arith.divf %531, %532 : vector<2x128xf32>
    %534 = vector.extract_strided_slice %522 {offsets = [0, 128], sizes = [2, 128], strides = [1, 1]} : vector<2x384xf32> to vector<2x128xf32>
    %535 = vector.extract_strided_slice %525 {offsets = [0, 128], sizes = [2, 128], strides = [1, 1]} : vector<2x384xf32> to vector<2x128xf32>
    %536 = arith.addf %534, %535 : vector<2x128xf32>
    %537 = arith.negf %536 : vector<2x128xf32>
    %538 = math.exp %537 : vector<2x128xf32>
    %cst_145 = arith.constant 1.000000e+00 : f32
    %539 = vector.broadcast %cst_145 : f32 to vector<2x128xf32>
    %540 = arith.addf %539, %538 : vector<2x128xf32>
    %541 = arith.divf %539, %540 : vector<2x128xf32>
    %542 = vector.extract_strided_slice %522 {offsets = [0, 256], sizes = [2, 128], strides = [1, 1]} : vector<2x384xf32> to vector<2x128xf32>
    %543 = vector.extract_strided_slice %525 {offsets = [0, 256], sizes = [2, 128], strides = [1, 1]} : vector<2x384xf32> to vector<2x128xf32>
    %544 = arith.mulf %533, %543 : vector<2x128xf32>
    %545 = arith.addf %542, %544 : vector<2x128xf32>
    %546 = math.tanh %545 : vector<2x128xf32>
    %cst_146 = arith.constant 1.000000e+00 : f32
    %547 = vector.broadcast %cst_146 : f32 to vector<2x128xf32>
    %548 = arith.subf %547, %541 : vector<2x128xf32>
    %549 = arith.mulf %548, %546 : vector<2x128xf32>
    %550 = arith.mulf %541, %455 : vector<2x128xf32>
    %551 = arith.addf %549, %550 : vector<2x128xf32>
    %c4 = arith.constant 4 : index
    %c0_147 = arith.constant 0 : index
    %c0_148 = arith.constant 0 : index
    %552 = vector.load %arg26[%c4, %c0_147, %c0_148] : memref<8x2x128xf32, #tpu.memory_space<vmem>>, vector<1x2x128xf32>
    %553 = vector.shape_cast %552 : vector<1x2x128xf32> to vector<2x128xf32>
    %554 = vector.shape_cast %551 : vector<2x128xf32> to vector<1x2x128xf32>
    tpu.vector_store %arg26[%c4, %c0_147, %c0_148], %554 {strides = array<i32>} : memref<8x2x128xf32, #tpu.memory_space<vmem>>, vector<1x2x128xf32>,
    %cst_149 = arith.constant dense<0.000000e+00> : vector<2x384xf32>
    %555 = tpu.matmul %487, %60, %cst_149 {dimension_numbers = #tpu.dot_dimension_numbers<[1], [0], [0], [1], [0, 0, 1, 1], [], []>} : vector<2x128xf32>, vector<128x384xf32>, vector<2x384xf32> -> vector<2x384xf32>
    %556 = vector.broadcast %66 : vector<1x384xf32> to vector<2x384xf32>
    %557 = arith.addf %555, %556 : vector<2x384xf32>
    %558 = vector.extract_strided_slice %71 {offsets = [0, 0], sizes = [2, 128], strides = [1, 1]} : vector<2x384xf32> to vector<2x128xf32>
    %559 = vector.extract_strided_slice %557 {offsets = [0, 0], sizes = [2, 128], strides = [1, 1]} : vector<2x384xf32> to vector<2x128xf32>
    %560 = arith.addf %558, %559 : vector<2x128xf32>
    %561 = arith.negf %560 : vector<2x128xf32>
    %562 = math.exp %561 : vector<2x128xf32>
    %cst_150 = arith.constant 1.000000e+00 : f32
    %563 = vector.broadcast %cst_150 : f32 to vector<2x128xf32>
    %564 = arith.addf %563, %562 : vector<2x128xf32>
    %565 = arith.divf %563, %564 : vector<2x128xf32>
    %566 = vector.extract_strided_slice %71 {offsets = [0, 128], sizes = [2, 128], strides = [1, 1]} : vector<2x384xf32> to vector<2x128xf32>
    %567 = vector.extract_strided_slice %557 {offsets = [0, 128], sizes = [2, 128], strides = [1, 1]} : vector<2x384xf32> to vector<2x128xf32>
    %568 = arith.addf %566, %567 : vector<2x128xf32>
    %569 = arith.negf %568 : vector<2x128xf32>
    %570 = math.exp %569 : vector<2x128xf32>
    %cst_151 = arith.constant 1.000000e+00 : f32
    %571 = vector.broadcast %cst_151 : f32 to vector<2x128xf32>
    %572 = arith.addf %571, %570 : vector<2x128xf32>
    %573 = arith.divf %571, %572 : vector<2x128xf32>
    %574 = vector.extract_strided_slice %71 {offsets = [0, 256], sizes = [2, 128], strides = [1, 1]} : vector<2x384xf32> to vector<2x128xf32>
    %575 = vector.extract_strided_slice %557 {offsets = [0, 256], sizes = [2, 128], strides = [1, 1]} : vector<2x384xf32> to vector<2x128xf32>
    %576 = arith.mulf %565, %575 : vector<2x128xf32>
    %577 = arith.addf %574, %576 : vector<2x128xf32>
    %578 = math.tanh %577 : vector<2x128xf32>
    %cst_152 = arith.constant 1.000000e+00 : f32
    %579 = vector.broadcast %cst_152 : f32 to vector<2x128xf32>
    %580 = arith.subf %579, %573 : vector<2x128xf32>
    %581 = arith.mulf %580, %578 : vector<2x128xf32>
    %582 = arith.mulf %573, %487 : vector<2x128xf32>
    %583 = arith.addf %581, %582 : vector<2x128xf32>
    %cst_153 = arith.constant dense<0.000000e+00> : vector<2x384xf32>
    %584 = tpu.matmul %583, %58, %cst_153 {dimension_numbers = #tpu.dot_dimension_numbers<[1], [0], [0], [1], [0, 0, 1, 1], [], []>} : vector<2x128xf32>, vector<128x384xf32>, vector<2x384xf32> -> vector<2x384xf32>
    %585 = vector.broadcast %64 : vector<1x384xf32> to vector<2x384xf32>
    %586 = arith.addf %584, %585 : vector<2x384xf32>
    %cst_154 = arith.constant dense<0.000000e+00> : vector<2x384xf32>
    %587 = tpu.matmul %519, %61, %cst_154 {dimension_numbers = #tpu.dot_dimension_numbers<[1], [0], [0], [1], [0, 0, 1, 1], [], []>} : vector<2x128xf32>, vector<128x384xf32>, vector<2x384xf32> -> vector<2x384xf32>
    %588 = vector.broadcast %67 : vector<1x384xf32> to vector<2x384xf32>
    %589 = arith.addf %587, %588 : vector<2x384xf32>
    %590 = vector.extract_strided_slice %586 {offsets = [0, 0], sizes = [2, 128], strides = [1, 1]} : vector<2x384xf32> to vector<2x128xf32>
    %591 = vector.extract_strided_slice %589 {offsets = [0, 0], sizes = [2, 128], strides = [1, 1]} : vector<2x384xf32> to vector<2x128xf32>
    %592 = arith.addf %590, %591 : vector<2x128xf32>
    %593 = arith.negf %592 : vector<2x128xf32>
    %594 = math.exp %593 : vector<2x128xf32>
    %cst_155 = arith.constant 1.000000e+00 : f32
    %595 = vector.broadcast %cst_155 : f32 to vector<2x128xf32>
    %596 = arith.addf %595, %594 : vector<2x128xf32>
    %597 = arith.divf %595, %596 : vector<2x128xf32>
    %598 = vector.extract_strided_slice %586 {offsets = [0, 128], sizes = [2, 128], strides = [1, 1]} : vector<2x384xf32> to vector<2x128xf32>
    %599 = vector.extract_strided_slice %589 {offsets = [0, 128], sizes = [2, 128], strides = [1, 1]} : vector<2x384xf32> to vector<2x128xf32>
    %600 = arith.addf %598, %599 : vector<2x128xf32>
    %601 = arith.negf %600 : vector<2x128xf32>
    %602 = math.exp %601 : vector<2x128xf32>
    %cst_156 = arith.constant 1.000000e+00 : f32
    %603 = vector.broadcast %cst_156 : f32 to vector<2x128xf32>
    %604 = arith.addf %603, %602 : vector<2x128xf32>
    %605 = arith.divf %603, %604 : vector<2x128xf32>
    %606 = vector.extract_strided_slice %586 {offsets = [0, 256], sizes = [2, 128], strides = [1, 1]} : vector<2x384xf32> to vector<2x128xf32>
    %607 = vector.extract_strided_slice %589 {offsets = [0, 256], sizes = [2, 128], strides = [1, 1]} : vector<2x384xf32> to vector<2x128xf32>
    %608 = arith.mulf %597, %607 : vector<2x128xf32>
    %609 = arith.addf %606, %608 : vector<2x128xf32>
    %610 = math.tanh %609 : vector<2x128xf32>
    %cst_157 = arith.constant 1.000000e+00 : f32
    %611 = vector.broadcast %cst_157 : f32 to vector<2x128xf32>
    %612 = arith.subf %611, %605 : vector<2x128xf32>
    %613 = arith.mulf %612, %610 : vector<2x128xf32>
    %614 = arith.mulf %605, %519 : vector<2x128xf32>
    %615 = arith.addf %613, %614 : vector<2x128xf32>
    %cst_158 = arith.constant dense<0.000000e+00> : vector<2x384xf32>
    %616 = tpu.matmul %615, %59, %cst_158 {dimension_numbers = #tpu.dot_dimension_numbers<[1], [0], [0], [1], [0, 0, 1, 1], [], []>} : vector<2x128xf32>, vector<128x384xf32>, vector<2x384xf32> -> vector<2x384xf32>
    %617 = vector.broadcast %65 : vector<1x384xf32> to vector<2x384xf32>
    %618 = arith.addf %616, %617 : vector<2x384xf32>
    %cst_159 = arith.constant dense<0.000000e+00> : vector<2x384xf32>
    %619 = tpu.matmul %551, %62, %cst_159 {dimension_numbers = #tpu.dot_dimension_numbers<[1], [0], [0], [1], [0, 0, 1, 1], [], []>} : vector<2x128xf32>, vector<128x384xf32>, vector<2x384xf32> -> vector<2x384xf32>
    %620 = vector.broadcast %68 : vector<1x384xf32> to vector<2x384xf32>
    %621 = arith.addf %619, %620 : vector<2x384xf32>
    %622 = vector.extract_strided_slice %618 {offsets = [0, 0], sizes = [2, 128], strides = [1, 1]} : vector<2x384xf32> to vector<2x128xf32>
    %623 = vector.extract_strided_slice %621 {offsets = [0, 0], sizes = [2, 128], strides = [1, 1]} : vector<2x384xf32> to vector<2x128xf32>
    %624 = arith.addf %622, %623 : vector<2x128xf32>
    %625 = arith.negf %624 : vector<2x128xf32>
    %626 = math.exp %625 : vector<2x128xf32>
    %cst_160 = arith.constant 1.000000e+00 : f32
    %627 = vector.broadcast %cst_160 : f32 to vector<2x128xf32>
    %628 = arith.addf %627, %626 : vector<2x128xf32>
    %629 = arith.divf %627, %628 : vector<2x128xf32>
    %630 = vector.extract_strided_slice %618 {offsets = [0, 128], sizes = [2, 128], strides = [1, 1]} : vector<2x384xf32> to vector<2x128xf32>
    %631 = vector.extract_strided_slice %621 {offsets = [0, 128], sizes = [2, 128], strides = [1, 1]} : vector<2x384xf32> to vector<2x128xf32>
    %632 = arith.addf %630, %631 : vector<2x128xf32>
    %633 = arith.negf %632 : vector<2x128xf32>
    %634 = math.exp %633 : vector<2x128xf32>
    %cst_161 = arith.constant 1.000000e+00 : f32
    %635 = vector.broadcast %cst_161 : f32 to vector<2x128xf32>
    %636 = arith.addf %635, %634 : vector<2x128xf32>
    %637 = arith.divf %635, %636 : vector<2x128xf32>
    %638 = vector.extract_strided_slice %618 {offsets = [0, 256], sizes = [2, 128], strides = [1, 1]} : vector<2x384xf32> to vector<2x128xf32>
    %639 = vector.extract_strided_slice %621 {offsets = [0, 256], sizes = [2, 128], strides = [1, 1]} : vector<2x384xf32> to vector<2x128xf32>
    %640 = arith.mulf %629, %639 : vector<2x128xf32>
    %641 = arith.addf %638, %640 : vector<2x128xf32>
    %642 = math.tanh %641 : vector<2x128xf32>
    %cst_162 = arith.constant 1.000000e+00 : f32
    %643 = vector.broadcast %cst_162 : f32 to vector<2x128xf32>
    %644 = arith.subf %643, %637 : vector<2x128xf32>
    %645 = arith.mulf %644, %642 : vector<2x128xf32>
    %646 = arith.mulf %637, %551 : vector<2x128xf32>
    %647 = arith.addf %645, %646 : vector<2x128xf32>
    %c5 = arith.constant 5 : index
    %c0_163 = arith.constant 0 : index
    %c0_164 = arith.constant 0 : index
    %648 = vector.load %arg26[%c5, %c0_163, %c0_164] : memref<8x2x128xf32, #tpu.memory_space<vmem>>, vector<1x2x128xf32>
    %649 = vector.shape_cast %648 : vector<1x2x128xf32> to vector<2x128xf32>
    %650 = vector.shape_cast %647 : vector<2x128xf32> to vector<1x2x128xf32>
    tpu.vector_store %arg26[%c5, %c0_163, %c0_164], %650 {strides = array<i32>} : memref<8x2x128xf32, #tpu.memory_space<vmem>>, vector<1x2x128xf32>,
    %cst_165 = arith.constant dense<0.000000e+00> : vector<2x384xf32>
    %651 = tpu.matmul %583, %60, %cst_165 {dimension_numbers = #tpu.dot_dimension_numbers<[1], [0], [0], [1], [0, 0, 1, 1], [], []>} : vector<2x128xf32>, vector<128x384xf32>, vector<2x384xf32> -> vector<2x384xf32>
    %652 = vector.broadcast %66 : vector<1x384xf32> to vector<2x384xf32>
    %653 = arith.addf %651, %652 : vector<2x384xf32>
    %654 = vector.extract_strided_slice %71 {offsets = [0, 0], sizes = [2, 128], strides = [1, 1]} : vector<2x384xf32> to vector<2x128xf32>
    %655 = vector.extract_strided_slice %653 {offsets = [0, 0], sizes = [2, 128], strides = [1, 1]} : vector<2x384xf32> to vector<2x128xf32>
    %656 = arith.addf %654, %655 : vector<2x128xf32>
    %657 = arith.negf %656 : vector<2x128xf32>
    %658 = math.exp %657 : vector<2x128xf32>
    %cst_166 = arith.constant 1.000000e+00 : f32
    %659 = vector.broadcast %cst_166 : f32 to vector<2x128xf32>
    %660 = arith.addf %659, %658 : vector<2x128xf32>
    %661 = arith.divf %659, %660 : vector<2x128xf32>
    %662 = vector.extract_strided_slice %71 {offsets = [0, 128], sizes = [2, 128], strides = [1, 1]} : vector<2x384xf32> to vector<2x128xf32>
    %663 = vector.extract_strided_slice %653 {offsets = [0, 128], sizes = [2, 128], strides = [1, 1]} : vector<2x384xf32> to vector<2x128xf32>
    %664 = arith.addf %662, %663 : vector<2x128xf32>
    %665 = arith.negf %664 : vector<2x128xf32>
    %666 = math.exp %665 : vector<2x128xf32>
    %cst_167 = arith.constant 1.000000e+00 : f32
    %667 = vector.broadcast %cst_167 : f32 to vector<2x128xf32>
    %668 = arith.addf %667, %666 : vector<2x128xf32>
    %669 = arith.divf %667, %668 : vector<2x128xf32>
    %670 = vector.extract_strided_slice %71 {offsets = [0, 256], sizes = [2, 128], strides = [1, 1]} : vector<2x384xf32> to vector<2x128xf32>
    %671 = vector.extract_strided_slice %653 {offsets = [0, 256], sizes = [2, 128], strides = [1, 1]} : vector<2x384xf32> to vector<2x128xf32>
    %672 = arith.mulf %661, %671 : vector<2x128xf32>
    %673 = arith.addf %670, %672 : vector<2x128xf32>
    %674 = math.tanh %673 : vector<2x128xf32>
    %cst_168 = arith.constant 1.000000e+00 : f32
    %675 = vector.broadcast %cst_168 : f32 to vector<2x128xf32>
    %676 = arith.subf %675, %669 : vector<2x128xf32>
    %677 = arith.mulf %676, %674 : vector<2x128xf32>
    %678 = arith.mulf %669, %583 : vector<2x128xf32>
    %679 = arith.addf %677, %678 : vector<2x128xf32>
    %cst_169 = arith.constant dense<0.000000e+00> : vector<2x384xf32>
    %680 = tpu.matmul %679, %58, %cst_169 {dimension_numbers = #tpu.dot_dimension_numbers<[1], [0], [0], [1], [0, 0, 1, 1], [], []>} : vector<2x128xf32>, vector<128x384xf32>, vector<2x384xf32> -> vector<2x384xf32>
    %681 = vector.broadcast %64 : vector<1x384xf32> to vector<2x384xf32>
    %682 = arith.addf %680, %681 : vector<2x384xf32>
    %cst_170 = arith.constant dense<0.000000e+00> : vector<2x384xf32>
    %683 = tpu.matmul %615, %61, %cst_170 {dimension_numbers = #tpu.dot_dimension_numbers<[1], [0], [0], [1], [0, 0, 1, 1], [], []>} : vector<2x128xf32>, vector<128x384xf32>, vector<2x384xf32> -> vector<2x384xf32>
    %684 = vector.broadcast %67 : vector<1x384xf32> to vector<2x384xf32>
    %685 = arith.addf %683, %684 : vector<2x384xf32>
    %686 = vector.extract_strided_slice %682 {offsets = [0, 0], sizes = [2, 128], strides = [1, 1]} : vector<2x384xf32> to vector<2x128xf32>
    %687 = vector.extract_strided_slice %685 {offsets = [0, 0], sizes = [2, 128], strides = [1, 1]} : vector<2x384xf32> to vector<2x128xf32>
    %688 = arith.addf %686, %687 : vector<2x128xf32>
    %689 = arith.negf %688 : vector<2x128xf32>
    %690 = math.exp %689 : vector<2x128xf32>
    %cst_171 = arith.constant 1.000000e+00 : f32
    %691 = vector.broadcast %cst_171 : f32 to vector<2x128xf32>
    %692 = arith.addf %691, %690 : vector<2x128xf32>
    %693 = arith.divf %691, %692 : vector<2x128xf32>
    %694 = vector.extract_strided_slice %682 {offsets = [0, 128], sizes = [2, 128], strides = [1, 1]} : vector<2x384xf32> to vector<2x128xf32>
    %695 = vector.extract_strided_slice %685 {offsets = [0, 128], sizes = [2, 128], strides = [1, 1]} : vector<2x384xf32> to vector<2x128xf32>
    %696 = arith.addf %694, %695 : vector<2x128xf32>
    %697 = arith.negf %696 : vector<2x128xf32>
    %698 = math.exp %697 : vector<2x128xf32>
    %cst_172 = arith.constant 1.000000e+00 : f32
    %699 = vector.broadcast %cst_172 : f32 to vector<2x128xf32>
    %700 = arith.addf %699, %698 : vector<2x128xf32>
    %701 = arith.divf %699, %700 : vector<2x128xf32>
    %702 = vector.extract_strided_slice %682 {offsets = [0, 256], sizes = [2, 128], strides = [1, 1]} : vector<2x384xf32> to vector<2x128xf32>
    %703 = vector.extract_strided_slice %685 {offsets = [0, 256], sizes = [2, 128], strides = [1, 1]} : vector<2x384xf32> to vector<2x128xf32>
    %704 = arith.mulf %693, %703 : vector<2x128xf32>
    %705 = arith.addf %702, %704 : vector<2x128xf32>
    %706 = math.tanh %705 : vector<2x128xf32>
    %cst_173 = arith.constant 1.000000e+00 : f32
    %707 = vector.broadcast %cst_173 : f32 to vector<2x128xf32>
    %708 = arith.subf %707, %701 : vector<2x128xf32>
    %709 = arith.mulf %708, %706 : vector<2x128xf32>
    %710 = arith.mulf %701, %615 : vector<2x128xf32>
    %711 = arith.addf %709, %710 : vector<2x128xf32>
    %cst_174 = arith.constant dense<0.000000e+00> : vector<2x384xf32>
    %712 = tpu.matmul %711, %59, %cst_174 {dimension_numbers = #tpu.dot_dimension_numbers<[1], [0], [0], [1], [0, 0, 1, 1], [], []>} : vector<2x128xf32>, vector<128x384xf32>, vector<2x384xf32> -> vector<2x384xf32>
    %713 = vector.broadcast %65 : vector<1x384xf32> to vector<2x384xf32>
    %714 = arith.addf %712, %713 : vector<2x384xf32>
    %cst_175 = arith.constant dense<0.000000e+00> : vector<2x384xf32>
    %715 = tpu.matmul %647, %62, %cst_175 {dimension_numbers = #tpu.dot_dimension_numbers<[1], [0], [0], [1], [0, 0, 1, 1], [], []>} : vector<2x128xf32>, vector<128x384xf32>, vector<2x384xf32> -> vector<2x384xf32>
    %716 = vector.broadcast %68 : vector<1x384xf32> to vector<2x384xf32>
    %717 = arith.addf %715, %716 : vector<2x384xf32>
    %718 = vector.extract_strided_slice %714 {offsets = [0, 0], sizes = [2, 128], strides = [1, 1]} : vector<2x384xf32> to vector<2x128xf32>
    %719 = vector.extract_strided_slice %717 {offsets = [0, 0], sizes = [2, 128], strides = [1, 1]} : vector<2x384xf32> to vector<2x128xf32>
    %720 = arith.addf %718, %719 : vector<2x128xf32>
    %721 = arith.negf %720 : vector<2x128xf32>
    %722 = math.exp %721 : vector<2x128xf32>
    %cst_176 = arith.constant 1.000000e+00 : f32
    %723 = vector.broadcast %cst_176 : f32 to vector<2x128xf32>
    %724 = arith.addf %723, %722 : vector<2x128xf32>
    %725 = arith.divf %723, %724 : vector<2x128xf32>
    %726 = vector.extract_strided_slice %714 {offsets = [0, 128], sizes = [2, 128], strides = [1, 1]} : vector<2x384xf32> to vector<2x128xf32>
    %727 = vector.extract_strided_slice %717 {offsets = [0, 128], sizes = [2, 128], strides = [1, 1]} : vector<2x384xf32> to vector<2x128xf32>
    %728 = arith.addf %726, %727 : vector<2x128xf32>
    %729 = arith.negf %728 : vector<2x128xf32>
    %730 = math.exp %729 : vector<2x128xf32>
    %cst_177 = arith.constant 1.000000e+00 : f32
    %731 = vector.broadcast %cst_177 : f32 to vector<2x128xf32>
    %732 = arith.addf %731, %730 : vector<2x128xf32>
    %733 = arith.divf %731, %732 : vector<2x128xf32>
    %734 = vector.extract_strided_slice %714 {offsets = [0, 256], sizes = [2, 128], strides = [1, 1]} : vector<2x384xf32> to vector<2x128xf32>
    %735 = vector.extract_strided_slice %717 {offsets = [0, 256], sizes = [2, 128], strides = [1, 1]} : vector<2x384xf32> to vector<2x128xf32>
    %736 = arith.mulf %725, %735 : vector<2x128xf32>
    %737 = arith.addf %734, %736 : vector<2x128xf32>
    %738 = math.tanh %737 : vector<2x128xf32>
    %cst_178 = arith.constant 1.000000e+00 : f32
    %739 = vector.broadcast %cst_178 : f32 to vector<2x128xf32>
    %740 = arith.subf %739, %733 : vector<2x128xf32>
    %741 = arith.mulf %740, %738 : vector<2x128xf32>
    %742 = arith.mulf %733, %647 : vector<2x128xf32>
    %743 = arith.addf %741, %742 : vector<2x128xf32>
    %c6 = arith.constant 6 : index
    %c0_179 = arith.constant 0 : index
    %c0_180 = arith.constant 0 : index
    %744 = vector.load %arg26[%c6, %c0_179, %c0_180] : memref<8x2x128xf32, #tpu.memory_space<vmem>>, vector<1x2x128xf32>
    %745 = vector.shape_cast %744 : vector<1x2x128xf32> to vector<2x128xf32>
    %746 = vector.shape_cast %743 : vector<2x128xf32> to vector<1x2x128xf32>
    tpu.vector_store %arg26[%c6, %c0_179, %c0_180], %746 {strides = array<i32>} : memref<8x2x128xf32, #tpu.memory_space<vmem>>, vector<1x2x128xf32>,
    %cst_181 = arith.constant dense<0.000000e+00> : vector<2x384xf32>
    %747 = tpu.matmul %679, %60, %cst_181 {dimension_numbers = #tpu.dot_dimension_numbers<[1], [0], [0], [1], [0, 0, 1, 1], [], []>} : vector<2x128xf32>, vector<128x384xf32>, vector<2x384xf32> -> vector<2x384xf32>
    %748 = vector.broadcast %66 : vector<1x384xf32> to vector<2x384xf32>
    %749 = arith.addf %747, %748 : vector<2x384xf32>
    %750 = vector.extract_strided_slice %71 {offsets = [0, 0], sizes = [2, 128], strides = [1, 1]} : vector<2x384xf32> to vector<2x128xf32>
    %751 = vector.extract_strided_slice %749 {offsets = [0, 0], sizes = [2, 128], strides = [1, 1]} : vector<2x384xf32> to vector<2x128xf32>
    %752 = arith.addf %750, %751 : vector<2x128xf32>
    %753 = arith.negf %752 : vector<2x128xf32>
    %754 = math.exp %753 : vector<2x128xf32>
    %cst_182 = arith.constant 1.000000e+00 : f32
    %755 = vector.broadcast %cst_182 : f32 to vector<2x128xf32>
    %756 = arith.addf %755, %754 : vector<2x128xf32>
    %757 = arith.divf %755, %756 : vector<2x128xf32>
    %758 = vector.extract_strided_slice %71 {offsets = [0, 128], sizes = [2, 128], strides = [1, 1]} : vector<2x384xf32> to vector<2x128xf32>
    %759 = vector.extract_strided_slice %749 {offsets = [0, 128], sizes = [2, 128], strides = [1, 1]} : vector<2x384xf32> to vector<2x128xf32>
    %760 = arith.addf %758, %759 : vector<2x128xf32>
    %761 = arith.negf %760 : vector<2x128xf32>
    %762 = math.exp %761 : vector<2x128xf32>
    %cst_183 = arith.constant 1.000000e+00 : f32
    %763 = vector.broadcast %cst_183 : f32 to vector<2x128xf32>
    %764 = arith.addf %763, %762 : vector<2x128xf32>
    %765 = arith.divf %763, %764 : vector<2x128xf32>
    %766 = vector.extract_strided_slice %71 {offsets = [0, 256], sizes = [2, 128], strides = [1, 1]} : vector<2x384xf32> to vector<2x128xf32>
    %767 = vector.extract_strided_slice %749 {offsets = [0, 256], sizes = [2, 128], strides = [1, 1]} : vector<2x384xf32> to vector<2x128xf32>
    %768 = arith.mulf %757, %767 : vector<2x128xf32>
    %769 = arith.addf %766, %768 : vector<2x128xf32>
    %770 = math.tanh %769 : vector<2x128xf32>
    %cst_184 = arith.constant 1.000000e+00 : f32
    %771 = vector.broadcast %cst_184 : f32 to vector<2x128xf32>
    %772 = arith.subf %771, %765 : vector<2x128xf32>
    %773 = arith.mulf %772, %770 : vector<2x128xf32>
    %774 = arith.mulf %765, %679 : vector<2x128xf32>
    %775 = arith.addf %773, %774 : vector<2x128xf32>
    %cst_185 = arith.constant dense<0.000000e+00> : vector<2x384xf32>
    %776 = tpu.matmul %775, %58, %cst_185 {dimension_numbers = #tpu.dot_dimension_numbers<[1], [0], [0], [1], [0, 0, 1, 1], [], []>} : vector<2x128xf32>, vector<128x384xf32>, vector<2x384xf32> -> vector<2x384xf32>
    %777 = vector.broadcast %64 : vector<1x384xf32> to vector<2x384xf32>
    %778 = arith.addf %776, %777 : vector<2x384xf32>
    %cst_186 = arith.constant dense<0.000000e+00> : vector<2x384xf32>
    %779 = tpu.matmul %711, %61, %cst_186 {dimension_numbers = #tpu.dot_dimension_numbers<[1], [0], [0], [1], [0, 0, 1, 1], [], []>} : vector<2x128xf32>, vector<128x384xf32>, vector<2x384xf32> -> vector<2x384xf32>
    %780 = vector.broadcast %67 : vector<1x384xf32> to vector<2x384xf32>
    %781 = arith.addf %779, %780 : vector<2x384xf32>
    %782 = vector.extract_strided_slice %778 {offsets = [0, 0], sizes = [2, 128], strides = [1, 1]} : vector<2x384xf32> to vector<2x128xf32>
    %783 = vector.extract_strided_slice %781 {offsets = [0, 0], sizes = [2, 128], strides = [1, 1]} : vector<2x384xf32> to vector<2x128xf32>
    %784 = arith.addf %782, %783 : vector<2x128xf32>
    %785 = arith.negf %784 : vector<2x128xf32>
    %786 = math.exp %785 : vector<2x128xf32>
    %cst_187 = arith.constant 1.000000e+00 : f32
    %787 = vector.broadcast %cst_187 : f32 to vector<2x128xf32>
    %788 = arith.addf %787, %786 : vector<2x128xf32>
    %789 = arith.divf %787, %788 : vector<2x128xf32>
    %790 = vector.extract_strided_slice %778 {offsets = [0, 128], sizes = [2, 128], strides = [1, 1]} : vector<2x384xf32> to vector<2x128xf32>
    %791 = vector.extract_strided_slice %781 {offsets = [0, 128], sizes = [2, 128], strides = [1, 1]} : vector<2x384xf32> to vector<2x128xf32>
    %792 = arith.addf %790, %791 : vector<2x128xf32>
    %793 = arith.negf %792 : vector<2x128xf32>
    %794 = math.exp %793 : vector<2x128xf32>
    %cst_188 = arith.constant 1.000000e+00 : f32
    %795 = vector.broadcast %cst_188 : f32 to vector<2x128xf32>
    %796 = arith.addf %795, %794 : vector<2x128xf32>
    %797 = arith.divf %795, %796 : vector<2x128xf32>
    %798 = vector.extract_strided_slice %778 {offsets = [0, 256], sizes = [2, 128], strides = [1, 1]} : vector<2x384xf32> to vector<2x128xf32>
    %799 = vector.extract_strided_slice %781 {offsets = [0, 256], sizes = [2, 128], strides = [1, 1]} : vector<2x384xf32> to vector<2x128xf32>
    %800 = arith.mulf %789, %799 : vector<2x128xf32>
    %801 = arith.addf %798, %800 : vector<2x128xf32>
    %802 = math.tanh %801 : vector<2x128xf32>
    %cst_189 = arith.constant 1.000000e+00 : f32
    %803 = vector.broadcast %cst_189 : f32 to vector<2x128xf32>
    %804 = arith.subf %803, %797 : vector<2x128xf32>
    %805 = arith.mulf %804, %802 : vector<2x128xf32>
    %806 = arith.mulf %797, %711 : vector<2x128xf32>
    %807 = arith.addf %805, %806 : vector<2x128xf32>
    %cst_190 = arith.constant dense<0.000000e+00> : vector<2x384xf32>
    %808 = tpu.matmul %807, %59, %cst_190 {dimension_numbers = #tpu.dot_dimension_numbers<[1], [0], [0], [1], [0, 0, 1, 1], [], []>} : vector<2x128xf32>, vector<128x384xf32>, vector<2x384xf32> -> vector<2x384xf32>
    %809 = vector.broadcast %65 : vector<1x384xf32> to vector<2x384xf32>
    %810 = arith.addf %808, %809 : vector<2x384xf32>
    %cst_191 = arith.constant dense<0.000000e+00> : vector<2x384xf32>
    %811 = tpu.matmul %743, %62, %cst_191 {dimension_numbers = #tpu.dot_dimension_numbers<[1], [0], [0], [1], [0, 0, 1, 1], [], []>} : vector<2x128xf32>, vector<128x384xf32>, vector<2x384xf32> -> vector<2x384xf32>
    %812 = vector.broadcast %68 : vector<1x384xf32> to vector<2x384xf32>
    %813 = arith.addf %811, %812 : vector<2x384xf32>
    %814 = vector.extract_strided_slice %810 {offsets = [0, 0], sizes = [2, 128], strides = [1, 1]} : vector<2x384xf32> to vector<2x128xf32>
    %815 = vector.extract_strided_slice %813 {offsets = [0, 0], sizes = [2, 128], strides = [1, 1]} : vector<2x384xf32> to vector<2x128xf32>
    %816 = arith.addf %814, %815 : vector<2x128xf32>
    %817 = arith.negf %816 : vector<2x128xf32>
    %818 = math.exp %817 : vector<2x128xf32>
    %cst_192 = arith.constant 1.000000e+00 : f32
    %819 = vector.broadcast %cst_192 : f32 to vector<2x128xf32>
    %820 = arith.addf %819, %818 : vector<2x128xf32>
    %821 = arith.divf %819, %820 : vector<2x128xf32>
    %822 = vector.extract_strided_slice %810 {offsets = [0, 128], sizes = [2, 128], strides = [1, 1]} : vector<2x384xf32> to vector<2x128xf32>
    %823 = vector.extract_strided_slice %813 {offsets = [0, 128], sizes = [2, 128], strides = [1, 1]} : vector<2x384xf32> to vector<2x128xf32>
    %824 = arith.addf %822, %823 : vector<2x128xf32>
    %825 = arith.negf %824 : vector<2x128xf32>
    %826 = math.exp %825 : vector<2x128xf32>
    %cst_193 = arith.constant 1.000000e+00 : f32
    %827 = vector.broadcast %cst_193 : f32 to vector<2x128xf32>
    %828 = arith.addf %827, %826 : vector<2x128xf32>
    %829 = arith.divf %827, %828 : vector<2x128xf32>
    %830 = vector.extract_strided_slice %810 {offsets = [0, 256], sizes = [2, 128], strides = [1, 1]} : vector<2x384xf32> to vector<2x128xf32>
    %831 = vector.extract_strided_slice %813 {offsets = [0, 256], sizes = [2, 128], strides = [1, 1]} : vector<2x384xf32> to vector<2x128xf32>
    %832 = arith.mulf %821, %831 : vector<2x128xf32>
    %833 = arith.addf %830, %832 : vector<2x128xf32>
    %834 = math.tanh %833 : vector<2x128xf32>
    %cst_194 = arith.constant 1.000000e+00 : f32
    %835 = vector.broadcast %cst_194 : f32 to vector<2x128xf32>
    %836 = arith.subf %835, %829 : vector<2x128xf32>
    %837 = arith.mulf %836, %834 : vector<2x128xf32>
    %838 = arith.mulf %829, %743 : vector<2x128xf32>
    %839 = arith.addf %837, %838 : vector<2x128xf32>
    %c7 = arith.constant 7 : index
    %c0_195 = arith.constant 0 : index
    %c0_196 = arith.constant 0 : index
    %840 = vector.load %arg26[%c7, %c0_195, %c0_196] : memref<8x2x128xf32, #tpu.memory_space<vmem>>, vector<1x2x128xf32>
    %841 = vector.shape_cast %840 : vector<1x2x128xf32> to vector<2x128xf32>
    %842 = vector.shape_cast %839 : vector<2x128xf32> to vector<1x2x128xf32>
    tpu.vector_store %arg26[%c7, %c0_195, %c0_196], %842 {strides = array<i32>} : memref<8x2x128xf32, #tpu.memory_space<vmem>>, vector<1x2x128xf32>,
    return
  }
}

</mosaic_0001>

<llo_original>
// kernel: mvae_forward.5
$region0: #{mvae_forward.5}
  #allocation0 [shape = 'u32[]', space=smem, size = 0x4, offset = 0x4, fixed_abs, tag = 'smem constant byte address 0x4 - core index']
  #allocation1 [shape = 'u32[144,128]{1,0:T(1,128)}', space=vmem, size = 0x12000, scoped, tag = 'internal scratch']
  %s0 = inlined_call_operand.vmem [shape: f32[16,128], index: 0, kind: input, shape index: {}]
  %s1 = inlined_call_operand.vmem [shape: f32[128,16], index: 1, kind: input, shape index: {}]
  %s2 = inlined_call_operand.vmem [shape: f32[1,16], index: 2, kind: input, shape index: {}]
  %s3 = inlined_call_operand.vmem [shape: f32[16,16], index: 3, kind: output, shape index: {}]
  %s4 = sld [smem:[#allocation0]]
  $region22: #{mvae_forward.5} parent=0
    _
  %s6 = ssub.s32 1, %s4
  %s7 = scalar_select 0, %s6, %s4
  // Predicated region
  $region2: #{mvae_forward.5} parent=0 // pred_check
    _
  $region3: #{mvae_forward.5} parent=0 // pred_check_branch
    %9 = sbr.rel (0) target = $region5
  $region4: #{mvae_forward.5} parent=0 // pred_region
    _
  $region5: #{mvae_forward.5} parent=0 // pred_fallthru
    _
  // Predicated region
  $region6: #{mvae_forward.5} parent=0 // pred_check
    _
  $region7: #{mvae_forward.5} parent=0 // pred_check_branch
    %11 = sbr.rel (0) target = $region9
  $region8: #{mvae_forward.5} parent=0 // pred_region
    _
  $region9: #{mvae_forward.5} parent=0 // pred_fallthru
    _
  // Predicated region
  $region10: #{mvae_forward.5} parent=0 // pred_check
    _
  $region11: #{mvae_forward.5} parent=0 // pred_check_branch
    %13 = sbr.rel (0) target = $region13
  $region12: #{mvae_forward.5} parent=0 // pred_region
    _
  $region13: #{mvae_forward.5} parent=0 // pred_fallthru
    _
  %v14 = vld [vmem:[%s0] sm:$0xff]
  %v15 = vld [vmem:[%s0 + $0x8] sm:$0xff]
  %v16 = vld [vmem:[%s1] sm:$0xff]
  %v17 = vld [vmem:[%s1 + $0x8] sm:$0xff]
  %v18 = vld [vmem:[%s1 + $0x10] sm:$0xff]
  %v19 = vld [vmem:[%s1 + $0x18] sm:$0xff]
  %v20 = vld [vmem:[%s1 + $0x20] sm:$0xff]
  %v21 = vld [vmem:[%s1 + $0x28] sm:$0xff]
  %v22 = vld [vmem:[%s1 + $0x30] sm:$0xff]
  %v23 = vld [vmem:[%s1 + $0x38] sm:$0xff]
  %v24 = vld [vmem:[%s1 + $0x40] sm:$0xff]
  %v25 = vld [vmem:[%s1 + $0x48] sm:$0xff]
  %v26 = vld [vmem:[%s1 + $0x50] sm:$0xff]
  %v27 = vld [vmem:[%s1 + $0x58] sm:$0xff]
  %v28 = vld [vmem:[%s1 + $0x60] sm:$0xff]
  %v29 = vld [vmem:[%s1 + $0x68] sm:$0xff]
  %v30 = vld [vmem:[%s1 + $0x70] sm:$0xff]
  %v31 = vld [vmem:[%s1 + $0x78] sm:$0xff]
  %v32 = vld [vmem:[%s2] sm:$0x1]
  %v34 = vlaneseq
  %v35 = vshrl.u32 %v34, 7
  %v36 = vsub.s32 0, %v35
  %v37 = vrot.slane %v32, %v36
  %39 = vmatprep.subr.mxu0 0.0
  %40 = vmatpush1.msra.mxu0 %v16
  %41 = vmatprep.subr.mxu0 0.0
  %42 = vmatpush1.msra.mxu0 %v17
  %43 = vmatprep.subr.mxu0 0.0
  %44 = vmatpush1.msra.mxu0 %v18
  %45 = vmatprep.subr.mxu0 0.0
  %46 = vmatpush1.msra.mxu0 %v19
  %47 = vmatprep.subr.mxu0 0.0
  %48 = vmatpush1.msra.mxu0 %v20
  %49 = vmatprep.subr.mxu0 0.0
  %50 = vmatpush1.msra.mxu0 %v21
  %51 = vmatprep.subr.mxu0 0.0
  %52 = vmatpush1.msra.mxu0 %v22
  %53 = vmatprep.subr.mxu0 0.0
  %54 = vmatpush1.msra.mxu0 %v23
  %55 = vmatprep.subr.mxu0 0.0
  %56 = vmatpush1.msra.mxu0 %v24
  %57 = vmatprep.subr.mxu0 0.0
  %58 = vmatpush1.msra.mxu0 %v25
  %59 = vmatprep.subr.mxu0 0.0
  %60 = vmatpush1.msra.mxu0 %v26
  %61 = vmatprep.subr.mxu0 0.0
  %62 = vmatpush1.msra.mxu0 %v27
  %63 = vmatprep.subr.mxu0 0.0
  %64 = vmatpush1.msra.mxu0 %v28
  %65 = vmatprep.subr.mxu0 0.0
  %66 = vmatpush1.msra.mxu0 %v29
  %67 = vmatprep.subr.mxu0 0.0
  %68 = vmatpush1.msra.mxu0 %v30
  %69 = vmatprep.subr.mxu0 0.0
  %70 = vmatpush1.msra.mxu0 %v31
  %71 = vmatprep.subr.mxu0 0.0
  %72 = vmatpush1.msra.mxu0 0.0
  %73 = vmatprep.subr.mxu0 0.0
  %74 = vmatpush1.msra.mxu0 0.0
  %75 = vmatprep.subr.mxu0 0.0
  %76 = vmatpush1.msra.mxu0 0.0
  %77 = vmatprep.subr.mxu0 0.0
  %78 = vmatpush1.msra.mxu0 0.0
  %79 = vmatprep.subr.mxu0 0.0
  %80 = vmatpush1.msra.mxu0 0.0
  %81 = vmatprep.subr.mxu0 0.0
  %82 = vmatpush1.msra.mxu0 0.0
  %83 = vmatprep.subr.mxu0 0.0
  %84 = vmatpush1.msra.mxu0 0.0
  %85 = vmatprep.subr.mxu0 0.0
  %86 = vmatpush1.msra.mxu0 0.0
  %87 = vmatprep.subr.mxu0 0.0
  %88 = vmatpush1.msra.mxu0 0.0
  %89 = vmatprep.subr.mxu0 0.0
  %90 = vmatpush1.msra.mxu0 0.0
  %91 = vmatprep.subr.mxu0 0.0
  %92 = vmatpush1.msra.mxu0 0.0
  %93 = vmatprep.subr.mxu0 0.0
  %94 = vmatpush1.msra.mxu0 0.0
  %95 = vmatprep.subr.mxu0 0.0
  %96 = vmatpush1.msra.mxu0 0.0
  %97 = vmatprep.subr.mxu0 0.0
  %98 = vmatpush1.msra.mxu0 0.0
  %99 = vmatprep.subr.mxu0 0.0
  %100 = vmatpush1.msra.mxu0 0.0
  %101 = vmatprep.subr.mxu0 0.0
  %102 = vmatpush1.msra.mxu0 0.0
  %103 = vmatprep.mubr.f32.mxu0 0.0
  %104 = vmatmul.mubr.f32.gmra.mrb[0].mxu0 %v14
  %v105 = vpop.f32.mrb[0].mxu0
  %v106 = vadd.f32 %v37, %v105
  %v107 = vpop.f32.mrb[0].mxu0
  %108 = vmatprep.mubr.f32.mxu0 0.0
  %109 = vmatmul.mubr.f32.gmra.mrb[0].mxu0 %v15
  %v110 = vpop.f32.mrb[0].mxu0
  %v111 = vadd.f32 %v37, %v110
  %v112 = vpop.f32.mrb[0].mxu0
  %113 = vdwg.mxu0
  %vm114 = vcmask 130048
  %v115 = vsel %vm114, %v106, -inf
  %116 = vmax.xlane.f32.xlu0 %v115
  %v117 = vpop.xlane.xlu0 %116
  %v118 = vsel %vm114, %v111, -inf
  %119 = vmax.xlane.f32.xlu0 %v118
  %v120 = vpop.xlane.xlu0 %119
  %v121 = vsub.f32 %v106, %v117
  %v122 = vsub.f32 %v111, %v120
  %v123 = vmul.f32 %v121, 1.442695
  %v124 = vpow.pop %v123
  %v125 = vmul.f32 %v122, 1.442695
  %v126 = vpow.pop %v125
  %v127 = vsel %vm114, %v124, 0.0
  %128 = vadd.xlane.f32.xlu0 %v127
  %v129 = vpop.xlane.xlu0 %128
  %v130 = vsel %vm114, %v126, 0.0
  %131 = vadd.xlane.f32.xlu0 %v130
  %v132 = vpop.xlane.xlu0 %131
  %v133 = vrcp.pop %v129
  %v134 = vmul.f32 %v124, %v133
  %v135 = vrcp.pop %v132
  %v136 = vmul.f32 %v126, %v135
  %137 = vst.msk [vmem:[%s3] sm:$0xff] %vm114, %v134
  %138 = vst.msk [vmem:[%s3 + $0x8] sm:$0xff] %vm114, %v136
  // Predicated region
  $region14: #{mvae_forward.5} parent=0 // pred_check
    _
  $region15: #{mvae_forward.5} parent=0 // pred_check_branch
    %140 = sbr.rel (0) target = $region17
  $region16: #{mvae_forward.5} parent=0 // pred_region
    _
  $region17: #{mvae_forward.5} parent=0 // pred_fallthru
    _
  // Predicated region
  $region18: #{mvae_forward.5} parent=0 // pred_check
    _
  $region19: #{mvae_forward.5} parent=0 // pred_check_branch
    %142 = sbr.rel (0) target = $region21
  $region20: #{mvae_forward.5} parent=0 // pred_region
    _
  $region21: #{mvae_forward.5} parent=0 // pred_fallthru
    _

// kernel: mvae_forward.3
$region0: #{mvae_forward.3}
  #allocation0 [shape = 'u32[]', space=smem, size = 0x4, offset = 0x4, fixed_abs, tag = 'smem constant byte address 0x4 - core index']
  #allocation1 [shape = 'u32[144,128]{1,0:T(1,128)}', space=vmem, size = 0x12000, scoped, tag = 'internal scratch']
  %s0 = inlined_call_operand.vmem [shape: f32[2,16,8], index: 0, kind: input, shape index: {}]
  %s1 = inlined_call_operand.hbm [shape: f32[3,8,6], index: 1, kind: input, shape index: {}]
  %s2 = inlined_call_operand.hbm [shape: f32[1,6], index: 2, kind: input, shape index: {}]
  %s3 = inlined_call_operand.hbm [shape: f32[3,6,6], index: 3, kind: input, shape index: {}]
  %s4 = inlined_call_operand.hbm [shape: f32[1,6], index: 4, kind: input, shape index: {}]
  %s5 = inlined_call_operand.vmem [shape: f32[3,6,4], index: 5, kind: input, shape index: {}]
  %s6 = inlined_call_operand.hbm [shape: f32[1,4], index: 6, kind: input, shape index: {}]
  %s7 = inlined_call_operand.vmem [shape: f32[2,10,4], index: 7, kind: output, shape index: {}]
  %s8 = sld [smem:[#allocation0]]
  $region58: #{mvae_forward.3} parent=0
    _
  %s10 = ssub.s32 1, %s8
  %s11 = scalar_select 0, %s10, %s8
  $region1: #{mvae_forward.3} parent=0
    #allocation2 [shape = 'u8[12288]{0}', space=vmem, size = 0x3000, scoped, tag = 'input window, operand 1, single buffered']
    #allocation3 [shape = 's32[1]{0}', space=sflag, size = 0x4, scoped, tag = 'scoped memory for mvae_forward.3']
    #allocation4 [shape = 'u8[512]{0}', space=vmem, size = 0x400, scoped, tag = 'input window, operand 2, single buffered']
    #allocation5 [shape = 's32[1]{0}', space=sflag, size = 0x4, scoped, tag = 'scoped memory for mvae_forward.3']
    #allocation6 [shape = 'u8[12288]{0}', space=vmem, size = 0x3000, scoped, tag = 'input window, operand 3, single buffered']
    #allocation7 [shape = 'u8[512]{0}', space=vmem, size = 0x400, scoped, tag = 'input window, operand 4, single buffered']
    #allocation8 [shape = 's32[1]{0}', space=sflag, size = 0x4, scoped, tag = 'scoped memory for mvae_forward.3']
    #allocation9 [shape = 'u8[512]{0}', space=vmem, size = 0x400, scoped, tag = 'input window, operand 6, single buffered']
    %12 = vsyncpa [#allocation3], 0
    %13 = vsyncpa [#allocation5], 0
    %14 = vsyncpa [#allocation8], 0
    // Predicated region
    $region2: #{mvae_forward.3} parent=1 // pred_check
      _
    $region3: #{mvae_forward.3} parent=1 // pred_check_branch
      %16 = sbr.rel (0) target = $region5
    $region4: #{mvae_forward.3} parent=1 // pred_region
      _
    $region5: #{mvae_forward.3} parent=1 // pred_fallthru
      _
    // Predicated region
    $region6: #{mvae_forward.3} parent=1 // pred_check
      _
    $region7: #{mvae_forward.3} parent=1 // pred_check_branch
      %18 = sbr.rel (0) target = $region9
    $region8: #{mvae_forward.3} parent=1 // pred_region
      %s20 = ssub.s32 384, 384
      %21 = vsyncadd [#allocation3], %s20
      %s22 = sshll.u32 [#allocation2], 4
      %s23 = int_to_ptr.vmem [resolvable:$true] %s22
      %28 = dma.hbm_to_vmem [thread:$0]  %s1, 384, %s23, [#allocation3], 128, 128, 8
    $region9: #{mvae_forward.3} parent=1 // pred_fallthru
      _
    // Predicated region
    $region10: #{mvae_forward.3} parent=1 // pred_check
      _
    $region11: #{mvae_forward.3} parent=1 // pred_check_branch
      %30 = sbr.rel (0) target = $region13
    $region12: #{mvae_forward.3} parent=1 // pred_region
      %s32 = ssub.s32 16, 16
      %33 = vsyncadd [#allocation5], %s32
      %s35 = sshll.u32 [#allocation4], 4
      %s36 = int_to_ptr.vmem [resolvable:$true] %s35
      %38 = dma.hbm_to_vmem [thread:$0]  %s2, 16, %s36, [#allocation5]
    $region13: #{mvae_forward.3} parent=1 // pred_fallthru
      _
    // Predicated region
    $region14: #{mvae_forward.3} parent=1 // pred_check
      _
    $region15: #{mvae_forward.3} parent=1 // pred_check_branch
      %40 = sbr.rel (0) target = $region17
    $region16: #{mvae_forward.3} parent=1 // pred_region
      %s42 = ssub.s32 384, 384
      %43 = vsyncadd [#allocation5], %s42
      %s44 = sshll.u32 [#allocation6], 4
      %s45 = int_to_ptr.vmem [resolvable:$true] %s44
      %50 = dma.hbm_to_vmem [thread:$0]  %s3, 384, %s45, [#allocation5], 128, 128, 8
    $region17: #{mvae_forward.3} parent=1 // pred_fallthru
      _
    // Predicated region
    $region18: #{mvae_forward.3} parent=1 // pred_check
      _
    $region19: #{mvae_forward.3} parent=1 // pred_check_branch
      %52 = sbr.rel (0) target = $region21
    $region20: #{mvae_forward.3} parent=1 // pred_region
      %s54 = ssub.s32 16, 16
      %55 = vsyncadd [#allocation8], %s54
      %s57 = sshll.u32 [#allocation7], 4
      %s58 = int_to_ptr.vmem [resolvable:$true] %s57
      %60 = dma.hbm_to_vmem [thread:$0]  %s4, 16, %s58, [#allocation8]
    $region21: #{mvae_forward.3} parent=1 // pred_fallthru
      _
    // Predicated region
    $region22: #{mvae_forward.3} parent=1 // pred_check
      _
    $region23: #{mvae_forward.3} parent=1 // pred_check_branch
      %62 = sbr.rel (0) target = $region25
    $region24: #{mvae_forward.3} parent=1 // pred_region
      _
    $region25: #{mvae_forward.3} parent=1 // pred_fallthru
      _
    // Predicated region
    $region26: #{mvae_forward.3} parent=1 // pred_check
      _
    $region27: #{mvae_forward.3} parent=1 // pred_check_branch
      %64 = sbr.rel (0) target = $region29
    $region28: #{mvae_forward.3} parent=1 // pred_region
      %s66 = ssub.s32 16, 16
      %67 = vsyncadd [#allocation8], %s66
      %s69 = sshll.u32 [#allocation9], 4
      %s70 = int_to_ptr.vmem [resolvable:$true] %s69
      %72 = dma.hbm_to_vmem [thread:$0]  %s6, 16, %s70, [#allocation8]
    $region29: #{mvae_forward.3} parent=1 // pred_fallthru
      _
    // Predicated region
    $region30: #{mvae_forward.3} parent=1 // pred_check
      _
    $region31: #{mvae_forward.3} parent=1 // pred_check_branch
      %74 = sbr.rel (0) target = $region33
    $region32: #{mvae_forward.3} parent=1 // pred_region
      %75 = dma.done [#allocation3], 384
    $region33: #{mvae_forward.3} parent=1 // pred_fallthru
      _
    // Predicated region
    $region34: #{mvae_forward.3} parent=1 // pred_check
      _
    $region35: #{mvae_forward.3} parent=1 // pred_check_branch
      %77 = sbr.rel (0) target = $region37
    $region36: #{mvae_forward.3} parent=1 // pred_region
      %78 = dma.done [#allocation5], 16
    $region37: #{mvae_forward.3} parent=1 // pred_fallthru
      _
    // Predicated region
    $region38: #{mvae_forward.3} parent=1 // pred_check
      _
    $region39: #{mvae_forward.3} parent=1 // pred_check_branch
      %80 = sbr.rel (0) target = $region41
    $region40: #{mvae_forward.3} parent=1 // pred_region
      %81 = dma.done [#allocation5], 384
    $region41: #{mvae_forward.3} parent=1 // pred_fallthru
      _
    // Predicated region
    $region42: #{mvae_forward.3} parent=1 // pred_check
      _
    $region43: #{mvae_forward.3} parent=1 // pred_check_branch
      %83 = sbr.rel (0) target = $region45
    $region44: #{mvae_forward.3} parent=1 // pred_region
      %84 = dma.done [#allocation8], 16
    $region45: #{mvae_forward.3} parent=1 // pred_fallthru
      _
    // Predicated region
    $region46: #{mvae_forward.3} parent=1 // pred_check
      _
    $region47: #{mvae_forward.3} parent=1 // pred_check_branch
      %86 = sbr.rel (0) target = $region49
    $region48: #{mvae_forward.3} parent=1 // pred_region
      %87 = dma.done [#allocation8], 16
    $region49: #{mvae_forward.3} parent=1 // pred_fallthru
      _
    %v88 = vld [vmem:[%s0] sm:$0xff]
    %v89 = vld [vmem:[%s0 + $0x8] sm:$0xff]
    %v90 = vld [vmem:[#allocation2] sm:$0xff]
    %s91 = scalar_lea.vmem [#allocation2], 8
    %v92 = vld [vmem:[%s91] sm:$0xff]
    %vm95 = vcmask 1046528
    %v96 = vrot.slane %v88, 1
    %v97 = vrot.slane %v89, 1
    %v98 = vsel %vm95, %v96, %v97
    %vm99 = vcmask 64512
    %v100 = vsel %vm99, %v98, 0
    %v102 = vsel %vm99, %v97, 0
    %104 = vmatprep.subr.mxu0 0.0
    %105 = vmatpush1.msra.mxu0 %v92
    %106 = vmatprep.subr.mxu0 0.0
    %107 = vmatpush1.msra.mxu0 0.0
    %108 = vmatprep.subr.mxu0 0.0
    %109 = vmatpush1.msra.mxu0 0.0
    %110 = vmatprep.subr.mxu0 0.0
    %111 = vmatpush1.msra.mxu0 0.0
    %112 = vmatprep.subr.mxu0 0.0
    %113 = vmatpush1.msra.mxu0 0.0
    %114 = vmatprep.subr.mxu0 0.0
    %115 = vmatpush1.msra.mxu0 0.0
    %116 = vmatprep.subr.mxu0 0.0
    %117 = vmatpush1.msra.mxu0 0.0
    %118 = vmatprep.subr.mxu0 0.0
    %119 = vmatpush1.msra.mxu0 0.0
    %120 = vmatprep.subr.mxu0 0.0
    %121 = vmatpush1.msra.mxu0 0.0
    %122 = vmatprep.subr.mxu0 0.0
    %123 = vmatpush1.msra.mxu0 0.0
    %124 = vmatprep.subr.mxu0 0.0
    %125 = vmatpush1.msra.mxu0 0.0
    %126 = vmatprep.subr.mxu0 0.0
    %127 = vmatpush1.msra.mxu0 0.0
    %128 = vmatprep.subr.mxu0 0.0
    %129 = vmatpush1.msra.mxu0 0.0
    %130 = vmatprep.subr.mxu0 0.0
    %131 = vmatpush1.msra.mxu0 0.0
    %132 = vmatprep.subr.mxu0 0.0
    %133 = vmatpush1.msra.mxu0 0.0
    %134 = vmatprep.subr.mxu0 0.0
    %135 = vmatpush1.msra.mxu0 0.0
    %136 = vmatprep.subr.mxu0 0.0
    %137 = vmatpush1.msra.mxu0 0.0
    %138 = vmatprep.subr.mxu0 0.0
    %139 = vmatpush1.msra.mxu0 0.0
    %140 = vmatprep.subr.mxu0 0.0
    %141 = vmatpush1.msra.mxu0 0.0
    %142 = vmatprep.subr.mxu0 0.0
    %143 = vmatpush1.msra.mxu0 0.0
    %144 = vmatprep.subr.mxu0 0.0
    %145 = vmatpush1.msra.mxu0 0.0
    %146 = vmatprep.subr.mxu0 0.0
    %147 = vmatpush1.msra.mxu0 0.0
    %148 = vmatprep.subr.mxu0 0.0
    %149 = vmatpush1.msra.mxu0 0.0
    %150 = vmatprep.subr.mxu0 0.0
    %151 = vmatpush1.msra.mxu0 0.0
    %152 = vmatprep.subr.mxu0 0.0
    %153 = vmatpush1.msra.mxu0 0.0
    %154 = vmatprep.subr.mxu0 0.0
    %155 = vmatpush1.msra.mxu0 0.0
    %156 = vmatprep.subr.mxu0 0.0
    %157 = vmatpush1.msra.mxu0 0.0
    %158 = vmatprep.subr.mxu0 0.0
    %159 = vmatpush1.msra.mxu0 0.0
    %160 = vmatprep.subr.mxu0 0.0
    %161 = vmatpush1.msra.mxu0 0.0
    %162 = vmatprep.subr.mxu0 0.0
    %163 = vmatpush1.msra.mxu0 0.0
    %164 = vmatprep.subr.mxu0 0.0
    %165 = vmatpush1.msra.mxu0 0.0
    %166 = vmatprep.subr.mxu0 0.0
    %167 = vmatpush1.msra.mxu0 0.0
    %168 = vmatprep.mubr.f32.mxu0 0.0
    %169 = vmatmul.mubr.f32.gmra.mrb[0].mxu0 %v100
    %v170 = vpop.f32.mrb[0].mxu0
    %v171 = vadd.f32 0.0, %v170
    %v172 = vpop.f32.mrb[0].mxu0
    %173 = vmatprep.mubr.f32.mxu0 0.0
    %174 = vmatmul.mubr.f32.gmra.mrb[0].mxu0 %v102
    %v175 = vpop.f32.mrb[0].mxu0
    %v176 = vadd.f32 0.0, %v175
    %v177 = vpop.f32.mrb[0].mxu0
    %178 = vdwg.mxu0
    %v179 = vsel %vm99, %v88, 0
    %v181 = vsel %vm99, %v89, 0
    %183 = vmatprep.subr.mxu0 0.0
    %184 = vmatpush1.msra.mxu0 %v90
    %185 = vmatprep.subr.mxu0 0.0
    %186 = vmatpush1.msra.mxu0 0.0
    %187 = vmatprep.subr.mxu0 0.0
    %188 = vmatpush1.msra.mxu0 0.0
    %189 = vmatprep.subr.mxu0 0.0
    %190 = vmatpush1.msra.mxu0 0.0
    %191 = vmatprep.subr.mxu0 0.0
    %192 = vmatpush1.msra.mxu0 0.0
    %193 = vmatprep.subr.mxu0 0.0
    %194 = vmatpush1.msra.mxu0 0.0
    %195 = vmatprep.subr.mxu0 0.0
    %196 = vmatpush1.msra.mxu0 0.0
    %197 = vmatprep.subr.mxu0 0.0
    %198 = vmatpush1.msra.mxu0 0.0
    %199 = vmatprep.subr.mxu0 0.0
    %200 = vmatpush1.msra.mxu0 0.0
    %201 = vmatprep.subr.mxu0 0.0
    %202 = vmatpush1.msra.mxu0 0.0
    %203 = vmatprep.subr.mxu0 0.0
    %204 = vmatpush1.msra.mxu0 0.0
    %205 = vmatprep.subr.mxu0 0.0
    %206 = vmatpush1.msra.mxu0 0.0
    %207 = vmatprep.subr.mxu0 0.0
    %208 = vmatpush1.msra.mxu0 0.0
    %209 = vmatprep.subr.mxu0 0.0
    %210 = vmatpush1.msra.mxu0 0.0
    %211 = vmatprep.subr.mxu0 0.0
    %212 = vmatpush1.msra.mxu0 0.0
    %213 = vmatprep.subr.mxu0 0.0
    %214 = vmatpush1.msra.mxu0 0.0
    %215 = vmatprep.subr.mxu0 0.0
    %216 = vmatpush1.msra.mxu0 0.0
    %217 = vmatprep.subr.mxu0 0.0
    %218 = vmatpush1.msra.mxu0 0.0
    %219 = vmatprep.subr.mxu0 0.0
    %220 = vmatpush1.msra.mxu0 0.0
    %221 = vmatprep.subr.mxu0 0.0
    %222 = vmatpush1.msra.mxu0 0.0
    %223 = vmatprep.subr.mxu0 0.0
    %224 = vmatpush1.msra.mxu0 0.0
    %225 = vmatprep.subr.mxu0 0.0
    %226 = vmatpush1.msra.mxu0 0.0
    %227 = vmatprep.subr.mxu0 0.0
    %228 = vmatpush1.msra.mxu0 0.0
    %229 = vmatprep.subr.mxu0 0.0
    %230 = vmatpush1.msra.mxu0 0.0
    %231 = vmatprep.subr.mxu0 0.0
    %232 = vmatpush1.msra.mxu0 0.0
    %233 = vmatprep.subr.mxu0 0.0
    %234 = vmatpush1.msra.mxu0 0.0
    %235 = vmatprep.subr.mxu0 0.0
    %236 = vmatpush1.msra.mxu0 0.0
    %237 = vmatprep.subr.mxu0 0.0
    %238 = vmatpush1.msra.mxu0 0.0
    %239 = vmatprep.subr.mxu0 0.0
    %240 = vmatpush1.msra.mxu0 0.0
    %241 = vmatprep.subr.mxu0 0.0
    %242 = vmatpush1.msra.mxu0 0.0
    %243 = vmatprep.subr.mxu0 0.0
    %244 = vmatpush1.msra.mxu0 0.0
    %245 = vmatprep.subr.mxu0 0.0
    %246 = vmatpush1.msra.mxu0 0.0
    %247 = vmatprep.mubr.f32.mxu0 0.0
    %248 = vmatmul.mubr.f32.gmra.mrb[0].mxu0 %v179
    %v249 = vpop.f32.mrb[0].mxu0
    %v250 = vadd.f32 %v171, %v249
    %v251 = vpop.f32.mrb[0].mxu0
    %252 = vmatprep.mubr.f32.mxu0 0.0
    %253 = vmatmul.mubr.f32.gmra.mrb[0].mxu0 %v181
    %v254 = vpop.f32.mrb[0].mxu0
    %v255 = vadd.f32 %v176, %v254
    %v256 = vpop.f32.mrb[0].mxu0
    %257 = vdwg.mxu0
    %s258 = scalar_lea.vmem [#allocation2], 16
    %v259 = vld [vmem:[%s258] sm:$0xff]
    %vm260 = vcmask 1045504
    %v261 = vrot.slane %v88, 2
    %v262 = vrot.slane %v89, 2
    %v263 = vsel %vm260, %v261, %v262
    %v264 = vsel %vm99, %v263, 0
    %v266 = vsel %vm99, %v262, 0
    %268 = vmatprep.subr.mxu0 0.0
    %269 = vmatpush1.msra.mxu0 %v259
    %270 = vmatprep.subr.mxu0 0.0
    %271 = vmatpush1.msra.mxu0 0.0
    %272 = vmatprep.subr.mxu0 0.0
    %273 = vmatpush1.msra.mxu0 0.0
    %274 = vmatprep.subr.mxu0 0.0
    %275 = vmatpush1.msra.mxu0 0.0
    %276 = vmatprep.subr.mxu0 0.0
    %277 = vmatpush1.msra.mxu0 0.0
    %278 = vmatprep.subr.mxu0 0.0
    %279 = vmatpush1.msra.mxu0 0.0
    %280 = vmatprep.subr.mxu0 0.0
    %281 = vmatpush1.msra.mxu0 0.0
    %282 = vmatprep.subr.mxu0 0.0
    %283 = vmatpush1.msra.mxu0 0.0
    %284 = vmatprep.subr.mxu0 0.0
    %285 = vmatpush1.msra.mxu0 0.0
    %286 = vmatprep.subr.mxu0 0.0
    %287 = vmatpush1.msra.mxu0 0.0
    %288 = vmatprep.subr.mxu0 0.0
    %289 = vmatpush1.msra.mxu0 0.0
    %290 = vmatprep.subr.mxu0 0.0
    %291 = vmatpush1.msra.mxu0 0.0
    %292 = vmatprep.subr.mxu0 0.0
    %293 = vmatpush1.msra.mxu0 0.0
    %294 = vmatprep.subr.mxu0 0.0
    %295 = vmatpush1.msra.mxu0 0.0
    %296 = vmatprep.subr.mxu0 0.0
    %297 = vmatpush1.msra.mxu0 0.0
    %298 = vmatprep.subr.mxu0 0.0
    %299 = vmatpush1.msra.mxu0 0.0
    %300 = vmatprep.subr.mxu0 0.0
    %301 = vmatpush1.msra.mxu0 0.0
    %302 = vmatprep.subr.mxu0 0.0
    %303 = vmatpush1.msra.mxu0 0.0
    %304 = vmatprep.subr.mxu0 0.0
    %305 = vmatpush1.msra.mxu0 0.0
    %306 = vmatprep.subr.mxu0 0.0
    %307 = vmatpush1.msra.mxu0 0.0
    %308 = vmatprep.subr.mxu0 0.0
    %309 = vmatpush1.msra.mxu0 0.0
    %310 = vmatprep.subr.mxu0 0.0
    %311 = vmatpush1.msra.mxu0 0.0
    %312 = vmatprep.subr.mxu0 0.0
    %313 = vmatpush1.msra.mxu0 0.0
    %314 = vmatprep.subr.mxu0 0.0
    %315 = vmatpush1.msra.mxu0 0.0
    %316 = vmatprep.subr.mxu0 0.0
    %317 = vmatpush1.msra.mxu0 0.0
    %318 = vmatprep.subr.mxu0 0.0
    %319 = vmatpush1.msra.mxu0 0.0
    %320 = vmatprep.subr.mxu0 0.0
    %321 = vmatpush1.msra.mxu0 0.0
    %322 = vmatprep.subr.mxu0 0.0
    %323 = vmatpush1.msra.mxu0 0.0
    %324 = vmatprep.subr.mxu0 0.0
    %325 = vmatpush1.msra.mxu0 0.0
    %326 = vmatprep.subr.mxu0 0.0
    %327 = vmatpush1.msra.mxu0 0.0
    %328 = vmatprep.subr.mxu0 0.0
    %329 = vmatpush1.msra.mxu0 0.0
    %330 = vmatprep.subr.mxu0 0.0
    %331 = vmatpush1.msra.mxu0 0.0
    %332 = vmatprep.mubr.f32.mxu0 0.0
    %333 = vmatmul.mubr.f32.gmra.mrb[0].mxu0 %v264
    %v334 = vpop.f32.mrb[0].mxu0
    %v335 = vadd.f32 0.0, %v334
    %v336 = vpop.f32.mrb[0].mxu0
    %337 = vmatprep.mubr.f32.mxu0 0.0
    %338 = vmatmul.mubr.f32.gmra.mrb[0].mxu0 %v266
    %v339 = vpop.f32.mrb[0].mxu0
    %v340 = vadd.f32 0.0, %v339
    %v341 = vpop.f32.mrb[0].mxu0
    %342 = vdwg.mxu0
    %v343 = vadd.f32 %v250, %v335
    %v344 = vadd.f32 %v255, %v340
    %v345 = vld [vmem:[#allocation4] sm:$0x1]
    %v347 = vlaneseq
    %v348 = vshrl.u32 %v347, 7
    %v349 = vsub.s32 0, %v348
    %v350 = vrot.slane %v345, %v349
    %v352 = vadd.f32 %v343, %v350
    %v353 = vadd.f32 %v344, %v350
    %v354 = vmax.f32 %v352, 0.0
    %v355 = vmax.f32 %v353, 0.0
    %v356 = vld [vmem:[#allocation6] sm:$0x3f]
    %s357 = scalar_lea.vmem [#allocation6], 8
    %v358 = vld [vmem:[%s357] sm:$0x3f]
    %v361 = vrot.slane %v354, 1
    %v362 = vrot.slane %v355, 1
    %v363 = vsel %vm95, %v361, %v362
    %vm364 = vcmask 48128
    %v365 = vsel %vm364, %v363, 0
    %v367 = vsel %vm364, %v362, 0
    %v370 = vsel %vm260, %v358, 0
    %372 = vmatprep.subr.mxu0 0.0
    %373 = vmatpush1.msra.mxu0 %v370
    %374 = vmatprep.subr.mxu0 0.0
    %375 = vmatpush1.msra.mxu0 0.0
    %376 = vmatprep.subr.mxu0 0.0
    %377 = vmatpush1.msra.mxu0 0.0
    %378 = vmatprep.subr.mxu0 0.0
    %379 = vmatpush1.msra.mxu0 0.0
    %380 = vmatprep.subr.mxu0 0.0
    %381 = vmatpush1.msra.mxu0 0.0
    %382 = vmatprep.subr.mxu0 0.0
    %383 = vmatpush1.msra.mxu0 0.0
    %384 = vmatprep.subr.mxu0 0.0
    %385 = vmatpush1.msra.mxu0 0.0
    %386 = vmatprep.subr.mxu0 0.0
    %387 = vmatpush1.msra.mxu0 0.0
    %388 = vmatprep.subr.mxu0 0.0
    %389 = vmatpush1.msra.mxu0 0.0
    %390 = vmatprep.subr.mxu0 0.0
    %391 = vmatpush1.msra.mxu0 0.0
    %392 = vmatprep.subr.mxu0 0.0
    %393 = vmatpush1.msra.mxu0 0.0
    %394 = vmatprep.subr.mxu0 0.0
    %395 = vmatpush1.msra.mxu0 0.0
    %396 = vmatprep.subr.mxu0 0.0
    %397 = vmatpush1.msra.mxu0 0.0
    %398 = vmatprep.subr.mxu0 0.0
    %399 = vmatpush1.msra.mxu0 0.0
    %400 = vmatprep.subr.mxu0 0.0
    %401 = vmatpush1.msra.mxu0 0.0
    %402 = vmatprep.subr.mxu0 0.0
    %403 = vmatpush1.msra.mxu0 0.0
    %404 = vmatprep.subr.mxu0 0.0
    %405 = vmatpush1.msra.mxu0 0.0
    %406 = vmatprep.subr.mxu0 0.0
    %407 = vmatpush1.msra.mxu0 0.0
    %408 = vmatprep.subr.mxu0 0.0
    %409 = vmatpush1.msra.mxu0 0.0
    %410 = vmatprep.subr.mxu0 0.0
    %411 = vmatpush1.msra.mxu0 0.0
    %412 = vmatprep.subr.mxu0 0.0
    %413 = vmatpush1.msra.mxu0 0.0
    %414 = vmatprep.subr.mxu0 0.0
    %415 = vmatpush1.msra.mxu0 0.0
    %416 = vmatprep.subr.mxu0 0.0
    %417 = vmatpush1.msra.mxu0 0.0
    %418 = vmatprep.subr.mxu0 0.0
    %419 = vmatpush1.msra.mxu0 0.0
    %420 = vmatprep.subr.mxu0 0.0
    %421 = vmatpush1.msra.mxu0 0.0
    %422 = vmatprep.subr.mxu0 0.0
    %423 = vmatpush1.msra.mxu0 0.0
    %424 = vmatprep.subr.mxu0 0.0
    %425 = vmatpush1.msra.mxu0 0.0
    %426 = vmatprep.subr.mxu0 0.0
    %427 = vmatpush1.msra.mxu0 0.0
    %428 = vmatprep.subr.mxu0 0.0
    %429 = vmatpush1.msra.mxu0 0.0
    %430 = vmatprep.subr.mxu0 0.0
    %431 = vmatpush1.msra.mxu0 0.0
    %432 = vmatprep.subr.mxu0 0.0
    %433 = vmatpush1.msra.mxu0 0.0
    %434 = vmatprep.subr.mxu0 0.0
    %435 = vmatpush1.msra.mxu0 0.0
    %436 = vmatprep.mubr.f32.mxu0 0.0
    %437 = vmatmul.mubr.f32.gmra.mrb[0].mxu0 %v365
    %v438 = vpop.f32.mrb[0].mxu0
    %v439 = vadd.f32 0.0, %v438
    %v440 = vpop.f32.mrb[0].mxu0
    %441 = vmatprep.mubr.f32.mxu0 0.0
    %442 = vmatmul.mubr.f32.gmra.mrb[0].mxu0 %v367
    %v443 = vpop.f32.mrb[0].mxu0
    %v444 = vadd.f32 0.0, %v443
    %v445 = vpop.f32.mrb[0].mxu0
    %446 = vdwg.mxu0
    %v447 = vsel %vm364, %v354, 0
    %v449 = vsel %vm364, %v355, 0
    %v452 = vsel %vm260, %v356, 0
    %454 = vmatprep.subr.mxu0 0.0
    %455 = vmatpush1.msra.mxu0 %v452
    %456 = vmatprep.subr.mxu0 0.0
    %457 = vmatpush1.msra.mxu0 0.0
    %458 = vmatprep.subr.mxu0 0.0
    %459 = vmatpush1.msra.mxu0 0.0
    %460 = vmatprep.subr.mxu0 0.0
    %461 = vmatpush1.msra.mxu0 0.0
    %462 = vmatprep.subr.mxu0 0.0
    %463 = vmatpush1.msra.mxu0 0.0
    %464 = vmatprep.subr.mxu0 0.0
    %465 = vmatpush1.msra.mxu0 0.0
    %466 = vmatprep.subr.mxu0 0.0
    %467 = vmatpush1.msra.mxu0 0.0
    %468 = vmatprep.subr.mxu0 0.0
    %469 = vmatpush1.msra.mxu0 0.0
    %470 = vmatprep.subr.mxu0 0.0
    %471 = vmatpush1.msra.mxu0 0.0
    %472 = vmatprep.subr.mxu0 0.0
    %473 = vmatpush1.msra.mxu0 0.0
    %474 = vmatprep.subr.mxu0 0.0
    %475 = vmatpush1.msra.mxu0 0.0
    %476 = vmatprep.subr.mxu0 0.0
    %477 = vmatpush1.msra.mxu0 0.0
    %478 = vmatprep.subr.mxu0 0.0
    %479 = vmatpush1.msra.mxu0 0.0
    %480 = vmatprep.subr.mxu0 0.0
    %481 = vmatpush1.msra.mxu0 0.0
    %482 = vmatprep.subr.mxu0 0.0
    %483 = vmatpush1.msra.mxu0 0.0
    %484 = vmatprep.subr.mxu0 0.0
    %485 = vmatpush1.msra.mxu0 0.0
    %486 = vmatprep.subr.mxu0 0.0
    %487 = vmatpush1.msra.mxu0 0.0
    %488 = vmatprep.subr.mxu0 0.0
    %489 = vmatpush1.msra.mxu0 0.0
    %490 = vmatprep.subr.mxu0 0.0
    %491 = vmatpush1.msra.mxu0 0.0
    %492 = vmatprep.subr.mxu0 0.0
    %493 = vmatpush1.msra.mxu0 0.0
    %494 = vmatprep.subr.mxu0 0.0
    %495 = vmatpush1.msra.mxu0 0.0
    %496 = vmatprep.subr.mxu0 0.0
    %497 = vmatpush1.msra.mxu0 0.0
    %498 = vmatprep.subr.mxu0 0.0
    %499 = vmatpush1.msra.mxu0 0.0
    %500 = vmatprep.subr.mxu0 0.0
    %501 = vmatpush1.msra.mxu0 0.0
    %502 = vmatprep.subr.mxu0 0.0
    %503 = vmatpush1.msra.mxu0 0.0
    %504 = vmatprep.subr.mxu0 0.0
    %505 = vmatpush1.msra.mxu0 0.0
    %506 = vmatprep.subr.mxu0 0.0
    %507 = vmatpush1.msra.mxu0 0.0
    %508 = vmatprep.subr.mxu0 0.0
    %509 = vmatpush1.msra.mxu0 0.0
    %510 = vmatprep.subr.mxu0 0.0
    %511 = vmatpush1.msra.mxu0 0.0
    %512 = vmatprep.subr.mxu0 0.0
    %513 = vmatpush1.msra.mxu0 0.0
    %514 = vmatprep.subr.mxu0 0.0
    %515 = vmatpush1.msra.mxu0 0.0
    %516 = vmatprep.subr.mxu0 0.0
    %517 = vmatpush1.msra.mxu0 0.0
    %518 = vmatprep.mubr.f32.mxu0 0.0
    %519 = vmatmul.mubr.f32.gmra.mrb[0].mxu0 %v447
    %v520 = vpop.f32.mrb[0].mxu0
    %v521 = vadd.f32 %v439, %v520
    %v522 = vpop.f32.mrb[0].mxu0
    %523 = vmatprep.mubr.f32.mxu0 0.0
    %524 = vmatmul.mubr.f32.gmra.mrb[0].mxu0 %v449
    %v525 = vpop.f32.mrb[0].mxu0
    %v526 = vadd.f32 %v444, %v525
    %v527 = vpop.f32.mrb[0].mxu0
    %528 = vdwg.mxu0
    %s529 = scalar_lea.vmem [#allocation6], 16
    %v530 = vld [vmem:[%s529] sm:$0x3f]
    %v531 = vrot.slane %v354, 2
    %v532 = vrot.slane %v355, 2
    %v533 = vsel %vm260, %v531, %v532
    %v534 = vsel %vm364, %v533, 0
    %v536 = vsel %vm364, %v532, 0
    %v539 = vsel %vm260, %v530, 0
    %541 = vmatprep.subr.mxu0 0.0
    %542 = vmatpush1.msra.mxu0 %v539
    %543 = vmatprep.subr.mxu0 0.0
    %544 = vmatpush1.msra.mxu0 0.0
    %545 = vmatprep.subr.mxu0 0.0
    %546 = vmatpush1.msra.mxu0 0.0
    %547 = vmatprep.subr.mxu0 0.0
    %548 = vmatpush1.msra.mxu0 0.0
    %549 = vmatprep.subr.mxu0 0.0
    %550 = vmatpush1.msra.mxu0 0.0
    %551 = vmatprep.subr.mxu0 0.0
    %552 = vmatpush1.msra.mxu0 0.0
    %553 = vmatprep.subr.mxu0 0.0
    %554 = vmatpush1.msra.mxu0 0.0
    %555 = vmatprep.subr.mxu0 0.0
    %556 = vmatpush1.msra.mxu0 0.0
    %557 = vmatprep.subr.mxu0 0.0
    %558 = vmatpush1.msra.mxu0 0.0
    %559 = vmatprep.subr.mxu0 0.0
    %560 = vmatpush1.msra.mxu0 0.0
    %561 = vmatprep.subr.mxu0 0.0
    %562 = vmatpush1.msra.mxu0 0.0
    %563 = vmatprep.subr.mxu0 0.0
    %564 = vmatpush1.msra.mxu0 0.0
    %565 = vmatprep.subr.mxu0 0.0
    %566 = vmatpush1.msra.mxu0 0.0
    %567 = vmatprep.subr.mxu0 0.0
    %568 = vmatpush1.msra.mxu0 0.0
    %569 = vmatprep.subr.mxu0 0.0
    %570 = vmatpush1.msra.mxu0 0.0
    %571 = vmatprep.subr.mxu0 0.0
    %572 = vmatpush1.msra.mxu0 0.0
    %573 = vmatprep.subr.mxu0 0.0
    %574 = vmatpush1.msra.mxu0 0.0
    %575 = vmatprep.subr.mxu0 0.0
    %576 = vmatpush1.msra.mxu0 0.0
    %577 = vmatprep.subr.mxu0 0.0
    %578 = vmatpush1.msra.mxu0 0.0
    %579 = vmatprep.subr.mxu0 0.0
    %580 = vmatpush1.msra.mxu0 0.0
    %581 = vmatprep.subr.mxu0 0.0
    %582 = vmatpush1.msra.mxu0 0.0
    %583 = vmatprep.subr.mxu0 0.0
    %584 = vmatpush1.msra.mxu0 0.0
    %585 = vmatprep.subr.mxu0 0.0
    %586 = vmatpush1.msra.mxu0 0.0
    %587 = vmatprep.subr.mxu0 0.0
    %588 = vmatpush1.msra.mxu0 0.0
    %589 = vmatprep.subr.mxu0 0.0
    %590 = vmatpush1.msra.mxu0 0.0
    %591 = vmatprep.subr.mxu0 0.0
    %592 = vmatpush1.msra.mxu0 0.0
    %593 = vmatprep.subr.mxu0 0.0
    %594 = vmatpush1.msra.mxu0 0.0
    %595 = vmatprep.subr.mxu0 0.0
    %596 = vmatpush1.msra.mxu0 0.0
    %597 = vmatprep.subr.mxu0 0.0
    %598 = vmatpush1.msra.mxu0 0.0
    %599 = vmatprep.subr.mxu0 0.0
    %600 = vmatpush1.msra.mxu0 0.0
    %601 = vmatprep.subr.mxu0 0.0
    %602 = vmatpush1.msra.mxu0 0.0
    %603 = vmatprep.subr.mxu0 0.0
    %604 = vmatpush1.msra.mxu0 0.0
    %605 = vmatprep.mubr.f32.mxu0 0.0
    %606 = vmatmul.mubr.f32.gmra.mrb[0].mxu0 %v534
    %v607 = vpop.f32.mrb[0].mxu0
    %v608 = vadd.f32 0.0, %v607
    %v609 = vpop.f32.mrb[0].mxu0
    %610 = vmatprep.mubr.f32.mxu0 0.0
    %611 = vmatmul.mubr.f32.gmra.mrb[0].mxu0 %v536
    %v612 = vpop.f32.mrb[0].mxu0
    %v613 = vadd.f32 0.0, %v612
    %v614 = vpop.f32.mrb[0].mxu0
    %615 = vdwg.mxu0
    %v616 = vadd.f32 %v521, %v608
    %v617 = vadd.f32 %v526, %v613
    %v618 = vld [vmem:[#allocation7] sm:$0x1]
    %v620 = vlaneseq
    %v621 = vshrl.u32 %v620, 7
    %v622 = vsub.s32 0, %v621
    %v623 = vrot.slane %v618, %v622
    %v625 = vadd.f32 %v616, %v623
    %v626 = vadd.f32 %v617, %v623
    %v627 = vmax.f32 %v625, 0.0
    %v628 = vmax.f32 %v626, 0.0
    %v629 = vld [vmem:[%s5] sm:$0x3f]
    %s630 = scalar_lea.vmem %s5, 8
    %v631 = vld [vmem:[%s630] sm:$0x3f]
    %v634 = vrot.slane %v627, 1
    %v635 = vrot.slane %v628, 1
    %v636 = vsel %vm95, %v634, %v635
    %v637 = vsel %vm364, %v636, 0
    %v639 = vsel %vm364, %v635, 0
    %v642 = vsel %vm260, %v631, 0
    %644 = vmatprep.subr.mxu0 0.0
    %645 = vmatpush1.msra.mxu0 %v642
    %646 = vmatprep.subr.mxu0 0.0
    %647 = vmatpush1.msra.mxu0 0.0
    %648 = vmatprep.subr.mxu0 0.0
    %649 = vmatpush1.msra.mxu0 0.0
    %650 = vmatprep.subr.mxu0 0.0
    %651 = vmatpush1.msra.mxu0 0.0
    %652 = vmatprep.subr.mxu0 0.0
    %653 = vmatpush1.msra.mxu0 0.0
    %654 = vmatprep.subr.mxu0 0.0
    %655 = vmatpush1.msra.mxu0 0.0
    %656 = vmatprep.subr.mxu0 0.0
    %657 = vmatpush1.msra.mxu0 0.0
    %658 = vmatprep.subr.mxu0 0.0
    %659 = vmatpush1.msra.mxu0 0.0
    %660 = vmatprep.subr.mxu0 0.0
    %661 = vmatpush1.msra.mxu0 0.0
    %662 = vmatprep.subr.mxu0 0.0
    %663 = vmatpush1.msra.mxu0 0.0
    %664 = vmatprep.subr.mxu0 0.0
    %665 = vmatpush1.msra.mxu0 0.0
    %666 = vmatprep.subr.mxu0 0.0
    %667 = vmatpush1.msra.mxu0 0.0
    %668 = vmatprep.subr.mxu0 0.0
    %669 = vmatpush1.msra.mxu0 0.0
    %670 = vmatprep.subr.mxu0 0.0
    %671 = vmatpush1.msra.mxu0 0.0
    %672 = vmatprep.subr.mxu0 0.0
    %673 = vmatpush1.msra.mxu0 0.0
    %674 = vmatprep.subr.mxu0 0.0
    %675 = vmatpush1.msra.mxu0 0.0
    %676 = vmatprep.subr.mxu0 0.0
    %677 = vmatpush1.msra.mxu0 0.0
    %678 = vmatprep.subr.mxu0 0.0
    %679 = vmatpush1.msra.mxu0 0.0
    %680 = vmatprep.subr.mxu0 0.0
    %681 = vmatpush1.msra.mxu0 0.0
    %682 = vmatprep.subr.mxu0 0.0
    %683 = vmatpush1.msra.mxu0 0.0
    %684 = vmatprep.subr.mxu0 0.0
    %685 = vmatpush1.msra.mxu0 0.0
    %686 = vmatprep.subr.mxu0 0.0
    %687 = vmatpush1.msra.mxu0 0.0
    %688 = vmatprep.subr.mxu0 0.0
    %689 = vmatpush1.msra.mxu0 0.0
    %690 = vmatprep.subr.mxu0 0.0
    %691 = vmatpush1.msra.mxu0 0.0
    %692 = vmatprep.subr.mxu0 0.0
    %693 = vmatpush1.msra.mxu0 0.0
    %694 = vmatprep.subr.mxu0 0.0
    %695 = vmatpush1.msra.mxu0 0.0
    %696 = vmatprep.subr.mxu0 0.0
    %697 = vmatpush1.msra.mxu0 0.0
    %698 = vmatprep.subr.mxu0 0.0
    %699 = vmatpush1.msra.mxu0 0.0
    %700 = vmatprep.subr.mxu0 0.0
    %701 = vmatpush1.msra.mxu0 0.0
    %702 = vmatprep.subr.mxu0 0.0
    %703 = vmatpush1.msra.mxu0 0.0
    %704 = vmatprep.subr.mxu0 0.0
    %705 = vmatpush1.msra.mxu0 0.0
    %706 = vmatprep.subr.mxu0 0.0
    %707 = vmatpush1.msra.mxu0 0.0
    %708 = vmatprep.mubr.f32.mxu0 0.0
    %709 = vmatmul.mubr.f32.gmra.mrb[0].mxu0 %v637
    %v710 = vpop.f32.mrb[0].mxu0
    %v711 = vadd.f32 0.0, %v710
    %v712 = vpop.f32.mrb[0].mxu0
    %713 = vmatprep.mubr.f32.mxu0 0.0
    %714 = vmatmul.mubr.f32.gmra.mrb[0].mxu0 %v639
    %v715 = vpop.f32.mrb[0].mxu0
    %v716 = vadd.f32 0.0, %v715
    %v717 = vpop.f32.mrb[0].mxu0
    %718 = vdwg.mxu0
    %v719 = vsel %vm364, %v627, 0
    %v721 = vsel %vm364, %v628, 0
    %v724 = vsel %vm260, %v629, 0
    %726 = vmatprep.subr.mxu0 0.0
    %727 = vmatpush1.msra.mxu0 %v724
    %728 = vmatprep.subr.mxu0 0.0
    %729 = vmatpush1.msra.mxu0 0.0
    %730 = vmatprep.subr.mxu0 0.0
    %731 = vmatpush1.msra.mxu0 0.0
    %732 = vmatprep.subr.mxu0 0.0
    %733 = vmatpush1.msra.mxu0 0.0
    %734 = vmatprep.subr.mxu0 0.0
    %735 = vmatpush1.msra.mxu0 0.0
    %736 = vmatprep.subr.mxu0 0.0
    %737 = vmatpush1.msra.mxu0 0.0
    %738 = vmatprep.subr.mxu0 0.0
    %739 = vmatpush1.msra.mxu0 0.0
    %740 = vmatprep.subr.mxu0 0.0
    %741 = vmatpush1.msra.mxu0 0.0
    %742 = vmatprep.subr.mxu0 0.0
    %743 = vmatpush1.msra.mxu0 0.0
    %744 = vmatprep.subr.mxu0 0.0
    %745 = vmatpush1.msra.mxu0 0.0
    %746 = vmatprep.subr.mxu0 0.0
    %747 = vmatpush1.msra.mxu0 0.0
    %748 = vmatprep.subr.mxu0 0.0
    %749 = vmatpush1.msra.mxu0 0.0
    %750 = vmatprep.subr.mxu0 0.0
    %751 = vmatpush1.msra.mxu0 0.0
    %752 = vmatprep.subr.mxu0 0.0
    %753 = vmatpush1.msra.mxu0 0.0
    %754 = vmatprep.subr.mxu0 0.0
    %755 = vmatpush1.msra.mxu0 0.0
    %756 = vmatprep.subr.mxu0 0.0
    %757 = vmatpush1.msra.mxu0 0.0
    %758 = vmatprep.subr.mxu0 0.0
    %759 = vmatpush1.msra.mxu0 0.0
    %760 = vmatprep.subr.mxu0 0.0
    %761 = vmatpush1.msra.mxu0 0.0
    %762 = vmatprep.subr.mxu0 0.0
    %763 = vmatpush1.msra.mxu0 0.0
    %764 = vmatprep.subr.mxu0 0.0
    %765 = vmatpush1.msra.mxu0 0.0
    %766 = vmatprep.subr.mxu0 0.0
    %767 = vmatpush1.msra.mxu0 0.0
    %768 = vmatprep.subr.mxu0 0.0
    %769 = vmatpush1.msra.mxu0 0.0
    %770 = vmatprep.subr.mxu0 0.0
    %771 = vmatpush1.msra.mxu0 0.0
    %772 = vmatprep.subr.mxu0 0.0
    %773 = vmatpush1.msra.mxu0 0.0
    %774 = vmatprep.subr.mxu0 0.0
    %775 = vmatpush1.msra.mxu0 0.0
    %776 = vmatprep.subr.mxu0 0.0
    %777 = vmatpush1.msra.mxu0 0.0
    %778 = vmatprep.subr.mxu0 0.0
    %779 = vmatpush1.msra.mxu0 0.0
    %780 = vmatprep.subr.mxu0 0.0
    %781 = vmatpush1.msra.mxu0 0.0
    %782 = vmatprep.subr.mxu0 0.0
    %783 = vmatpush1.msra.mxu0 0.0
    %784 = vmatprep.subr.mxu0 0.0
    %785 = vmatpush1.msra.mxu0 0.0
    %786 = vmatprep.subr.mxu0 0.0
    %787 = vmatpush1.msra.mxu0 0.0
    %788 = vmatprep.subr.mxu0 0.0
    %789 = vmatpush1.msra.mxu0 0.0
    %790 = vmatprep.mubr.f32.mxu0 0.0
    %791 = vmatmul.mubr.f32.gmra.mrb[0].mxu0 %v719
    %v792 = vpop.f32.mrb[0].mxu0
    %v793 = vadd.f32 %v711, %v792
    %v794 = vpop.f32.mrb[0].mxu0
    %795 = vmatprep.mubr.f32.mxu0 0.0
    %796 = vmatmul.mubr.f32.gmra.mrb[0].mxu0 %v721
    %v797 = vpop.f32.mrb[0].mxu0
    %v798 = vadd.f32 %v716, %v797
    %v799 = vpop.f32.mrb[0].mxu0
    %800 = vdwg.mxu0
    %s801 = scalar_lea.vmem %s5, 16
    %v802 = vld [vmem:[%s801] sm:$0x3f]
    %v803 = vrot.slane %v627, 2
    %v804 = vrot.slane %v628, 2
    %v805 = vsel %vm260, %v803, %v804
    %v806 = vsel %vm364, %v805, 0
    %v808 = vsel %vm364, %v804, 0
    %v811 = vsel %vm260, %v802, 0
    %813 = vmatprep.subr.mxu0 0.0
    %814 = vmatpush1.msra.mxu0 %v811
    %815 = vmatprep.subr.mxu0 0.0
    %816 = vmatpush1.msra.mxu0 0.0
    %817 = vmatprep.subr.mxu0 0.0
    %818 = vmatpush1.msra.mxu0 0.0
    %819 = vmatprep.subr.mxu0 0.0
    %820 = vmatpush1.msra.mxu0 0.0
    %821 = vmatprep.subr.mxu0 0.0
    %822 = vmatpush1.msra.mxu0 0.0
    %823 = vmatprep.subr.mxu0 0.0
    %824 = vmatpush1.msra.mxu0 0.0
    %825 = vmatprep.subr.mxu0 0.0
    %826 = vmatpush1.msra.mxu0 0.0
    %827 = vmatprep.subr.mxu0 0.0
    %828 = vmatpush1.msra.mxu0 0.0
    %829 = vmatprep.subr.mxu0 0.0
    %830 = vmatpush1.msra.mxu0 0.0
    %831 = vmatprep.subr.mxu0 0.0
    %832 = vmatpush1.msra.mxu0 0.0
    %833 = vmatprep.subr.mxu0 0.0
    %834 = vmatpush1.msra.mxu0 0.0
    %835 = vmatprep.subr.mxu0 0.0
    %836 = vmatpush1.msra.mxu0 0.0
    %837 = vmatprep.subr.mxu0 0.0
    %838 = vmatpush1.msra.mxu0 0.0
    %839 = vmatprep.subr.mxu0 0.0
    %840 = vmatpush1.msra.mxu0 0.0
    %841 = vmatprep.subr.mxu0 0.0
    %842 = vmatpush1.msra.mxu0 0.0
    %843 = vmatprep.subr.mxu0 0.0
    %844 = vmatpush1.msra.mxu0 0.0
    %845 = vmatprep.subr.mxu0 0.0
    %846 = vmatpush1.msra.mxu0 0.0
    %847 = vmatprep.subr.mxu0 0.0
    %848 = vmatpush1.msra.mxu0 0.0
    %849 = vmatprep.subr.mxu0 0.0
    %850 = vmatpush1.msra.mxu0 0.0
    %851 = vmatprep.subr.mxu0 0.0
    %852 = vmatpush1.msra.mxu0 0.0
    %853 = vmatprep.subr.mxu0 0.0
    %854 = vmatpush1.msra.mxu0 0.0
    %855 = vmatprep.subr.mxu0 0.0
    %856 = vmatpush1.msra.mxu0 0.0
    %857 = vmatprep.subr.mxu0 0.0
    %858 = vmatpush1.msra.mxu0 0.0
    %859 = vmatprep.subr.mxu0 0.0
    %860 = vmatpush1.msra.mxu0 0.0
    %861 = vmatprep.subr.mxu0 0.0
    %862 = vmatpush1.msra.mxu0 0.0
    %863 = vmatprep.subr.mxu0 0.0
    %864 = vmatpush1.msra.mxu0 0.0
    %865 = vmatprep.subr.mxu0 0.0
    %866 = vmatpush1.msra.mxu0 0.0
    %867 = vmatprep.subr.mxu0 0.0
    %868 = vmatpush1.msra.mxu0 0.0
    %869 = vmatprep.subr.mxu0 0.0
    %870 = vmatpush1.msra.mxu0 0.0
    %871 = vmatprep.subr.mxu0 0.0
    %872 = vmatpush1.msra.mxu0 0.0
    %873 = vmatprep.subr.mxu0 0.0
    %874 = vmatpush1.msra.mxu0 0.0
    %875 = vmatprep.subr.mxu0 0.0
    %876 = vmatpush1.msra.mxu0 0.0
    %877 = vmatprep.mubr.f32.mxu0 0.0
    %878 = vmatmul.mubr.f32.gmra.mrb[0].mxu0 %v806
    %v879 = vpop.f32.mrb[0].mxu0
    %v880 = vadd.f32 0.0, %v879
    %v881 = vpop.f32.mrb[0].mxu0
    %882 = vmatprep.mubr.f32.mxu0 0.0
    %883 = vmatmul.mubr.f32.gmra.mrb[0].mxu0 %v808
    %v884 = vpop.f32.mrb[0].mxu0
    %v885 = vadd.f32 0.0, %v884
    %v886 = vpop.f32.mrb[0].mxu0
    %887 = vdwg.mxu0
    %v888 = vadd.f32 %v793, %v880
    %v889 = vadd.f32 %v798, %v885
    %v890 = vld [vmem:[#allocation9] sm:$0x1]
    %v892 = vlaneseq
    %v893 = vshrl.u32 %v892, 7
    %v894 = vsub.s32 0, %v893
    %v895 = vrot.slane %v890, %v894
    %v897 = vadd.f32 %v888, %v895
    %v898 = vadd.f32 %v889, %v895
    %v899 = vmax.f32 %v897, 0.0
    %v900 = vmax.f32 %v898, 0.0
    %vm901 = vcmask 31744
    %902 = vst.msk [vmem:[%s7] sm:$0xff] %vm901, %v899
    %vm903 = vcmask 25600
    %904 = vst.msk [vmem:[%s7 + $0x8] sm:$0x3] %vm903, %v900
    %s905 = scalar_lea.vmem %s0, 16
    %v906 = vld [vmem:[%s905] sm:$0xff]
    %v907 = vld [vmem:[%s905 + $0x8] sm:$0xff]
    %v908 = vld [vmem:[#allocation2] sm:$0xff]
    %v909 = vld [vmem:[%s91] sm:$0xff]
    %v912 = vrot.slane %v906, 1
    %v913 = vrot.slane %v907, 1
    %v914 = vsel %vm95, %v912, %v913
    %v915 = vsel %vm99, %v914, 0
    %v917 = vsel %vm99, %v913, 0
    %919 = vmatprep.subr.mxu0 0.0
    %920 = vmatpush1.msra.mxu0 %v909
    %921 = vmatprep.subr.mxu0 0.0
    %922 = vmatpush1.msra.mxu0 0.0
    %923 = vmatprep.subr.mxu0 0.0
    %924 = vmatpush1.msra.mxu0 0.0
    %925 = vmatprep.subr.mxu0 0.0
    %926 = vmatpush1.msra.mxu0 0.0
    %927 = vmatprep.subr.mxu0 0.0
    %928 = vmatpush1.msra.mxu0 0.0
    %929 = vmatprep.subr.mxu0 0.0
    %930 = vmatpush1.msra.mxu0 0.0
    %931 = vmatprep.subr.mxu0 0.0
    %932 = vmatpush1.msra.mxu0 0.0
    %933 = vmatprep.subr.mxu0 0.0
    %934 = vmatpush1.msra.mxu0 0.0
    %935 = vmatprep.subr.mxu0 0.0
    %936 = vmatpush1.msra.mxu0 0.0
    %937 = vmatprep.subr.mxu0 0.0
    %938 = vmatpush1.msra.mxu0 0.0
    %939 = vmatprep.subr.mxu0 0.0
    %940 = vmatpush1.msra.mxu0 0.0
    %941 = vmatprep.subr.mxu0 0.0
    %942 = vmatpush1.msra.mxu0 0.0
    %943 = vmatprep.subr.mxu0 0.0
    %944 = vmatpush1.msra.mxu0 0.0
    %945 = vmatprep.subr.mxu0 0.0
    %946 = vmatpush1.msra.mxu0 0.0
    %947 = vmatprep.subr.mxu0 0.0
    %948 = vmatpush1.msra.mxu0 0.0
    %949 = vmatprep.subr.mxu0 0.0
    %950 = vmatpush1.msra.mxu0 0.0
    %951 = vmatprep.subr.mxu0 0.0
    %952 = vmatpush1.msra.mxu0 0.0
    %953 = vmatprep.subr.mxu0 0.0
    %954 = vmatpush1.msra.mxu0 0.0
    %955 = vmatprep.subr.mxu0 0.0
    %956 = vmatpush1.msra.mxu0 0.0
    %957 = vmatprep.subr.mxu0 0.0
    %958 = vmatpush1.msra.mxu0 0.0
    %959 = vmatprep.subr.mxu0 0.0
    %960 = vmatpush1.msra.mxu0 0.0
    %961 = vmatprep.subr.mxu0 0.0
    %962 = vmatpush1.msra.mxu0 0.0
    %963 = vmatprep.subr.mxu0 0.0
    %964 = vmatpush1.msra.mxu0 0.0
    %965 = vmatprep.subr.mxu0 0.0
    %966 = vmatpush1.msra.mxu0 0.0
    %967 = vmatprep.subr.mxu0 0.0
    %968 = vmatpush1.msra.mxu0 0.0
    %969 = vmatprep.subr.mxu0 0.0
    %970 = vmatpush1.msra.mxu0 0.0
    %971 = vmatprep.subr.mxu0 0.0
    %972 = vmatpush1.msra.mxu0 0.0
    %973 = vmatprep.subr.mxu0 0.0
    %974 = vmatpush1.msra.mxu0 0.0
    %975 = vmatprep.subr.mxu0 0.0
    %976 = vmatpush1.msra.mxu0 0.0
    %977 = vmatprep.subr.mxu0 0.0
    %978 = vmatpush1.msra.mxu0 0.0
    %979 = vmatprep.subr.mxu0 0.0
    %980 = vmatpush1.msra.mxu0 0.0
    %981 = vmatprep.subr.mxu0 0.0
    %982 = vmatpush1.msra.mxu0 0.0
    %983 = vmatprep.mubr.f32.mxu0 0.0
    %984 = vmatmul.mubr.f32.gmra.mrb[0].mxu0 %v915
    %v985 = vpop.f32.mrb[0].mxu0
    %v986 = vadd.f32 0.0, %v985
    %v987 = vpop.f32.mrb[0].mxu0
    %988 = vmatprep.mubr.f32.mxu0 0.0
    %989 = vmatmul.mubr.f32.gmra.mrb[0].mxu0 %v917
    %v990 = vpop.f32.mrb[0].mxu0
    %v991 = vadd.f32 0.0, %v990
    %v992 = vpop.f32.mrb[0].mxu0
    %993 = vdwg.mxu0
    %v994 = vsel %vm99, %v906, 0
    %v996 = vsel %vm99, %v907, 0
    %998 = vmatprep.subr.mxu0 0.0
    %999 = vmatpush1.msra.mxu0 %v908
    %1000 = vmatprep.subr.mxu0 0.0
    %1001 = vmatpush1.msra.mxu0 0.0
    %1002 = vmatprep.subr.mxu0 0.0
    %1003 = vmatpush1.msra.mxu0 0.0
    %1004 = vmatprep.subr.mxu0 0.0
    %1005 = vmatpush1.msra.mxu0 0.0
    %1006 = vmatprep.subr.mxu0 0.0
    %1007 = vmatpush1.msra.mxu0 0.0
    %1008 = vmatprep.subr.mxu0 0.0
    %1009 = vmatpush1.msra.mxu0 0.0
    %1010 = vmatprep.subr.mxu0 0.0
    %1011 = vmatpush1.msra.mxu0 0.0
    %1012 = vmatprep.subr.mxu0 0.0
    %1013 = vmatpush1.msra.mxu0 0.0
    %1014 = vmatprep.subr.mxu0 0.0
    %1015 = vmatpush1.msra.mxu0 0.0
    %1016 = vmatprep.subr.mxu0 0.0
    %1017 = vmatpush1.msra.mxu0 0.0
    %1018 = vmatprep.subr.mxu0 0.0
    %1019 = vmatpush1.msra.mxu0 0.0
    %1020 = vmatprep.subr.mxu0 0.0
    %1021 = vmatpush1.msra.mxu0 0.0
    %1022 = vmatprep.subr.mxu0 0.0
    %1023 = vmatpush1.msra.mxu0 0.0
    %1024 = vmatprep.subr.mxu0 0.0
    %1025 = vmatpush1.msra.mxu0 0.0
    %1026 = vmatprep.subr.mxu0 0.0
    %1027 = vmatpush1.msra.mxu0 0.0
    %1028 = vmatprep.subr.mxu0 0.0
    %1029 = vmatpush1.msra.mxu0 0.0
    %1030 = vmatprep.subr.mxu0 0.0
    %1031 = vmatpush1.msra.mxu0 0.0
    %1032 = vmatprep.subr.mxu0 0.0
    %1033 = vmatpush1.msra.mxu0 0.0
    %1034 = vmatprep.subr.mxu0 0.0
    %1035 = vmatpush1.msra.mxu0 0.0
    %1036 = vmatprep.subr.mxu0 0.0
    %1037 = vmatpush1.msra.mxu0 0.0
    %1038 = vmatprep.subr.mxu0 0.0
    %1039 = vmatpush1.msra.mxu0 0.0
    %1040 = vmatprep.subr.mxu0 0.0
    %1041 = vmatpush1.msra.mxu0 0.0
    %1042 = vmatprep.subr.mxu0 0.0
    %1043 = vmatpush1.msra.mxu0 0.0
    %1044 = vmatprep.subr.mxu0 0.0
    %1045 = vmatpush1.msra.mxu0 0.0
    %1046 = vmatprep.subr.mxu0 0.0
    %1047 = vmatpush1.msra.mxu0 0.0
    %1048 = vmatprep.subr.mxu0 0.0
    %1049 = vmatpush1.msra.mxu0 0.0
    %1050 = vmatprep.subr.mxu0 0.0
    %1051 = vmatpush1.msra.mxu0 0.0
    %1052 = vmatprep.subr.mxu0 0.0
    %1053 = vmatpush1.msra.mxu0 0.0
    %1054 = vmatprep.subr.mxu0 0.0
    %1055 = vmatpush1.msra.mxu0 0.0
    %1056 = vmatprep.subr.mxu0 0.0
    %1057 = vmatpush1.msra.mxu0 0.0
    %1058 = vmatprep.subr.mxu0 0.0
    %1059 = vmatpush1.msra.mxu0 0.0
    %1060 = vmatprep.subr.mxu0 0.0
    %1061 = vmatpush1.msra.mxu0 0.0
    %1062 = vmatprep.mubr.f32.mxu0 0.0
    %1063 = vmatmul.mubr.f32.gmra.mrb[0].mxu0 %v994
    %v1064 = vpop.f32.mrb[0].mxu0
    %v1065 = vadd.f32 %v986, %v1064
    %v1066 = vpop.f32.mrb[0].mxu0
    %1067 = vmatprep.mubr.f32.mxu0 0.0
    %1068 = vmatmul.mubr.f32.gmra.mrb[0].mxu0 %v996
    %v1069 = vpop.f32.mrb[0].mxu0
    %v1070 = vadd.f32 %v991, %v1069
    %v1071 = vpop.f32.mrb[0].mxu0
    %1072 = vdwg.mxu0
    %v1073 = vld [vmem:[%s258] sm:$0xff]
    %v1074 = vrot.slane %v906, 2
    %v1075 = vrot.slane %v907, 2
    %v1076 = vsel %vm260, %v1074, %v1075
    %v1077 = vsel %vm99, %v1076, 0
    %v1079 = vsel %vm99, %v1075, 0
    %1081 = vmatprep.subr.mxu0 0.0
    %1082 = vmatpush1.msra.mxu0 %v1073
    %1083 = vmatprep.subr.mxu0 0.0
    %1084 = vmatpush1.msra.mxu0 0.0
    %1085 = vmatprep.subr.mxu0 0.0
    %1086 = vmatpush1.msra.mxu0 0.0
    %1087 = vmatprep.subr.mxu0 0.0
    %1088 = vmatpush1.msra.mxu0 0.0
    %1089 = vmatprep.subr.mxu0 0.0
    %1090 = vmatpush1.msra.mxu0 0.0
    %1091 = vmatprep.subr.mxu0 0.0
    %1092 = vmatpush1.msra.mxu0 0.0
    %1093 = vmatprep.subr.mxu0 0.0
    %1094 = vmatpush1.msra.mxu0 0.0
    %1095 = vmatprep.subr.mxu0 0.0
    %1096 = vmatpush1.msra.mxu0 0.0
    %1097 = vmatprep.subr.mxu0 0.0
    %1098 = vmatpush1.msra.mxu0 0.0
    %1099 = vmatprep.subr.mxu0 0.0
    %1100 = vmatpush1.msra.mxu0 0.0
    %1101 = vmatprep.subr.mxu0 0.0
    %1102 = vmatpush1.msra.mxu0 0.0
    %1103 = vmatprep.subr.mxu0 0.0
    %1104 = vmatpush1.msra.mxu0 0.0
    %1105 = vmatprep.subr.mxu0 0.0
    %1106 = vmatpush1.msra.mxu0 0.0
    %1107 = vmatprep.subr.mxu0 0.0
    %1108 = vmatpush1.msra.mxu0 0.0
    %1109 = vmatprep.subr.mxu0 0.0
    %1110 = vmatpush1.msra.mxu0 0.0
    %1111 = vmatprep.subr.mxu0 0.0
    %1112 = vmatpush1.msra.mxu0 0.0
    %1113 = vmatprep.subr.mxu0 0.0
    %1114 = vmatpush1.msra.mxu0 0.0
    %1115 = vmatprep.subr.mxu0 0.0
    %1116 = vmatpush1.msra.mxu0 0.0
    %1117 = vmatprep.subr.mxu0 0.0
    %1118 = vmatpush1.msra.mxu0 0.0
    %1119 = vmatprep.subr.mxu0 0.0
    %1120 = vmatpush1.msra.mxu0 0.0
    %1121 = vmatprep.subr.mxu0 0.0
    %1122 = vmatpush1.msra.mxu0 0.0
    %1123 = vmatprep.subr.mxu0 0.0
    %1124 = vmatpush1.msra.mxu0 0.0
    %1125 = vmatprep.subr.mxu0 0.0
    %1126 = vmatpush1.msra.mxu0 0.0
    %1127 = vmatprep.subr.mxu0 0.0
    %1128 = vmatpush1.msra.mxu0 0.0
    %1129 = vmatprep.subr.mxu0 0.0
    %1130 = vmatpush1.msra.mxu0 0.0
    %1131 = vmatprep.subr.mxu0 0.0
    %1132 = vmatpush1.msra.mxu0 0.0
    %1133 = vmatprep.subr.mxu0 0.0
    %1134 = vmatpush1.msra.mxu0 0.0
    %1135 = vmatprep.subr.mxu0 0.0
    %1136 = vmatpush1.msra.mxu0 0.0
    %1137 = vmatprep.subr.mxu0 0.0
    %1138 = vmatpush1.msra.mxu0 0.0
    %1139 = vmatprep.subr.mxu0 0.0
    %1140 = vmatpush1.msra.mxu0 0.0
    %1141 = vmatprep.subr.mxu0 0.0
    %1142 = vmatpush1.msra.mxu0 0.0
    %1143 = vmatprep.subr.mxu0 0.0
    %1144 = vmatpush1.msra.mxu0 0.0
    %1145 = vmatprep.mubr.f32.mxu0 0.0
    %1146 = vmatmul.mubr.f32.gmra.mrb[0].mxu0 %v1077
    %v1147 = vpop.f32.mrb[0].mxu0
    %v1148 = vadd.f32 0.0, %v1147
    %v1149 = vpop.f32.mrb[0].mxu0
    %1150 = vmatprep.mubr.f32.mxu0 0.0
    %1151 = vmatmul.mubr.f32.gmra.mrb[0].mxu0 %v1079
    %v1152 = vpop.f32.mrb[0].mxu0
    %v1153 = vadd.f32 0.0, %v1152
    %v1154 = vpop.f32.mrb[0].mxu0
    %1155 = vdwg.mxu0
    %v1156 = vadd.f32 %v1065, %v1148
    %v1157 = vadd.f32 %v1070, %v1153
    %v1158 = vld [vmem:[#allocation4] sm:$0x1]
    %v1160 = vlaneseq
    %v1161 = vshrl.u32 %v1160, 7
    %v1162 = vsub.s32 0, %v1161
    %v1163 = vrot.slane %v1158, %v1162
    %v1165 = vadd.f32 %v1156, %v1163
    %v1166 = vadd.f32 %v1157, %v1163
    %v1167 = vmax.f32 %v1165, 0.0
    %v1168 = vmax.f32 %v1166, 0.0
    %v1169 = vld [vmem:[#allocation6] sm:$0x3f]
    %v1170 = vld [vmem:[%s357] sm:$0x3f]
    %v1173 = vrot.slane %v1167, 1
    %v1174 = vrot.slane %v1168, 1
    %v1175 = vsel %vm95, %v1173, %v1174
    %v1176 = vsel %vm364, %v1175, 0
    %v1178 = vsel %vm364, %v1174, 0
    %v1181 = vsel %vm260, %v1170, 0
    %1183 = vmatprep.subr.mxu0 0.0
    %1184 = vmatpush1.msra.mxu0 %v1181
    %1185 = vmatprep.subr.mxu0 0.0
    %1186 = vmatpush1.msra.mxu0 0.0
    %1187 = vmatprep.subr.mxu0 0.0
    %1188 = vmatpush1.msra.mxu0 0.0
    %1189 = vmatprep.subr.mxu0 0.0
    %1190 = vmatpush1.msra.mxu0 0.0
    %1191 = vmatprep.subr.mxu0 0.0
    %1192 = vmatpush1.msra.mxu0 0.0
    %1193 = vmatprep.subr.mxu0 0.0
    %1194 = vmatpush1.msra.mxu0 0.0
    %1195 = vmatprep.subr.mxu0 0.0
    %1196 = vmatpush1.msra.mxu0 0.0
    %1197 = vmatprep.subr.mxu0 0.0
    %1198 = vmatpush1.msra.mxu0 0.0
    %1199 = vmatprep.subr.mxu0 0.0
    %1200 = vmatpush1.msra.mxu0 0.0
    %1201 = vmatprep.subr.mxu0 0.0
    %1202 = vmatpush1.msra.mxu0 0.0
    %1203 = vmatprep.subr.mxu0 0.0
    %1204 = vmatpush1.msra.mxu0 0.0
    %1205 = vmatprep.subr.mxu0 0.0
    %1206 = vmatpush1.msra.mxu0 0.0
    %1207 = vmatprep.subr.mxu0 0.0
    %1208 = vmatpush1.msra.mxu0 0.0
    %1209 = vmatprep.subr.mxu0 0.0
    %1210 = vmatpush1.msra.mxu0 0.0
    %1211 = vmatprep.subr.mxu0 0.0
    %1212 = vmatpush1.msra.mxu0 0.0
    %1213 = vmatprep.subr.mxu0 0.0
    %1214 = vmatpush1.msra.mxu0 0.0
    %1215 = vmatprep.subr.mxu0 0.0
    %1216 = vmatpush1.msra.mxu0 0.0
    %1217 = vmatprep.subr.mxu0 0.0
    %1218 = vmatpush1.msra.mxu0 0.0
    %1219 = vmatprep.subr.mxu0 0.0
    %1220 = vmatpush1.msra.mxu0 0.0
    %1221 = vmatprep.subr.mxu0 0.0
    %1222 = vmatpush1.msra.mxu0 0.0
    %1223 = vmatprep.subr.mxu0 0.0
    %1224 = vmatpush1.msra.mxu0 0.0
    %1225 = vmatprep.subr.mxu0 0.0
    %1226 = vmatpush1.msra.mxu0 0.0
    %1227 = vmatprep.subr.mxu0 0.0
    %1228 = vmatpush1.msra.mxu0 0.0
    %1229 = vmatprep.subr.mxu0 0.0
    %1230 = vmatpush1.msra.mxu0 0.0
    %1231 = vmatprep.subr.mxu0 0.0
    %1232 = vmatpush1.msra.mxu0 0.0
    %1233 = vmatprep.subr.mxu0 0.0
    %1234 = vmatpush1.msra.mxu0 0.0
    %1235 = vmatprep.subr.mxu0 0.0
    %1236 = vmatpush1.msra.mxu0 0.0
    %1237 = vmatprep.subr.mxu0 0.0
    %1238 = vmatpush1.msra.mxu0 0.0
    %1239 = vmatprep.subr.mxu0 0.0
    %1240 = vmatpush1.msra.mxu0 0.0
    %1241 = vmatprep.subr.mxu0 0.0
    %1242 = vmatpush1.msra.mxu0 0.0
    %1243 = vmatprep.subr.mxu0 0.0
    %1244 = vmatpush1.msra.mxu0 0.0
    %1245 = vmatprep.subr.mxu0 0.0
    %1246 = vmatpush1.msra.mxu0 0.0
    %1247 = vmatprep.mubr.f32.mxu0 0.0
    %1248 = vmatmul.mubr.f32.gmra.mrb[0].mxu0 %v1176
    %v1249 = vpop.f32.mrb[0].mxu0
    %v1250 = vadd.f32 0.0, %v1249
    %v1251 = vpop.f32.mrb[0].mxu0
    %1252 = vmatprep.mubr.f32.mxu0 0.0
    %1253 = vmatmul.mubr.f32.gmra.mrb[0].mxu0 %v1178
    %v1254 = vpop.f32.mrb[0].mxu0
    %v1255 = vadd.f32 0.0, %v1254
    %v1256 = vpop.f32.mrb[0].mxu0
    %1257 = vdwg.mxu0
    %v1258 = vsel %vm364, %v1167, 0
    %v1260 = vsel %vm364, %v1168, 0
    %v1263 = vsel %vm260, %v1169, 0
    %1265 = vmatprep.subr.mxu0 0.0
    %1266 = vmatpush1.msra.mxu0 %v1263
    %1267 = vmatprep.subr.mxu0 0.0
    %1268 = vmatpush1.msra.mxu0 0.0
    %1269 = vmatprep.subr.mxu0 0.0
    %1270 = vmatpush1.msra.mxu0 0.0
    %1271 = vmatprep.subr.mxu0 0.0
    %1272 = vmatpush1.msra.mxu0 0.0
    %1273 = vmatprep.subr.mxu0 0.0
    %1274 = vmatpush1.msra.mxu0 0.0
    %1275 = vmatprep.subr.mxu0 0.0
    %1276 = vmatpush1.msra.mxu0 0.0
    %1277 = vmatprep.subr.mxu0 0.0
    %1278 = vmatpush1.msra.mxu0 0.0
    %1279 = vmatprep.subr.mxu0 0.0
    %1280 = vmatpush1.msra.mxu0 0.0
    %1281 = vmatprep.subr.mxu0 0.0
    %1282 = vmatpush1.msra.mxu0 0.0
    %1283 = vmatprep.subr.mxu0 0.0
    %1284 = vmatpush1.msra.mxu0 0.0
    %1285 = vmatprep.subr.mxu0 0.0
    %1286 = vmatpush1.msra.mxu0 0.0
    %1287 = vmatprep.subr.mxu0 0.0
    %1288 = vmatpush1.msra.mxu0 0.0
    %1289 = vmatprep.subr.mxu0 0.0
    %1290 = vmatpush1.msra.mxu0 0.0
    %1291 = vmatprep.subr.mxu0 0.0
    %1292 = vmatpush1.msra.mxu0 0.0
    %1293 = vmatprep.subr.mxu0 0.0
    %1294 = vmatpush1.msra.mxu0 0.0
    %1295 = vmatprep.subr.mxu0 0.0
    %1296 = vmatpush1.msra.mxu0 0.0
    %1297 = vmatprep.subr.mxu0 0.0
    %1298 = vmatpush1.msra.mxu0 0.0
    %1299 = vmatprep.subr.mxu0 0.0
    %1300 = vmatpush1.msra.mxu0 0.0
    %1301 = vmatprep.subr.mxu0 0.0
    %1302 = vmatpush1.msra.mxu0 0.0
    %1303 = vmatprep.subr.mxu0 0.0
    %1304 = vmatpush1.msra.mxu0 0.0
    %1305 = vmatprep.subr.mxu0 0.0
    %1306 = vmatpush1.msra.mxu0 0.0
    %1307 = vmatprep.subr.mxu0 0.0
    %1308 = vmatpush1.msra.mxu0 0.0
    %1309 = vmatprep.subr.mxu0 0.0
    %1310 = vmatpush1.msra.mxu0 0.0
    %1311 = vmatprep.subr.mxu0 0.0
    %1312 = vmatpush1.msra.mxu0 0.0
    %1313 = vmatprep.subr.mxu0 0.0
    %1314 = vmatpush1.msra.mxu0 0.0
    %1315 = vmatprep.subr.mxu0 0.0
    %1316 = vmatpush1.msra.mxu0 0.0
    %1317 = vmatprep.subr.mxu0 0.0
    %1318 = vmatpush1.msra.mxu0 0.0
    %1319 = vmatprep.subr.mxu0 0.0
    %1320 = vmatpush1.msra.mxu0 0.0
    %1321 = vmatprep.subr.mxu0 0.0
    %1322 = vmatpush1.msra.mxu0 0.0
    %1323 = vmatprep.subr.mxu0 0.0
    %1324 = vmatpush1.msra.mxu0 0.0
    %1325 = vmatprep.subr.mxu0 0.0
    %1326 = vmatpush1.msra.mxu0 0.0
    %1327 = vmatprep.subr.mxu0 0.0
    %1328 = vmatpush1.msra.mxu0 0.0
    %1329 = vmatprep.mubr.f32.mxu0 0.0
    %1330 = vmatmul.mubr.f32.gmra.mrb[0].mxu0 %v1258
    %v1331 = vpop.f32.mrb[0].mxu0
    %v1332 = vadd.f32 %v1250, %v1331
    %v1333 = vpop.f32.mrb[0].mxu0
    %1334 = vmatprep.mubr.f32.mxu0 0.0
    %1335 = vmatmul.mubr.f32.gmra.mrb[0].mxu0 %v1260
    %v1336 = vpop.f32.mrb[0].mxu0
    %v1337 = vadd.f32 %v1255, %v1336
    %v1338 = vpop.f32.mrb[0].mxu0
    %1339 = vdwg.mxu0
    %v1340 = vld [vmem:[%s529] sm:$0x3f]
    %v1341 = vrot.slane %v1167, 2
    %v1342 = vrot.slane %v1168, 2
    %v1343 = vsel %vm260, %v1341, %v1342
    %v1344 = vsel %vm364, %v1343, 0
    %v1346 = vsel %vm364, %v1342, 0
    %v1349 = vsel %vm260, %v1340, 0
    %1351 = vmatprep.subr.mxu0 0.0
    %1352 = vmatpush1.msra.mxu0 %v1349
    %1353 = vmatprep.subr.mxu0 0.0
    %1354 = vmatpush1.msra.mxu0 0.0
    %1355 = vmatprep.subr.mxu0 0.0
    %1356 = vmatpush1.msra.mxu0 0.0
    %1357 = vmatprep.subr.mxu0 0.0
    %1358 = vmatpush1.msra.mxu0 0.0
    %1359 = vmatprep.subr.mxu0 0.0
    %1360 = vmatpush1.msra.mxu0 0.0
    %1361 = vmatprep.subr.mxu0 0.0
    %1362 = vmatpush1.msra.mxu0 0.0
    %1363 = vmatprep.subr.mxu0 0.0
    %1364 = vmatpush1.msra.mxu0 0.0
    %1365 = vmatprep.subr.mxu0 0.0
    %1366 = vmatpush1.msra.mxu0 0.0
    %1367 = vmatprep.subr.mxu0 0.0
    %1368 = vmatpush1.msra.mxu0 0.0
    %1369 = vmatprep.subr.mxu0 0.0
    %1370 = vmatpush1.msra.mxu0 0.0
    %1371 = vmatprep.subr.mxu0 0.0
    %1372 = vmatpush1.msra.mxu0 0.0
    %1373 = vmatprep.subr.mxu0 0.0
    %1374 = vmatpush1.msra.mxu0 0.0
    %1375 = vmatprep.subr.mxu0 0.0
    %1376 = vmatpush1.msra.mxu0 0.0
    %1377 = vmatprep.subr.mxu0 0.0
    %1378 = vmatpush1.msra.mxu0 0.0
    %1379 = vmatprep.subr.mxu0 0.0
    %1380 = vmatpush1.msra.mxu0 0.0
    %1381 = vmatprep.subr.mxu0 0.0
    %1382 = vmatpush1.msra.mxu0 0.0
    %1383 = vmatprep.subr.mxu0 0.0
    %1384 = vmatpush1.msra.mxu0 0.0
    %1385 = vmatprep.subr.mxu0 0.0
    %1386 = vmatpush1.msra.mxu0 0.0
    %1387 = vmatprep.subr.mxu0 0.0
    %1388 = vmatpush1.msra.mxu0 0.0
    %1389 = vmatprep.subr.mxu0 0.0
    %1390 = vmatpush1.msra.mxu0 0.0
    %1391 = vmatprep.subr.mxu0 0.0
    %1392 = vmatpush1.msra.mxu0 0.0
    %1393 = vmatprep.subr.mxu0 0.0
    %1394 = vmatpush1.msra.mxu0 0.0
    %1395 = vmatprep.subr.mxu0 0.0
    %1396 = vmatpush1.msra.mxu0 0.0
    %1397 = vmatprep.subr.mxu0 0.0
    %1398 = vmatpush1.msra.mxu0 0.0
    %1399 = vmatprep.subr.mxu0 0.0
    %1400 = vmatpush1.msra.mxu0 0.0
    %1401 = vmatprep.subr.mxu0 0.0
    %1402 = vmatpush1.msra.mxu0 0.0
    %1403 = vmatprep.subr.mxu0 0.0
    %1404 = vmatpush1.msra.mxu0 0.0
    %1405 = vmatprep.subr.mxu0 0.0
    %1406 = vmatpush1.msra.mxu0 0.0
    %1407 = vmatprep.subr.mxu0 0.0
    %1408 = vmatpush1.msra.mxu0 0.0
    %1409 = vmatprep.subr.mxu0 0.0
    %1410 = vmatpush1.msra.mxu0 0.0
    %1411 = vmatprep.subr.mxu0 0.0
    %1412 = vmatpush1.msra.mxu0 0.0
    %1413 = vmatprep.subr.mxu0 0.0
    %1414 = vmatpush1.msra.mxu0 0.0
    %1415 = vmatprep.mubr.f32.mxu0 0.0
    %1416 = vmatmul.mubr.f32.gmra.mrb[0].mxu0 %v1344
    %v1417 = vpop.f32.mrb[0].mxu0
    %v1418 = vadd.f32 0.0, %v1417
    %v1419 = vpop.f32.mrb[0].mxu0
    %1420 = vmatprep.mubr.f32.mxu0 0.0
    %1421 = vmatmul.mubr.f32.gmra.mrb[0].mxu0 %v1346
    %v1422 = vpop.f32.mrb[0].mxu0
    %v1423 = vadd.f32 0.0, %v1422
    %v1424 = vpop.f32.mrb[0].mxu0
    %1425 = vdwg.mxu0
    %v1426 = vadd.f32 %v1332, %v1418
    %v1427 = vadd.f32 %v1337, %v1423
    %v1428 = vld [vmem:[#allocation7] sm:$0x1]
    %v1430 = vlaneseq
    %v1431 = vshrl.u32 %v1430, 7
    %v1432 = vsub.s32 0, %v1431
    %v1433 = vrot.slane %v1428, %v1432
    %v1435 = vadd.f32 %v1426, %v1433
    %v1436 = vadd.f32 %v1427, %v1433
    %v1437 = vmax.f32 %v1435, 0.0
    %v1438 = vmax.f32 %v1436, 0.0
    %v1439 = vld [vmem:[%s5] sm:$0x3f]
    %v1440 = vld [vmem:[%s630] sm:$0x3f]
    %v1443 = vrot.slane %v1437, 1
    %v1444 = vrot.slane %v1438, 1
    %v1445 = vsel %vm95, %v1443, %v1444
    %v1446 = vsel %vm364, %v1445, 0
    %v1448 = vsel %vm364, %v1444, 0
    %v1451 = vsel %vm260, %v1440, 0
    %1453 = vmatprep.subr.mxu0 0.0
    %1454 = vmatpush1.msra.mxu0 %v1451
    %1455 = vmatprep.subr.mxu0 0.0
    %1456 = vmatpush1.msra.mxu0 0.0
    %1457 = vmatprep.subr.mxu0 0.0
    %1458 = vmatpush1.msra.mxu0 0.0
    %1459 = vmatprep.subr.mxu0 0.0
    %1460 = vmatpush1.msra.mxu0 0.0
    %1461 = vmatprep.subr.mxu0 0.0
    %1462 = vmatpush1.msra.mxu0 0.0
    %1463 = vmatprep.subr.mxu0 0.0
    %1464 = vmatpush1.msra.mxu0 0.0
    %1465 = vmatprep.subr.mxu0 0.0
    %1466 = vmatpush1.msra.mxu0 0.0
    %1467 = vmatprep.subr.mxu0 0.0
    %1468 = vmatpush1.msra.mxu0 0.0
    %1469 = vmatprep.subr.mxu0 0.0
    %1470 = vmatpush1.msra.mxu0 0.0
    %1471 = vmatprep.subr.mxu0 0.0
    %1472 = vmatpush1.msra.mxu0 0.0
    %1473 = vmatprep.subr.mxu0 0.0
    %1474 = vmatpush1.msra.mxu0 0.0
    %1475 = vmatprep.subr.mxu0 0.0
    %1476 = vmatpush1.msra.mxu0 0.0
    %1477 = vmatprep.subr.mxu0 0.0
    %1478 = vmatpush1.msra.mxu0 0.0
    %1479 = vmatprep.subr.mxu0 0.0
    %1480 = vmatpush1.msra.mxu0 0.0
    %1481 = vmatprep.subr.mxu0 0.0
    %1482 = vmatpush1.msra.mxu0 0.0
    %1483 = vmatprep.subr.mxu0 0.0
    %1484 = vmatpush1.msra.mxu0 0.0
    %1485 = vmatprep.subr.mxu0 0.0
    %1486 = vmatpush1.msra.mxu0 0.0
    %1487 = vmatprep.subr.mxu0 0.0
    %1488 = vmatpush1.msra.mxu0 0.0
    %1489 = vmatprep.subr.mxu0 0.0
    %1490 = vmatpush1.msra.mxu0 0.0
    %1491 = vmatprep.subr.mxu0 0.0
    %1492 = vmatpush1.msra.mxu0 0.0
    %1493 = vmatprep.subr.mxu0 0.0
    %1494 = vmatpush1.msra.mxu0 0.0
    %1495 = vmatprep.subr.mxu0 0.0
    %1496 = vmatpush1.msra.mxu0 0.0
    %1497 = vmatprep.subr.mxu0 0.0
    %1498 = vmatpush1.msra.mxu0 0.0
    %1499 = vmatprep.subr.mxu0 0.0
    %1500 = vmatpush1.msra.mxu0 0.0
    %1501 = vmatprep.subr.mxu0 0.0
    %1502 = vmatpush1.msra.mxu0 0.0
    %1503 = vmatprep.subr.mxu0 0.0
    %1504 = vmatpush1.msra.mxu0 0.0
    %1505 = vmatprep.subr.mxu0 0.0
    %1506 = vmatpush1.msra.mxu0 0.0
    %1507 = vmatprep.subr.mxu0 0.0
    %1508 = vmatpush1.msra.mxu0 0.0
    %1509 = vmatprep.subr.mxu0 0.0
    %1510 = vmatpush1.msra.mxu0 0.0
    %1511 = vmatprep.subr.mxu0 0.0
    %1512 = vmatpush1.msra.mxu0 0.0
    %1513 = vmatprep.subr.mxu0 0.0
    %1514 = vmatpush1.msra.mxu0 0.0
    %1515 = vmatprep.subr.mxu0 0.0
    %1516 = vmatpush1.msra.mxu0 0.0
    %1517 = vmatprep.mubr.f32.mxu0 0.0
    %1518 = vmatmul.mubr.f32.gmra.mrb[0].mxu0 %v1446
    %v1519 = vpop.f32.mrb[0].mxu0
    %v1520 = vadd.f32 0.0, %v1519
    %v1521 = vpop.f32.mrb[0].mxu0
    %1522 = vmatprep.mubr.f32.mxu0 0.0
    %1523 = vmatmul.mubr.f32.gmra.mrb[0].mxu0 %v1448
    %v1524 = vpop.f32.mrb[0].mxu0
    %v1525 = vadd.f32 0.0, %v1524
    %v1526 = vpop.f32.mrb[0].mxu0
    %1527 = vdwg.mxu0
    %v1528 = vsel %vm364, %v1437, 0
    %v1530 = vsel %vm364, %v1438, 0
    %v1533 = vsel %vm260, %v1439, 0
    %1535 = vmatprep.subr.mxu0 0.0
    %1536 = vmatpush1.msra.mxu0 %v1533
    %1537 = vmatprep.subr.mxu0 0.0
    %1538 = vmatpush1.msra.mxu0 0.0
    %1539 = vmatprep.subr.mxu0 0.0
    %1540 = vmatpush1.msra.mxu0 0.0
    %1541 = vmatprep.subr.mxu0 0.0
    %1542 = vmatpush1.msra.mxu0 0.0
    %1543 = vmatprep.subr.mxu0 0.0
    %1544 = vmatpush1.msra.mxu0 0.0
    %1545 = vmatprep.subr.mxu0 0.0
    %1546 = vmatpush1.msra.mxu0 0.0
    %1547 = vmatprep.subr.mxu0 0.0
    %1548 = vmatpush1.msra.mxu0 0.0
    %1549 = vmatprep.subr.mxu0 0.0
    %1550 = vmatpush1.msra.mxu0 0.0
    %1551 = vmatprep.subr.mxu0 0.0
    %1552 = vmatpush1.msra.mxu0 0.0
    %1553 = vmatprep.subr.mxu0 0.0
    %1554 = vmatpush1.msra.mxu0 0.0
    %1555 = vmatprep.subr.mxu0 0.0
    %1556 = vmatpush1.msra.mxu0 0.0
    %1557 = vmatprep.subr.mxu0 0.0
    %1558 = vmatpush1.msra.mxu0 0.0
    %1559 = vmatprep.subr.mxu0 0.0
    %1560 = vmatpush1.msra.mxu0 0.0
    %1561 = vmatprep.subr.mxu0 0.0
    %1562 = vmatpush1.msra.mxu0 0.0
    %1563 = vmatprep.subr.mxu0 0.0
    %1564 = vmatpush1.msra.mxu0 0.0
    %1565 = vmatprep.subr.mxu0 0.0
    %1566 = vmatpush1.msra.mxu0 0.0
    %1567 = vmatprep.subr.mxu0 0.0
    %1568 = vmatpush1.msra.mxu0 0.0
    %1569 = vmatprep.subr.mxu0 0.0
    %1570 = vmatpush1.msra.mxu0 0.0
    %1571 = vmatprep.subr.mxu0 0.0
    %1572 = vmatpush1.msra.mxu0 0.0
    %1573 = vmatprep.subr.mxu0 0.0
    %1574 = vmatpush1.msra.mxu0 0.0
    %1575 = vmatprep.subr.mxu0 0.0
    %1576 = vmatpush1.msra.mxu0 0.0
    %1577 = vmatprep.subr.mxu0 0.0
    %1578 = vmatpush1.msra.mxu0 0.0
    %1579 = vmatprep.subr.mxu0 0.0
    %1580 = vmatpush1.msra.mxu0 0.0
    %1581 = vmatprep.subr.mxu0 0.0
    %1582 = vmatpush1.msra.mxu0 0.0
    %1583 = vmatprep.subr.mxu0 0.0
    %1584 = vmatpush1.msra.mxu0 0.0
    %1585 = vmatprep.subr.mxu0 0.0
    %1586 = vmatpush1.msra.mxu0 0.0
    %1587 = vmatprep.subr.mxu0 0.0
    %1588 = vmatpush1.msra.mxu0 0.0
    %1589 = vmatprep.subr.mxu0 0.0
    %1590 = vmatpush1.msra.mxu0 0.0
    %1591 = vmatprep.subr.mxu0 0.0
    %1592 = vmatpush1.msra.mxu0 0.0
    %1593 = vmatprep.subr.mxu0 0.0
    %1594 = vmatpush1.msra.mxu0 0.0
    %1595 = vmatprep.subr.mxu0 0.0
    %1596 = vmatpush1.msra.mxu0 0.0
    %1597 = vmatprep.subr.mxu0 0.0
    %1598 = vmatpush1.msra.mxu0 0.0
    %1599 = vmatprep.mubr.f32.mxu0 0.0
    %1600 = vmatmul.mubr.f32.gmra.mrb[0].mxu0 %v1528
    %v1601 = vpop.f32.mrb[0].mxu0
    %v1602 = vadd.f32 %v1520, %v1601
    %v1603 = vpop.f32.mrb[0].mxu0
    %1604 = vmatprep.mubr.f32.mxu0 0.0
    %1605 = vmatmul.mubr.f32.gmra.mrb[0].mxu0 %v1530
    %v1606 = vpop.f32.mrb[0].mxu0
    %v1607 = vadd.f32 %v1525, %v1606
    %v1608 = vpop.f32.mrb[0].mxu0
    %1609 = vdwg.mxu0
    %v1610 = vld [vmem:[%s801] sm:$0x3f]
    %v1611 = vrot.slane %v1437, 2
    %v1612 = vrot.slane %v1438, 2
    %v1613 = vsel %vm260, %v1611, %v1612
    %v1614 = vsel %vm364, %v1613, 0
    %v1616 = vsel %vm364, %v1612, 0
    %v1619 = vsel %vm260, %v1610, 0
    %1621 = vmatprep.subr.mxu0 0.0
    %1622 = vmatpush1.msra.mxu0 %v1619
    %1623 = vmatprep.subr.mxu0 0.0
    %1624 = vmatpush1.msra.mxu0 0.0
    %1625 = vmatprep.subr.mxu0 0.0
    %1626 = vmatpush1.msra.mxu0 0.0
    %1627 = vmatprep.subr.mxu0 0.0
    %1628 = vmatpush1.msra.mxu0 0.0
    %1629 = vmatprep.subr.mxu0 0.0
    %1630 = vmatpush1.msra.mxu0 0.0
    %1631 = vmatprep.subr.mxu0 0.0
    %1632 = vmatpush1.msra.mxu0 0.0
    %1633 = vmatprep.subr.mxu0 0.0
    %1634 = vmatpush1.msra.mxu0 0.0
    %1635 = vmatprep.subr.mxu0 0.0
    %1636 = vmatpush1.msra.mxu0 0.0
    %1637 = vmatprep.subr.mxu0 0.0
    %1638 = vmatpush1.msra.mxu0 0.0
    %1639 = vmatprep.subr.mxu0 0.0
    %1640 = vmatpush1.msra.mxu0 0.0
    %1641 = vmatprep.subr.mxu0 0.0
    %1642 = vmatpush1.msra.mxu0 0.0
    %1643 = vmatprep.subr.mxu0 0.0
    %1644 = vmatpush1.msra.mxu0 0.0
    %1645 = vmatprep.subr.mxu0 0.0
    %1646 = vmatpush1.msra.mxu0 0.0
    %1647 = vmatprep.subr.mxu0 0.0
    %1648 = vmatpush1.msra.mxu0 0.0
    %1649 = vmatprep.subr.mxu0 0.0
    %1650 = vmatpush1.msra.mxu0 0.0
    %1651 = vmatprep.subr.mxu0 0.0
    %1652 = vmatpush1.msra.mxu0 0.0
    %1653 = vmatprep.subr.mxu0 0.0
    %1654 = vmatpush1.msra.mxu0 0.0
    %1655 = vmatprep.subr.mxu0 0.0
    %1656 = vmatpush1.msra.mxu0 0.0
    %1657 = vmatprep.subr.mxu0 0.0
    %1658 = vmatpush1.msra.mxu0 0.0
    %1659 = vmatprep.subr.mxu0 0.0
    %1660 = vmatpush1.msra.mxu0 0.0
    %1661 = vmatprep.subr.mxu0 0.0
    %1662 = vmatpush1.msra.mxu0 0.0
    %1663 = vmatprep.subr.mxu0 0.0
    %1664 = vmatpush1.msra.mxu0 0.0
    %1665 = vmatprep.subr.mxu0 0.0
    %1666 = vmatpush1.msra.mxu0 0.0
    %1667 = vmatprep.subr.mxu0 0.0
    %1668 = vmatpush1.msra.mxu0 0.0
    %1669 = vmatprep.subr.mxu0 0.0
    %1670 = vmatpush1.msra.mxu0 0.0
    %1671 = vmatprep.subr.mxu0 0.0
    %1672 = vmatpush1.msra.mxu0 0.0
    %1673 = vmatprep.subr.mxu0 0.0
    %1674 = vmatpush1.msra.mxu0 0.0
    %1675 = vmatprep.subr.mxu0 0.0
    %1676 = vmatpush1.msra.mxu0 0.0
    %1677 = vmatprep.subr.mxu0 0.0
    %1678 = vmatpush1.msra.mxu0 0.0
    %1679 = vmatprep.subr.mxu0 0.0
    %1680 = vmatpush1.msra.mxu0 0.0
    %1681 = vmatprep.subr.mxu0 0.0
    %1682 = vmatpush1.msra.mxu0 0.0
    %1683 = vmatprep.subr.mxu0 0.0
    %1684 = vmatpush1.msra.mxu0 0.0
    %1685 = vmatprep.mubr.f32.mxu0 0.0
    %1686 = vmatmul.mubr.f32.gmra.mrb[0].mxu0 %v1614
    %v1687 = vpop.f32.mrb[0].mxu0
    %v1688 = vadd.f32 0.0, %v1687
    %v1689 = vpop.f32.mrb[0].mxu0
    %1690 = vmatprep.mubr.f32.mxu0 0.0
    %1691 = vmatmul.mubr.f32.gmra.mrb[0].mxu0 %v1616
    %v1692 = vpop.f32.mrb[0].mxu0
    %v1693 = vadd.f32 0.0, %v1692
    %v1694 = vpop.f32.mrb[0].mxu0
    %1695 = vdwg.mxu0
    %v1696 = vadd.f32 %v1602, %v1688
    %v1697 = vadd.f32 %v1607, %v1693
    %v1698 = vld [vmem:[#allocation9] sm:$0x1]
    %v1700 = vlaneseq
    %v1701 = vshrl.u32 %v1700, 7
    %v1702 = vsub.s32 0, %v1701
    %v1703 = vrot.slane %v1698, %v1702
    %v1705 = vadd.f32 %v1696, %v1703
    %v1706 = vadd.f32 %v1697, %v1703
    %v1707 = vmax.f32 %v1705, 0.0
    %v1708 = vmax.f32 %v1706, 0.0
    %s1709 = scalar_lea.vmem %s7, 16
    %1710 = vst.msk [vmem:[%s1709] sm:$0xff] %vm901, %v1707
    %1711 = vst.msk [vmem:[%s1709 + $0x8] sm:$0x3] %vm903, %v1708
    // Predicated region
    $region50: #{mvae_forward.3} parent=1 // pred_check
      _
    $region51: #{mvae_forward.3} parent=1 // pred_check_branch
      %1713 = sbr.rel (0) target = $region53
    $region52: #{mvae_forward.3} parent=1 // pred_region
      _
    $region53: #{mvae_forward.3} parent=1 // pred_fallthru
      _
    // Predicated region
    $region54: #{mvae_forward.3} parent=1 // pred_check
      _
    $region55: #{mvae_forward.3} parent=1 // pred_check_branch
      %1715 = sbr.rel (0) target = $region57
    $region56: #{mvae_forward.3} parent=1 // pred_region
      _
    $region57: #{mvae_forward.3} parent=1 // pred_fallthru
      _
    %1716 = vsyncpa [#allocation3], 1
    %1717 = vsyncpa [#allocation5], 1
    %1718 = vsyncpa [#allocation8], 1

// kernel: mvae_forward.4
$region0: #{mvae_forward.4}
  #allocation0 [shape = 'u32[]', space=smem, size = 0x4, offset = 0x4, fixed_abs, tag = 'smem constant byte address 0x4 - core index']
  #allocation1 [shape = 'u32[144,128]{1,0:T(1,128)}', space=vmem, size = 0x12000, scoped, tag = 'internal scratch']
  %s0 = inlined_call_operand.vmem [shape: f32[2,40], index: 0, kind: input, shape index: {}]
  %s1 = inlined_call_operand.vmem [shape: f32[2,16], index: 1, kind: input, shape index: {}]
  %s2 = inlined_call_operand.vmem [shape: f32[2,1], index: 2, kind: input, shape index: {}]
  %s3 = inlined_call_operand.hbm [shape: f32[40,48], index: 3, kind: input, shape index: {}]
  %s4 = inlined_call_operand.hbm [shape: f32[1,48], index: 4, kind: input, shape index: {}]
  %s5 = inlined_call_operand.vmem [shape: f32[48,16], index: 5, kind: input, shape index: {}]
  %s6 = inlined_call_operand.hbm [shape: f32[1,16], index: 6, kind: input, shape index: {}]
  %s7 = inlined_call_operand.vmem [shape: f32[48,16], index: 7, kind: input, shape index: {}]
  %s8 = inlined_call_operand.hbm [shape: f32[1,16], index: 8, kind: input, shape index: {}]
  %s9 = inlined_call_operand.hbm [shape: f32[16,32], index: 9, kind: input, shape index: {}]
  %s10 = inlined_call_operand.hbm [shape: f32[1,32], index: 10, kind: input, shape index: {}]
  %s11 = inlined_call_operand.hbm [shape: f32[1,32], index: 11, kind: input, shape index: {}]
  %s12 = inlined_call_operand.vmem [shape: f32[32,384], index: 12, kind: input, shape index: {}]
  %s13 = inlined_call_operand.vmem [shape: f32[128,384], index: 13, kind: input, shape index: {}]
  %s14 = inlined_call_operand.hbm [shape: f32[1,384], index: 14, kind: input, shape index: {}]
  %s15 = inlined_call_operand.hbm [shape: f32[1,384], index: 15, kind: input, shape index: {}]
  %s16 = inlined_call_operand.hbm [shape: f32[128,384], index: 16, kind: input, shape index: {}]
  %s17 = inlined_call_operand.hbm [shape: f32[128,384], index: 17, kind: input, shape index: {}]
  %s18 = inlined_call_operand.hbm [shape: f32[1,384], index: 18, kind: input, shape index: {}]
  %s19 = inlined_call_operand.hbm [shape: f32[1,384], index: 19, kind: input, shape index: {}]
  %s20 = inlined_call_operand.hbm [shape: f32[128,384], index: 20, kind: input, shape index: {}]
  %s21 = inlined_call_operand.hbm [shape: f32[128,384], index: 21, kind: input, shape index: {}]
  %s22 = inlined_call_operand.hbm [shape: f32[1,384], index: 22, kind: input, shape index: {}]
  %s23 = inlined_call_operand.hbm [shape: f32[1,384], index: 23, kind: input, shape index: {}]
  %s24 = inlined_call_operand.hbm [shape: f32[2,16], index: 24, kind: output, shape index: {0}]
  %s25 = inlined_call_operand.hbm [shape: f32[2,16], index: 25, kind: output, shape index: {1}]
  %s26 = inlined_call_operand.vmem [shape: f32[8,2,128], index: 26, kind: output, shape index: {2}]
  %27 = xla_tuple %s24, %s25, %s26
  %s28 = sld [smem:[#allocation0]]
  $region190: #{mvae_forward.4} parent=0
    _
  %s30 = ssub.s32 1, %s28
  %s31 = scalar_select 0, %s30, %s28
  $region1: #{mvae_forward.4} parent=0
    #allocation2 [shape = 'u8[20480]{0}', space=vmem, size = 0x5000, scoped, tag = 'input window, operand 3, single buffered']
    #allocation3 [shape = 's32[1]{0}', space=sflag, size = 0x4, scoped, tag = 'scoped memory for mvae_forward.4']
    #allocation4 [shape = 's32[1]{0}', space=sflag, size = 0x4, scoped, tag = 'scoped memory for mvae_forward.4']
    #allocation5 [shape = 'u8[512]{0}', space=vmem, size = 0x400, scoped, tag = 'input window, operand 4, single buffered']
    #allocation6 [shape = 's32[1]{0}', space=sflag, size = 0x4, scoped, tag = 'scoped memory for mvae_forward.4']
    #allocation7 [shape = 'u8[512]{0}', space=vmem, size = 0x400, scoped, tag = 'input window, operand 6, single buffered']
    #allocation8 [shape = 'u8[512]{0}', space=vmem, size = 0x400, scoped, tag = 'input window, operand 8, single buffered']
    #allocation9 [shape = 's32[1]{0}', space=sflag, size = 0x4, scoped, tag = 'scoped memory for mvae_forward.4']
    #allocation10 [shape = 'u8[8192]{0}', space=vmem, size = 0x2000, scoped, tag = 'input window, operand 9, single buffered']
    #allocation11 [shape = 'u8[512]{0}', space=vmem, size = 0x400, scoped, tag = 'input window, operand 10, single buffered']
    #allocation12 [shape = 's32[1]{0}', space=sflag, size = 0x4, scoped, tag = 'scoped memory for mvae_forward.4']
    #allocation13 [shape = 'u8[512]{0}', space=vmem, size = 0x400, scoped, tag = 'input window, operand 11, single buffered']
    #allocation14 [shape = 'u8[1536]{0}', space=vmem, size = 0x800, scoped, tag = 'input window, operand 14, single buffered']
    #allocation15 [shape = 's32[1]{0}', space=sflag, size = 0x4, scoped, tag = 'scoped memory for mvae_forward.4']
    #allocation16 [shape = 'u8[1536]{0}', space=vmem, size = 0x800, scoped, tag = 'input window, operand 15, single buffered']
    #allocation17 [shape = 'u8[196608]{0}', space=vmem, size = 0x30000, scoped, tag = 'input window, operand 16, single buffered']
    #allocation18 [shape = 's32[1]{0}', space=sflag, size = 0x4, scoped, tag = 'scoped memory for mvae_forward.4']
    #allocation19 [shape = 'u8[196608]{0}', space=vmem, size = 0x30000, scoped, tag = 'input window, operand 17, single buffered']
    #allocation20 [shape = 'u8[1536]{0}', space=vmem, size = 0x800, scoped, tag = 'input window, operand 18, single buffered']
    #allocation21 [shape = 's32[1]{0}', space=sflag, size = 0x4, scoped, tag = 'scoped memory for mvae_forward.4']
    #allocation22 [shape = 'u8[1536]{0}', space=vmem, size = 0x800, scoped, tag = 'input window, operand 19, single buffered']
    #allocation23 [shape = 'u8[196608]{0}', space=vmem, size = 0x30000, scoped, tag = 'input window, operand 20, single buffered']
    #allocation24 [shape = 's32[1]{0}', space=sflag, size = 0x4, scoped, tag = 'scoped memory for mvae_forward.4']
    #allocation25 [shape = 'u8[196608]{0}', space=vmem, size = 0x30000, scoped, tag = 'input window, operand 21, single buffered']
    #allocation26 [shape = 'u8[1536]{0}', space=vmem, size = 0x800, scoped, tag = 'input window, operand 22, single buffered']
    #allocation27 [shape = 's32[1]{0}', space=sflag, size = 0x4, scoped, tag = 'scoped memory for mvae_forward.4']
    #allocation28 [shape = 'u8[1536]{0}', space=vmem, size = 0x800, scoped, tag = 'input window, operand 23, single buffered']
    #allocation29 [shape = 'u8[1024]{0}', space=vmem, size = 0x400, scoped, tag = 'output window, operand 0, single buffered']
    #allocation30 [shape = 'u8[1024]{0}', space=vmem, size = 0x400, scoped, tag = 'output window, operand 1, single buffered']
    #allocation31 [shape = 's32[1]{0}', space=sflag, size = 0x4, scoped, tag = 'scoped memory for mvae_forward.4']
    %32 = vsyncpa [#allocation3], 0
    %33 = vsyncpa [#allocation6], 0
    %34 = vsyncpa [#allocation9], 0
    %35 = vsyncpa [#allocation12], 0
    %36 = vsyncpa [#allocation15], 0
    %37 = vsyncpa [#allocation18], 0
    %38 = vsyncpa [#allocation21], 0
    %39 = vsyncpa [#allocation24], 0
    %40 = vsyncpa [#allocation27], 0
    %41 = vsyncpa [#allocation4], 0
    %42 = vsyncpa [#allocation31], 0
    // Predicated region
    $region2: #{mvae_forward.4} parent=1 // pred_check
      _
    $region3: #{mvae_forward.4} parent=1 // pred_check_branch
      %44 = sbr.rel (0) target = $region5
    $region4: #{mvae_forward.4} parent=1 // pred_region
      _
    $region5: #{mvae_forward.4} parent=1 // pred_fallthru
      _
    // Predicated region
    $region6: #{mvae_forward.4} parent=1 // pred_check
      _
    $region7: #{mvae_forward.4} parent=1 // pred_check_branch
      %46 = sbr.rel (0) target = $region9
    $region8: #{mvae_forward.4} parent=1 // pred_region
      _
    $region9: #{mvae_forward.4} parent=1 // pred_fallthru
      _
    // Predicated region
    $region10: #{mvae_forward.4} parent=1 // pred_check
      _
    $region11: #{mvae_forward.4} parent=1 // pred_check_branch
      %48 = sbr.rel (0) target = $region13
    $region12: #{mvae_forward.4} parent=1 // pred_region
      _
    $region13: #{mvae_forward.4} parent=1 // pred_fallthru
      _
    // Predicated region
    $region14: #{mvae_forward.4} parent=1 // pred_check
      _
    $region15: #{mvae_forward.4} parent=1 // pred_check_branch
      %50 = sbr.rel (0) target = $region17
    $region16: #{mvae_forward.4} parent=1 // pred_region
      %s52 = ssub.s32 640, 640
      %53 = vsyncadd [#allocation3], %s52
      %s54 = sshll.u32 [#allocation2], 4
      %s55 = int_to_ptr.vmem [resolvable:$true] %s54
      %60 = dma.hbm_to_vmem [thread:$0]  %s3, 640, %s55, [#allocation3], 128, 128, 8
    $region17: #{mvae_forward.4} parent=1 // pred_fallthru
      _
    // Predicated region
    $region18: #{mvae_forward.4} parent=1 // pred_check
      _
    $region19: #{mvae_forward.4} parent=1 // pred_check_branch
      %62 = sbr.rel (0) target = $region21
    $region20: #{mvae_forward.4} parent=1 // pred_region
      %s64 = ssub.s32 16, 16
      %65 = vsyncadd [#allocation6], %s64
      %s67 = sshll.u32 [#allocation5], 4
      %s68 = int_to_ptr.vmem [resolvable:$true] %s67
      %70 = dma.hbm_to_vmem [thread:$0]  %s4, 16, %s68, [#allocation6]
    $region21: #{mvae_forward.4} parent=1 // pred_fallthru
      _
    // Predicated region
    $region22: #{mvae_forward.4} parent=1 // pred_check
      _
    $region23: #{mvae_forward.4} parent=1 // pred_check_branch
      %72 = sbr.rel (0) target = $region25
    $region24: #{mvae_forward.4} parent=1 // pred_region
      _
    $region25: #{mvae_forward.4} parent=1 // pred_fallthru
      _
    // Predicated region
    $region26: #{mvae_forward.4} parent=1 // pred_check
      _
    $region27: #{mvae_forward.4} parent=1 // pred_check_branch
      %74 = sbr.rel (0) target = $region29
    $region28: #{mvae_forward.4} parent=1 // pred_region
      %s76 = ssub.s32 16, 16
      %77 = vsyncadd [#allocation6], %s76
      %s79 = sshll.u32 [#allocation7], 4
      %s80 = int_to_ptr.vmem [resolvable:$true] %s79
      %82 = dma.hbm_to_vmem [thread:$0]  %s6, 16, %s80, [#allocation6]
    $region29: #{mvae_forward.4} parent=1 // pred_fallthru
      _
    // Predicated region
    $region30: #{mvae_forward.4} parent=1 // pred_check
      _
    $region31: #{mvae_forward.4} parent=1 // pred_check_branch
      %84 = sbr.rel (0) target = $region33
    $region32: #{mvae_forward.4} parent=1 // pred_region
      _
    $region33: #{mvae_forward.4} parent=1 // pred_fallthru
      _
    // Predicated region
    $region34: #{mvae_forward.4} parent=1 // pred_check
      _
    $region35: #{mvae_forward.4} parent=1 // pred_check_branch
      %86 = sbr.rel (0) target = $region37
    $region36: #{mvae_forward.4} parent=1 // pred_region
      %s88 = ssub.s32 16, 16
      %89 = vsyncadd [#allocation9], %s88
      %s91 = sshll.u32 [#allocation8], 4
      %s92 = int_to_ptr.vmem [resolvable:$true] %s91
      %94 = dma.hbm_to_vmem [thread:$0]  %s8, 16, %s92, [#allocation9]
    $region37: #{mvae_forward.4} parent=1 // pred_fallthru
      _
    // Predicated region
    $region38: #{mvae_forward.4} parent=1 // pred_check
      _
    $region39: #{mvae_forward.4} parent=1 // pred_check_branch
      %96 = sbr.rel (0) target = $region41
    $region40: #{mvae_forward.4} parent=1 // pred_region
      %s98 = ssub.s32 256, 256
      %99 = vsyncadd [#allocation9], %s98
      %s100 = sshll.u32 [#allocation10], 4
      %s101 = int_to_ptr.vmem [resolvable:$true] %s100
      %106 = dma.hbm_to_vmem [thread:$0]  %s9, 256, %s101, [#allocation9], 128, 128, 8
    $region41: #{mvae_forward.4} parent=1 // pred_fallthru
      _
    // Predicated region
    $region42: #{mvae_forward.4} parent=1 // pred_check
      _
    $region43: #{mvae_forward.4} parent=1 // pred_check_branch
      %108 = sbr.rel (0) target = $region45
    $region44: #{mvae_forward.4} parent=1 // pred_region
      %s110 = ssub.s32 16, 16
      %111 = vsyncadd [#allocation12], %s110
      %s113 = sshll.u32 [#allocation11], 4
      %s114 = int_to_ptr.vmem [resolvable:$true] %s113
      %116 = dma.hbm_to_vmem [thread:$0]  %s10, 16, %s114, [#allocation12]
    $region45: #{mvae_forward.4} parent=1 // pred_fallthru
      _
    // Predicated region
    $region46: #{mvae_forward.4} parent=1 // pred_check
      _
    $region47: #{mvae_forward.4} parent=1 // pred_check_branch
      %118 = sbr.rel (0) target = $region49
    $region48: #{mvae_forward.4} parent=1 // pred_region
      %s120 = ssub.s32 16, 16
      %121 = vsyncadd [#allocation12], %s120
      %s123 = sshll.u32 [#allocation13], 4
      %s124 = int_to_ptr.vmem [resolvable:$true] %s123
      %126 = dma.hbm_to_vmem [thread:$0]  %s11, 16, %s124, [#allocation12]
    $region49: #{mvae_forward.4} parent=1 // pred_fallthru
      _
    // Predicated region
    $region50: #{mvae_forward.4} parent=1 // pred_check
      _
    $region51: #{mvae_forward.4} parent=1 // pred_check_branch
      %128 = sbr.rel (0) target = $region53
    $region52: #{mvae_forward.4} parent=1 // pred_region
      _
    $region53: #{mvae_forward.4} parent=1 // pred_fallthru
      _
    // Predicated region
    $region54: #{mvae_forward.4} parent=1 // pred_check
      _
    $region55: #{mvae_forward.4} parent=1 // pred_check_branch
      %130 = sbr.rel (0) target = $region57
    $region56: #{mvae_forward.4} parent=1 // pred_region
      _
    $region57: #{mvae_forward.4} parent=1 // pred_fallthru
      _
    // Predicated region
    $region58: #{mvae_forward.4} parent=1 // pred_check
      _
    $region59: #{mvae_forward.4} parent=1 // pred_check_branch
      %132 = sbr.rel (0) target = $region61
    $region60: #{mvae_forward.4} parent=1 // pred_region
      %s134 = ssub.s32 48, 48
      %135 = vsyncadd [#allocation15], %s134
      %s137 = sshll.u32 [#allocation14], 4
      %s138 = int_to_ptr.vmem [resolvable:$true] %s137
      %140 = dma.hbm_to_vmem [thread:$0]  %s14, 48, %s138, [#allocation15]
    $region61: #{mvae_forward.4} parent=1 // pred_fallthru
      _
    // Predicated region
    $region62: #{mvae_forward.4} parent=1 // pred_check
      _
    $region63: #{mvae_forward.4} parent=1 // pred_check_branch
      %142 = sbr.rel (0) target = $region65
    $region64: #{mvae_forward.4} parent=1 // pred_region
      %s144 = ssub.s32 48, 48
      %145 = vsyncadd [#allocation15], %s144
      %s147 = sshll.u32 [#allocation16], 4
      %s148 = int_to_ptr.vmem [resolvable:$true] %s147
      %150 = dma.hbm_to_vmem [thread:$0]  %s15, 48, %s148, [#allocation15]
    $region65: #{mvae_forward.4} parent=1 // pred_fallthru
      _
    // Predicated region
    $region66: #{mvae_forward.4} parent=1 // pred_check
      _
    $region67: #{mvae_forward.4} parent=1 // pred_check_branch
      %152 = sbr.rel (0) target = $region69
    $region68: #{mvae_forward.4} parent=1 // pred_region
      %s154 = ssub.s32 6144, 6144
      %155 = vsyncadd [#allocation18], %s154
      %s156 = sshll.u32 [#allocation17], 4
      %s157 = int_to_ptr.vmem [resolvable:$true] %s156
      %162 = dma.hbm_to_vmem [thread:$0]  %s16, 6144, %s157, [#allocation18], 384, 384, 24
    $region69: #{mvae_forward.4} parent=1 // pred_fallthru
      _
    // Predicated region
    $region70: #{mvae_forward.4} parent=1 // pred_check
      _
    $region71: #{mvae_forward.4} parent=1 // pred_check_branch
      %164 = sbr.rel (0) target = $region73
    $region72: #{mvae_forward.4} parent=1 // pred_region
      %s166 = ssub.s32 6144, 6144
      %167 = vsyncadd [#allocation18], %s166
      %s168 = sshll.u32 [#allocation19], 4
      %s169 = int_to_ptr.vmem [resolvable:$true] %s168
      %174 = dma.hbm_to_vmem [thread:$0]  %s17, 6144, %s169, [#allocation18], 384, 384, 24
    $region73: #{mvae_forward.4} parent=1 // pred_fallthru
      _
    // Predicated region
    $region74: #{mvae_forward.4} parent=1 // pred_check
      _
    $region75: #{mvae_forward.4} parent=1 // pred_check_branch
      %176 = sbr.rel (0) target = $region77
    $region76: #{mvae_forward.4} parent=1 // pred_region
      %s178 = ssub.s32 48, 48
      %179 = vsyncadd [#allocation21], %s178
      %s181 = sshll.u32 [#allocation20], 4
      %s182 = int_to_ptr.vmem [resolvable:$true] %s181
      %184 = dma.hbm_to_vmem [thread:$0]  %s18, 48, %s182, [#allocation21]
    $region77: #{mvae_forward.4} parent=1 // pred_fallthru
      _
    // Predicated region
    $region78: #{mvae_forward.4} parent=1 // pred_check
      _
    $region79: #{mvae_forward.4} parent=1 // pred_check_branch
      %186 = sbr.rel (0) target = $region81
    $region80: #{mvae_forward.4} parent=1 // pred_region
      %s188 = ssub.s32 48, 48
      %189 = vsyncadd [#allocation21], %s188
      %s191 = sshll.u32 [#allocation22], 4
      %s192 = int_to_ptr.vmem [resolvable:$true] %s191
      %194 = dma.hbm_to_vmem [thread:$0]  %s19, 48, %s192, [#allocation21]
    $region81: #{mvae_forward.4} parent=1 // pred_fallthru
      _
    // Predicated region
    $region82: #{mvae_forward.4} parent=1 // pred_check
      _
    $region83: #{mvae_forward.4} parent=1 // pred_check_branch
      %196 = sbr.rel (0) target = $region85
    $region84: #{mvae_forward.4} parent=1 // pred_region
      %s198 = ssub.s32 6144, 6144
      %199 = vsyncadd [#allocation24], %s198
      %s200 = sshll.u32 [#allocation23], 4
      %s201 = int_to_ptr.vmem [resolvable:$true] %s200
      %206 = dma.hbm_to_vmem [thread:$0]  %s20, 6144, %s201, [#allocation24], 384, 384, 24
    $region85: #{mvae_forward.4} parent=1 // pred_fallthru
      _
    // Predicated region
    $region86: #{mvae_forward.4} parent=1 // pred_check
      _
    $region87: #{mvae_forward.4} parent=1 // pred_check_branch
      %208 = sbr.rel (0) target = $region89
    $region88: #{mvae_forward.4} parent=1 // pred_region
      %s210 = ssub.s32 6144, 6144
      %211 = vsyncadd [#allocation24], %s210
      %s212 = sshll.u32 [#allocation25], 4
      %s213 = int_to_ptr.vmem [resolvable:$true] %s212
      %218 = dma.hbm_to_vmem [thread:$0]  %s21, 6144, %s213, [#allocation24], 384, 384, 24
    $region89: #{mvae_forward.4} parent=1 // pred_fallthru
      _
    // Predicated region
    $region90: #{mvae_forward.4} parent=1 // pred_check
      _
    $region91: #{mvae_forward.4} parent=1 // pred_check_branch
      %220 = sbr.rel (0) target = $region93
    $region92: #{mvae_forward.4} parent=1 // pred_region
      %s222 = ssub.s32 48, 48
      %223 = vsyncadd [#allocation27], %s222
      %s225 = sshll.u32 [#allocation26], 4
      %s226 = int_to_ptr.vmem [resolvable:$true] %s225
      %228 = dma.hbm_to_vmem [thread:$0]  %s22, 48, %s226, [#allocation27]
    $region93: #{mvae_forward.4} parent=1 // pred_fallthru
      _
    // Predicated region
    $region94: #{mvae_forward.4} parent=1 // pred_check
      _
    $region95: #{mvae_forward.4} parent=1 // pred_check_branch
      %230 = sbr.rel (0) target = $region97
    $region96: #{mvae_forward.4} parent=1 // pred_region
      %s232 = ssub.s32 48, 48
      %233 = vsyncadd [#allocation27], %s232
      %s235 = sshll.u32 [#allocation28], 4
      %s236 = int_to_ptr.vmem [resolvable:$true] %s235
      %238 = dma.hbm_to_vmem [thread:$0]  %s23, 48, %s236, [#allocation27]
    $region97: #{mvae_forward.4} parent=1 // pred_fallthru
      _
    // Predicated region
    $region98: #{mvae_forward.4} parent=1 // pred_check
      _
    $region99: #{mvae_forward.4} parent=1 // pred_check_branch
      %240 = sbr.rel (0) target = $region101
    $region100: #{mvae_forward.4} parent=1 // pred_region
      %241 = dma.done [#allocation3], 640
    $region101: #{mvae_forward.4} parent=1 // pred_fallthru
      _
    // Predicated region
    $region102: #{mvae_forward.4} parent=1 // pred_check
      _
    $region103: #{mvae_forward.4} parent=1 // pred_check_branch
      %243 = sbr.rel (0) target = $region105
    $region104: #{mvae_forward.4} parent=1 // pred_region
      %244 = dma.done [#allocation6], 16
    $region105: #{mvae_forward.4} parent=1 // pred_fallthru
      _
    // Predicated region
    $region106: #{mvae_forward.4} parent=1 // pred_check
      _
    $region107: #{mvae_forward.4} parent=1 // pred_check_branch
      %246 = sbr.rel (0) target = $region109
    $region108: #{mvae_forward.4} parent=1 // pred_region
      %247 = dma.done [#allocation6], 16
    $region109: #{mvae_forward.4} parent=1 // pred_fallthru
      _
    // Predicated region
    $region110: #{mvae_forward.4} parent=1 // pred_check
      _
    $region111: #{mvae_forward.4} parent=1 // pred_check_branch
      %249 = sbr.rel (0) target = $region113
    $region112: #{mvae_forward.4} parent=1 // pred_region
      %250 = dma.done [#allocation9], 16
    $region113: #{mvae_forward.4} parent=1 // pred_fallthru
      _
    // Predicated region
    $region114: #{mvae_forward.4} parent=1 // pred_check
      _
    $region115: #{mvae_forward.4} parent=1 // pred_check_branch
      %252 = sbr.rel (0) target = $region117
    $region116: #{mvae_forward.4} parent=1 // pred_region
      %253 = dma.done [#allocation9], 256
    $region117: #{mvae_forward.4} parent=1 // pred_fallthru
      _
    // Predicated region
    $region118: #{mvae_forward.4} parent=1 // pred_check
      _
    $region119: #{mvae_forward.4} parent=1 // pred_check_branch
      %255 = sbr.rel (0) target = $region121
    $region120: #{mvae_forward.4} parent=1 // pred_region
      %256 = dma.done [#allocation12], 16
    $region121: #{mvae_forward.4} parent=1 // pred_fallthru
      _
    // Predicated region
    $region122: #{mvae_forward.4} parent=1 // pred_check
      _
    $region123: #{mvae_forward.4} parent=1 // pred_check_branch
      %258 = sbr.rel (0) target = $region125
    $region124: #{mvae_forward.4} parent=1 // pred_region
      %259 = dma.done [#allocation12], 16
    $region125: #{mvae_forward.4} parent=1 // pred_fallthru
      _
    // Predicated region
    $region126: #{mvae_forward.4} parent=1 // pred_check
      _
    $region127: #{mvae_forward.4} parent=1 // pred_check_branch
      %261 = sbr.rel (0) target = $region129
    $region128: #{mvae_forward.4} parent=1 // pred_region
      %262 = dma.done [#allocation15], 48
    $region129: #{mvae_forward.4} parent=1 // pred_fallthru
      _
    // Predicated region
    $region130: #{mvae_forward.4} parent=1 // pred_check
      _
    $region131: #{mvae_forward.4} parent=1 // pred_check_branch
      %264 = sbr.rel (0) target = $region133
    $region132: #{mvae_forward.4} parent=1 // pred_region
      %265 = dma.done [#allocation15], 48
    $region133: #{mvae_forward.4} parent=1 // pred_fallthru
      _
    // Predicated region
    $region134: #{mvae_forward.4} parent=1 // pred_check
      _
    $region135: #{mvae_forward.4} parent=1 // pred_check_branch
      %267 = sbr.rel (0) target = $region137
    $region136: #{mvae_forward.4} parent=1 // pred_region
      %268 = dma.done [#allocation18], 6144
    $region137: #{mvae_forward.4} parent=1 // pred_fallthru
      _
    // Predicated region
    $region138: #{mvae_forward.4} parent=1 // pred_check
      _
    $region139: #{mvae_forward.4} parent=1 // pred_check_branch
      %270 = sbr.rel (0) target = $region141
    $region140: #{mvae_forward.4} parent=1 // pred_region
      %271 = dma.done [#allocation18], 6144
    $region141: #{mvae_forward.4} parent=1 // pred_fallthru
      _
    // Predicated region
    $region142: #{mvae_forward.4} parent=1 // pred_check
      _
    $region143: #{mvae_forward.4} parent=1 // pred_check_branch
      %273 = sbr.rel (0) target = $region145
    $region144: #{mvae_forward.4} parent=1 // pred_region
      %274 = dma.done [#allocation21], 48
    $region145: #{mvae_forward.4} parent=1 // pred_fallthru
      _
    // Predicated region
    $region146: #{mvae_forward.4} parent=1 // pred_check
      _
    $region147: #{mvae_forward.4} parent=1 // pred_check_branch
      %276 = sbr.rel (0) target = $region149
    $region148: #{mvae_forward.4} parent=1 // pred_region
      %277 = dma.done [#allocation21], 48
    $region149: #{mvae_forward.4} parent=1 // pred_fallthru
      _
    // Predicated region
    $region150: #{mvae_forward.4} parent=1 // pred_check
      _
    $region151: #{mvae_forward.4} parent=1 // pred_check_branch
      %279 = sbr.rel (0) target = $region153
    $region152: #{mvae_forward.4} parent=1 // pred_region
      %280 = dma.done [#allocation24], 6144
    $region153: #{mvae_forward.4} parent=1 // pred_fallthru
      _
    // Predicated region
    $region154: #{mvae_forward.4} parent=1 // pred_check
      _
    $region155: #{mvae_forward.4} parent=1 // pred_check_branch
      %282 = sbr.rel (0) target = $region157
    $region156: #{mvae_forward.4} parent=1 // pred_region
      %283 = dma.done [#allocation24], 6144
    $region157: #{mvae_forward.4} parent=1 // pred_fallthru
      _
    // Predicated region
    $region158: #{mvae_forward.4} parent=1 // pred_check
      _
    $region159: #{mvae_forward.4} parent=1 // pred_check_branch
      %285 = sbr.rel (0) target = $region161
    $region160: #{mvae_forward.4} parent=1 // pred_region
      %286 = dma.done [#allocation27], 48
    $region161: #{mvae_forward.4} parent=1 // pred_fallthru
      _
    // Predicated region
    $region162: #{mvae_forward.4} parent=1 // pred_check
      _
    $region163: #{mvae_forward.4} parent=1 // pred_check_branch
      %288 = sbr.rel (0) target = $region165
    $region164: #{mvae_forward.4} parent=1 // pred_region
      %289 = dma.done [#allocation27], 48
    $region165: #{mvae_forward.4} parent=1 // pred_fallthru
      _
    %v290 = vld [vmem:[%s0] sm:$0x3]
    %v291 = vld [vmem:[#allocation2] sm:$0xff]
    %v292 = vld [vmem:[#allocation2 + $0x8] sm:$0xff]
    %v293 = vld [vmem:[#allocation2 + $0x10] sm:$0xff]
    %v294 = vld [vmem:[#allocation2 + $0x18] sm:$0xff]
    %v295 = vld [vmem:[#allocation2 + $0x20] sm:$0xff]
    %v296 = vld [vmem:[#allocation5] sm:$0x1]
    %v298 = vlaneseq
    %v299 = vshrl.u32 %v298, 7
    %v300 = vsub.s32 0, %v299
    %v301 = vrot.slane %v296, %v300
    %vm303 = vcmask 326656
    %v305 = vsel %vm303, %v290, 0
    %307 = vmatprep.subr.mxu0 0.0
    %308 = vmatpush1.msra.mxu0 %v291
    %309 = vmatprep.subr.mxu0 0.0
    %310 = vmatpush1.msra.mxu0 %v292
    %311 = vmatprep.subr.mxu0 0.0
    %312 = vmatpush1.msra.mxu0 %v293
    %313 = vmatprep.subr.mxu0 0.0
    %314 = vmatpush1.msra.mxu0 %v294
    %315 = vmatprep.subr.mxu0 0.0
    %316 = vmatpush1.msra.mxu0 %v295
    %317 = vmatprep.subr.mxu0 0.0
    %318 = vmatpush1.msra.mxu0 0.0
    %319 = vmatprep.subr.mxu0 0.0
    %320 = vmatpush1.msra.mxu0 0.0
    %321 = vmatprep.subr.mxu0 0.0
    %322 = vmatpush1.msra.mxu0 0.0
    %323 = vmatprep.subr.mxu0 0.0
    %324 = vmatpush1.msra.mxu0 0.0
    %325 = vmatprep.subr.mxu0 0.0
    %326 = vmatpush1.msra.mxu0 0.0
    %327 = vmatprep.subr.mxu0 0.0
    %328 = vmatpush1.msra.mxu0 0.0
    %329 = vmatprep.subr.mxu0 0.0
    %330 = vmatpush1.msra.mxu0 0.0
    %331 = vmatprep.subr.mxu0 0.0
    %332 = vmatpush1.msra.mxu0 0.0
    %333 = vmatprep.subr.mxu0 0.0
    %334 = vmatpush1.msra.mxu0 0.0
    %335 = vmatprep.subr.mxu0 0.0
    %336 = vmatpush1.msra.mxu0 0.0
    %337 = vmatprep.subr.mxu0 0.0
    %338 = vmatpush1.msra.mxu0 0.0
    %339 = vmatprep.subr.mxu0 0.0
    %340 = vmatpush1.msra.mxu0 0.0
    %341 = vmatprep.subr.mxu0 0.0
    %342 = vmatpush1.msra.mxu0 0.0
    %343 = vmatprep.subr.mxu0 0.0
    %344 = vmatpush1.msra.mxu0 0.0
    %345 = vmatprep.subr.mxu0 0.0
    %346 = vmatpush1.msra.mxu0 0.0
    %347 = vmatprep.subr.mxu0 0.0
    %348 = vmatpush1.msra.mxu0 0.0
    %349 = vmatprep.subr.mxu0 0.0
    %350 = vmatpush1.msra.mxu0 0.0
    %351 = vmatprep.subr.mxu0 0.0
    %352 = vmatpush1.msra.mxu0 0.0
    %353 = vmatprep.subr.mxu0 0.0
    %354 = vmatpush1.msra.mxu0 0.0
    %355 = vmatprep.subr.mxu0 0.0
    %356 = vmatpush1.msra.mxu0 0.0
    %357 = vmatprep.subr.mxu0 0.0
    %358 = vmatpush1.msra.mxu0 0.0
    %359 = vmatprep.subr.mxu0 0.0
    %360 = vmatpush1.msra.mxu0 0.0
    %361 = vmatprep.subr.mxu0 0.0
    %362 = vmatpush1.msra.mxu0 0.0
    %363 = vmatprep.subr.mxu0 0.0
    %364 = vmatpush1.msra.mxu0 0.0
    %365 = vmatprep.subr.mxu0 0.0
    %366 = vmatpush1.msra.mxu0 0.0
    %367 = vmatprep.subr.mxu0 0.0
    %368 = vmatpush1.msra.mxu0 0.0
    %369 = vmatprep.subr.mxu0 0.0
    %370 = vmatpush1.msra.mxu0 0.0
    %371 = vmatprep.mubr.f32.mxu0 0.0
    %372 = vmatmul.mubr.f32.gmra.mrb[0].mxu0 %v305
    %v373 = vpop.f32.mrb[0].mxu0
    %v374 = vadd.f32 %v301, %v373
    %v375 = vpop.f32.mrb[0].mxu0
    %376 = vdwg.mxu0
    %vm377 = vcmp.gt.f32.partialorder %v374, 0.0
    %v378 = vmul.f32 %v374, 1.442695
    %v379 = vpow.pop %v378
    %v380 = vsub.f32 %v379, 1.0
    %v381 = vmul.f32 %v380, 1.6732632
    %v382 = vsel %vm377, %v374, %v381
    %v383 = vmul.f32 %v382, 1.050701
    %v384 = vld [vmem:[%s5] sm:$0xff]
    %v385 = vld [vmem:[%s5 + $0x8] sm:$0xff]
    %v386 = vld [vmem:[%s5 + $0x10] sm:$0xff]
    %v387 = vld [vmem:[%s5 + $0x18] sm:$0xff]
    %v388 = vld [vmem:[%s5 + $0x20] sm:$0xff]
    %v389 = vld [vmem:[%s5 + $0x28] sm:$0xff]
    %v390 = vld [vmem:[#allocation7] sm:$0x1]
    %v392 = vlaneseq
    %v393 = vshrl.u32 %v392, 7
    %v394 = vsub.s32 0, %v393
    %v395 = vrot.slane %v390, %v394
    %vm397 = vcmask 392192
    %v399 = vsel %vm397, %v383, 0
    %401 = vmatprep.subr.mxu0 0.0
    %402 = vmatpush1.msra.mxu0 %v384
    %403 = vmatprep.subr.mxu0 0.0
    %404 = vmatpush1.msra.mxu0 %v385
    %405 = vmatprep.subr.mxu0 0.0
    %406 = vmatpush1.msra.mxu0 %v386
    %407 = vmatprep.subr.mxu0 0.0
    %408 = vmatpush1.msra.mxu0 %v387
    %409 = vmatprep.subr.mxu0 0.0
    %410 = vmatpush1.msra.mxu0 %v388
    %411 = vmatprep.subr.mxu0 0.0
    %412 = vmatpush1.msra.mxu0 %v389
    %413 = vmatprep.subr.mxu0 0.0
    %414 = vmatpush1.msra.mxu0 0.0
    %415 = vmatprep.subr.mxu0 0.0
    %416 = vmatpush1.msra.mxu0 0.0
    %417 = vmatprep.subr.mxu0 0.0
    %418 = vmatpush1.msra.mxu0 0.0
    %419 = vmatprep.subr.mxu0 0.0
    %420 = vmatpush1.msra.mxu0 0.0
    %421 = vmatprep.subr.mxu0 0.0
    %422 = vmatpush1.msra.mxu0 0.0
    %423 = vmatprep.subr.mxu0 0.0
    %424 = vmatpush1.msra.mxu0 0.0
    %425 = vmatprep.subr.mxu0 0.0
    %426 = vmatpush1.msra.mxu0 0.0
    %427 = vmatprep.subr.mxu0 0.0
    %428 = vmatpush1.msra.mxu0 0.0
    %429 = vmatprep.subr.mxu0 0.0
    %430 = vmatpush1.msra.mxu0 0.0
    %431 = vmatprep.subr.mxu0 0.0
    %432 = vmatpush1.msra.mxu0 0.0
    %433 = vmatprep.subr.mxu0 0.0
    %434 = vmatpush1.msra.mxu0 0.0
    %435 = vmatprep.subr.mxu0 0.0
    %436 = vmatpush1.msra.mxu0 0.0
    %437 = vmatprep.subr.mxu0 0.0
    %438 = vmatpush1.msra.mxu0 0.0
    %439 = vmatprep.subr.mxu0 0.0
    %440 = vmatpush1.msra.mxu0 0.0
    %441 = vmatprep.subr.mxu0 0.0
    %442 = vmatpush1.msra.mxu0 0.0
    %443 = vmatprep.subr.mxu0 0.0
    %444 = vmatpush1.msra.mxu0 0.0
    %445 = vmatprep.subr.mxu0 0.0
    %446 = vmatpush1.msra.mxu0 0.0
    %447 = vmatprep.subr.mxu0 0.0
    %448 = vmatpush1.msra.mxu0 0.0
    %449 = vmatprep.subr.mxu0 0.0
    %450 = vmatpush1.msra.mxu0 0.0
    %451 = vmatprep.subr.mxu0 0.0
    %452 = vmatpush1.msra.mxu0 0.0
    %453 = vmatprep.subr.mxu0 0.0
    %454 = vmatpush1.msra.mxu0 0.0
    %455 = vmatprep.subr.mxu0 0.0
    %456 = vmatpush1.msra.mxu0 0.0
    %457 = vmatprep.subr.mxu0 0.0
    %458 = vmatpush1.msra.mxu0 0.0
    %459 = vmatprep.subr.mxu0 0.0
    %460 = vmatpush1.msra.mxu0 0.0
    %461 = vmatprep.subr.mxu0 0.0
    %462 = vmatpush1.msra.mxu0 0.0
    %463 = vmatprep.subr.mxu0 0.0
    %464 = vmatpush1.msra.mxu0 0.0
    %465 = vmatprep.mubr.f32.mxu0 0.0
    %466 = vmatmul.mubr.f32.gmra.mrb[0].mxu0 %v399
    %v467 = vpop.f32.mrb[0].mxu0
    %v468 = vadd.f32 %v395, %v467
    %v469 = vpop.f32.mrb[0].mxu0
    %470 = vdwg.mxu0
    %v471 = vld [vmem:[%s7] sm:$0xff]
    %v472 = vld [vmem:[%s7 + $0x8] sm:$0xff]
    %v473 = vld [vmem:[%s7 + $0x10] sm:$0xff]
    %v474 = vld [vmem:[%s7 + $0x18] sm:$0xff]
    %v475 = vld [vmem:[%s7 + $0x20] sm:$0xff]
    %v476 = vld [vmem:[%s7 + $0x28] sm:$0xff]
    %v477 = vld [vmem:[#allocation8] sm:$0x1]
    %v479 = vlaneseq
    %v480 = vshrl.u32 %v479, 7
    %v481 = vsub.s32 0, %v480
    %v482 = vrot.slane %v477, %v481
    %484 = vmatprep.subr.mxu0 0.0
    %485 = vmatpush1.msra.mxu0 %v471
    %486 = vmatprep.subr.mxu0 0.0
    %487 = vmatpush1.msra.mxu0 %v472
    %488 = vmatprep.subr.mxu0 0.0
    %489 = vmatpush1.msra.mxu0 %v473
    %490 = vmatprep.subr.mxu0 0.0
    %491 = vmatpush1.msra.mxu0 %v474
    %492 = vmatprep.subr.mxu0 0.0
    %493 = vmatpush1.msra.mxu0 %v475
    %494 = vmatprep.subr.mxu0 0.0
    %495 = vmatpush1.msra.mxu0 %v476
    %496 = vmatprep.subr.mxu0 0.0
    %497 = vmatpush1.msra.mxu0 0.0
    %498 = vmatprep.subr.mxu0 0.0
    %499 = vmatpush1.msra.mxu0 0.0
    %500 = vmatprep.subr.mxu0 0.0
    %501 = vmatpush1.msra.mxu0 0.0
    %502 = vmatprep.subr.mxu0 0.0
    %503 = vmatpush1.msra.mxu0 0.0
    %504 = vmatprep.subr.mxu0 0.0
    %505 = vmatpush1.msra.mxu0 0.0
    %506 = vmatprep.subr.mxu0 0.0
    %507 = vmatpush1.msra.mxu0 0.0
    %508 = vmatprep.subr.mxu0 0.0
    %509 = vmatpush1.msra.mxu0 0.0
    %510 = vmatprep.subr.mxu0 0.0
    %511 = vmatpush1.msra.mxu0 0.0
    %512 = vmatprep.subr.mxu0 0.0
    %513 = vmatpush1.msra.mxu0 0.0
    %514 = vmatprep.subr.mxu0 0.0
    %515 = vmatpush1.msra.mxu0 0.0
    %516 = vmatprep.subr.mxu0 0.0
    %517 = vmatpush1.msra.mxu0 0.0
    %518 = vmatprep.subr.mxu0 0.0
    %519 = vmatpush1.msra.mxu0 0.0
    %520 = vmatprep.subr.mxu0 0.0
    %521 = vmatpush1.msra.mxu0 0.0
    %522 = vmatprep.subr.mxu0 0.0
    %523 = vmatpush1.msra.mxu0 0.0
    %524 = vmatprep.subr.mxu0 0.0
    %525 = vmatpush1.msra.mxu0 0.0
    %526 = vmatprep.subr.mxu0 0.0
    %527 = vmatpush1.msra.mxu0 0.0
    %528 = vmatprep.subr.mxu0 0.0
    %529 = vmatpush1.msra.mxu0 0.0
    %530 = vmatprep.subr.mxu0 0.0
    %531 = vmatpush1.msra.mxu0 0.0
    %532 = vmatprep.subr.mxu0 0.0
    %533 = vmatpush1.msra.mxu0 0.0
    %534 = vmatprep.subr.mxu0 0.0
    %535 = vmatpush1.msra.mxu0 0.0
    %536 = vmatprep.subr.mxu0 0.0
    %537 = vmatpush1.msra.mxu0 0.0
    %538 = vmatprep.subr.mxu0 0.0
    %539 = vmatpush1.msra.mxu0 0.0
    %540 = vmatprep.subr.mxu0 0.0
    %541 = vmatpush1.msra.mxu0 0.0
    %542 = vmatprep.subr.mxu0 0.0
    %543 = vmatpush1.msra.mxu0 0.0
    %544 = vmatprep.subr.mxu0 0.0
    %545 = vmatpush1.msra.mxu0 0.0
    %546 = vmatprep.subr.mxu0 0.0
    %547 = vmatpush1.msra.mxu0 0.0
    %548 = vmatprep.mubr.f32.mxu0 0.0
    %549 = vmatmul.mubr.f32.gmra.mrb[0].mxu0 %v399
    %v550 = vpop.f32.mrb[0].mxu0
    %v551 = vadd.f32 %v482, %v550
    %v552 = vpop.f32.mrb[0].mxu0
    %553 = vdwg.mxu0
    %vm554 = vcmask 123904
    %555 = vst.msk [vmem:[#allocation29] sm:$0x3] %vm554, %v468
    %556 = vst.msk [vmem:[#allocation30] sm:$0x3] %vm554, %v551
    %v557 = vmul.f32 %v551, 0.5
    %v558 = vmul.f32 %v557, 1.442695
    %v559 = vpow.pop %v558
    %v560 = vld [vmem:[%s1] sm:$0x3]
    %v561 = vmul.f32 %v560, 0.01
    %v562 = vmul.f32 %v559, %v561
    %v563 = vadd.f32 %v562, %v468
    %v564 = vld [vmem:[#allocation10] sm:$0xff]
    %v565 = vld [vmem:[#allocation10 + $0x8] sm:$0xff]
    %v566 = vld [vmem:[%s2] sm:$0x3]
    %v567 = vld [vmem:[#allocation11] sm:$0x1]
    %569 = vset.pattern.permute.xlu0 0
    %570 = vperm.xlu0 %569, %v566
    %v571 = vpop.permute.xlu0 %570
    %v574 = vlaneseq
    %v575 = vshrl.u32 %v574, 7
    %v576 = vsub.s32 0, %v575
    %v577 = vrot.slane %v567, %v576
    %v579 = vmul.f32 %v571, %v577
    %vm580 = vcmask 130048
    %v582 = vsel %vm580, %v563, 0
    %584 = vmatprep.subr.mxu0 0.0
    %585 = vmatpush1.msra.mxu0 %v564
    %586 = vmatprep.subr.mxu0 0.0
    %587 = vmatpush1.msra.mxu0 %v565
    %588 = vmatprep.subr.mxu0 0.0
    %589 = vmatpush1.msra.mxu0 0.0
    %590 = vmatprep.subr.mxu0 0.0
    %591 = vmatpush1.msra.mxu0 0.0
    %592 = vmatprep.subr.mxu0 0.0
    %593 = vmatpush1.msra.mxu0 0.0
    %594 = vmatprep.subr.mxu0 0.0
    %595 = vmatpush1.msra.mxu0 0.0
    %596 = vmatprep.subr.mxu0 0.0
    %597 = vmatpush1.msra.mxu0 0.0
    %598 = vmatprep.subr.mxu0 0.0
    %599 = vmatpush1.msra.mxu0 0.0
    %600 = vmatprep.subr.mxu0 0.0
    %601 = vmatpush1.msra.mxu0 0.0
    %602 = vmatprep.subr.mxu0 0.0
    %603 = vmatpush1.msra.mxu0 0.0
    %604 = vmatprep.subr.mxu0 0.0
    %605 = vmatpush1.msra.mxu0 0.0
    %606 = vmatprep.subr.mxu0 0.0
    %607 = vmatpush1.msra.mxu0 0.0
    %608 = vmatprep.subr.mxu0 0.0
    %609 = vmatpush1.msra.mxu0 0.0
    %610 = vmatprep.subr.mxu0 0.0
    %611 = vmatpush1.msra.mxu0 0.0
    %612 = vmatprep.subr.mxu0 0.0
    %613 = vmatpush1.msra.mxu0 0.0
    %614 = vmatprep.subr.mxu0 0.0
    %615 = vmatpush1.msra.mxu0 0.0
    %616 = vmatprep.subr.mxu0 0.0
    %617 = vmatpush1.msra.mxu0 0.0
    %618 = vmatprep.subr.mxu0 0.0
    %619 = vmatpush1.msra.mxu0 0.0
    %620 = vmatprep.subr.mxu0 0.0
    %621 = vmatpush1.msra.mxu0 0.0
    %622 = vmatprep.subr.mxu0 0.0
    %623 = vmatpush1.msra.mxu0 0.0
    %624 = vmatprep.subr.mxu0 0.0
    %625 = vmatpush1.msra.mxu0 0.0
    %626 = vmatprep.subr.mxu0 0.0
    %627 = vmatpush1.msra.mxu0 0.0
    %628 = vmatprep.subr.mxu0 0.0
    %629 = vmatpush1.msra.mxu0 0.0
    %630 = vmatprep.subr.mxu0 0.0
    %631 = vmatpush1.msra.mxu0 0.0
    %632 = vmatprep.subr.mxu0 0.0
    %633 = vmatpush1.msra.mxu0 0.0
    %634 = vmatprep.subr.mxu0 0.0
    %635 = vmatpush1.msra.mxu0 0.0
    %636 = vmatprep.subr.mxu0 0.0
    %637 = vmatpush1.msra.mxu0 0.0
    %638 = vmatprep.subr.mxu0 0.0
    %639 = vmatpush1.msra.mxu0 0.0
    %640 = vmatprep.subr.mxu0 0.0
    %641 = vmatpush1.msra.mxu0 0.0
    %642 = vmatprep.subr.mxu0 0.0
    %643 = vmatpush1.msra.mxu0 0.0
    %644 = vmatprep.subr.mxu0 0.0
    %645 = vmatpush1.msra.mxu0 0.0
    %646 = vmatprep.subr.mxu0 0.0
    %647 = vmatpush1.msra.mxu0 0.0
    %648 = vmatprep.mubr.f32.mxu0 0.0
    %649 = vmatmul.mubr.f32.gmra.mrb[0].mxu0 %v582
    %v650 = vpop.f32.mrb[0].mxu0
    %v651 = vadd.f32 %v579, %v650
    %v652 = vpop.f32.mrb[0].mxu0
    %653 = vdwg.mxu0
    %v654 = vld [vmem:[#allocation13] sm:$0x1]
    %v656 = vlaneseq
    %v657 = vshrl.u32 %v656, 7
    %v658 = vsub.s32 0, %v657
    %v659 = vrot.slane %v654, %v658
    %v661 = vadd.f32 %v651, %v659
    %vm662 = vcmp.gt.f32.partialorder %v661, 0.0
    %v663 = vmul.f32 %v661, 1.442695
    %v664 = vpow.pop %v663
    %v665 = vsub.f32 %v664, 1.0
    %v666 = vmul.f32 %v665, 1.6732632
    %v667 = vsel %vm662, %v661, %v666
    %v668 = vmul.f32 %v667, 1.050701
    %v669 = vld [vmem:[%s12] sm:$0xff]
    %v670 = vld [vmem:[%s12 + $0x8] sm:$0xff]
    %v671 = vld [vmem:[%s12 + $0x10] sm:$0xff]
    %v672 = vld [vmem:[%s12 + $0x18] sm:$0xff]
    %v673 = vld [vmem:[%s12 + $0x20] sm:$0xff]
    %v674 = vld [vmem:[%s12 + $0x28] sm:$0xff]
    %v675 = vld [vmem:[%s12 + $0x30] sm:$0xff]
    %v676 = vld [vmem:[%s12 + $0x38] sm:$0xff]
    %v677 = vld [vmem:[%s12 + $0x40] sm:$0xff]
    %v678 = vld [vmem:[%s12 + $0x48] sm:$0xff]
    %v679 = vld [vmem:[%s12 + $0x50] sm:$0xff]
    %v680 = vld [vmem:[%s12 + $0x58] sm:$0xff]
    %v681 = vld [vmem:[#allocation17] sm:$0xff]
    %v682 = vld [vmem:[#allocation17 + $0x8] sm:$0xff]
    %v683 = vld [vmem:[#allocation17 + $0x10] sm:$0xff]
    %v684 = vld [vmem:[#allocation17 + $0x18] sm:$0xff]
    %v685 = vld [vmem:[#allocation17 + $0x20] sm:$0xff]
    %v686 = vld [vmem:[#allocation17 + $0x28] sm:$0xff]
    %v687 = vld [vmem:[#allocation17 + $0x30] sm:$0xff]
    %v688 = vld [vmem:[#allocation17 + $0x38] sm:$0xff]
    %v689 = vld [vmem:[#allocation17 + $0x40] sm:$0xff]
    %v690 = vld [vmem:[#allocation17 + $0x48] sm:$0xff]
    %v691 = vld [vmem:[#allocation17 + $0x50] sm:$0xff]
    %v692 = vld [vmem:[#allocation17 + $0x58] sm:$0xff]
    %v693 = vld [vmem:[#allocation17 + $0x60] sm:$0xff]
    %v694 = vld [vmem:[#allocation17 + $0x68] sm:$0xff]
    %v695 = vld [vmem:[#allocation17 + $0x70] sm:$0xff]
    %v696 = vld [vmem:[#allocation17 + $0x78] sm:$0xff]
    %v697 = vld [vmem:[#allocation17 + $0x80] sm:$0xff]
    %v698 = vld [vmem:[#allocation17 + $0x88] sm:$0xff]
    %v699 = vld [vmem:[#allocation17 + $0x90] sm:$0xff]
    %v700 = vld [vmem:[#allocation17 + $0x98] sm:$0xff]
    %v701 = vld [vmem:[#allocation17 + $0xa0] sm:$0xff]
    %v702 = vld [vmem:[#allocation17 + $0xa8] sm:$0xff]
    %v703 = vld [vmem:[#allocation17 + $0xb0] sm:$0xff]
    %v704 = vld [vmem:[#allocation17 + $0xb8] sm:$0xff]
    %v705 = vld [vmem:[#allocation17 + $0xc0] sm:$0xff]
    %v706 = vld [vmem:[#allocation17 + $0xc8] sm:$0xff]
    %v707 = vld [vmem:[#allocation17 + $0xd0] sm:$0xff]
    %v708 = vld [vmem:[#allocation17 + $0xd8] sm:$0xff]
    %v709 = vld [vmem:[#allocation17 + $0xe0] sm:$0xff]
    %v710 = vld [vmem:[#allocation17 + $0xe8] sm:$0xff]
    %v711 = vld [vmem:[#allocation17 + $0xf0] sm:$0xff]
    %v712 = vld [vmem:[#allocation17 + $0xf8] sm:$0xff]
    %v713 = vld [vmem:[#allocation17 + $0x100] sm:$0xff]
    %v714 = vld [vmem:[#allocation17 + $0x108] sm:$0xff]
    %v715 = vld [vmem:[#allocation17 + $0x110] sm:$0xff]
    %v716 = vld [vmem:[#allocation17 + $0x118] sm:$0xff]
    %v717 = vld [vmem:[#allocation17 + $0x120] sm:$0xff]
    %v718 = vld [vmem:[#allocation17 + $0x128] sm:$0xff]
    %v719 = vld [vmem:[#allocation17 + $0x130] sm:$0xff]
    %v720 = vld [vmem:[#allocation17 + $0x138] sm:$0xff]
    %v721 = vld [vmem:[#allocation17 + $0x140] sm:$0xff]
    %v722 = vld [vmem:[#allocation17 + $0x148] sm:$0xff]
    %v723 = vld [vmem:[#allocation17 + $0x150] sm:$0xff]
    %v724 = vld [vmem:[#allocation17 + $0x158] sm:$0xff]
    %v725 = vld [vmem:[#allocation17 + $0x160] sm:$0xff]
    %v726 = vld [vmem:[#allocation17 + $0x168] sm:$0xff]
    %v727 = vld [vmem:[#allocation17 + $0x170] sm:$0xff]
    %v728 = vld [vmem:[#allocation17 + $0x178] sm:$0xff]
    %v729 = vld [vmem:[#allocation23] sm:$0xff]
    %v730 = vld [vmem:[#allocation23 + $0x8] sm:$0xff]
    %v731 = vld [vmem:[#allocation23 + $0x10] sm:$0xff]
    %v732 = vld [vmem:[#allocation23 + $0x18] sm:$0xff]
    %v733 = vld [vmem:[#allocation23 + $0x20] sm:$0xff]
    %v734 = vld [vmem:[#allocation23 + $0x28] sm:$0xff]
    %v735 = vld [vmem:[#allocation23 + $0x30] sm:$0xff]
    %v736 = vld [vmem:[#allocation23 + $0x38] sm:$0xff]
    %v737 = vld [vmem:[#allocation23 + $0x40] sm:$0xff]
    %v738 = vld [vmem:[#allocation23 + $0x48] sm:$0xff]
    %v739 = vld [vmem:[#allocation23 + $0x50] sm:$0xff]
    %v740 = vld [vmem:[#allocation23 + $0x58] sm:$0xff]
    %v741 = vld [vmem:[#allocation23 + $0x60] sm:$0xff]
    %v742 = vld [vmem:[#allocation23 + $0x68] sm:$0xff]
    %v743 = vld [vmem:[#allocation23 + $0x70] sm:$0xff]
    %v744 = vld [vmem:[#allocation23 + $0x78] sm:$0xff]
    %v745 = vld [vmem:[#allocation23 + $0x80] sm:$0xff]
    %v746 = vld [vmem:[#allocation23 + $0x88] sm:$0xff]
    %v747 = vld [vmem:[#allocation23 + $0x90] sm:$0xff]
    %v748 = vld [vmem:[#allocation23 + $0x98] sm:$0xff]
    %v749 = vld [vmem:[#allocation23 + $0xa0] sm:$0xff]
    %v750 = vld [vmem:[#allocation23 + $0xa8] sm:$0xff]
    %v751 = vld [vmem:[#allocation23 + $0xb0] sm:$0xff]
    %v752 = vld [vmem:[#allocation23 + $0xb8] sm:$0xff]
    %v753 = vld [vmem:[#allocation23 + $0xc0] sm:$0xff]
    %v754 = vld [vmem:[#allocation23 + $0xc8] sm:$0xff]
    %v755 = vld [vmem:[#allocation23 + $0xd0] sm:$0xff]
    %v756 = vld [vmem:[#allocation23 + $0xd8] sm:$0xff]
    %v757 = vld [vmem:[#allocation23 + $0xe0] sm:$0xff]
    %v758 = vld [vmem:[#allocation23 + $0xe8] sm:$0xff]
    %v759 = vld [vmem:[#allocation23 + $0xf0] sm:$0xff]
    %v760 = vld [vmem:[#allocation23 + $0xf8] sm:$0xff]
    %v761 = vld [vmem:[#allocation23 + $0x100] sm:$0xff]
    %v762 = vld [vmem:[#allocation23 + $0x108] sm:$0xff]
    %v763 = vld [vmem:[#allocation23 + $0x110] sm:$0xff]
    %v764 = vld [vmem:[#allocation23 + $0x118] sm:$0xff]
    %v765 = vld [vmem:[#allocation23 + $0x120] sm:$0xff]
    %v766 = vld [vmem:[#allocation23 + $0x128] sm:$0xff]
    %v767 = vld [vmem:[#allocation23 + $0x130] sm:$0xff]
    %v768 = vld [vmem:[#allocation23 + $0x138] sm:$0xff]
    %v769 = vld [vmem:[#allocation23 + $0x140] sm:$0xff]
    %v770 = vld [vmem:[#allocation23 + $0x148] sm:$0xff]
    %v771 = vld [vmem:[#allocation23 + $0x150] sm:$0xff]
    %v772 = vld [vmem:[#allocation23 + $0x158] sm:$0xff]
    %v773 = vld [vmem:[#allocation23 + $0x160] sm:$0xff]
    %v774 = vld [vmem:[#allocation23 + $0x168] sm:$0xff]
    %v775 = vld [vmem:[#allocation23 + $0x170] sm:$0xff]
    %v776 = vld [vmem:[#allocation23 + $0x178] sm:$0xff]
    %v777 = vld [vmem:[%s13] sm:$0xff]
    %v778 = vld [vmem:[%s13 + $0x8] sm:$0xff]
    %v779 = vld [vmem:[%s13 + $0x10] sm:$0xff]
    %v780 = vld [vmem:[%s13 + $0x18] sm:$0xff]
    %v781 = vld [vmem:[%s13 + $0x20] sm:$0xff]
    %v782 = vld [vmem:[%s13 + $0x28] sm:$0xff]
    %v783 = vld [vmem:[%s13 + $0x30] sm:$0xff]
    %v784 = vld [vmem:[%s13 + $0x38] sm:$0xff]
    %v785 = vld [vmem:[%s13 + $0x40] sm:$0xff]
    %v786 = vld [vmem:[%s13 + $0x48] sm:$0xff]
    %v787 = vld [vmem:[%s13 + $0x50] sm:$0xff]
    %v788 = vld [vmem:[%s13 + $0x58] sm:$0xff]
    %v789 = vld [vmem:[%s13 + $0x60] sm:$0xff]
    %v790 = vld [vmem:[%s13 + $0x68] sm:$0xff]
    %v791 = vld [vmem:[%s13 + $0x70] sm:$0xff]
    %v792 = vld [vmem:[%s13 + $0x78] sm:$0xff]
    %v793 = vld [vmem:[%s13 + $0x80] sm:$0xff]
    %v794 = vld [vmem:[%s13 + $0x88] sm:$0xff]
    %v795 = vld [vmem:[%s13 + $0x90] sm:$0xff]
    %v796 = vld [vmem:[%s13 + $0x98] sm:$0xff]
    %v797 = vld [vmem:[%s13 + $0xa0] sm:$0xff]
    %v798 = vld [vmem:[%s13 + $0xa8] sm:$0xff]
    %v799 = vld [vmem:[%s13 + $0xb0] sm:$0xff]
    %v800 = vld [vmem:[%s13 + $0xb8] sm:$0xff]
    %v801 = vld [vmem:[%s13 + $0xc0] sm:$0xff]
    %v802 = vld [vmem:[%s13 + $0xc8] sm:$0xff]
    %v803 = vld [vmem:[%s13 + $0xd0] sm:$0xff]
    %v804 = vld [vmem:[%s13 + $0xd8] sm:$0xff]
    %v805 = vld [vmem:[%s13 + $0xe0] sm:$0xff]
    %v806 = vld [vmem:[%s13 + $0xe8] sm:$0xff]
    %v807 = vld [vmem:[%s13 + $0xf0] sm:$0xff]
    %v808 = vld [vmem:[%s13 + $0xf8] sm:$0xff]
    %v809 = vld [vmem:[%s13 + $0x100] sm:$0xff]
    %v810 = vld [vmem:[%s13 + $0x108] sm:$0xff]
    %v811 = vld [vmem:[%s13 + $0x110] sm:$0xff]
    %v812 = vld [vmem:[%s13 + $0x118] sm:$0xff]
    %v813 = vld [vmem:[%s13 + $0x120] sm:$0xff]
    %v814 = vld [vmem:[%s13 + $0x128] sm:$0xff]
    %v815 = vld [vmem:[%s13 + $0x130] sm:$0xff]
    %v816 = vld [vmem:[%s13 + $0x138] sm:$0xff]
    %v817 = vld [vmem:[%s13 + $0x140] sm:$0xff]
    %v818 = vld [vmem:[%s13 + $0x148] sm:$0xff]
    %v819 = vld [vmem:[%s13 + $0x150] sm:$0xff]
    %v820 = vld [vmem:[%s13 + $0x158] sm:$0xff]
    %v821 = vld [vmem:[%s13 + $0x160] sm:$0xff]
    %v822 = vld [vmem:[%s13 + $0x168] sm:$0xff]
    %v823 = vld [vmem:[%s13 + $0x170] sm:$0xff]
    %v824 = vld [vmem:[%s13 + $0x178] sm:$0xff]
    %v825 = vld [vmem:[#allocation19] sm:$0xff]
    %v826 = vld [vmem:[#allocation19 + $0x8] sm:$0xff]
    %v827 = vld [vmem:[#allocation19 + $0x10] sm:$0xff]
    %v828 = vld [vmem:[#allocation19 + $0x18] sm:$0xff]
    %v829 = vld [vmem:[#allocation19 + $0x20] sm:$0xff]
    %v830 = vld [vmem:[#allocation19 + $0x28] sm:$0xff]
    %v831 = vld [vmem:[#allocation19 + $0x30] sm:$0xff]
    %v832 = vld [vmem:[#allocation19 + $0x38] sm:$0xff]
    %v833 = vld [vmem:[#allocation19 + $0x40] sm:$0xff]
    %v834 = vld [vmem:[#allocation19 + $0x48] sm:$0xff]
    %v835 = vld [vmem:[#allocation19 + $0x50] sm:$0xff]
    %v836 = vld [vmem:[#allocation19 + $0x58] sm:$0xff]
    %v837 = vld [vmem:[#allocation19 + $0x60] sm:$0xff]
    %v838 = vld [vmem:[#allocation19 + $0x68] sm:$0xff]
    %v839 = vld [vmem:[#allocation19 + $0x70] sm:$0xff]
    %v840 = vld [vmem:[#allocation19 + $0x78] sm:$0xff]
    %v841 = vld [vmem:[#allocation19 + $0x80] sm:$0xff]
    %v842 = vld [vmem:[#allocation19 + $0x88] sm:$0xff]
    %v843 = vld [vmem:[#allocation19 + $0x90] sm:$0xff]
    %v844 = vld [vmem:[#allocation19 + $0x98] sm:$0xff]
    %v845 = vld [vmem:[#allocation19 + $0xa0] sm:$0xff]
    %v846 = vld [vmem:[#allocation19 + $0xa8] sm:$0xff]
    %v847 = vld [vmem:[#allocation19 + $0xb0] sm:$0xff]
    %v848 = vld [vmem:[#allocation19 + $0xb8] sm:$0xff]
    %v849 = vld [vmem:[#allocation19 + $0xc0] sm:$0xff]
    %v850 = vld [vmem:[#allocation19 + $0xc8] sm:$0xff]
    %v851 = vld [vmem:[#allocation19 + $0xd0] sm:$0xff]
    %v852 = vld [vmem:[#allocation19 + $0xd8] sm:$0xff]
    %v853 = vld [vmem:[#allocation19 + $0xe0] sm:$0xff]
    %v854 = vld [vmem:[#allocation19 + $0xe8] sm:$0xff]
    %v855 = vld [vmem:[#allocation19 + $0xf0] sm:$0xff]
    %v856 = vld [vmem:[#allocation19 + $0xf8] sm:$0xff]
    %v857 = vld [vmem:[#allocation19 + $0x100] sm:$0xff]
    %v858 = vld [vmem:[#allocation19 + $0x108] sm:$0xff]
    %v859 = vld [vmem:[#allocation19 + $0x110] sm:$0xff]
    %v860 = vld [vmem:[#allocation19 + $0x118] sm:$0xff]
    %v861 = vld [vmem:[#allocation19 + $0x120] sm:$0xff]
    %v862 = vld [vmem:[#allocation19 + $0x128] sm:$0xff]
    %v863 = vld [vmem:[#allocation19 + $0x130] sm:$0xff]
    %v864 = vld [vmem:[#allocation19 + $0x138] sm:$0xff]
    %v865 = vld [vmem:[#allocation19 + $0x140] sm:$0xff]
    %v866 = vld [vmem:[#allocation19 + $0x148] sm:$0xff]
    %v867 = vld [vmem:[#allocation19 + $0x150] sm:$0xff]
    %v868 = vld [vmem:[#allocation19 + $0x158] sm:$0xff]
    %v869 = vld [vmem:[#allocation19 + $0x160] sm:$0xff]
    %v870 = vld [vmem:[#allocation19 + $0x168] sm:$0xff]
    %v871 = vld [vmem:[#allocation19 + $0x170] sm:$0xff]
    %v872 = vld [vmem:[#allocation19 + $0x178] sm:$0xff]
    %v873 = vld [vmem:[#allocation25] sm:$0xff]
    %v874 = vld [vmem:[#allocation25 + $0x8] sm:$0xff]
    %v875 = vld [vmem:[#allocation25 + $0x10] sm:$0xff]
    %v876 = vld [vmem:[#allocation25 + $0x18] sm:$0xff]
    %v877 = vld [vmem:[#allocation25 + $0x20] sm:$0xff]
    %v878 = vld [vmem:[#allocation25 + $0x28] sm:$0xff]
    %v879 = vld [vmem:[#allocation25 + $0x30] sm:$0xff]
    %v880 = vld [vmem:[#allocation25 + $0x38] sm:$0xff]
    %v881 = vld [vmem:[#allocation25 + $0x40] sm:$0xff]
    %v882 = vld [vmem:[#allocation25 + $0x48] sm:$0xff]
    %v883 = vld [vmem:[#allocation25 + $0x50] sm:$0xff]
    %v884 = vld [vmem:[#allocation25 + $0x58] sm:$0xff]
    %v885 = vld [vmem:[#allocation25 + $0x60] sm:$0xff]
    %v886 = vld [vmem:[#allocation25 + $0x68] sm:$0xff]
    %v887 = vld [vmem:[#allocation25 + $0x70] sm:$0xff]
    %v888 = vld [vmem:[#allocation25 + $0x78] sm:$0xff]
    %v889 = vld [vmem:[#allocation25 + $0x80] sm:$0xff]
    %v890 = vld [vmem:[#allocation25 + $0x88] sm:$0xff]
    %v891 = vld [vmem:[#allocation25 + $0x90] sm:$0xff]
    %v892 = vld [vmem:[#allocation25 + $0x98] sm:$0xff]
    %v893 = vld [vmem:[#allocation25 + $0xa0] sm:$0xff]
    %v894 = vld [vmem:[#allocation25 + $0xa8] sm:$0xff]
    %v895 = vld [vmem:[#allocation25 + $0xb0] sm:$0xff]
    %v896 = vld [vmem:[#allocation25 + $0xb8] sm:$0xff]
    %v897 = vld [vmem:[#allocation25 + $0xc0] sm:$0xff]
    %v898 = vld [vmem:[#allocation25 + $0xc8] sm:$0xff]
    %v899 = vld [vmem:[#allocation25 + $0xd0] sm:$0xff]
    %v900 = vld [vmem:[#allocation25 + $0xd8] sm:$0xff]
    %v901 = vld [vmem:[#allocation25 + $0xe0] sm:$0xff]
    %v902 = vld [vmem:[#allocation25 + $0xe8] sm:$0xff]
    %v903 = vld [vmem:[#allocation25 + $0xf0] sm:$0xff]
    %v904 = vld [vmem:[#allocation25 + $0xf8] sm:$0xff]
    %v905 = vld [vmem:[#allocation25 + $0x100] sm:$0xff]
    %v906 = vld [vmem:[#allocation25 + $0x108] sm:$0xff]
    %v907 = vld [vmem:[#allocation25 + $0x110] sm:$0xff]
    %v908 = vld [vmem:[#allocation25 + $0x118] sm:$0xff]
    %v909 = vld [vmem:[#allocation25 + $0x120] sm:$0xff]
    %v910 = vld [vmem:[#allocation25 + $0x128] sm:$0xff]
    %v911 = vld [vmem:[#allocation25 + $0x130] sm:$0xff]
    %v912 = vld [vmem:[#allocation25 + $0x138] sm:$0xff]
    %v913 = vld [vmem:[#allocation25 + $0x140] sm:$0xff]
    %v914 = vld [vmem:[#allocation25 + $0x148] sm:$0xff]
    %v915 = vld [vmem:[#allocation25 + $0x150] sm:$0xff]
    %v916 = vld [vmem:[#allocation25 + $0x158] sm:$0xff]
    %v917 = vld [vmem:[#allocation25 + $0x160] sm:$0xff]
    %v918 = vld [vmem:[#allocation25 + $0x168] sm:$0xff]
    %v919 = vld [vmem:[#allocation25 + $0x170] sm:$0xff]
    %v920 = vld [vmem:[#allocation25 + $0x178] sm:$0xff]
    %v921 = vld [vmem:[#allocation14] sm:$0x7]
    %v922 = vld [vmem:[#allocation20] sm:$0x7]
    %v923 = vld [vmem:[#allocation26] sm:$0x7]
    %v924 = vld [vmem:[#allocation16] sm:$0x7]
    %v925 = vld [vmem:[#allocation22] sm:$0x7]
    %v926 = vld [vmem:[#allocation28] sm:$0x7]
    %v928 = vlaneseq
    %v929 = vshrl.u32 %v928, 7
    %v930 = vsub.s32 0, %v929
    %v931 = vrot.slane %v921, %v930
    %v932 = vlaneseq
    %v933 = vshrl.u32 %v932, 7
    %v934 = vsub.s32 1, %v933
    %v935 = vrot.slane %v921, %v934
    %v936 = vlaneseq
    %v937 = vshrl.u32 %v936, 7
    %v938 = vsub.s32 2, %v937
    %v939 = vrot.slane %v921, %v938
    %vm943 = vcmask 261120
    %v945 = vsel %vm943, %v668, 0
    %947 = vmatprep.subr.mxu0 %v670
    %948 = vmatpush1.msra.mxu0 %v669
    %949 = vmatprep.subr.mxu0 %v673
    %950 = vmatpush1.msra.mxu0 %v672
    %951 = vmatprep.subr.mxu0 %v676
    %952 = vmatpush1.msra.mxu0 %v675
    %953 = vmatprep.subr.mxu0 %v679
    %954 = vmatpush1.msra.mxu0 %v678
    %955 = vmatprep.subr.mxu0 0.0
    %956 = vmatpush1.msra.mxu0 0.0
    %957 = vmatprep.subr.mxu0 0.0
    %958 = vmatpush1.msra.mxu0 0.0
    %959 = vmatprep.subr.mxu0 0.0
    %960 = vmatpush1.msra.mxu0 0.0
    %961 = vmatprep.subr.mxu0 0.0
    %962 = vmatpush1.msra.mxu0 0.0
    %963 = vmatprep.subr.mxu0 0.0
    %964 = vmatpush1.msra.mxu0 0.0
    %965 = vmatprep.subr.mxu0 0.0
    %966 = vmatpush1.msra.mxu0 0.0
    %967 = vmatprep.subr.mxu0 0.0
    %968 = vmatpush1.msra.mxu0 0.0
    %969 = vmatprep.subr.mxu0 0.0
    %970 = vmatpush1.msra.mxu0 0.0
    %971 = vmatprep.subr.mxu0 0.0
    %972 = vmatpush1.msra.mxu0 0.0
    %973 = vmatprep.subr.mxu0 0.0
    %974 = vmatpush1.msra.mxu0 0.0
    %975 = vmatprep.subr.mxu0 0.0
    %976 = vmatpush1.msra.mxu0 0.0
    %977 = vmatprep.subr.mxu0 0.0
    %978 = vmatpush1.msra.mxu0 0.0
    %979 = vmatprep.subr.mxu0 0.0
    %980 = vmatpush1.msra.mxu0 0.0
    %981 = vmatprep.subr.mxu0 0.0
    %982 = vmatpush1.msra.mxu0 0.0
    %983 = vmatprep.subr.mxu0 0.0
    %984 = vmatpush1.msra.mxu0 0.0
    %985 = vmatprep.subr.mxu0 0.0
    %986 = vmatpush1.msra.mxu0 0.0
    %987 = vmatprep.subr.mxu0 0.0
    %988 = vmatpush1.msra.mxu0 0.0
    %989 = vmatprep.subr.mxu0 0.0
    %990 = vmatpush1.msra.mxu0 0.0
    %991 = vmatprep.subr.mxu0 0.0
    %992 = vmatpush1.msra.mxu0 0.0
    %993 = vmatprep.subr.mxu0 0.0
    %994 = vmatpush1.msra.mxu0 0.0
    %995 = vmatprep.subr.mxu0 0.0
    %996 = vmatpush1.msra.mxu0 0.0
    %997 = vmatprep.subr.mxu0 0.0
    %998 = vmatpush1.msra.mxu0 0.0
    %999 = vmatprep.subr.mxu0 0.0
    %1000 = vmatpush1.msra.mxu0 0.0
    %1001 = vmatprep.subr.mxu0 0.0
    %1002 = vmatpush1.msra.mxu0 0.0
    %1003 = vmatprep.subr.mxu0 0.0
    %1004 = vmatpush1.msra.mxu0 0.0
    %1005 = vmatprep.subr.mxu0 0.0
    %1006 = vmatpush1.msra.mxu0 0.0
    %1007 = vmatprep.subr.mxu0 0.0
    %1008 = vmatpush1.msra.mxu0 0.0
    %1009 = vmatprep.subr.mxu0 0.0
    %1010 = vmatpush1.msra.mxu0 0.0
    %1011 = vmatprep.mubr.f32.mxu0 0.0
    %1012 = vmatmul.mubr.f32.gmra.mrb[0].mxu0 %v945
    %v1013 = vpop.f32.mrb[0].mxu0
    %v1014 = vadd.f32 %v931, %v1013
    %v1015 = vpop.f32.mrb[0].mxu0
    %v1016 = vadd.f32 %v935, %v1015
    %1017 = vdwg.mxu0
    %1018 = vmatprep.subr.mxu0 0.0
    %1019 = vmatpush1.msra.mxu0 %v671
    %1020 = vmatprep.subr.mxu0 0.0
    %1021 = vmatpush1.msra.mxu0 %v674
    %1022 = vmatprep.subr.mxu0 0.0
    %1023 = vmatpush1.msra.mxu0 %v677
    %1024 = vmatprep.subr.mxu0 0.0
    %1025 = vmatpush1.msra.mxu0 %v680
    %1026 = vmatprep.subr.mxu0 0.0
    %1027 = vmatpush1.msra.mxu0 0.0
    %1028 = vmatprep.subr.mxu0 0.0
    %1029 = vmatpush1.msra.mxu0 0.0
    %1030 = vmatprep.subr.mxu0 0.0
    %1031 = vmatpush1.msra.mxu0 0.0
    %1032 = vmatprep.subr.mxu0 0.0
    %1033 = vmatpush1.msra.mxu0 0.0
    %1034 = vmatprep.subr.mxu0 0.0
    %1035 = vmatpush1.msra.mxu0 0.0
    %1036 = vmatprep.subr.mxu0 0.0
    %1037 = vmatpush1.msra.mxu0 0.0
    %1038 = vmatprep.subr.mxu0 0.0
    %1039 = vmatpush1.msra.mxu0 0.0
    %1040 = vmatprep.subr.mxu0 0.0
    %1041 = vmatpush1.msra.mxu0 0.0
    %1042 = vmatprep.subr.mxu0 0.0
    %1043 = vmatpush1.msra.mxu0 0.0
    %1044 = vmatprep.subr.mxu0 0.0
    %1045 = vmatpush1.msra.mxu0 0.0
    %1046 = vmatprep.subr.mxu0 0.0
    %1047 = vmatpush1.msra.mxu0 0.0
    %1048 = vmatprep.subr.mxu0 0.0
    %1049 = vmatpush1.msra.mxu0 0.0
    %1050 = vmatprep.subr.mxu0 0.0
    %1051 = vmatpush1.msra.mxu0 0.0
    %1052 = vmatprep.subr.mxu0 0.0
    %1053 = vmatpush1.msra.mxu0 0.0
    %1054 = vmatprep.subr.mxu0 0.0
    %1055 = vmatpush1.msra.mxu0 0.0
    %1056 = vmatprep.subr.mxu0 0.0
    %1057 = vmatpush1.msra.mxu0 0.0
    %1058 = vmatprep.subr.mxu0 0.0
    %1059 = vmatpush1.msra.mxu0 0.0
    %1060 = vmatprep.subr.mxu0 0.0
    %1061 = vmatpush1.msra.mxu0 0.0
    %1062 = vmatprep.subr.mxu0 0.0
    %1063 = vmatpush1.msra.mxu0 0.0
    %1064 = vmatprep.subr.mxu0 0.0
    %1065 = vmatpush1.msra.mxu0 0.0
    %1066 = vmatprep.subr.mxu0 0.0
    %1067 = vmatpush1.msra.mxu0 0.0
    %1068 = vmatprep.subr.mxu0 0.0
    %1069 = vmatpush1.msra.mxu0 0.0
    %1070 = vmatprep.subr.mxu0 0.0
    %1071 = vmatpush1.msra.mxu0 0.0
    %1072 = vmatprep.subr.mxu0 0.0
    %1073 = vmatpush1.msra.mxu0 0.0
    %1074 = vmatprep.subr.mxu0 0.0
    %1075 = vmatpush1.msra.mxu0 0.0
    %1076 = vmatprep.subr.mxu0 0.0
    %1077 = vmatpush1.msra.mxu0 0.0
    %1078 = vmatprep.subr.mxu0 0.0
    %1079 = vmatpush1.msra.mxu0 0.0
    %1080 = vmatprep.subr.mxu0 0.0
    %1081 = vmatpush1.msra.mxu0 0.0
    %1082 = vmatprep.mubr.f32.mxu0 0.0
    %1083 = vmatmul.mubr.f32.gmra.mrb[0].mxu0 %v945
    %v1084 = vpop.f32.mrb[0].mxu0
    %v1085 = vadd.f32 %v939, %v1084
    %v1086 = vpop.f32.mrb[0].mxu0
    %1087 = vdwg.mxu0
    %v1089 = vlaneseq
    %v1090 = vshrl.u32 %v1089, 7
    %v1091 = vsub.s32 0, %v1090
    %v1092 = vrot.slane %v924, %v1091
    %v1093 = vlaneseq
    %v1094 = vshrl.u32 %v1093, 7
    %v1095 = vsub.s32 1, %v1094
    %v1096 = vrot.slane %v924, %v1095
    %v1097 = vlaneseq
    %v1098 = vshrl.u32 %v1097, 7
    %v1099 = vsub.s32 2, %v1098
    %v1100 = vrot.slane %v924, %v1099
    %1104 = vmatprep.subr.mxu0 %v778
    %1105 = vmatpush1.msra.mxu0 %v777
    %1106 = vmatprep.subr.mxu0 %v781
    %1107 = vmatpush1.msra.mxu0 %v780
    %1108 = vmatprep.subr.mxu0 %v784
    %1109 = vmatpush1.msra.mxu0 %v783
    %1110 = vmatprep.subr.mxu0 %v787
    %1111 = vmatpush1.msra.mxu0 %v786
    %1112 = vmatprep.subr.mxu0 %v790
    %1113 = vmatpush1.msra.mxu0 %v789
    %1114 = vmatprep.subr.mxu0 %v793
    %1115 = vmatpush1.msra.mxu0 %v792
    %1116 = vmatprep.subr.mxu0 %v796
    %1117 = vmatpush1.msra.mxu0 %v795
    %1118 = vmatprep.subr.mxu0 %v799
    %1119 = vmatpush1.msra.mxu0 %v798
    %1120 = vmatprep.subr.mxu0 %v802
    %1121 = vmatpush1.msra.mxu0 %v801
    %1122 = vmatprep.subr.mxu0 %v805
    %1123 = vmatpush1.msra.mxu0 %v804
    %1124 = vmatprep.subr.mxu0 %v808
    %1125 = vmatpush1.msra.mxu0 %v807
    %1126 = vmatprep.subr.mxu0 %v811
    %1127 = vmatpush1.msra.mxu0 %v810
    %1128 = vmatprep.subr.mxu0 %v814
    %1129 = vmatpush1.msra.mxu0 %v813
    %1130 = vmatprep.subr.mxu0 %v817
    %1131 = vmatpush1.msra.mxu0 %v816
    %1132 = vmatprep.subr.mxu0 %v820
    %1133 = vmatpush1.msra.mxu0 %v819
    %1134 = vmatprep.subr.mxu0 %v823
    %1135 = vmatpush1.msra.mxu0 %v822
    %1136 = vmatprep.subr.mxu0 0.0
    %1137 = vmatpush1.msra.mxu0 0.0
    %1138 = vmatprep.subr.mxu0 0.0
    %1139 = vmatpush1.msra.mxu0 0.0
    %1140 = vmatprep.subr.mxu0 0.0
    %1141 = vmatpush1.msra.mxu0 0.0
    %1142 = vmatprep.subr.mxu0 0.0
    %1143 = vmatpush1.msra.mxu0 0.0
    %1144 = vmatprep.subr.mxu0 0.0
    %1145 = vmatpush1.msra.mxu0 0.0
    %1146 = vmatprep.subr.mxu0 0.0
    %1147 = vmatpush1.msra.mxu0 0.0
    %1148 = vmatprep.subr.mxu0 0.0
    %1149 = vmatpush1.msra.mxu0 0.0
    %1150 = vmatprep.subr.mxu0 0.0
    %1151 = vmatpush1.msra.mxu0 0.0
    %1152 = vmatprep.subr.mxu0 0.0
    %1153 = vmatpush1.msra.mxu0 0.0
    %1154 = vmatprep.subr.mxu0 0.0
    %1155 = vmatpush1.msra.mxu0 0.0
    %1156 = vmatprep.subr.mxu0 0.0
    %1157 = vmatpush1.msra.mxu0 0.0
    %1158 = vmatprep.subr.mxu0 0.0
    %1159 = vmatpush1.msra.mxu0 0.0
    %1160 = vmatprep.subr.mxu0 0.0
    %1161 = vmatpush1.msra.mxu0 0.0
    %1162 = vmatprep.subr.mxu0 0.0
    %1163 = vmatpush1.msra.mxu0 0.0
    %1164 = vmatprep.subr.mxu0 0.0
    %1165 = vmatpush1.msra.mxu0 0.0
    %1166 = vmatprep.subr.mxu0 0.0
    %1167 = vmatpush1.msra.mxu0 0.0
    %1168 = vmatprep.mubr.f32.mxu0 0.0
    %1169 = vmatmul.mubr.f32.gmra.mrb[0].mxu0 0.0
    %v1170 = vpop.f32.mrb[0].mxu0
    %v1171 = vadd.f32 %v1092, %v1170
    %v1172 = vpop.f32.mrb[0].mxu0
    %v1173 = vadd.f32 %v1096, %v1172
    %1174 = vdwg.mxu0
    %1175 = vmatprep.subr.mxu0 0.0
    %1176 = vmatpush1.msra.mxu0 %v779
    %1177 = vmatprep.subr.mxu0 0.0
    %1178 = vmatpush1.msra.mxu0 %v782
    %1179 = vmatprep.subr.mxu0 0.0
    %1180 = vmatpush1.msra.mxu0 %v785
    %1181 = vmatprep.subr.mxu0 0.0
    %1182 = vmatpush1.msra.mxu0 %v788
    %1183 = vmatprep.subr.mxu0 0.0
    %1184 = vmatpush1.msra.mxu0 %v791
    %1185 = vmatprep.subr.mxu0 0.0
    %1186 = vmatpush1.msra.mxu0 %v794
    %1187 = vmatprep.subr.mxu0 0.0
    %1188 = vmatpush1.msra.mxu0 %v797
    %1189 = vmatprep.subr.mxu0 0.0
    %1190 = vmatpush1.msra.mxu0 %v800
    %1191 = vmatprep.subr.mxu0 0.0
    %1192 = vmatpush1.msra.mxu0 %v803
    %1193 = vmatprep.subr.mxu0 0.0
    %1194 = vmatpush1.msra.mxu0 %v806
    %1195 = vmatprep.subr.mxu0 0.0
    %1196 = vmatpush1.msra.mxu0 %v809
    %1197 = vmatprep.subr.mxu0 0.0
    %1198 = vmatpush1.msra.mxu0 %v812
    %1199 = vmatprep.subr.mxu0 0.0
    %1200 = vmatpush1.msra.mxu0 %v815
    %1201 = vmatprep.subr.mxu0 0.0
    %1202 = vmatpush1.msra.mxu0 %v818
    %1203 = vmatprep.subr.mxu0 0.0
    %1204 = vmatpush1.msra.mxu0 %v821
    %1205 = vmatprep.subr.mxu0 0.0
    %1206 = vmatpush1.msra.mxu0 %v824
    %1207 = vmatprep.subr.mxu0 0.0
    %1208 = vmatpush1.msra.mxu0 0.0
    %1209 = vmatprep.subr.mxu0 0.0
    %1210 = vmatpush1.msra.mxu0 0.0
    %1211 = vmatprep.subr.mxu0 0.0
    %1212 = vmatpush1.msra.mxu0 0.0
    %1213 = vmatprep.subr.mxu0 0.0
    %1214 = vmatpush1.msra.mxu0 0.0
    %1215 = vmatprep.subr.mxu0 0.0
    %1216 = vmatpush1.msra.mxu0 0.0
    %1217 = vmatprep.subr.mxu0 0.0
    %1218 = vmatpush1.msra.mxu0 0.0
    %1219 = vmatprep.subr.mxu0 0.0
    %1220 = vmatpush1.msra.mxu0 0.0
    %1221 = vmatprep.subr.mxu0 0.0
    %1222 = vmatpush1.msra.mxu0 0.0
    %1223 = vmatprep.subr.mxu0 0.0
    %1224 = vmatpush1.msra.mxu0 0.0
    %1225 = vmatprep.subr.mxu0 0.0
    %1226 = vmatpush1.msra.mxu0 0.0
    %1227 = vmatprep.subr.mxu0 0.0
    %1228 = vmatpush1.msra.mxu0 0.0
    %1229 = vmatprep.subr.mxu0 0.0
    %1230 = vmatpush1.msra.mxu0 0.0
    %1231 = vmatprep.subr.mxu0 0.0
    %1232 = vmatpush1.msra.mxu0 0.0
    %1233 = vmatprep.subr.mxu0 0.0
    %1234 = vmatpush1.msra.mxu0 0.0
    %1235 = vmatprep.subr.mxu0 0.0
    %1236 = vmatpush1.msra.mxu0 0.0
    %1237 = vmatprep.subr.mxu0 0.0
    %1238 = vmatpush1.msra.mxu0 0.0
    %1239 = vmatprep.mubr.f32.mxu0 0.0
    %1240 = vmatmul.mubr.f32.gmra.mrb[0].mxu0 0.0
    %v1241 = vpop.f32.mrb[0].mxu0
    %v1242 = vadd.f32 %v1100, %v1241
    %v1243 = vpop.f32.mrb[0].mxu0
    %1244 = vdwg.mxu0
    %v1245 = vadd.f32 %v1014, %v1171
    %v1246 = vxor.u32 %v1245, 2147483648
    %v1247 = vmul.f32 %v1246, 1.442695
    %v1248 = vpow.pop %v1247
    %v1249 = vadd.f32 %v1248, 1.0
    %v1250 = vrcp.pop %v1249
    %v1251 = vmul.f32 1.0, %v1250
    %v1252 = vadd.f32 %v1016, %v1173
    %v1253 = vxor.u32 %v1252, 2147483648
    %v1254 = vmul.f32 %v1253, 1.442695
    %v1255 = vpow.pop %v1254
    %v1256 = vadd.f32 %v1255, 1.0
    %v1257 = vrcp.pop %v1256
    %v1258 = vmul.f32 1.0, %v1257
    %v1259 = vmul.f32 %v1251, %v1242
    %v1260 = vadd.f32 %v1085, %v1259
    %v1261 = vtanh.pop %v1260
    %v1262 = vsub.f32 1.0, %v1258
    %v1263 = vmul.f32 %v1262, %v1261
    %v1264 = vmul.f32 %v1258, 0.0
    %v1265 = vadd.f32 %v1263, %v1264
    %v1267 = vlaneseq
    %v1268 = vshrl.u32 %v1267, 7
    %v1269 = vsub.s32 0, %v1268
    %v1270 = vrot.slane %v922, %v1269
    %v1271 = vlaneseq
    %v1272 = vshrl.u32 %v1271, 7
    %v1273 = vsub.s32 1, %v1272
    %v1274 = vrot.slane %v922, %v1273
    %v1275 = vlaneseq
    %v1276 = vshrl.u32 %v1275, 7
    %v1277 = vsub.s32 2, %v1276
    %v1278 = vrot.slane %v922, %v1277
    %1282 = vmatprep.subr.mxu0 %v682
    %1283 = vmatpush1.msra.mxu0 %v681
    %1284 = vmatprep.subr.mxu0 %v685
    %1285 = vmatpush1.msra.mxu0 %v684
    %1286 = vmatprep.subr.mxu0 %v688
    %1287 = vmatpush1.msra.mxu0 %v687
    %1288 = vmatprep.subr.mxu0 %v691
    %1289 = vmatpush1.msra.mxu0 %v690
    %1290 = vmatprep.subr.mxu0 %v694
    %1291 = vmatpush1.msra.mxu0 %v693
    %1292 = vmatprep.subr.mxu0 %v697
    %1293 = vmatpush1.msra.mxu0 %v696
    %1294 = vmatprep.subr.mxu0 %v700
    %1295 = vmatpush1.msra.mxu0 %v699
    %1296 = vmatprep.subr.mxu0 %v703
    %1297 = vmatpush1.msra.mxu0 %v702
    %1298 = vmatprep.subr.mxu0 %v706
    %1299 = vmatpush1.msra.mxu0 %v705
    %1300 = vmatprep.subr.mxu0 %v709
    %1301 = vmatpush1.msra.mxu0 %v708
    %1302 = vmatprep.subr.mxu0 %v712
    %1303 = vmatpush1.msra.mxu0 %v711
    %1304 = vmatprep.subr.mxu0 %v715
    %1305 = vmatpush1.msra.mxu0 %v714
    %1306 = vmatprep.subr.mxu0 %v718
    %1307 = vmatpush1.msra.mxu0 %v717
    %1308 = vmatprep.subr.mxu0 %v721
    %1309 = vmatpush1.msra.mxu0 %v720
    %1310 = vmatprep.subr.mxu0 %v724
    %1311 = vmatpush1.msra.mxu0 %v723
    %1312 = vmatprep.subr.mxu0 %v727
    %1313 = vmatpush1.msra.mxu0 %v726
    %1314 = vmatprep.subr.mxu0 0.0
    %1315 = vmatpush1.msra.mxu0 0.0
    %1316 = vmatprep.subr.mxu0 0.0
    %1317 = vmatpush1.msra.mxu0 0.0
    %1318 = vmatprep.subr.mxu0 0.0
    %1319 = vmatpush1.msra.mxu0 0.0
    %1320 = vmatprep.subr.mxu0 0.0
    %1321 = vmatpush1.msra.mxu0 0.0
    %1322 = vmatprep.subr.mxu0 0.0
    %1323 = vmatpush1.msra.mxu0 0.0
    %1324 = vmatprep.subr.mxu0 0.0
    %1325 = vmatpush1.msra.mxu0 0.0
    %1326 = vmatprep.subr.mxu0 0.0
    %1327 = vmatpush1.msra.mxu0 0.0
    %1328 = vmatprep.subr.mxu0 0.0
    %1329 = vmatpush1.msra.mxu0 0.0
    %1330 = vmatprep.subr.mxu0 0.0
    %1331 = vmatpush1.msra.mxu0 0.0
    %1332 = vmatprep.subr.mxu0 0.0
    %1333 = vmatpush1.msra.mxu0 0.0
    %1334 = vmatprep.subr.mxu0 0.0
    %1335 = vmatpush1.msra.mxu0 0.0
    %1336 = vmatprep.subr.mxu0 0.0
    %1337 = vmatpush1.msra.mxu0 0.0
    %1338 = vmatprep.subr.mxu0 0.0
    %1339 = vmatpush1.msra.mxu0 0.0
    %1340 = vmatprep.subr.mxu0 0.0
    %1341 = vmatpush1.msra.mxu0 0.0
    %1342 = vmatprep.subr.mxu0 0.0
    %1343 = vmatpush1.msra.mxu0 0.0
    %1344 = vmatprep.subr.mxu0 0.0
    %1345 = vmatpush1.msra.mxu0 0.0
    %1346 = vmatprep.mubr.f32.mxu0 0.0
    %1347 = vmatmul.mubr.f32.gmra.mrb[0].mxu0 %v1265
    %v1348 = vpop.f32.mrb[0].mxu0
    %v1349 = vadd.f32 %v1270, %v1348
    %v1350 = vpop.f32.mrb[0].mxu0
    %v1351 = vadd.f32 %v1274, %v1350
    %1352 = vdwg.mxu0
    %1353 = vmatprep.subr.mxu0 0.0
    %1354 = vmatpush1.msra.mxu0 %v683
    %1355 = vmatprep.subr.mxu0 0.0
    %1356 = vmatpush1.msra.mxu0 %v686
    %1357 = vmatprep.subr.mxu0 0.0
    %1358 = vmatpush1.msra.mxu0 %v689
    %1359 = vmatprep.subr.mxu0 0.0
    %1360 = vmatpush1.msra.mxu0 %v692
    %1361 = vmatprep.subr.mxu0 0.0
    %1362 = vmatpush1.msra.mxu0 %v695
    %1363 = vmatprep.subr.mxu0 0.0
    %1364 = vmatpush1.msra.mxu0 %v698
    %1365 = vmatprep.subr.mxu0 0.0
    %1366 = vmatpush1.msra.mxu0 %v701
    %1367 = vmatprep.subr.mxu0 0.0
    %1368 = vmatpush1.msra.mxu0 %v704
    %1369 = vmatprep.subr.mxu0 0.0
    %1370 = vmatpush1.msra.mxu0 %v707
    %1371 = vmatprep.subr.mxu0 0.0
    %1372 = vmatpush1.msra.mxu0 %v710
    %1373 = vmatprep.subr.mxu0 0.0
    %1374 = vmatpush1.msra.mxu0 %v713
    %1375 = vmatprep.subr.mxu0 0.0
    %1376 = vmatpush1.msra.mxu0 %v716
    %1377 = vmatprep.subr.mxu0 0.0
    %1378 = vmatpush1.msra.mxu0 %v719
    %1379 = vmatprep.subr.mxu0 0.0
    %1380 = vmatpush1.msra.mxu0 %v722
    %1381 = vmatprep.subr.mxu0 0.0
    %1382 = vmatpush1.msra.mxu0 %v725
    %1383 = vmatprep.subr.mxu0 0.0
    %1384 = vmatpush1.msra.mxu0 %v728
    %1385 = vmatprep.subr.mxu0 0.0
    %1386 = vmatpush1.msra.mxu0 0.0
    %1387 = vmatprep.subr.mxu0 0.0
    %1388 = vmatpush1.msra.mxu0 0.0
    %1389 = vmatprep.subr.mxu0 0.0
    %1390 = vmatpush1.msra.mxu0 0.0
    %1391 = vmatprep.subr.mxu0 0.0
    %1392 = vmatpush1.msra.mxu0 0.0
    %1393 = vmatprep.subr.mxu0 0.0
    %1394 = vmatpush1.msra.mxu0 0.0
    %1395 = vmatprep.subr.mxu0 0.0
    %1396 = vmatpush1.msra.mxu0 0.0
    %1397 = vmatprep.subr.mxu0 0.0
    %1398 = vmatpush1.msra.mxu0 0.0
    %1399 = vmatprep.subr.mxu0 0.0
    %1400 = vmatpush1.msra.mxu0 0.0
    %1401 = vmatprep.subr.mxu0 0.0
    %1402 = vmatpush1.msra.mxu0 0.0
    %1403 = vmatprep.subr.mxu0 0.0
    %1404 = vmatpush1.msra.mxu0 0.0
    %1405 = vmatprep.subr.mxu0 0.0
    %1406 = vmatpush1.msra.mxu0 0.0
    %1407 = vmatprep.subr.mxu0 0.0
    %1408 = vmatpush1.msra.mxu0 0.0
    %1409 = vmatprep.subr.mxu0 0.0
    %1410 = vmatpush1.msra.mxu0 0.0
    %1411 = vmatprep.subr.mxu0 0.0
    %1412 = vmatpush1.msra.mxu0 0.0
    %1413 = vmatprep.subr.mxu0 0.0
    %1414 = vmatpush1.msra.mxu0 0.0
    %1415 = vmatprep.subr.mxu0 0.0
    %1416 = vmatpush1.msra.mxu0 0.0
    %1417 = vmatprep.mubr.f32.mxu0 0.0
    %1418 = vmatmul.mubr.f32.gmra.mrb[0].mxu0 %v1265
    %v1419 = vpop.f32.mrb[0].mxu0
    %v1420 = vadd.f32 %v1278, %v1419
    %v1421 = vpop.f32.mrb[0].mxu0
    %1422 = vdwg.mxu0
    %v1424 = vlaneseq
    %v1425 = vshrl.u32 %v1424, 7
    %v1426 = vsub.s32 0, %v1425
    %v1427 = vrot.slane %v925, %v1426
    %v1428 = vlaneseq
    %v1429 = vshrl.u32 %v1428, 7
    %v1430 = vsub.s32 1, %v1429
    %v1431 = vrot.slane %v925, %v1430
    %v1432 = vlaneseq
    %v1433 = vshrl.u32 %v1432, 7
    %v1434 = vsub.s32 2, %v1433
    %v1435 = vrot.slane %v925, %v1434
    %1439 = vmatprep.subr.mxu0 %v826
    %1440 = vmatpush1.msra.mxu0 %v825
    %1441 = vmatprep.subr.mxu0 %v829
    %1442 = vmatpush1.msra.mxu0 %v828
    %1443 = vmatprep.subr.mxu0 %v832
    %1444 = vmatpush1.msra.mxu0 %v831
    %1445 = vmatprep.subr.mxu0 %v835
    %1446 = vmatpush1.msra.mxu0 %v834
    %1447 = vmatprep.subr.mxu0 %v838
    %1448 = vmatpush1.msra.mxu0 %v837
    %1449 = vmatprep.subr.mxu0 %v841
    %1450 = vmatpush1.msra.mxu0 %v840
    %1451 = vmatprep.subr.mxu0 %v844
    %1452 = vmatpush1.msra.mxu0 %v843
    %1453 = vmatprep.subr.mxu0 %v847
    %1454 = vmatpush1.msra.mxu0 %v846
    %1455 = vmatprep.subr.mxu0 %v850
    %1456 = vmatpush1.msra.mxu0 %v849
    %1457 = vmatprep.subr.mxu0 %v853
    %1458 = vmatpush1.msra.mxu0 %v852
    %1459 = vmatprep.subr.mxu0 %v856
    %1460 = vmatpush1.msra.mxu0 %v855
    %1461 = vmatprep.subr.mxu0 %v859
    %1462 = vmatpush1.msra.mxu0 %v858
    %1463 = vmatprep.subr.mxu0 %v862
    %1464 = vmatpush1.msra.mxu0 %v861
    %1465 = vmatprep.subr.mxu0 %v865
    %1466 = vmatpush1.msra.mxu0 %v864
    %1467 = vmatprep.subr.mxu0 %v868
    %1468 = vmatpush1.msra.mxu0 %v867
    %1469 = vmatprep.subr.mxu0 %v871
    %1470 = vmatpush1.msra.mxu0 %v870
    %1471 = vmatprep.subr.mxu0 0.0
    %1472 = vmatpush1.msra.mxu0 0.0
    %1473 = vmatprep.subr.mxu0 0.0
    %1474 = vmatpush1.msra.mxu0 0.0
    %1475 = vmatprep.subr.mxu0 0.0
    %1476 = vmatpush1.msra.mxu0 0.0
    %1477 = vmatprep.subr.mxu0 0.0
    %1478 = vmatpush1.msra.mxu0 0.0
    %1479 = vmatprep.subr.mxu0 0.0
    %1480 = vmatpush1.msra.mxu0 0.0
    %1481 = vmatprep.subr.mxu0 0.0
    %1482 = vmatpush1.msra.mxu0 0.0
    %1483 = vmatprep.subr.mxu0 0.0
    %1484 = vmatpush1.msra.mxu0 0.0
    %1485 = vmatprep.subr.mxu0 0.0
    %1486 = vmatpush1.msra.mxu0 0.0
    %1487 = vmatprep.subr.mxu0 0.0
    %1488 = vmatpush1.msra.mxu0 0.0
    %1489 = vmatprep.subr.mxu0 0.0
    %1490 = vmatpush1.msra.mxu0 0.0
    %1491 = vmatprep.subr.mxu0 0.0
    %1492 = vmatpush1.msra.mxu0 0.0
    %1493 = vmatprep.subr.mxu0 0.0
    %1494 = vmatpush1.msra.mxu0 0.0
    %1495 = vmatprep.subr.mxu0 0.0
    %1496 = vmatpush1.msra.mxu0 0.0
    %1497 = vmatprep.subr.mxu0 0.0
    %1498 = vmatpush1.msra.mxu0 0.0
    %1499 = vmatprep.subr.mxu0 0.0
    %1500 = vmatpush1.msra.mxu0 0.0
    %1501 = vmatprep.subr.mxu0 0.0
    %1502 = vmatpush1.msra.mxu0 0.0
    %1503 = vmatprep.mubr.f32.mxu0 0.0
    %1504 = vmatmul.mubr.f32.gmra.mrb[0].mxu0 0.0
    %v1505 = vpop.f32.mrb[0].mxu0
    %v1506 = vadd.f32 %v1427, %v1505
    %v1507 = vpop.f32.mrb[0].mxu0
    %v1508 = vadd.f32 %v1431, %v1507
    %1509 = vdwg.mxu0
    %1510 = vmatprep.subr.mxu0 0.0
    %1511 = vmatpush1.msra.mxu0 %v827
    %1512 = vmatprep.subr.mxu0 0.0
    %1513 = vmatpush1.msra.mxu0 %v830
    %1514 = vmatprep.subr.mxu0 0.0
    %1515 = vmatpush1.msra.mxu0 %v833
    %1516 = vmatprep.subr.mxu0 0.0
    %1517 = vmatpush1.msra.mxu0 %v836
    %1518 = vmatprep.subr.mxu0 0.0
    %1519 = vmatpush1.msra.mxu0 %v839
    %1520 = vmatprep.subr.mxu0 0.0
    %1521 = vmatpush1.msra.mxu0 %v842
    %1522 = vmatprep.subr.mxu0 0.0
    %1523 = vmatpush1.msra.mxu0 %v845
    %1524 = vmatprep.subr.mxu0 0.0
    %1525 = vmatpush1.msra.mxu0 %v848
    %1526 = vmatprep.subr.mxu0 0.0
    %1527 = vmatpush1.msra.mxu0 %v851
    %1528 = vmatprep.subr.mxu0 0.0
    %1529 = vmatpush1.msra.mxu0 %v854
    %1530 = vmatprep.subr.mxu0 0.0
    %1531 = vmatpush1.msra.mxu0 %v857
    %1532 = vmatprep.subr.mxu0 0.0
    %1533 = vmatpush1.msra.mxu0 %v860
    %1534 = vmatprep.subr.mxu0 0.0
    %1535 = vmatpush1.msra.mxu0 %v863
    %1536 = vmatprep.subr.mxu0 0.0
    %1537 = vmatpush1.msra.mxu0 %v866
    %1538 = vmatprep.subr.mxu0 0.0
    %1539 = vmatpush1.msra.mxu0 %v869
    %1540 = vmatprep.subr.mxu0 0.0
    %1541 = vmatpush1.msra.mxu0 %v872
    %1542 = vmatprep.subr.mxu0 0.0
    %1543 = vmatpush1.msra.mxu0 0.0
    %1544 = vmatprep.subr.mxu0 0.0
    %1545 = vmatpush1.msra.mxu0 0.0
    %1546 = vmatprep.subr.mxu0 0.0
    %1547 = vmatpush1.msra.mxu0 0.0
    %1548 = vmatprep.subr.mxu0 0.0
    %1549 = vmatpush1.msra.mxu0 0.0
    %1550 = vmatprep.subr.mxu0 0.0
    %1551 = vmatpush1.msra.mxu0 0.0
    %1552 = vmatprep.subr.mxu0 0.0
    %1553 = vmatpush1.msra.mxu0 0.0
    %1554 = vmatprep.subr.mxu0 0.0
    %1555 = vmatpush1.msra.mxu0 0.0
    %1556 = vmatprep.subr.mxu0 0.0
    %1557 = vmatpush1.msra.mxu0 0.0
    %1558 = vmatprep.subr.mxu0 0.0
    %1559 = vmatpush1.msra.mxu0 0.0
    %1560 = vmatprep.subr.mxu0 0.0
    %1561 = vmatpush1.msra.mxu0 0.0
    %1562 = vmatprep.subr.mxu0 0.0
    %1563 = vmatpush1.msra.mxu0 0.0
    %1564 = vmatprep.subr.mxu0 0.0
    %1565 = vmatpush1.msra.mxu0 0.0
    %1566 = vmatprep.subr.mxu0 0.0
    %1567 = vmatpush1.msra.mxu0 0.0
    %1568 = vmatprep.subr.mxu0 0.0
    %1569 = vmatpush1.msra.mxu0 0.0
    %1570 = vmatprep.subr.mxu0 0.0
    %1571 = vmatpush1.msra.mxu0 0.0
    %1572 = vmatprep.subr.mxu0 0.0
    %1573 = vmatpush1.msra.mxu0 0.0
    %1574 = vmatprep.mubr.f32.mxu0 0.0
    %1575 = vmatmul.mubr.f32.gmra.mrb[0].mxu0 0.0
    %v1576 = vpop.f32.mrb[0].mxu0
    %v1577 = vadd.f32 %v1435, %v1576
    %v1578 = vpop.f32.mrb[0].mxu0
    %1579 = vdwg.mxu0
    %v1580 = vadd.f32 %v1349, %v1506
    %v1581 = vxor.u32 %v1580, 2147483648
    %v1582 = vmul.f32 %v1581, 1.442695
    %v1583 = vpow.pop %v1582
    %v1584 = vadd.f32 %v1583, 1.0
    %v1585 = vrcp.pop %v1584
    %v1586 = vmul.f32 1.0, %v1585
    %v1587 = vadd.f32 %v1351, %v1508
    %v1588 = vxor.u32 %v1587, 2147483648
    %v1589 = vmul.f32 %v1588, 1.442695
    %v1590 = vpow.pop %v1589
    %v1591 = vadd.f32 %v1590, 1.0
    %v1592 = vrcp.pop %v1591
    %v1593 = vmul.f32 1.0, %v1592
    %v1594 = vmul.f32 %v1586, %v1577
    %v1595 = vadd.f32 %v1420, %v1594
    %v1596 = vtanh.pop %v1595
    %v1597 = vsub.f32 1.0, %v1593
    %v1598 = vmul.f32 %v1597, %v1596
    %v1599 = vmul.f32 %v1593, 0.0
    %v1600 = vadd.f32 %v1598, %v1599
    %v1602 = vlaneseq
    %v1603 = vshrl.u32 %v1602, 7
    %v1604 = vsub.s32 0, %v1603
    %v1605 = vrot.slane %v923, %v1604
    %v1606 = vlaneseq
    %v1607 = vshrl.u32 %v1606, 7
    %v1608 = vsub.s32 1, %v1607
    %v1609 = vrot.slane %v923, %v1608
    %v1610 = vlaneseq
    %v1611 = vshrl.u32 %v1610, 7
    %v1612 = vsub.s32 2, %v1611
    %v1613 = vrot.slane %v923, %v1612
    %1617 = vmatprep.subr.mxu0 %v730
    %1618 = vmatpush1.msra.mxu0 %v729
    %1619 = vmatprep.subr.mxu0 %v733
    %1620 = vmatpush1.msra.mxu0 %v732
    %1621 = vmatprep.subr.mxu0 %v736
    %1622 = vmatpush1.msra.mxu0 %v735
    %1623 = vmatprep.subr.mxu0 %v739
    %1624 = vmatpush1.msra.mxu0 %v738
    %1625 = vmatprep.subr.mxu0 %v742
    %1626 = vmatpush1.msra.mxu0 %v741
    %1627 = vmatprep.subr.mxu0 %v745
    %1628 = vmatpush1.msra.mxu0 %v744
    %1629 = vmatprep.subr.mxu0 %v748
    %1630 = vmatpush1.msra.mxu0 %v747
    %1631 = vmatprep.subr.mxu0 %v751
    %1632 = vmatpush1.msra.mxu0 %v750
    %1633 = vmatprep.subr.mxu0 %v754
    %1634 = vmatpush1.msra.mxu0 %v753
    %1635 = vmatprep.subr.mxu0 %v757
    %1636 = vmatpush1.msra.mxu0 %v756
    %1637 = vmatprep.subr.mxu0 %v760
    %1638 = vmatpush1.msra.mxu0 %v759
    %1639 = vmatprep.subr.mxu0 %v763
    %1640 = vmatpush1.msra.mxu0 %v762
    %1641 = vmatprep.subr.mxu0 %v766
    %1642 = vmatpush1.msra.mxu0 %v765
    %1643 = vmatprep.subr.mxu0 %v769
    %1644 = vmatpush1.msra.mxu0 %v768
    %1645 = vmatprep.subr.mxu0 %v772
    %1646 = vmatpush1.msra.mxu0 %v771
    %1647 = vmatprep.subr.mxu0 %v775
    %1648 = vmatpush1.msra.mxu0 %v774
    %1649 = vmatprep.subr.mxu0 0.0
    %1650 = vmatpush1.msra.mxu0 0.0
    %1651 = vmatprep.subr.mxu0 0.0
    %1652 = vmatpush1.msra.mxu0 0.0
    %1653 = vmatprep.subr.mxu0 0.0
    %1654 = vmatpush1.msra.mxu0 0.0
    %1655 = vmatprep.subr.mxu0 0.0
    %1656 = vmatpush1.msra.mxu0 0.0
    %1657 = vmatprep.subr.mxu0 0.0
    %1658 = vmatpush1.msra.mxu0 0.0
    %1659 = vmatprep.subr.mxu0 0.0
    %1660 = vmatpush1.msra.mxu0 0.0
    %1661 = vmatprep.subr.mxu0 0.0
    %1662 = vmatpush1.msra.mxu0 0.0
    %1663 = vmatprep.subr.mxu0 0.0
    %1664 = vmatpush1.msra.mxu0 0.0
    %1665 = vmatprep.subr.mxu0 0.0
    %1666 = vmatpush1.msra.mxu0 0.0
    %1667 = vmatprep.subr.mxu0 0.0
    %1668 = vmatpush1.msra.mxu0 0.0
    %1669 = vmatprep.subr.mxu0 0.0
    %1670 = vmatpush1.msra.mxu0 0.0
    %1671 = vmatprep.subr.mxu0 0.0
    %1672 = vmatpush1.msra.mxu0 0.0
    %1673 = vmatprep.subr.mxu0 0.0
    %1674 = vmatpush1.msra.mxu0 0.0
    %1675 = vmatprep.subr.mxu0 0.0
    %1676 = vmatpush1.msra.mxu0 0.0
    %1677 = vmatprep.subr.mxu0 0.0
    %1678 = vmatpush1.msra.mxu0 0.0
    %1679 = vmatprep.subr.mxu0 0.0
    %1680 = vmatpush1.msra.mxu0 0.0
    %1681 = vmatprep.mubr.f32.mxu0 0.0
    %1682 = vmatmul.mubr.f32.gmra.mrb[0].mxu0 %v1600
    %v1683 = vpop.f32.mrb[0].mxu0
    %v1684 = vadd.f32 %v1605, %v1683
    %v1685 = vpop.f32.mrb[0].mxu0
    %v1686 = vadd.f32 %v1609, %v1685
    %1687 = vdwg.mxu0
    %1688 = vmatprep.subr.mxu0 0.0
    %1689 = vmatpush1.msra.mxu0 %v731
    %1690 = vmatprep.subr.mxu0 0.0
    %1691 = vmatpush1.msra.mxu0 %v734
    %1692 = vmatprep.subr.mxu0 0.0
    %1693 = vmatpush1.msra.mxu0 %v737
    %1694 = vmatprep.subr.mxu0 0.0
    %1695 = vmatpush1.msra.mxu0 %v740
    %1696 = vmatprep.subr.mxu0 0.0
    %1697 = vmatpush1.msra.mxu0 %v743
    %1698 = vmatprep.subr.mxu0 0.0
    %1699 = vmatpush1.msra.mxu0 %v746
    %1700 = vmatprep.subr.mxu0 0.0
    %1701 = vmatpush1.msra.mxu0 %v749
    %1702 = vmatprep.subr.mxu0 0.0
    %1703 = vmatpush1.msra.mxu0 %v752
    %1704 = vmatprep.subr.mxu0 0.0
    %1705 = vmatpush1.msra.mxu0 %v755
    %1706 = vmatprep.subr.mxu0 0.0
    %1707 = vmatpush1.msra.mxu0 %v758
    %1708 = vmatprep.subr.mxu0 0.0
    %1709 = vmatpush1.msra.mxu0 %v761
    %1710 = vmatprep.subr.mxu0 0.0
    %1711 = vmatpush1.msra.mxu0 %v764
    %1712 = vmatprep.subr.mxu0 0.0
    %1713 = vmatpush1.msra.mxu0 %v767
    %1714 = vmatprep.subr.mxu0 0.0
    %1715 = vmatpush1.msra.mxu0 %v770
    %1716 = vmatprep.subr.mxu0 0.0
    %1717 = vmatpush1.msra.mxu0 %v773
    %1718 = vmatprep.subr.mxu0 0.0
    %1719 = vmatpush1.msra.mxu0 %v776
    %1720 = vmatprep.subr.mxu0 0.0
    %1721 = vmatpush1.msra.mxu0 0.0
    %1722 = vmatprep.subr.mxu0 0.0
    %1723 = vmatpush1.msra.mxu0 0.0
    %1724 = vmatprep.subr.mxu0 0.0
    %1725 = vmatpush1.msra.mxu0 0.0
    %1726 = vmatprep.subr.mxu0 0.0
    %1727 = vmatpush1.msra.mxu0 0.0
    %1728 = vmatprep.subr.mxu0 0.0
    %1729 = vmatpush1.msra.mxu0 0.0
    %1730 = vmatprep.subr.mxu0 0.0
    %1731 = vmatpush1.msra.mxu0 0.0
    %1732 = vmatprep.subr.mxu0 0.0
    %1733 = vmatpush1.msra.mxu0 0.0
    %1734 = vmatprep.subr.mxu0 0.0
    %1735 = vmatpush1.msra.mxu0 0.0
    %1736 = vmatprep.subr.mxu0 0.0
    %1737 = vmatpush1.msra.mxu0 0.0
    %1738 = vmatprep.subr.mxu0 0.0
    %1739 = vmatpush1.msra.mxu0 0.0
    %1740 = vmatprep.subr.mxu0 0.0
    %1741 = vmatpush1.msra.mxu0 0.0
    %1742 = vmatprep.subr.mxu0 0.0
    %1743 = vmatpush1.msra.mxu0 0.0
    %1744 = vmatprep.subr.mxu0 0.0
    %1745 = vmatpush1.msra.mxu0 0.0
    %1746 = vmatprep.subr.mxu0 0.0
    %1747 = vmatpush1.msra.mxu0 0.0
    %1748 = vmatprep.subr.mxu0 0.0
    %1749 = vmatpush1.msra.mxu0 0.0
    %1750 = vmatprep.subr.mxu0 0.0
    %1751 = vmatpush1.msra.mxu0 0.0
    %1752 = vmatprep.mubr.f32.mxu0 0.0
    %1753 = vmatmul.mubr.f32.gmra.mrb[0].mxu0 %v1600
    %v1754 = vpop.f32.mrb[0].mxu0
    %v1755 = vadd.f32 %v1613, %v1754
    %v1756 = vpop.f32.mrb[0].mxu0
    %1757 = vdwg.mxu0
    %v1759 = vlaneseq
    %v1760 = vshrl.u32 %v1759, 7
    %v1761 = vsub.s32 0, %v1760
    %v1762 = vrot.slane %v926, %v1761
    %v1763 = vlaneseq
    %v1764 = vshrl.u32 %v1763, 7
    %v1765 = vsub.s32 1, %v1764
    %v1766 = vrot.slane %v926, %v1765
    %v1767 = vlaneseq
    %v1768 = vshrl.u32 %v1767, 7
    %v1769 = vsub.s32 2, %v1768
    %v1770 = vrot.slane %v926, %v1769
    %1774 = vmatprep.subr.mxu0 %v874
    %1775 = vmatpush1.msra.mxu0 %v873
    %1776 = vmatprep.subr.mxu0 %v877
    %1777 = vmatpush1.msra.mxu0 %v876
    %1778 = vmatprep.subr.mxu0 %v880
    %1779 = vmatpush1.msra.mxu0 %v879
    %1780 = vmatprep.subr.mxu0 %v883
    %1781 = vmatpush1.msra.mxu0 %v882
    %1782 = vmatprep.subr.mxu0 %v886
    %1783 = vmatpush1.msra.mxu0 %v885
    %1784 = vmatprep.subr.mxu0 %v889
    %1785 = vmatpush1.msra.mxu0 %v888
    %1786 = vmatprep.subr.mxu0 %v892
    %1787 = vmatpush1.msra.mxu0 %v891
    %1788 = vmatprep.subr.mxu0 %v895
    %1789 = vmatpush1.msra.mxu0 %v894
    %1790 = vmatprep.subr.mxu0 %v898
    %1791 = vmatpush1.msra.mxu0 %v897
    %1792 = vmatprep.subr.mxu0 %v901
    %1793 = vmatpush1.msra.mxu0 %v900
    %1794 = vmatprep.subr.mxu0 %v904
    %1795 = vmatpush1.msra.mxu0 %v903
    %1796 = vmatprep.subr.mxu0 %v907
    %1797 = vmatpush1.msra.mxu0 %v906
    %1798 = vmatprep.subr.mxu0 %v910
    %1799 = vmatpush1.msra.mxu0 %v909
    %1800 = vmatprep.subr.mxu0 %v913
    %1801 = vmatpush1.msra.mxu0 %v912
    %1802 = vmatprep.subr.mxu0 %v916
    %1803 = vmatpush1.msra.mxu0 %v915
    %1804 = vmatprep.subr.mxu0 %v919
    %1805 = vmatpush1.msra.mxu0 %v918
    %1806 = vmatprep.subr.mxu0 0.0
    %1807 = vmatpush1.msra.mxu0 0.0
    %1808 = vmatprep.subr.mxu0 0.0
    %1809 = vmatpush1.msra.mxu0 0.0
    %1810 = vmatprep.subr.mxu0 0.0
    %1811 = vmatpush1.msra.mxu0 0.0
    %1812 = vmatprep.subr.mxu0 0.0
    %1813 = vmatpush1.msra.mxu0 0.0
    %1814 = vmatprep.subr.mxu0 0.0
    %1815 = vmatpush1.msra.mxu0 0.0
    %1816 = vmatprep.subr.mxu0 0.0
    %1817 = vmatpush1.msra.mxu0 0.0
    %1818 = vmatprep.subr.mxu0 0.0
    %1819 = vmatpush1.msra.mxu0 0.0
    %1820 = vmatprep.subr.mxu0 0.0
    %1821 = vmatpush1.msra.mxu0 0.0
    %1822 = vmatprep.subr.mxu0 0.0
    %1823 = vmatpush1.msra.mxu0 0.0
    %1824 = vmatprep.subr.mxu0 0.0
    %1825 = vmatpush1.msra.mxu0 0.0
    %1826 = vmatprep.subr.mxu0 0.0
    %1827 = vmatpush1.msra.mxu0 0.0
    %1828 = vmatprep.subr.mxu0 0.0
    %1829 = vmatpush1.msra.mxu0 0.0
    %1830 = vmatprep.subr.mxu0 0.0
    %1831 = vmatpush1.msra.mxu0 0.0
    %1832 = vmatprep.subr.mxu0 0.0
    %1833 = vmatpush1.msra.mxu0 0.0
    %1834 = vmatprep.subr.mxu0 0.0
    %1835 = vmatpush1.msra.mxu0 0.0
    %1836 = vmatprep.subr.mxu0 0.0
    %1837 = vmatpush1.msra.mxu0 0.0
    %1838 = vmatprep.mubr.f32.mxu0 0.0
    %1839 = vmatmul.mubr.f32.gmra.mrb[0].mxu0 0.0
    %v1840 = vpop.f32.mrb[0].mxu0
    %v1841 = vadd.f32 %v1762, %v1840
    %v1842 = vpop.f32.mrb[0].mxu0
    %v1843 = vadd.f32 %v1766, %v1842
    %1844 = vdwg.mxu0
    %1845 = vmatprep.subr.mxu0 0.0
    %1846 = vmatpush1.msra.mxu0 %v875
    %1847 = vmatprep.subr.mxu0 0.0
    %1848 = vmatpush1.msra.mxu0 %v878
    %1849 = vmatprep.subr.mxu0 0.0
    %1850 = vmatpush1.msra.mxu0 %v881
    %1851 = vmatprep.subr.mxu0 0.0
    %1852 = vmatpush1.msra.mxu0 %v884
    %1853 = vmatprep.subr.mxu0 0.0
    %1854 = vmatpush1.msra.mxu0 %v887
    %1855 = vmatprep.subr.mxu0 0.0
    %1856 = vmatpush1.msra.mxu0 %v890
    %1857 = vmatprep.subr.mxu0 0.0
    %1858 = vmatpush1.msra.mxu0 %v893
    %1859 = vmatprep.subr.mxu0 0.0
    %1860 = vmatpush1.msra.mxu0 %v896
    %1861 = vmatprep.subr.mxu0 0.0
    %1862 = vmatpush1.msra.mxu0 %v899
    %1863 = vmatprep.subr.mxu0 0.0
    %1864 = vmatpush1.msra.mxu0 %v902
    %1865 = vmatprep.subr.mxu0 0.0
    %1866 = vmatpush1.msra.mxu0 %v905
    %1867 = vmatprep.subr.mxu0 0.0
    %1868 = vmatpush1.msra.mxu0 %v908
    %1869 = vmatprep.subr.mxu0 0.0
    %1870 = vmatpush1.msra.mxu0 %v911
    %1871 = vmatprep.subr.mxu0 0.0
    %1872 = vmatpush1.msra.mxu0 %v914
    %1873 = vmatprep.subr.mxu0 0.0
    %1874 = vmatpush1.msra.mxu0 %v917
    %1875 = vmatprep.subr.mxu0 0.0
    %1876 = vmatpush1.msra.mxu0 %v920
    %1877 = vmatprep.subr.mxu0 0.0
    %1878 = vmatpush1.msra.mxu0 0.0
    %1879 = vmatprep.subr.mxu0 0.0
    %1880 = vmatpush1.msra.mxu0 0.0
    %1881 = vmatprep.subr.mxu0 0.0
    %1882 = vmatpush1.msra.mxu0 0.0
    %1883 = vmatprep.subr.mxu0 0.0
    %1884 = vmatpush1.msra.mxu0 0.0
    %1885 = vmatprep.subr.mxu0 0.0
    %1886 = vmatpush1.msra.mxu0 0.0
    %1887 = vmatprep.subr.mxu0 0.0
    %1888 = vmatpush1.msra.mxu0 0.0
    %1889 = vmatprep.subr.mxu0 0.0
    %1890 = vmatpush1.msra.mxu0 0.0
    %1891 = vmatprep.subr.mxu0 0.0
    %1892 = vmatpush1.msra.mxu0 0.0
    %1893 = vmatprep.subr.mxu0 0.0
    %1894 = vmatpush1.msra.mxu0 0.0
    %1895 = vmatprep.subr.mxu0 0.0
    %1896 = vmatpush1.msra.mxu0 0.0
    %1897 = vmatprep.subr.mxu0 0.0
    %1898 = vmatpush1.msra.mxu0 0.0
    %1899 = vmatprep.subr.mxu0 0.0
    %1900 = vmatpush1.msra.mxu0 0.0
    %1901 = vmatprep.subr.mxu0 0.0
    %1902 = vmatpush1.msra.mxu0 0.0
    %1903 = vmatprep.subr.mxu0 0.0
    %1904 = vmatpush1.msra.mxu0 0.0
    %1905 = vmatprep.subr.mxu0 0.0
    %1906 = vmatpush1.msra.mxu0 0.0
    %1907 = vmatprep.subr.mxu0 0.0
    %1908 = vmatpush1.msra.mxu0 0.0
    %1909 = vmatprep.mubr.f32.mxu0 0.0
    %1910 = vmatmul.mubr.f32.gmra.mrb[0].mxu0 0.0
    %v1911 = vpop.f32.mrb[0].mxu0
    %v1912 = vadd.f32 %v1770, %v1911
    %v1913 = vpop.f32.mrb[0].mxu0
    %1914 = vdwg.mxu0
    %v1915 = vadd.f32 %v1684, %v1841
    %v1916 = vxor.u32 %v1915, 2147483648
    %v1917 = vmul.f32 %v1916, 1.442695
    %v1918 = vpow.pop %v1917
    %v1919 = vadd.f32 %v1918, 1.0
    %v1920 = vrcp.pop %v1919
    %v1921 = vmul.f32 1.0, %v1920
    %v1922 = vadd.f32 %v1686, %v1843
    %v1923 = vxor.u32 %v1922, 2147483648
    %v1924 = vmul.f32 %v1923, 1.442695
    %v1925 = vpow.pop %v1924
    %v1926 = vadd.f32 %v1925, 1.0
    %v1927 = vrcp.pop %v1926
    %v1928 = vmul.f32 1.0, %v1927
    %v1929 = vmul.f32 %v1921, %v1912
    %v1930 = vadd.f32 %v1755, %v1929
    %v1931 = vtanh.pop %v1930
    %v1932 = vsub.f32 1.0, %v1928
    %v1933 = vmul.f32 %v1932, %v1931
    %v1934 = vmul.f32 %v1928, 0.0
    %v1935 = vadd.f32 %v1933, %v1934
    %1936 = vst [vmem:[%s26] sm:$0x3] %v1935
    %1937 = vmatprep.subr.mxu0 %v778
    %1938 = vmatpush1.msra.mxu0 %v777
    %1939 = vmatprep.subr.mxu0 %v781
    %1940 = vmatpush1.msra.mxu0 %v780
    %1941 = vmatprep.subr.mxu0 %v784
    %1942 = vmatpush1.msra.mxu0 %v783
    %1943 = vmatprep.subr.mxu0 %v787
    %1944 = vmatpush1.msra.mxu0 %v786
    %1945 = vmatprep.subr.mxu0 %v790
    %1946 = vmatpush1.msra.mxu0 %v789
    %1947 = vmatprep.subr.mxu0 %v793
    %1948 = vmatpush1.msra.mxu0 %v792
    %1949 = vmatprep.subr.mxu0 %v796
    %1950 = vmatpush1.msra.mxu0 %v795
    %1951 = vmatprep.subr.mxu0 %v799
    %1952 = vmatpush1.msra.mxu0 %v798
    %1953 = vmatprep.subr.mxu0 %v802
    %1954 = vmatpush1.msra.mxu0 %v801
    %1955 = vmatprep.subr.mxu0 %v805
    %1956 = vmatpush1.msra.mxu0 %v804
    %1957 = vmatprep.subr.mxu0 %v808
    %1958 = vmatpush1.msra.mxu0 %v807
    %1959 = vmatprep.subr.mxu0 %v811
    %1960 = vmatpush1.msra.mxu0 %v810
    %1961 = vmatprep.subr.mxu0 %v814
    %1962 = vmatpush1.msra.mxu0 %v813
    %1963 = vmatprep.subr.mxu0 %v817
    %1964 = vmatpush1.msra.mxu0 %v816
    %1965 = vmatprep.subr.mxu0 %v820
    %1966 = vmatpush1.msra.mxu0 %v819
    %1967 = vmatprep.subr.mxu0 %v823
    %1968 = vmatpush1.msra.mxu0 %v822
    %1969 = vmatprep.subr.mxu0 0.0
    %1970 = vmatpush1.msra.mxu0 0.0
    %1971 = vmatprep.subr.mxu0 0.0
    %1972 = vmatpush1.msra.mxu0 0.0
    %1973 = vmatprep.subr.mxu0 0.0
    %1974 = vmatpush1.msra.mxu0 0.0
    %1975 = vmatprep.subr.mxu0 0.0
    %1976 = vmatpush1.msra.mxu0 0.0
    %1977 = vmatprep.subr.mxu0 0.0
    %1978 = vmatpush1.msra.mxu0 0.0
    %1979 = vmatprep.subr.mxu0 0.0
    %1980 = vmatpush1.msra.mxu0 0.0
    %1981 = vmatprep.subr.mxu0 0.0
    %1982 = vmatpush1.msra.mxu0 0.0
    %1983 = vmatprep.subr.mxu0 0.0
    %1984 = vmatpush1.msra.mxu0 0.0
    %1985 = vmatprep.subr.mxu0 0.0
    %1986 = vmatpush1.msra.mxu0 0.0
    %1987 = vmatprep.subr.mxu0 0.0
    %1988 = vmatpush1.msra.mxu0 0.0
    %1989 = vmatprep.subr.mxu0 0.0
    %1990 = vmatpush1.msra.mxu0 0.0
    %1991 = vmatprep.subr.mxu0 0.0
    %1992 = vmatpush1.msra.mxu0 0.0
    %1993 = vmatprep.subr.mxu0 0.0
    %1994 = vmatpush1.msra.mxu0 0.0
    %1995 = vmatprep.subr.mxu0 0.0
    %1996 = vmatpush1.msra.mxu0 0.0
    %1997 = vmatprep.subr.mxu0 0.0
    %1998 = vmatpush1.msra.mxu0 0.0
    %1999 = vmatprep.subr.mxu0 0.0
    %2000 = vmatpush1.msra.mxu0 0.0
    %2001 = vmatprep.mubr.f32.mxu0 0.0
    %2002 = vmatmul.mubr.f32.gmra.mrb[0].mxu0 %v1265
    %v2003 = vpop.f32.mrb[0].mxu0
    %v2004 = vadd.f32 %v1092, %v2003
    %v2005 = vpop.f32.mrb[0].mxu0
    %v2006 = vadd.f32 %v1096, %v2005
    %2007 = vdwg.mxu0
    %2008 = vmatprep.subr.mxu0 0.0
    %2009 = vmatpush1.msra.mxu0 %v779
    %2010 = vmatprep.subr.mxu0 0.0
    %2011 = vmatpush1.msra.mxu0 %v782
    %2012 = vmatprep.subr.mxu0 0.0
    %2013 = vmatpush1.msra.mxu0 %v785
    %2014 = vmatprep.subr.mxu0 0.0
    %2015 = vmatpush1.msra.mxu0 %v788
    %2016 = vmatprep.subr.mxu0 0.0
    %2017 = vmatpush1.msra.mxu0 %v791
    %2018 = vmatprep.subr.mxu0 0.0
    %2019 = vmatpush1.msra.mxu0 %v794
    %2020 = vmatprep.subr.mxu0 0.0
    %2021 = vmatpush1.msra.mxu0 %v797
    %2022 = vmatprep.subr.mxu0 0.0
    %2023 = vmatpush1.msra.mxu0 %v800
    %2024 = vmatprep.subr.mxu0 0.0
    %2025 = vmatpush1.msra.mxu0 %v803
    %2026 = vmatprep.subr.mxu0 0.0
    %2027 = vmatpush1.msra.mxu0 %v806
    %2028 = vmatprep.subr.mxu0 0.0
    %2029 = vmatpush1.msra.mxu0 %v809
    %2030 = vmatprep.subr.mxu0 0.0
    %2031 = vmatpush1.msra.mxu0 %v812
    %2032 = vmatprep.subr.mxu0 0.0
    %2033 = vmatpush1.msra.mxu0 %v815
    %2034 = vmatprep.subr.mxu0 0.0
    %2035 = vmatpush1.msra.mxu0 %v818
    %2036 = vmatprep.subr.mxu0 0.0
    %2037 = vmatpush1.msra.mxu0 %v821
    %2038 = vmatprep.subr.mxu0 0.0
    %2039 = vmatpush1.msra.mxu0 %v824
    %2040 = vmatprep.subr.mxu0 0.0
    %2041 = vmatpush1.msra.mxu0 0.0
    %2042 = vmatprep.subr.mxu0 0.0
    %2043 = vmatpush1.msra.mxu0 0.0
    %2044 = vmatprep.subr.mxu0 0.0
    %2045 = vmatpush1.msra.mxu0 0.0
    %2046 = vmatprep.subr.mxu0 0.0
    %2047 = vmatpush1.msra.mxu0 0.0
    %2048 = vmatprep.subr.mxu0 0.0
    %2049 = vmatpush1.msra.mxu0 0.0
    %2050 = vmatprep.subr.mxu0 0.0
    %2051 = vmatpush1.msra.mxu0 0.0
    %2052 = vmatprep.subr.mxu0 0.0
    %2053 = vmatpush1.msra.mxu0 0.0
    %2054 = vmatprep.subr.mxu0 0.0
    %2055 = vmatpush1.msra.mxu0 0.0
    %2056 = vmatprep.subr.mxu0 0.0
    %2057 = vmatpush1.msra.mxu0 0.0
    %2058 = vmatprep.subr.mxu0 0.0
    %2059 = vmatpush1.msra.mxu0 0.0
    %2060 = vmatprep.subr.mxu0 0.0
    %2061 = vmatpush1.msra.mxu0 0.0
    %2062 = vmatprep.subr.mxu0 0.0
    %2063 = vmatpush1.msra.mxu0 0.0
    %2064 = vmatprep.subr.mxu0 0.0
    %2065 = vmatpush1.msra.mxu0 0.0
    %2066 = vmatprep.subr.mxu0 0.0
    %2067 = vmatpush1.msra.mxu0 0.0
    %2068 = vmatprep.subr.mxu0 0.0
    %2069 = vmatpush1.msra.mxu0 0.0
    %2070 = vmatprep.subr.mxu0 0.0
    %2071 = vmatpush1.msra.mxu0 0.0
    %2072 = vmatprep.mubr.f32.mxu0 0.0
    %2073 = vmatmul.mubr.f32.gmra.mrb[0].mxu0 %v1265
    %v2074 = vpop.f32.mrb[0].mxu0
    %v2075 = vadd.f32 %v1100, %v2074
    %v2076 = vpop.f32.mrb[0].mxu0
    %2077 = vdwg.mxu0
    %v2078 = vadd.f32 %v1014, %v2004
    %v2079 = vxor.u32 %v2078, 2147483648
    %v2080 = vmul.f32 %v2079, 1.442695
    %v2081 = vpow.pop %v2080
    %v2082 = vadd.f32 %v2081, 1.0
    %v2083 = vrcp.pop %v2082
    %v2084 = vmul.f32 1.0, %v2083
    %v2085 = vadd.f32 %v1016, %v2006
    %v2086 = vxor.u32 %v2085, 2147483648
    %v2087 = vmul.f32 %v2086, 1.442695
    %v2088 = vpow.pop %v2087
    %v2089 = vadd.f32 %v2088, 1.0
    %v2090 = vrcp.pop %v2089
    %v2091 = vmul.f32 1.0, %v2090
    %v2092 = vmul.f32 %v2084, %v2075
    %v2093 = vadd.f32 %v1085, %v2092
    %v2094 = vtanh.pop %v2093
    %v2095 = vsub.f32 1.0, %v2091
    %v2096 = vmul.f32 %v2095, %v2094
    %v2097 = vmul.f32 %v2091, %v1265
    %v2098 = vadd.f32 %v2096, %v2097
    %2099 = vmatprep.subr.mxu0 %v682
    %2100 = vmatpush1.msra.mxu0 %v681
    %2101 = vmatprep.subr.mxu0 %v685
    %2102 = vmatpush1.msra.mxu0 %v684
    %2103 = vmatprep.subr.mxu0 %v688
    %2104 = vmatpush1.msra.mxu0 %v687
    %2105 = vmatprep.subr.mxu0 %v691
    %2106 = vmatpush1.msra.mxu0 %v690
    %2107 = vmatprep.subr.mxu0 %v694
    %2108 = vmatpush1.msra.mxu0 %v693
    %2109 = vmatprep.subr.mxu0 %v697
    %2110 = vmatpush1.msra.mxu0 %v696
    %2111 = vmatprep.subr.mxu0 %v700
    %2112 = vmatpush1.msra.mxu0 %v699
    %2113 = vmatprep.subr.mxu0 %v703
    %2114 = vmatpush1.msra.mxu0 %v702
    %2115 = vmatprep.subr.mxu0 %v706
    %2116 = vmatpush1.msra.mxu0 %v705
    %2117 = vmatprep.subr.mxu0 %v709
    %2118 = vmatpush1.msra.mxu0 %v708
    %2119 = vmatprep.subr.mxu0 %v712
    %2120 = vmatpush1.msra.mxu0 %v711
    %2121 = vmatprep.subr.mxu0 %v715
    %2122 = vmatpush1.msra.mxu0 %v714
    %2123 = vmatprep.subr.mxu0 %v718
    %2124 = vmatpush1.msra.mxu0 %v717
    %2125 = vmatprep.subr.mxu0 %v721
    %2126 = vmatpush1.msra.mxu0 %v720
    %2127 = vmatprep.subr.mxu0 %v724
    %2128 = vmatpush1.msra.mxu0 %v723
    %2129 = vmatprep.subr.mxu0 %v727
    %2130 = vmatpush1.msra.mxu0 %v726
    %2131 = vmatprep.subr.mxu0 0.0
    %2132 = vmatpush1.msra.mxu0 0.0
    %2133 = vmatprep.subr.mxu0 0.0
    %2134 = vmatpush1.msra.mxu0 0.0
    %2135 = vmatprep.subr.mxu0 0.0
    %2136 = vmatpush1.msra.mxu0 0.0
    %2137 = vmatprep.subr.mxu0 0.0
    %2138 = vmatpush1.msra.mxu0 0.0
    %2139 = vmatprep.subr.mxu0 0.0
    %2140 = vmatpush1.msra.mxu0 0.0
    %2141 = vmatprep.subr.mxu0 0.0
    %2142 = vmatpush1.msra.mxu0 0.0
    %2143 = vmatprep.subr.mxu0 0.0
    %2144 = vmatpush1.msra.mxu0 0.0
    %2145 = vmatprep.subr.mxu0 0.0
    %2146 = vmatpush1.msra.mxu0 0.0
    %2147 = vmatprep.subr.mxu0 0.0
    %2148 = vmatpush1.msra.mxu0 0.0
    %2149 = vmatprep.subr.mxu0 0.0
    %2150 = vmatpush1.msra.mxu0 0.0
    %2151 = vmatprep.subr.mxu0 0.0
    %2152 = vmatpush1.msra.mxu0 0.0
    %2153 = vmatprep.subr.mxu0 0.0
    %2154 = vmatpush1.msra.mxu0 0.0
    %2155 = vmatprep.subr.mxu0 0.0
    %2156 = vmatpush1.msra.mxu0 0.0
    %2157 = vmatprep.subr.mxu0 0.0
    %2158 = vmatpush1.msra.mxu0 0.0
    %2159 = vmatprep.subr.mxu0 0.0
    %2160 = vmatpush1.msra.mxu0 0.0
    %2161 = vmatprep.subr.mxu0 0.0
    %2162 = vmatpush1.msra.mxu0 0.0
    %2163 = vmatprep.mubr.f32.mxu0 0.0
    %2164 = vmatmul.mubr.f32.gmra.mrb[0].mxu0 %v2098
    %v2165 = vpop.f32.mrb[0].mxu0
    %v2166 = vadd.f32 %v1270, %v2165
    %v2167 = vpop.f32.mrb[0].mxu0
    %v2168 = vadd.f32 %v1274, %v2167
    %2169 = vdwg.mxu0
    %2170 = vmatprep.subr.mxu0 0.0
    %2171 = vmatpush1.msra.mxu0 %v683
    %2172 = vmatprep.subr.mxu0 0.0
    %2173 = vmatpush1.msra.mxu0 %v686
    %2174 = vmatprep.subr.mxu0 0.0
    %2175 = vmatpush1.msra.mxu0 %v689
    %2176 = vmatprep.subr.mxu0 0.0
    %2177 = vmatpush1.msra.mxu0 %v692
    %2178 = vmatprep.subr.mxu0 0.0
    %2179 = vmatpush1.msra.mxu0 %v695
    %2180 = vmatprep.subr.mxu0 0.0
    %2181 = vmatpush1.msra.mxu0 %v698
    %2182 = vmatprep.subr.mxu0 0.0
    %2183 = vmatpush1.msra.mxu0 %v701
    %2184 = vmatprep.subr.mxu0 0.0
    %2185 = vmatpush1.msra.mxu0 %v704
    %2186 = vmatprep.subr.mxu0 0.0
    %2187 = vmatpush1.msra.mxu0 %v707
    %2188 = vmatprep.subr.mxu0 0.0
    %2189 = vmatpush1.msra.mxu0 %v710
    %2190 = vmatprep.subr.mxu0 0.0
    %2191 = vmatpush1.msra.mxu0 %v713
    %2192 = vmatprep.subr.mxu0 0.0
    %2193 = vmatpush1.msra.mxu0 %v716
    %2194 = vmatprep.subr.mxu0 0.0
    %2195 = vmatpush1.msra.mxu0 %v719
    %2196 = vmatprep.subr.mxu0 0.0
    %2197 = vmatpush1.msra.mxu0 %v722
    %2198 = vmatprep.subr.mxu0 0.0
    %2199 = vmatpush1.msra.mxu0 %v725
    %2200 = vmatprep.subr.mxu0 0.0
    %2201 = vmatpush1.msra.mxu0 %v728
    %2202 = vmatprep.subr.mxu0 0.0
    %2203 = vmatpush1.msra.mxu0 0.0
    %2204 = vmatprep.subr.mxu0 0.0
    %2205 = vmatpush1.msra.mxu0 0.0
    %2206 = vmatprep.subr.mxu0 0.0
    %2207 = vmatpush1.msra.mxu0 0.0
    %2208 = vmatprep.subr.mxu0 0.0
    %2209 = vmatpush1.msra.mxu0 0.0
    %2210 = vmatprep.subr.mxu0 0.0
    %2211 = vmatpush1.msra.mxu0 0.0
    %2212 = vmatprep.subr.mxu0 0.0
    %2213 = vmatpush1.msra.mxu0 0.0
    %2214 = vmatprep.subr.mxu0 0.0
    %2215 = vmatpush1.msra.mxu0 0.0
    %2216 = vmatprep.subr.mxu0 0.0
    %2217 = vmatpush1.msra.mxu0 0.0
    %2218 = vmatprep.subr.mxu0 0.0
    %2219 = vmatpush1.msra.mxu0 0.0
    %2220 = vmatprep.subr.mxu0 0.0
    %2221 = vmatpush1.msra.mxu0 0.0
    %2222 = vmatprep.subr.mxu0 0.0
    %2223 = vmatpush1.msra.mxu0 0.0
    %2224 = vmatprep.subr.mxu0 0.0
    %2225 = vmatpush1.msra.mxu0 0.0
    %2226 = vmatprep.subr.mxu0 0.0
    %2227 = vmatpush1.msra.mxu0 0.0
    %2228 = vmatprep.subr.mxu0 0.0
    %2229 = vmatpush1.msra.mxu0 0.0
    %2230 = vmatprep.subr.mxu0 0.0
    %2231 = vmatpush1.msra.mxu0 0.0
    %2232 = vmatprep.subr.mxu0 0.0
    %2233 = vmatpush1.msra.mxu0 0.0
    %2234 = vmatprep.mubr.f32.mxu0 0.0
    %2235 = vmatmul.mubr.f32.gmra.mrb[0].mxu0 %v2098
    %v2236 = vpop.f32.mrb[0].mxu0
    %v2237 = vadd.f32 %v1278, %v2236
    %v2238 = vpop.f32.mrb[0].mxu0
    %2239 = vdwg.mxu0
    %2240 = vmatprep.subr.mxu0 %v826
    %2241 = vmatpush1.msra.mxu0 %v825
    %2242 = vmatprep.subr.mxu0 %v829
    %2243 = vmatpush1.msra.mxu0 %v828
    %2244 = vmatprep.subr.mxu0 %v832
    %2245 = vmatpush1.msra.mxu0 %v831
    %2246 = vmatprep.subr.mxu0 %v835
    %2247 = vmatpush1.msra.mxu0 %v834
    %2248 = vmatprep.subr.mxu0 %v838
    %2249 = vmatpush1.msra.mxu0 %v837
    %2250 = vmatprep.subr.mxu0 %v841
    %2251 = vmatpush1.msra.mxu0 %v840
    %2252 = vmatprep.subr.mxu0 %v844
    %2253 = vmatpush1.msra.mxu0 %v843
    %2254 = vmatprep.subr.mxu0 %v847
    %2255 = vmatpush1.msra.mxu0 %v846
    %2256 = vmatprep.subr.mxu0 %v850
    %2257 = vmatpush1.msra.mxu0 %v849
    %2258 = vmatprep.subr.mxu0 %v853
    %2259 = vmatpush1.msra.mxu0 %v852
    %2260 = vmatprep.subr.mxu0 %v856
    %2261 = vmatpush1.msra.mxu0 %v855
    %2262 = vmatprep.subr.mxu0 %v859
    %2263 = vmatpush1.msra.mxu0 %v858
    %2264 = vmatprep.subr.mxu0 %v862
    %2265 = vmatpush1.msra.mxu0 %v861
    %2266 = vmatprep.subr.mxu0 %v865
    %2267 = vmatpush1.msra.mxu0 %v864
    %2268 = vmatprep.subr.mxu0 %v868
    %2269 = vmatpush1.msra.mxu0 %v867
    %2270 = vmatprep.subr.mxu0 %v871
    %2271 = vmatpush1.msra.mxu0 %v870
    %2272 = vmatprep.subr.mxu0 0.0
    %2273 = vmatpush1.msra.mxu0 0.0
    %2274 = vmatprep.subr.mxu0 0.0
    %2275 = vmatpush1.msra.mxu0 0.0
    %2276 = vmatprep.subr.mxu0 0.0
    %2277 = vmatpush1.msra.mxu0 0.0
    %2278 = vmatprep.subr.mxu0 0.0
    %2279 = vmatpush1.msra.mxu0 0.0
    %2280 = vmatprep.subr.mxu0 0.0
    %2281 = vmatpush1.msra.mxu0 0.0
    %2282 = vmatprep.subr.mxu0 0.0
    %2283 = vmatpush1.msra.mxu0 0.0
    %2284 = vmatprep.subr.mxu0 0.0
    %2285 = vmatpush1.msra.mxu0 0.0
    %2286 = vmatprep.subr.mxu0 0.0
    %2287 = vmatpush1.msra.mxu0 0.0
    %2288 = vmatprep.subr.mxu0 0.0
    %2289 = vmatpush1.msra.mxu0 0.0
    %2290 = vmatprep.subr.mxu0 0.0
    %2291 = vmatpush1.msra.mxu0 0.0
    %2292 = vmatprep.subr.mxu0 0.0
    %2293 = vmatpush1.msra.mxu0 0.0
    %2294 = vmatprep.subr.mxu0 0.0
    %2295 = vmatpush1.msra.mxu0 0.0
    %2296 = vmatprep.subr.mxu0 0.0
    %2297 = vmatpush1.msra.mxu0 0.0
    %2298 = vmatprep.subr.mxu0 0.0
    %2299 = vmatpush1.msra.mxu0 0.0
    %2300 = vmatprep.subr.mxu0 0.0
    %2301 = vmatpush1.msra.mxu0 0.0
    %2302 = vmatprep.subr.mxu0 0.0
    %2303 = vmatpush1.msra.mxu0 0.0
    %2304 = vmatprep.mubr.f32.mxu0 0.0
    %2305 = vmatmul.mubr.f32.gmra.mrb[0].mxu0 %v1600
    %v2306 = vpop.f32.mrb[0].mxu0
    %v2307 = vadd.f32 %v1427, %v2306
    %v2308 = vpop.f32.mrb[0].mxu0
    %v2309 = vadd.f32 %v1431, %v2308
    %2310 = vdwg.mxu0
    %2311 = vmatprep.subr.mxu0 0.0
    %2312 = vmatpush1.msra.mxu0 %v827
    %2313 = vmatprep.subr.mxu0 0.0
    %2314 = vmatpush1.msra.mxu0 %v830
    %2315 = vmatprep.subr.mxu0 0.0
    %2316 = vmatpush1.msra.mxu0 %v833
    %2317 = vmatprep.subr.mxu0 0.0
    %2318 = vmatpush1.msra.mxu0 %v836
    %2319 = vmatprep.subr.mxu0 0.0
    %2320 = vmatpush1.msra.mxu0 %v839
    %2321 = vmatprep.subr.mxu0 0.0
    %2322 = vmatpush1.msra.mxu0 %v842
    %2323 = vmatprep.subr.mxu0 0.0
    %2324 = vmatpush1.msra.mxu0 %v845
    %2325 = vmatprep.subr.mxu0 0.0
    %2326 = vmatpush1.msra.mxu0 %v848
    %2327 = vmatprep.subr.mxu0 0.0
    %2328 = vmatpush1.msra.mxu0 %v851
    %2329 = vmatprep.subr.mxu0 0.0
    %2330 = vmatpush1.msra.mxu0 %v854
    %2331 = vmatprep.subr.mxu0 0.0
    %2332 = vmatpush1.msra.mxu0 %v857
    %2333 = vmatprep.subr.mxu0 0.0
    %2334 = vmatpush1.msra.mxu0 %v860
    %2335 = vmatprep.subr.mxu0 0.0
    %2336 = vmatpush1.msra.mxu0 %v863
    %2337 = vmatprep.subr.mxu0 0.0
    %2338 = vmatpush1.msra.mxu0 %v866
    %2339 = vmatprep.subr.mxu0 0.0
    %2340 = vmatpush1.msra.mxu0 %v869
    %2341 = vmatprep.subr.mxu0 0.0
    %2342 = vmatpush1.msra.mxu0 %v872
    %2343 = vmatprep.subr.mxu0 0.0
    %2344 = vmatpush1.msra.mxu0 0.0
    %2345 = vmatprep.subr.mxu0 0.0
    %2346 = vmatpush1.msra.mxu0 0.0
    %2347 = vmatprep.subr.mxu0 0.0
    %2348 = vmatpush1.msra.mxu0 0.0
    %2349 = vmatprep.subr.mxu0 0.0
    %2350 = vmatpush1.msra.mxu0 0.0
    %2351 = vmatprep.subr.mxu0 0.0
    %2352 = vmatpush1.msra.mxu0 0.0
    %2353 = vmatprep.subr.mxu0 0.0
    %2354 = vmatpush1.msra.mxu0 0.0
    %2355 = vmatprep.subr.mxu0 0.0
    %2356 = vmatpush1.msra.mxu0 0.0
    %2357 = vmatprep.subr.mxu0 0.0
    %2358 = vmatpush1.msra.mxu0 0.0
    %2359 = vmatprep.subr.mxu0 0.0
    %2360 = vmatpush1.msra.mxu0 0.0
    %2361 = vmatprep.subr.mxu0 0.0
    %2362 = vmatpush1.msra.mxu0 0.0
    %2363 = vmatprep.subr.mxu0 0.0
    %2364 = vmatpush1.msra.mxu0 0.0
    %2365 = vmatprep.subr.mxu0 0.0
    %2366 = vmatpush1.msra.mxu0 0.0
    %2367 = vmatprep.subr.mxu0 0.0
    %2368 = vmatpush1.msra.mxu0 0.0
    %2369 = vmatprep.subr.mxu0 0.0
    %2370 = vmatpush1.msra.mxu0 0.0
    %2371 = vmatprep.subr.mxu0 0.0
    %2372 = vmatpush1.msra.mxu0 0.0
    %2373 = vmatprep.subr.mxu0 0.0
    %2374 = vmatpush1.msra.mxu0 0.0
    %2375 = vmatprep.mubr.f32.mxu0 0.0
    %2376 = vmatmul.mubr.f32.gmra.mrb[0].mxu0 %v1600
    %v2377 = vpop.f32.mrb[0].mxu0
    %v2378 = vadd.f32 %v1435, %v2377
    %v2379 = vpop.f32.mrb[0].mxu0
    %2380 = vdwg.mxu0
    %v2381 = vadd.f32 %v2166, %v2307
    %v2382 = vxor.u32 %v2381, 2147483648
    %v2383 = vmul.f32 %v2382, 1.442695
    %v2384 = vpow.pop %v2383
    %v2385 = vadd.f32 %v2384, 1.0
    %v2386 = vrcp.pop %v2385
    %v2387 = vmul.f32 1.0, %v2386
    %v2388 = vadd.f32 %v2168, %v2309
    %v2389 = vxor.u32 %v2388, 2147483648
    %v2390 = vmul.f32 %v2389, 1.442695
    %v2391 = vpow.pop %v2390
    %v2392 = vadd.f32 %v2391, 1.0
    %v2393 = vrcp.pop %v2392
    %v2394 = vmul.f32 1.0, %v2393
    %v2395 = vmul.f32 %v2387, %v2378
    %v2396 = vadd.f32 %v2237, %v2395
    %v2397 = vtanh.pop %v2396
    %v2398 = vsub.f32 1.0, %v2394
    %v2399 = vmul.f32 %v2398, %v2397
    %v2400 = vmul.f32 %v2394, %v1600
    %v2401 = vadd.f32 %v2399, %v2400
    %2402 = vmatprep.subr.mxu0 %v730
    %2403 = vmatpush1.msra.mxu0 %v729
    %2404 = vmatprep.subr.mxu0 %v733
    %2405 = vmatpush1.msra.mxu0 %v732
    %2406 = vmatprep.subr.mxu0 %v736
    %2407 = vmatpush1.msra.mxu0 %v735
    %2408 = vmatprep.subr.mxu0 %v739
    %2409 = vmatpush1.msra.mxu0 %v738
    %2410 = vmatprep.subr.mxu0 %v742
    %2411 = vmatpush1.msra.mxu0 %v741
    %2412 = vmatprep.subr.mxu0 %v745
    %2413 = vmatpush1.msra.mxu0 %v744
    %2414 = vmatprep.subr.mxu0 %v748
    %2415 = vmatpush1.msra.mxu0 %v747
    %2416 = vmatprep.subr.mxu0 %v751
    %2417 = vmatpush1.msra.mxu0 %v750
    %2418 = vmatprep.subr.mxu0 %v754
    %2419 = vmatpush1.msra.mxu0 %v753
    %2420 = vmatprep.subr.mxu0 %v757
    %2421 = vmatpush1.msra.mxu0 %v756
    %2422 = vmatprep.subr.mxu0 %v760
    %2423 = vmatpush1.msra.mxu0 %v759
    %2424 = vmatprep.subr.mxu0 %v763
    %2425 = vmatpush1.msra.mxu0 %v762
    %2426 = vmatprep.subr.mxu0 %v766
    %2427 = vmatpush1.msra.mxu0 %v765
    %2428 = vmatprep.subr.mxu0 %v769
    %2429 = vmatpush1.msra.mxu0 %v768
    %2430 = vmatprep.subr.mxu0 %v772
    %2431 = vmatpush1.msra.mxu0 %v771
    %2432 = vmatprep.subr.mxu0 %v775
    %2433 = vmatpush1.msra.mxu0 %v774
    %2434 = vmatprep.subr.mxu0 0.0
    %2435 = vmatpush1.msra.mxu0 0.0
    %2436 = vmatprep.subr.mxu0 0.0
    %2437 = vmatpush1.msra.mxu0 0.0
    %2438 = vmatprep.subr.mxu0 0.0
    %2439 = vmatpush1.msra.mxu0 0.0
    %2440 = vmatprep.subr.mxu0 0.0
    %2441 = vmatpush1.msra.mxu0 0.0
    %2442 = vmatprep.subr.mxu0 0.0
    %2443 = vmatpush1.msra.mxu0 0.0
    %2444 = vmatprep.subr.mxu0 0.0
    %2445 = vmatpush1.msra.mxu0 0.0
    %2446 = vmatprep.subr.mxu0 0.0
    %2447 = vmatpush1.msra.mxu0 0.0
    %2448 = vmatprep.subr.mxu0 0.0
    %2449 = vmatpush1.msra.mxu0 0.0
    %2450 = vmatprep.subr.mxu0 0.0
    %2451 = vmatpush1.msra.mxu0 0.0
    %2452 = vmatprep.subr.mxu0 0.0
    %2453 = vmatpush1.msra.mxu0 0.0
    %2454 = vmatprep.subr.mxu0 0.0
    %2455 = vmatpush1.msra.mxu0 0.0
    %2456 = vmatprep.subr.mxu0 0.0
    %2457 = vmatpush1.msra.mxu0 0.0
    %2458 = vmatprep.subr.mxu0 0.0
    %2459 = vmatpush1.msra.mxu0 0.0
    %2460 = vmatprep.subr.mxu0 0.0
    %2461 = vmatpush1.msra.mxu0 0.0
    %2462 = vmatprep.subr.mxu0 0.0
    %2463 = vmatpush1.msra.mxu0 0.0
    %2464 = vmatprep.subr.mxu0 0.0
    %2465 = vmatpush1.msra.mxu0 0.0
    %2466 = vmatprep.mubr.f32.mxu0 0.0
    %2467 = vmatmul.mubr.f32.gmra.mrb[0].mxu0 %v2401
    %v2468 = vpop.f32.mrb[0].mxu0
    %v2469 = vadd.f32 %v1605, %v2468
    %v2470 = vpop.f32.mrb[0].mxu0
    %v2471 = vadd.f32 %v1609, %v2470
    %2472 = vdwg.mxu0
    %2473 = vmatprep.subr.mxu0 0.0
    %2474 = vmatpush1.msra.mxu0 %v731
    %2475 = vmatprep.subr.mxu0 0.0
    %2476 = vmatpush1.msra.mxu0 %v734
    %2477 = vmatprep.subr.mxu0 0.0
    %2478 = vmatpush1.msra.mxu0 %v737
    %2479 = vmatprep.subr.mxu0 0.0
    %2480 = vmatpush1.msra.mxu0 %v740
    %2481 = vmatprep.subr.mxu0 0.0
    %2482 = vmatpush1.msra.mxu0 %v743
    %2483 = vmatprep.subr.mxu0 0.0
    %2484 = vmatpush1.msra.mxu0 %v746
    %2485 = vmatprep.subr.mxu0 0.0
    %2486 = vmatpush1.msra.mxu0 %v749
    %2487 = vmatprep.subr.mxu0 0.0
    %2488 = vmatpush1.msra.mxu0 %v752
    %2489 = vmatprep.subr.mxu0 0.0
    %2490 = vmatpush1.msra.mxu0 %v755
    %2491 = vmatprep.subr.mxu0 0.0
    %2492 = vmatpush1.msra.mxu0 %v758
    %2493 = vmatprep.subr.mxu0 0.0
    %2494 = vmatpush1.msra.mxu0 %v761
    %2495 = vmatprep.subr.mxu0 0.0
    %2496 = vmatpush1.msra.mxu0 %v764
    %2497 = vmatprep.subr.mxu0 0.0
    %2498 = vmatpush1.msra.mxu0 %v767
    %2499 = vmatprep.subr.mxu0 0.0
    %2500 = vmatpush1.msra.mxu0 %v770
    %2501 = vmatprep.subr.mxu0 0.0
    %2502 = vmatpush1.msra.mxu0 %v773
    %2503 = vmatprep.subr.mxu0 0.0
    %2504 = vmatpush1.msra.mxu0 %v776
    %2505 = vmatprep.subr.mxu0 0.0
    %2506 = vmatpush1.msra.mxu0 0.0
    %2507 = vmatprep.subr.mxu0 0.0
    %2508 = vmatpush1.msra.mxu0 0.0
    %2509 = vmatprep.subr.mxu0 0.0
    %2510 = vmatpush1.msra.mxu0 0.0
    %2511 = vmatprep.subr.mxu0 0.0
    %2512 = vmatpush1.msra.mxu0 0.0
    %2513 = vmatprep.subr.mxu0 0.0
    %2514 = vmatpush1.msra.mxu0 0.0
    %2515 = vmatprep.subr.mxu0 0.0
    %2516 = vmatpush1.msra.mxu0 0.0
    %2517 = vmatprep.subr.mxu0 0.0
    %2518 = vmatpush1.msra.mxu0 0.0
    %2519 = vmatprep.subr.mxu0 0.0
    %2520 = vmatpush1.msra.mxu0 0.0
    %2521 = vmatprep.subr.mxu0 0.0
    %2522 = vmatpush1.msra.mxu0 0.0
    %2523 = vmatprep.subr.mxu0 0.0
    %2524 = vmatpush1.msra.mxu0 0.0
    %2525 = vmatprep.subr.mxu0 0.0
    %2526 = vmatpush1.msra.mxu0 0.0
    %2527 = vmatprep.subr.mxu0 0.0
    %2528 = vmatpush1.msra.mxu0 0.0
    %2529 = vmatprep.subr.mxu0 0.0
    %2530 = vmatpush1.msra.mxu0 0.0
    %2531 = vmatprep.subr.mxu0 0.0
    %2532 = vmatpush1.msra.mxu0 0.0
    %2533 = vmatprep.subr.mxu0 0.0
    %2534 = vmatpush1.msra.mxu0 0.0
    %2535 = vmatprep.subr.mxu0 0.0
    %2536 = vmatpush1.msra.mxu0 0.0
    %2537 = vmatprep.mubr.f32.mxu0 0.0
    %2538 = vmatmul.mubr.f32.gmra.mrb[0].mxu0 %v2401
    %v2539 = vpop.f32.mrb[0].mxu0
    %v2540 = vadd.f32 %v1613, %v2539
    %v2541 = vpop.f32.mrb[0].mxu0
    %2542 = vdwg.mxu0
    %2543 = vmatprep.subr.mxu0 %v874
    %2544 = vmatpush1.msra.mxu0 %v873
    %2545 = vmatprep.subr.mxu0 %v877
    %2546 = vmatpush1.msra.mxu0 %v876
    %2547 = vmatprep.subr.mxu0 %v880
    %2548 = vmatpush1.msra.mxu0 %v879
    %2549 = vmatprep.subr.mxu0 %v883
    %2550 = vmatpush1.msra.mxu0 %v882
    %2551 = vmatprep.subr.mxu0 %v886
    %2552 = vmatpush1.msra.mxu0 %v885
    %2553 = vmatprep.subr.mxu0 %v889
    %2554 = vmatpush1.msra.mxu0 %v888
    %2555 = vmatprep.subr.mxu0 %v892
    %2556 = vmatpush1.msra.mxu0 %v891
    %2557 = vmatprep.subr.mxu0 %v895
    %2558 = vmatpush1.msra.mxu0 %v894
    %2559 = vmatprep.subr.mxu0 %v898
    %2560 = vmatpush1.msra.mxu0 %v897
    %2561 = vmatprep.subr.mxu0 %v901
    %2562 = vmatpush1.msra.mxu0 %v900
    %2563 = vmatprep.subr.mxu0 %v904
    %2564 = vmatpush1.msra.mxu0 %v903
    %2565 = vmatprep.subr.mxu0 %v907
    %2566 = vmatpush1.msra.mxu0 %v906
    %2567 = vmatprep.subr.mxu0 %v910
    %2568 = vmatpush1.msra.mxu0 %v909
    %2569 = vmatprep.subr.mxu0 %v913
    %2570 = vmatpush1.msra.mxu0 %v912
    %2571 = vmatprep.subr.mxu0 %v916
    %2572 = vmatpush1.msra.mxu0 %v915
    %2573 = vmatprep.subr.mxu0 %v919
    %2574 = vmatpush1.msra.mxu0 %v918
    %2575 = vmatprep.subr.mxu0 0.0
    %2576 = vmatpush1.msra.mxu0 0.0
    %2577 = vmatprep.subr.mxu0 0.0
    %2578 = vmatpush1.msra.mxu0 0.0
    %2579 = vmatprep.subr.mxu0 0.0
    %2580 = vmatpush1.msra.mxu0 0.0
    %2581 = vmatprep.subr.mxu0 0.0
    %2582 = vmatpush1.msra.mxu0 0.0
    %2583 = vmatprep.subr.mxu0 0.0
    %2584 = vmatpush1.msra.mxu0 0.0
    %2585 = vmatprep.subr.mxu0 0.0
    %2586 = vmatpush1.msra.mxu0 0.0
    %2587 = vmatprep.subr.mxu0 0.0
    %2588 = vmatpush1.msra.mxu0 0.0
    %2589 = vmatprep.subr.mxu0 0.0
    %2590 = vmatpush1.msra.mxu0 0.0
    %2591 = vmatprep.subr.mxu0 0.0
    %2592 = vmatpush1.msra.mxu0 0.0
    %2593 = vmatprep.subr.mxu0 0.0
    %2594 = vmatpush1.msra.mxu0 0.0
    %2595 = vmatprep.subr.mxu0 0.0
    %2596 = vmatpush1.msra.mxu0 0.0
    %2597 = vmatprep.subr.mxu0 0.0
    %2598 = vmatpush1.msra.mxu0 0.0
    %2599 = vmatprep.subr.mxu0 0.0
    %2600 = vmatpush1.msra.mxu0 0.0
    %2601 = vmatprep.subr.mxu0 0.0
    %2602 = vmatpush1.msra.mxu0 0.0
    %2603 = vmatprep.subr.mxu0 0.0
    %2604 = vmatpush1.msra.mxu0 0.0
    %2605 = vmatprep.subr.mxu0 0.0
    %2606 = vmatpush1.msra.mxu0 0.0
    %2607 = vmatprep.mubr.f32.mxu0 0.0
    %2608 = vmatmul.mubr.f32.gmra.mrb[0].mxu0 %v1935
    %v2609 = vpop.f32.mrb[0].mxu0
    %v2610 = vadd.f32 %v1762, %v2609
    %v2611 = vpop.f32.mrb[0].mxu0
    %v2612 = vadd.f32 %v1766, %v2611
    %2613 = vdwg.mxu0
    %2614 = vmatprep.subr.mxu0 0.0
    %2615 = vmatpush1.msra.mxu0 %v875
    %2616 = vmatprep.subr.mxu0 0.0
    %2617 = vmatpush1.msra.mxu0 %v878
    %2618 = vmatprep.subr.mxu0 0.0
    %2619 = vmatpush1.msra.mxu0 %v881
    %2620 = vmatprep.subr.mxu0 0.0
    %2621 = vmatpush1.msra.mxu0 %v884
    %2622 = vmatprep.subr.mxu0 0.0
    %2623 = vmatpush1.msra.mxu0 %v887
    %2624 = vmatprep.subr.mxu0 0.0
    %2625 = vmatpush1.msra.mxu0 %v890
    %2626 = vmatprep.subr.mxu0 0.0
    %2627 = vmatpush1.msra.mxu0 %v893
    %2628 = vmatprep.subr.mxu0 0.0
    %2629 = vmatpush1.msra.mxu0 %v896
    %2630 = vmatprep.subr.mxu0 0.0
    %2631 = vmatpush1.msra.mxu0 %v899
    %2632 = vmatprep.subr.mxu0 0.0
    %2633 = vmatpush1.msra.mxu0 %v902
    %2634 = vmatprep.subr.mxu0 0.0
    %2635 = vmatpush1.msra.mxu0 %v905
    %2636 = vmatprep.subr.mxu0 0.0
    %2637 = vmatpush1.msra.mxu0 %v908
    %2638 = vmatprep.subr.mxu0 0.0
    %2639 = vmatpush1.msra.mxu0 %v911
    %2640 = vmatprep.subr.mxu0 0.0
    %2641 = vmatpush1.msra.mxu0 %v914
    %2642 = vmatprep.subr.mxu0 0.0
    %2643 = vmatpush1.msra.mxu0 %v917
    %2644 = vmatprep.subr.mxu0 0.0
    %2645 = vmatpush1.msra.mxu0 %v920
    %2646 = vmatprep.subr.mxu0 0.0
    %2647 = vmatpush1.msra.mxu0 0.0
    %2648 = vmatprep.subr.mxu0 0.0
    %2649 = vmatpush1.msra.mxu0 0.0
    %2650 = vmatprep.subr.mxu0 0.0
    %2651 = vmatpush1.msra.mxu0 0.0
    %2652 = vmatprep.subr.mxu0 0.0
    %2653 = vmatpush1.msra.mxu0 0.0
    %2654 = vmatprep.subr.mxu0 0.0
    %2655 = vmatpush1.msra.mxu0 0.0
    %2656 = vmatprep.subr.mxu0 0.0
    %2657 = vmatpush1.msra.mxu0 0.0
    %2658 = vmatprep.subr.mxu0 0.0
    %2659 = vmatpush1.msra.mxu0 0.0
    %2660 = vmatprep.subr.mxu0 0.0
    %2661 = vmatpush1.msra.mxu0 0.0
    %2662 = vmatprep.subr.mxu0 0.0
    %2663 = vmatpush1.msra.mxu0 0.0
    %2664 = vmatprep.subr.mxu0 0.0
    %2665 = vmatpush1.msra.mxu0 0.0
    %2666 = vmatprep.subr.mxu0 0.0
    %2667 = vmatpush1.msra.mxu0 0.0
    %2668 = vmatprep.subr.mxu0 0.0
    %2669 = vmatpush1.msra.mxu0 0.0
    %2670 = vmatprep.subr.mxu0 0.0
    %2671 = vmatpush1.msra.mxu0 0.0
    %2672 = vmatprep.subr.mxu0 0.0
    %2673 = vmatpush1.msra.mxu0 0.0
    %2674 = vmatprep.subr.mxu0 0.0
    %2675 = vmatpush1.msra.mxu0 0.0
    %2676 = vmatprep.subr.mxu0 0.0
    %2677 = vmatpush1.msra.mxu0 0.0
    %2678 = vmatprep.mubr.f32.mxu0 0.0
    %2679 = vmatmul.mubr.f32.gmra.mrb[0].mxu0 %v1935
    %v2680 = vpop.f32.mrb[0].mxu0
    %v2681 = vadd.f32 %v1770, %v2680
    %v2682 = vpop.f32.mrb[0].mxu0
    %2683 = vdwg.mxu0
    %v2684 = vadd.f32 %v2469, %v2610
    %v2685 = vxor.u32 %v2684, 2147483648
    %v2686 = vmul.f32 %v2685, 1.442695
    %v2687 = vpow.pop %v2686
    %v2688 = vadd.f32 %v2687, 1.0
    %v2689 = vrcp.pop %v2688
    %v2690 = vmul.f32 1.0, %v2689
    %v2691 = vadd.f32 %v2471, %v2612
    %v2692 = vxor.u32 %v2691, 2147483648
    %v2693 = vmul.f32 %v2692, 1.442695
    %v2694 = vpow.pop %v2693
    %v2695 = vadd.f32 %v2694, 1.0
    %v2696 = vrcp.pop %v2695
    %v2697 = vmul.f32 1.0, %v2696
    %v2698 = vmul.f32 %v2690, %v2681
    %v2699 = vadd.f32 %v2540, %v2698
    %v2700 = vtanh.pop %v2699
    %v2701 = vsub.f32 1.0, %v2697
    %v2702 = vmul.f32 %v2701, %v2700
    %v2703 = vmul.f32 %v2697, %v1935
    %v2704 = vadd.f32 %v2702, %v2703
    %s2705 = scalar_lea.vmem %s26, 2
    %2706 = vst [vmem:[%s2705] sm:$0x3] %v2704
    %2707 = vmatprep.subr.mxu0 %v778
    %2708 = vmatpush1.msra.mxu0 %v777
    %2709 = vmatprep.subr.mxu0 %v781
    %2710 = vmatpush1.msra.mxu0 %v780
    %2711 = vmatprep.subr.mxu0 %v784
    %2712 = vmatpush1.msra.mxu0 %v783
    %2713 = vmatprep.subr.mxu0 %v787
    %2714 = vmatpush1.msra.mxu0 %v786
    %2715 = vmatprep.subr.mxu0 %v790
    %2716 = vmatpush1.msra.mxu0 %v789
    %2717 = vmatprep.subr.mxu0 %v793
    %2718 = vmatpush1.msra.mxu0 %v792
    %2719 = vmatprep.subr.mxu0 %v796
    %2720 = vmatpush1.msra.mxu0 %v795
    %2721 = vmatprep.subr.mxu0 %v799
    %2722 = vmatpush1.msra.mxu0 %v798
    %2723 = vmatprep.subr.mxu0 %v802
    %2724 = vmatpush1.msra.mxu0 %v801
    %2725 = vmatprep.subr.mxu0 %v805
    %2726 = vmatpush1.msra.mxu0 %v804
    %2727 = vmatprep.subr.mxu0 %v808
    %2728 = vmatpush1.msra.mxu0 %v807
    %2729 = vmatprep.subr.mxu0 %v811
    %2730 = vmatpush1.msra.mxu0 %v810
    %2731 = vmatprep.subr.mxu0 %v814
    %2732 = vmatpush1.msra.mxu0 %v813
    %2733 = vmatprep.subr.mxu0 %v817
    %2734 = vmatpush1.msra.mxu0 %v816
    %2735 = vmatprep.subr.mxu0 %v820
    %2736 = vmatpush1.msra.mxu0 %v819
    %2737 = vmatprep.subr.mxu0 %v823
    %2738 = vmatpush1.msra.mxu0 %v822
    %2739 = vmatprep.subr.mxu0 0.0
    %2740 = vmatpush1.msra.mxu0 0.0
    %2741 = vmatprep.subr.mxu0 0.0
    %2742 = vmatpush1.msra.mxu0 0.0
    %2743 = vmatprep.subr.mxu0 0.0
    %2744 = vmatpush1.msra.mxu0 0.0
    %2745 = vmatprep.subr.mxu0 0.0
    %2746 = vmatpush1.msra.mxu0 0.0
    %2747 = vmatprep.subr.mxu0 0.0
    %2748 = vmatpush1.msra.mxu0 0.0
    %2749 = vmatprep.subr.mxu0 0.0
    %2750 = vmatpush1.msra.mxu0 0.0
    %2751 = vmatprep.subr.mxu0 0.0
    %2752 = vmatpush1.msra.mxu0 0.0
    %2753 = vmatprep.subr.mxu0 0.0
    %2754 = vmatpush1.msra.mxu0 0.0
    %2755 = vmatprep.subr.mxu0 0.0
    %2756 = vmatpush1.msra.mxu0 0.0
    %2757 = vmatprep.subr.mxu0 0.0
    %2758 = vmatpush1.msra.mxu0 0.0
    %2759 = vmatprep.subr.mxu0 0.0
    %2760 = vmatpush1.msra.mxu0 0.0
    %2761 = vmatprep.subr.mxu0 0.0
    %2762 = vmatpush1.msra.mxu0 0.0
    %2763 = vmatprep.subr.mxu0 0.0
    %2764 = vmatpush1.msra.mxu0 0.0
    %2765 = vmatprep.subr.mxu0 0.0
    %2766 = vmatpush1.msra.mxu0 0.0
    %2767 = vmatprep.subr.mxu0 0.0
    %2768 = vmatpush1.msra.mxu0 0.0
    %2769 = vmatprep.subr.mxu0 0.0
    %2770 = vmatpush1.msra.mxu0 0.0
    %2771 = vmatprep.mubr.f32.mxu0 0.0
    %2772 = vmatmul.mubr.f32.gmra.mrb[0].mxu0 %v2098
    %v2773 = vpop.f32.mrb[0].mxu0
    %v2774 = vadd.f32 %v1092, %v2773
    %v2775 = vpop.f32.mrb[0].mxu0
    %v2776 = vadd.f32 %v1096, %v2775
    %2777 = vdwg.mxu0
    %2778 = vmatprep.subr.mxu0 0.0
    %2779 = vmatpush1.msra.mxu0 %v779
    %2780 = vmatprep.subr.mxu0 0.0
    %2781 = vmatpush1.msra.mxu0 %v782
    %2782 = vmatprep.subr.mxu0 0.0
    %2783 = vmatpush1.msra.mxu0 %v785
    %2784 = vmatprep.subr.mxu0 0.0
    %2785 = vmatpush1.msra.mxu0 %v788
    %2786 = vmatprep.subr.mxu0 0.0
    %2787 = vmatpush1.msra.mxu0 %v791
    %2788 = vmatprep.subr.mxu0 0.0
    %2789 = vmatpush1.msra.mxu0 %v794
    %2790 = vmatprep.subr.mxu0 0.0
    %2791 = vmatpush1.msra.mxu0 %v797
    %2792 = vmatprep.subr.mxu0 0.0
    %2793 = vmatpush1.msra.mxu0 %v800
    %2794 = vmatprep.subr.mxu0 0.0
    %2795 = vmatpush1.msra.mxu0 %v803
    %2796 = vmatprep.subr.mxu0 0.0
    %2797 = vmatpush1.msra.mxu0 %v806
    %2798 = vmatprep.subr.mxu0 0.0
    %2799 = vmatpush1.msra.mxu0 %v809
    %2800 = vmatprep.subr.mxu0 0.0
    %2801 = vmatpush1.msra.mxu0 %v812
    %2802 = vmatprep.subr.mxu0 0.0
    %2803 = vmatpush1.msra.mxu0 %v815
    %2804 = vmatprep.subr.mxu0 0.0
    %2805 = vmatpush1.msra.mxu0 %v818
    %2806 = vmatprep.subr.mxu0 0.0
    %2807 = vmatpush1.msra.mxu0 %v821
    %2808 = vmatprep.subr.mxu0 0.0
    %2809 = vmatpush1.msra.mxu0 %v824
    %2810 = vmatprep.subr.mxu0 0.0
    %2811 = vmatpush1.msra.mxu0 0.0
    %2812 = vmatprep.subr.mxu0 0.0
    %2813 = vmatpush1.msra.mxu0 0.0
    %2814 = vmatprep.subr.mxu0 0.0
    %2815 = vmatpush1.msra.mxu0 0.0
    %2816 = vmatprep.subr.mxu0 0.0
    %2817 = vmatpush1.msra.mxu0 0.0
    %2818 = vmatprep.subr.mxu0 0.0
    %2819 = vmatpush1.msra.mxu0 0.0
    %2820 = vmatprep.subr.mxu0 0.0
    %2821 = vmatpush1.msra.mxu0 0.0
    %2822 = vmatprep.subr.mxu0 0.0
    %2823 = vmatpush1.msra.mxu0 0.0
    %2824 = vmatprep.subr.mxu0 0.0
    %2825 = vmatpush1.msra.mxu0 0.0
    %2826 = vmatprep.subr.mxu0 0.0
    %2827 = vmatpush1.msra.mxu0 0.0
    %2828 = vmatprep.subr.mxu0 0.0
    %2829 = vmatpush1.msra.mxu0 0.0
    %2830 = vmatprep.subr.mxu0 0.0
    %2831 = vmatpush1.msra.mxu0 0.0
    %2832 = vmatprep.subr.mxu0 0.0
    %2833 = vmatpush1.msra.mxu0 0.0
    %2834 = vmatprep.subr.mxu0 0.0
    %2835 = vmatpush1.msra.mxu0 0.0
    %2836 = vmatprep.subr.mxu0 0.0
    %2837 = vmatpush1.msra.mxu0 0.0
    %2838 = vmatprep.subr.mxu0 0.0
    %2839 = vmatpush1.msra.mxu0 0.0
    %2840 = vmatprep.subr.mxu0 0.0
    %2841 = vmatpush1.msra.mxu0 0.0
    %2842 = vmatprep.mubr.f32.mxu0 0.0
    %2843 = vmatmul.mubr.f32.gmra.mrb[0].mxu0 %v2098
    %v2844 = vpop.f32.mrb[0].mxu0
    %v2845 = vadd.f32 %v1100, %v2844
    %v2846 = vpop.f32.mrb[0].mxu0
    %2847 = vdwg.mxu0
    %v2848 = vadd.f32 %v1014, %v2774
    %v2849 = vxor.u32 %v2848, 2147483648
    %v2850 = vmul.f32 %v2849, 1.442695
    %v2851 = vpow.pop %v2850
    %v2852 = vadd.f32 %v2851, 1.0
    %v2853 = vrcp.pop %v2852
    %v2854 = vmul.f32 1.0, %v2853
    %v2855 = vadd.f32 %v1016, %v2776
    %v2856 = vxor.u32 %v2855, 2147483648
    %v2857 = vmul.f32 %v2856, 1.442695
    %v2858 = vpow.pop %v2857
    %v2859 = vadd.f32 %v2858, 1.0
    %v2860 = vrcp.pop %v2859
    %v2861 = vmul.f32 1.0, %v2860
    %v2862 = vmul.f32 %v2854, %v2845
    %v2863 = vadd.f32 %v1085, %v2862
    %v2864 = vtanh.pop %v2863
    %v2865 = vsub.f32 1.0, %v2861
    %v2866 = vmul.f32 %v2865, %v2864
    %v2867 = vmul.f32 %v2861, %v2098
    %v2868 = vadd.f32 %v2866, %v2867
    %2869 = vmatprep.subr.mxu0 %v682
    %2870 = vmatpush1.msra.mxu0 %v681
    %2871 = vmatprep.subr.mxu0 %v685
    %2872 = vmatpush1.msra.mxu0 %v684
    %2873 = vmatprep.subr.mxu0 %v688
    %2874 = vmatpush1.msra.mxu0 %v687
    %2875 = vmatprep.subr.mxu0 %v691
    %2876 = vmatpush1.msra.mxu0 %v690
    %2877 = vmatprep.subr.mxu0 %v694
    %2878 = vmatpush1.msra.mxu0 %v693
    %2879 = vmatprep.subr.mxu0 %v697
    %2880 = vmatpush1.msra.mxu0 %v696
    %2881 = vmatprep.subr.mxu0 %v700
    %2882 = vmatpush1.msra.mxu0 %v699
    %2883 = vmatprep.subr.mxu0 %v703
    %2884 = vmatpush1.msra.mxu0 %v702
    %2885 = vmatprep.subr.mxu0 %v706
    %2886 = vmatpush1.msra.mxu0 %v705
    %2887 = vmatprep.subr.mxu0 %v709
    %2888 = vmatpush1.msra.mxu0 %v708
    %2889 = vmatprep.subr.mxu0 %v712
    %2890 = vmatpush1.msra.mxu0 %v711
    %2891 = vmatprep.subr.mxu0 %v715
    %2892 = vmatpush1.msra.mxu0 %v714
    %2893 = vmatprep.subr.mxu0 %v718
    %2894 = vmatpush1.msra.mxu0 %v717
    %2895 = vmatprep.subr.mxu0 %v721
    %2896 = vmatpush1.msra.mxu0 %v720
    %2897 = vmatprep.subr.mxu0 %v724
    %2898 = vmatpush1.msra.mxu0 %v723
    %2899 = vmatprep.subr.mxu0 %v727
    %2900 = vmatpush1.msra.mxu0 %v726
    %2901 = vmatprep.subr.mxu0 0.0
    %2902 = vmatpush1.msra.mxu0 0.0
    %2903 = vmatprep.subr.mxu0 0.0
    %2904 = vmatpush1.msra.mxu0 0.0
    %2905 = vmatprep.subr.mxu0 0.0
    %2906 = vmatpush1.msra.mxu0 0.0
    %2907 = vmatprep.subr.mxu0 0.0
    %2908 = vmatpush1.msra.mxu0 0.0
    %2909 = vmatprep.subr.mxu0 0.0
    %2910 = vmatpush1.msra.mxu0 0.0
    %2911 = vmatprep.subr.mxu0 0.0
    %2912 = vmatpush1.msra.mxu0 0.0
    %2913 = vmatprep.subr.mxu0 0.0
    %2914 = vmatpush1.msra.mxu0 0.0
    %2915 = vmatprep.subr.mxu0 0.0
    %2916 = vmatpush1.msra.mxu0 0.0
    %2917 = vmatprep.subr.mxu0 0.0
    %2918 = vmatpush1.msra.mxu0 0.0
    %2919 = vmatprep.subr.mxu0 0.0
    %2920 = vmatpush1.msra.mxu0 0.0
    %2921 = vmatprep.subr.mxu0 0.0
    %2922 = vmatpush1.msra.mxu0 0.0
    %2923 = vmatprep.subr.mxu0 0.0
    %2924 = vmatpush1.msra.mxu0 0.0
    %2925 = vmatprep.subr.mxu0 0.0
    %2926 = vmatpush1.msra.mxu0 0.0
    %2927 = vmatprep.subr.mxu0 0.0
    %2928 = vmatpush1.msra.mxu0 0.0
    %2929 = vmatprep.subr.mxu0 0.0
    %2930 = vmatpush1.msra.mxu0 0.0
    %2931 = vmatprep.subr.mxu0 0.0
    %2932 = vmatpush1.msra.mxu0 0.0
    %2933 = vmatprep.mubr.f32.mxu0 0.0
    %2934 = vmatmul.mubr.f32.gmra.mrb[0].mxu0 %v2868
    %v2935 = vpop.f32.mrb[0].mxu0
    %v2936 = vadd.f32 %v1270, %v2935
    %v2937 = vpop.f32.mrb[0].mxu0
    %v2938 = vadd.f32 %v1274, %v2937
    %2939 = vdwg.mxu0
    %2940 = vmatprep.subr.mxu0 0.0
    %2941 = vmatpush1.msra.mxu0 %v683
    %2942 = vmatprep.subr.mxu0 0.0
    %2943 = vmatpush1.msra.mxu0 %v686
    %2944 = vmatprep.subr.mxu0 0.0
    %2945 = vmatpush1.msra.mxu0 %v689
    %2946 = vmatprep.subr.mxu0 0.0
    %2947 = vmatpush1.msra.mxu0 %v692
    %2948 = vmatprep.subr.mxu0 0.0
    %2949 = vmatpush1.msra.mxu0 %v695
    %2950 = vmatprep.subr.mxu0 0.0
    %2951 = vmatpush1.msra.mxu0 %v698
    %2952 = vmatprep.subr.mxu0 0.0
    %2953 = vmatpush1.msra.mxu0 %v701
    %2954 = vmatprep.subr.mxu0 0.0
    %2955 = vmatpush1.msra.mxu0 %v704
    %2956 = vmatprep.subr.mxu0 0.0
    %2957 = vmatpush1.msra.mxu0 %v707
    %2958 = vmatprep.subr.mxu0 0.0
    %2959 = vmatpush1.msra.mxu0 %v710
    %2960 = vmatprep.subr.mxu0 0.0
    %2961 = vmatpush1.msra.mxu0 %v713
    %2962 = vmatprep.subr.mxu0 0.0
    %2963 = vmatpush1.msra.mxu0 %v716
    %2964 = vmatprep.subr.mxu0 0.0
    %2965 = vmatpush1.msra.mxu0 %v719
    %2966 = vmatprep.subr.mxu0 0.0
    %2967 = vmatpush1.msra.mxu0 %v722
    %2968 = vmatprep.subr.mxu0 0.0
    %2969 = vmatpush1.msra.mxu0 %v725
    %2970 = vmatprep.subr.mxu0 0.0
    %2971 = vmatpush1.msra.mxu0 %v728
    %2972 = vmatprep.subr.mxu0 0.0
    %2973 = vmatpush1.msra.mxu0 0.0
    %2974 = vmatprep.subr.mxu0 0.0
    %2975 = vmatpush1.msra.mxu0 0.0
    %2976 = vmatprep.subr.mxu0 0.0
    %2977 = vmatpush1.msra.mxu0 0.0
    %2978 = vmatprep.subr.mxu0 0.0
    %2979 = vmatpush1.msra.mxu0 0.0
    %2980 = vmatprep.subr.mxu0 0.0
    %2981 = vmatpush1.msra.mxu0 0.0
    %2982 = vmatprep.subr.mxu0 0.0
    %2983 = vmatpush1.msra.mxu0 0.0
    %2984 = vmatprep.subr.mxu0 0.0
    %2985 = vmatpush1.msra.mxu0 0.0
    %2986 = vmatprep.subr.mxu0 0.0
    %2987 = vmatpush1.msra.mxu0 0.0
    %2988 = vmatprep.subr.mxu0 0.0
    %2989 = vmatpush1.msra.mxu0 0.0
    %2990 = vmatprep.subr.mxu0 0.0
    %2991 = vmatpush1.msra.mxu0 0.0
    %2992 = vmatprep.subr.mxu0 0.0
    %2993 = vmatpush1.msra.mxu0 0.0
    %2994 = vmatprep.subr.mxu0 0.0
    %2995 = vmatpush1.msra.mxu0 0.0
    %2996 = vmatprep.subr.mxu0 0.0
    %2997 = vmatpush1.msra.mxu0 0.0
    %2998 = vmatprep.subr.mxu0 0.0
    %2999 = vmatpush1.msra.mxu0 0.0
    %3000 = vmatprep.subr.mxu0 0.0
    %3001 = vmatpush1.msra.mxu0 0.0
    %3002 = vmatprep.subr.mxu0 0.0
    %3003 = vmatpush1.msra.mxu0 0.0
    %3004 = vmatprep.mubr.f32.mxu0 0.0
    %3005 = vmatmul.mubr.f32.gmra.mrb[0].mxu0 %v2868
    %v3006 = vpop.f32.mrb[0].mxu0
    %v3007 = vadd.f32 %v1278, %v3006
    %v3008 = vpop.f32.mrb[0].mxu0
    %3009 = vdwg.mxu0
    %3010 = vmatprep.subr.mxu0 %v826
    %3011 = vmatpush1.msra.mxu0 %v825
    %3012 = vmatprep.subr.mxu0 %v829
    %3013 = vmatpush1.msra.mxu0 %v828
    %3014 = vmatprep.subr.mxu0 %v832
    %3015 = vmatpush1.msra.mxu0 %v831
    %3016 = vmatprep.subr.mxu0 %v835
    %3017 = vmatpush1.msra.mxu0 %v834
    %3018 = vmatprep.subr.mxu0 %v838
    %3019 = vmatpush1.msra.mxu0 %v837
    %3020 = vmatprep.subr.mxu0 %v841
    %3021 = vmatpush1.msra.mxu0 %v840
    %3022 = vmatprep.subr.mxu0 %v844
    %3023 = vmatpush1.msra.mxu0 %v843
    %3024 = vmatprep.subr.mxu0 %v847
    %3025 = vmatpush1.msra.mxu0 %v846
    %3026 = vmatprep.subr.mxu0 %v850
    %3027 = vmatpush1.msra.mxu0 %v849
    %3028 = vmatprep.subr.mxu0 %v853
    %3029 = vmatpush1.msra.mxu0 %v852
    %3030 = vmatprep.subr.mxu0 %v856
    %3031 = vmatpush1.msra.mxu0 %v855
    %3032 = vmatprep.subr.mxu0 %v859
    %3033 = vmatpush1.msra.mxu0 %v858
    %3034 = vmatprep.subr.mxu0 %v862
    %3035 = vmatpush1.msra.mxu0 %v861
    %3036 = vmatprep.subr.mxu0 %v865
    %3037 = vmatpush1.msra.mxu0 %v864
    %3038 = vmatprep.subr.mxu0 %v868
    %3039 = vmatpush1.msra.mxu0 %v867
    %3040 = vmatprep.subr.mxu0 %v871
    %3041 = vmatpush1.msra.mxu0 %v870
    %3042 = vmatprep.subr.mxu0 0.0
    %3043 = vmatpush1.msra.mxu0 0.0
    %3044 = vmatprep.subr.mxu0 0.0
    %3045 = vmatpush1.msra.mxu0 0.0
    %3046 = vmatprep.subr.mxu0 0.0
    %3047 = vmatpush1.msra.mxu0 0.0
    %3048 = vmatprep.subr.mxu0 0.0
    %3049 = vmatpush1.msra.mxu0 0.0
    %3050 = vmatprep.subr.mxu0 0.0
    %3051 = vmatpush1.msra.mxu0 0.0
    %3052 = vmatprep.subr.mxu0 0.0
    %3053 = vmatpush1.msra.mxu0 0.0
    %3054 = vmatprep.subr.mxu0 0.0
    %3055 = vmatpush1.msra.mxu0 0.0
    %3056 = vmatprep.subr.mxu0 0.0
    %3057 = vmatpush1.msra.mxu0 0.0
    %3058 = vmatprep.subr.mxu0 0.0
    %3059 = vmatpush1.msra.mxu0 0.0
    %3060 = vmatprep.subr.mxu0 0.0
    %3061 = vmatpush1.msra.mxu0 0.0
    %3062 = vmatprep.subr.mxu0 0.0
    %3063 = vmatpush1.msra.mxu0 0.0
    %3064 = vmatprep.subr.mxu0 0.0
    %3065 = vmatpush1.msra.mxu0 0.0
    %3066 = vmatprep.subr.mxu0 0.0
    %3067 = vmatpush1.msra.mxu0 0.0
    %3068 = vmatprep.subr.mxu0 0.0
    %3069 = vmatpush1.msra.mxu0 0.0
    %3070 = vmatprep.subr.mxu0 0.0
    %3071 = vmatpush1.msra.mxu0 0.0
    %3072 = vmatprep.subr.mxu0 0.0
    %3073 = vmatpush1.msra.mxu0 0.0
    %3074 = vmatprep.mubr.f32.mxu0 0.0
    %3075 = vmatmul.mubr.f32.gmra.mrb[0].mxu0 %v2401
    %v3076 = vpop.f32.mrb[0].mxu0
    %v3077 = vadd.f32 %v1427, %v3076
    %v3078 = vpop.f32.mrb[0].mxu0
    %v3079 = vadd.f32 %v1431, %v3078
    %3080 = vdwg.mxu0
    %3081 = vmatprep.subr.mxu0 0.0
    %3082 = vmatpush1.msra.mxu0 %v827
    %3083 = vmatprep.subr.mxu0 0.0
    %3084 = vmatpush1.msra.mxu0 %v830
    %3085 = vmatprep.subr.mxu0 0.0
    %3086 = vmatpush1.msra.mxu0 %v833
    %3087 = vmatprep.subr.mxu0 0.0
    %3088 = vmatpush1.msra.mxu0 %v836
    %3089 = vmatprep.subr.mxu0 0.0
    %3090 = vmatpush1.msra.mxu0 %v839
    %3091 = vmatprep.subr.mxu0 0.0
    %3092 = vmatpush1.msra.mxu0 %v842
    %3093 = vmatprep.subr.mxu0 0.0
    %3094 = vmatpush1.msra.mxu0 %v845
    %3095 = vmatprep.subr.mxu0 0.0
    %3096 = vmatpush1.msra.mxu0 %v848
    %3097 = vmatprep.subr.mxu0 0.0
    %3098 = vmatpush1.msra.mxu0 %v851
    %3099 = vmatprep.subr.mxu0 0.0
    %3100 = vmatpush1.msra.mxu0 %v854
    %3101 = vmatprep.subr.mxu0 0.0
    %3102 = vmatpush1.msra.mxu0 %v857
    %3103 = vmatprep.subr.mxu0 0.0
    %3104 = vmatpush1.msra.mxu0 %v860
    %3105 = vmatprep.subr.mxu0 0.0
    %3106 = vmatpush1.msra.mxu0 %v863
    %3107 = vmatprep.subr.mxu0 0.0
    %3108 = vmatpush1.msra.mxu0 %v866
    %3109 = vmatprep.subr.mxu0 0.0
    %3110 = vmatpush1.msra.mxu0 %v869
    %3111 = vmatprep.subr.mxu0 0.0
    %3112 = vmatpush1.msra.mxu0 %v872
    %3113 = vmatprep.subr.mxu0 0.0
    %3114 = vmatpush1.msra.mxu0 0.0
    %3115 = vmatprep.subr.mxu0 0.0
    %3116 = vmatpush1.msra.mxu0 0.0
    %3117 = vmatprep.subr.mxu0 0.0
    %3118 = vmatpush1.msra.mxu0 0.0
    %3119 = vmatprep.subr.mxu0 0.0
    %3120 = vmatpush1.msra.mxu0 0.0
    %3121 = vmatprep.subr.mxu0 0.0
    %3122 = vmatpush1.msra.mxu0 0.0
    %3123 = vmatprep.subr.mxu0 0.0
    %3124 = vmatpush1.msra.mxu0 0.0
    %3125 = vmatprep.subr.mxu0 0.0
    %3126 = vmatpush1.msra.mxu0 0.0
    %3127 = vmatprep.subr.mxu0 0.0
    %3128 = vmatpush1.msra.mxu0 0.0
    %3129 = vmatprep.subr.mxu0 0.0
    %3130 = vmatpush1.msra.mxu0 0.0
    %3131 = vmatprep.subr.mxu0 0.0
    %3132 = vmatpush1.msra.mxu0 0.0
    %3133 = vmatprep.subr.mxu0 0.0
    %3134 = vmatpush1.msra.mxu0 0.0
    %3135 = vmatprep.subr.mxu0 0.0
    %3136 = vmatpush1.msra.mxu0 0.0
    %3137 = vmatprep.subr.mxu0 0.0
    %3138 = vmatpush1.msra.mxu0 0.0
    %3139 = vmatprep.subr.mxu0 0.0
    %3140 = vmatpush1.msra.mxu0 0.0
    %3141 = vmatprep.subr.mxu0 0.0
    %3142 = vmatpush1.msra.mxu0 0.0
    %3143 = vmatprep.subr.mxu0 0.0
    %3144 = vmatpush1.msra.mxu0 0.0
    %3145 = vmatprep.mubr.f32.mxu0 0.0
    %3146 = vmatmul.mubr.f32.gmra.mrb[0].mxu0 %v2401
    %v3147 = vpop.f32.mrb[0].mxu0
    %v3148 = vadd.f32 %v1435, %v3147
    %v3149 = vpop.f32.mrb[0].mxu0
    %3150 = vdwg.mxu0
    %v3151 = vadd.f32 %v2936, %v3077
    %v3152 = vxor.u32 %v3151, 2147483648
    %v3153 = vmul.f32 %v3152, 1.442695
    %v3154 = vpow.pop %v3153
    %v3155 = vadd.f32 %v3154, 1.0
    %v3156 = vrcp.pop %v3155
    %v3157 = vmul.f32 1.0, %v3156
    %v3158 = vadd.f32 %v2938, %v3079
    %v3159 = vxor.u32 %v3158, 2147483648
    %v3160 = vmul.f32 %v3159, 1.442695
    %v3161 = vpow.pop %v3160
    %v3162 = vadd.f32 %v3161, 1.0
    %v3163 = vrcp.pop %v3162
    %v3164 = vmul.f32 1.0, %v3163
    %v3165 = vmul.f32 %v3157, %v3148
    %v3166 = vadd.f32 %v3007, %v3165
    %v3167 = vtanh.pop %v3166
    %v3168 = vsub.f32 1.0, %v3164
    %v3169 = vmul.f32 %v3168, %v3167
    %v3170 = vmul.f32 %v3164, %v2401
    %v3171 = vadd.f32 %v3169, %v3170
    %3172 = vmatprep.subr.mxu0 %v730
    %3173 = vmatpush1.msra.mxu0 %v729
    %3174 = vmatprep.subr.mxu0 %v733
    %3175 = vmatpush1.msra.mxu0 %v732
    %3176 = vmatprep.subr.mxu0 %v736
    %3177 = vmatpush1.msra.mxu0 %v735
    %3178 = vmatprep.subr.mxu0 %v739
    %3179 = vmatpush1.msra.mxu0 %v738
    %3180 = vmatprep.subr.mxu0 %v742
    %3181 = vmatpush1.msra.mxu0 %v741
    %3182 = vmatprep.subr.mxu0 %v745
    %3183 = vmatpush1.msra.mxu0 %v744
    %3184 = vmatprep.subr.mxu0 %v748
    %3185 = vmatpush1.msra.mxu0 %v747
    %3186 = vmatprep.subr.mxu0 %v751
    %3187 = vmatpush1.msra.mxu0 %v750
    %3188 = vmatprep.subr.mxu0 %v754
    %3189 = vmatpush1.msra.mxu0 %v753
    %3190 = vmatprep.subr.mxu0 %v757
    %3191 = vmatpush1.msra.mxu0 %v756
    %3192 = vmatprep.subr.mxu0 %v760
    %3193 = vmatpush1.msra.mxu0 %v759
    %3194 = vmatprep.subr.mxu0 %v763
    %3195 = vmatpush1.msra.mxu0 %v762
    %3196 = vmatprep.subr.mxu0 %v766
    %3197 = vmatpush1.msra.mxu0 %v765
    %3198 = vmatprep.subr.mxu0 %v769
    %3199 = vmatpush1.msra.mxu0 %v768
    %3200 = vmatprep.subr.mxu0 %v772
    %3201 = vmatpush1.msra.mxu0 %v771
    %3202 = vmatprep.subr.mxu0 %v775
    %3203 = vmatpush1.msra.mxu0 %v774
    %3204 = vmatprep.subr.mxu0 0.0
    %3205 = vmatpush1.msra.mxu0 0.0
    %3206 = vmatprep.subr.mxu0 0.0
    %3207 = vmatpush1.msra.mxu0 0.0
    %3208 = vmatprep.subr.mxu0 0.0
    %3209 = vmatpush1.msra.mxu0 0.0
    %3210 = vmatprep.subr.mxu0 0.0
    %3211 = vmatpush1.msra.mxu0 0.0
    %3212 = vmatprep.subr.mxu0 0.0
    %3213 = vmatpush1.msra.mxu0 0.0
    %3214 = vmatprep.subr.mxu0 0.0
    %3215 = vmatpush1.msra.mxu0 0.0
    %3216 = vmatprep.subr.mxu0 0.0
    %3217 = vmatpush1.msra.mxu0 0.0
    %3218 = vmatprep.subr.mxu0 0.0
    %3219 = vmatpush1.msra.mxu0 0.0
    %3220 = vmatprep.subr.mxu0 0.0
    %3221 = vmatpush1.msra.mxu0 0.0
    %3222 = vmatprep.subr.mxu0 0.0
    %3223 = vmatpush1.msra.mxu0 0.0
    %3224 = vmatprep.subr.mxu0 0.0
    %3225 = vmatpush1.msra.mxu0 0.0
    %3226 = vmatprep.subr.mxu0 0.0
    %3227 = vmatpush1.msra.mxu0 0.0
    %3228 = vmatprep.subr.mxu0 0.0
    %3229 = vmatpush1.msra.mxu0 0.0
    %3230 = vmatprep.subr.mxu0 0.0
    %3231 = vmatpush1.msra.mxu0 0.0
    %3232 = vmatprep.subr.mxu0 0.0
    %3233 = vmatpush1.msra.mxu0 0.0
    %3234 = vmatprep.subr.mxu0 0.0
    %3235 = vmatpush1.msra.mxu0 0.0
    %3236 = vmatprep.mubr.f32.mxu0 0.0
    %3237 = vmatmul.mubr.f32.gmra.mrb[0].mxu0 %v3171
    %v3238 = vpop.f32.mrb[0].mxu0
    %v3239 = vadd.f32 %v1605, %v3238
    %v3240 = vpop.f32.mrb[0].mxu0
    %v3241 = vadd.f32 %v1609, %v3240
    %3242 = vdwg.mxu0
    %3243 = vmatprep.subr.mxu0 0.0
    %3244 = vmatpush1.msra.mxu0 %v731
    %3245 = vmatprep.subr.mxu0 0.0
    %3246 = vmatpush1.msra.mxu0 %v734
    %3247 = vmatprep.subr.mxu0 0.0
    %3248 = vmatpush1.msra.mxu0 %v737
    %3249 = vmatprep.subr.mxu0 0.0
    %3250 = vmatpush1.msra.mxu0 %v740
    %3251 = vmatprep.subr.mxu0 0.0
    %3252 = vmatpush1.msra.mxu0 %v743
    %3253 = vmatprep.subr.mxu0 0.0
    %3254 = vmatpush1.msra.mxu0 %v746
    %3255 = vmatprep.subr.mxu0 0.0
    %3256 = vmatpush1.msra.mxu0 %v749
    %3257 = vmatprep.subr.mxu0 0.0
    %3258 = vmatpush1.msra.mxu0 %v752
    %3259 = vmatprep.subr.mxu0 0.0
    %3260 = vmatpush1.msra.mxu0 %v755
    %3261 = vmatprep.subr.mxu0 0.0
    %3262 = vmatpush1.msra.mxu0 %v758
    %3263 = vmatprep.subr.mxu0 0.0
    %3264 = vmatpush1.msra.mxu0 %v761
    %3265 = vmatprep.subr.mxu0 0.0
    %3266 = vmatpush1.msra.mxu0 %v764
    %3267 = vmatprep.subr.mxu0 0.0
    %3268 = vmatpush1.msra.mxu0 %v767
    %3269 = vmatprep.subr.mxu0 0.0
    %3270 = vmatpush1.msra.mxu0 %v770
    %3271 = vmatprep.subr.mxu0 0.0
    %3272 = vmatpush1.msra.mxu0 %v773
    %3273 = vmatprep.subr.mxu0 0.0
    %3274 = vmatpush1.msra.mxu0 %v776
    %3275 = vmatprep.subr.mxu0 0.0
    %3276 = vmatpush1.msra.mxu0 0.0
    %3277 = vmatprep.subr.mxu0 0.0
    %3278 = vmatpush1.msra.mxu0 0.0
    %3279 = vmatprep.subr.mxu0 0.0
    %3280 = vmatpush1.msra.mxu0 0.0
    %3281 = vmatprep.subr.mxu0 0.0
    %3282 = vmatpush1.msra.mxu0 0.0
    %3283 = vmatprep.subr.mxu0 0.0
    %3284 = vmatpush1.msra.mxu0 0.0
    %3285 = vmatprep.subr.mxu0 0.0
    %3286 = vmatpush1.msra.mxu0 0.0
    %3287 = vmatprep.subr.mxu0 0.0
    %3288 = vmatpush1.msra.mxu0 0.0
    %3289 = vmatprep.subr.mxu0 0.0
    %3290 = vmatpush1.msra.mxu0 0.0
    %3291 = vmatprep.subr.mxu0 0.0
    %3292 = vmatpush1.msra.mxu0 0.0
    %3293 = vmatprep.subr.mxu0 0.0
    %3294 = vmatpush1.msra.mxu0 0.0
    %3295 = vmatprep.subr.mxu0 0.0
    %3296 = vmatpush1.msra.mxu0 0.0
    %3297 = vmatprep.subr.mxu0 0.0
    %3298 = vmatpush1.msra.mxu0 0.0
    %3299 = vmatprep.subr.mxu0 0.0
    %3300 = vmatpush1.msra.mxu0 0.0
    %3301 = vmatprep.subr.mxu0 0.0
    %3302 = vmatpush1.msra.mxu0 0.0
    %3303 = vmatprep.subr.mxu0 0.0
    %3304 = vmatpush1.msra.mxu0 0.0
    %3305 = vmatprep.subr.mxu0 0.0
    %3306 = vmatpush1.msra.mxu0 0.0
    %3307 = vmatprep.mubr.f32.mxu0 0.0
    %3308 = vmatmul.mubr.f32.gmra.mrb[0].mxu0 %v3171
    %v3309 = vpop.f32.mrb[0].mxu0
    %v3310 = vadd.f32 %v1613, %v3309
    %v3311 = vpop.f32.mrb[0].mxu0
    %3312 = vdwg.mxu0
    %3313 = vmatprep.subr.mxu0 %v874
    %3314 = vmatpush1.msra.mxu0 %v873
    %3315 = vmatprep.subr.mxu0 %v877
    %3316 = vmatpush1.msra.mxu0 %v876
    %3317 = vmatprep.subr.mxu0 %v880
    %3318 = vmatpush1.msra.mxu0 %v879
    %3319 = vmatprep.subr.mxu0 %v883
    %3320 = vmatpush1.msra.mxu0 %v882
    %3321 = vmatprep.subr.mxu0 %v886
    %3322 = vmatpush1.msra.mxu0 %v885
    %3323 = vmatprep.subr.mxu0 %v889
    %3324 = vmatpush1.msra.mxu0 %v888
    %3325 = vmatprep.subr.mxu0 %v892
    %3326 = vmatpush1.msra.mxu0 %v891
    %3327 = vmatprep.subr.mxu0 %v895
    %3328 = vmatpush1.msra.mxu0 %v894
    %3329 = vmatprep.subr.mxu0 %v898
    %3330 = vmatpush1.msra.mxu0 %v897
    %3331 = vmatprep.subr.mxu0 %v901
    %3332 = vmatpush1.msra.mxu0 %v900
    %3333 = vmatprep.subr.mxu0 %v904
    %3334 = vmatpush1.msra.mxu0 %v903
    %3335 = vmatprep.subr.mxu0 %v907
    %3336 = vmatpush1.msra.mxu0 %v906
    %3337 = vmatprep.subr.mxu0 %v910
    %3338 = vmatpush1.msra.mxu0 %v909
    %3339 = vmatprep.subr.mxu0 %v913
    %3340 = vmatpush1.msra.mxu0 %v912
    %3341 = vmatprep.subr.mxu0 %v916
    %3342 = vmatpush1.msra.mxu0 %v915
    %3343 = vmatprep.subr.mxu0 %v919
    %3344 = vmatpush1.msra.mxu0 %v918
    %3345 = vmatprep.subr.mxu0 0.0
    %3346 = vmatpush1.msra.mxu0 0.0
    %3347 = vmatprep.subr.mxu0 0.0
    %3348 = vmatpush1.msra.mxu0 0.0
    %3349 = vmatprep.subr.mxu0 0.0
    %3350 = vmatpush1.msra.mxu0 0.0
    %3351 = vmatprep.subr.mxu0 0.0
    %3352 = vmatpush1.msra.mxu0 0.0
    %3353 = vmatprep.subr.mxu0 0.0
    %3354 = vmatpush1.msra.mxu0 0.0
    %3355 = vmatprep.subr.mxu0 0.0
    %3356 = vmatpush1.msra.mxu0 0.0
    %3357 = vmatprep.subr.mxu0 0.0
    %3358 = vmatpush1.msra.mxu0 0.0
    %3359 = vmatprep.subr.mxu0 0.0
    %3360 = vmatpush1.msra.mxu0 0.0
    %3361 = vmatprep.subr.mxu0 0.0
    %3362 = vmatpush1.msra.mxu0 0.0
    %3363 = vmatprep.subr.mxu0 0.0
    %3364 = vmatpush1.msra.mxu0 0.0
    %3365 = vmatprep.subr.mxu0 0.0
    %3366 = vmatpush1.msra.mxu0 0.0
    %3367 = vmatprep.subr.mxu0 0.0
    %3368 = vmatpush1.msra.mxu0 0.0
    %3369 = vmatprep.subr.mxu0 0.0
    %3370 = vmatpush1.msra.mxu0 0.0
    %3371 = vmatprep.subr.mxu0 0.0
    %3372 = vmatpush1.msra.mxu0 0.0
    %3373 = vmatprep.subr.mxu0 0.0
    %3374 = vmatpush1.msra.mxu0 0.0
    %3375 = vmatprep.subr.mxu0 0.0
    %3376 = vmatpush1.msra.mxu0 0.0
    %3377 = vmatprep.mubr.f32.mxu0 0.0
    %3378 = vmatmul.mubr.f32.gmra.mrb[0].mxu0 %v2704
    %v3379 = vpop.f32.mrb[0].mxu0
    %v3380 = vadd.f32 %v1762, %v3379
    %v3381 = vpop.f32.mrb[0].mxu0
    %v3382 = vadd.f32 %v1766, %v3381
    %3383 = vdwg.mxu0
    %3384 = vmatprep.subr.mxu0 0.0
    %3385 = vmatpush1.msra.mxu0 %v875
    %3386 = vmatprep.subr.mxu0 0.0
    %3387 = vmatpush1.msra.mxu0 %v878
    %3388 = vmatprep.subr.mxu0 0.0
    %3389 = vmatpush1.msra.mxu0 %v881
    %3390 = vmatprep.subr.mxu0 0.0
    %3391 = vmatpush1.msra.mxu0 %v884
    %3392 = vmatprep.subr.mxu0 0.0
    %3393 = vmatpush1.msra.mxu0 %v887
    %3394 = vmatprep.subr.mxu0 0.0
    %3395 = vmatpush1.msra.mxu0 %v890
    %3396 = vmatprep.subr.mxu0 0.0
    %3397 = vmatpush1.msra.mxu0 %v893
    %3398 = vmatprep.subr.mxu0 0.0
    %3399 = vmatpush1.msra.mxu0 %v896
    %3400 = vmatprep.subr.mxu0 0.0
    %3401 = vmatpush1.msra.mxu0 %v899
    %3402 = vmatprep.subr.mxu0 0.0
    %3403 = vmatpush1.msra.mxu0 %v902
    %3404 = vmatprep.subr.mxu0 0.0
    %3405 = vmatpush1.msra.mxu0 %v905
    %3406 = vmatprep.subr.mxu0 0.0
    %3407 = vmatpush1.msra.mxu0 %v908
    %3408 = vmatprep.subr.mxu0 0.0
    %3409 = vmatpush1.msra.mxu0 %v911
    %3410 = vmatprep.subr.mxu0 0.0
    %3411 = vmatpush1.msra.mxu0 %v914
    %3412 = vmatprep.subr.mxu0 0.0
    %3413 = vmatpush1.msra.mxu0 %v917
    %3414 = vmatprep.subr.mxu0 0.0
    %3415 = vmatpush1.msra.mxu0 %v920
    %3416 = vmatprep.subr.mxu0 0.0
    %3417 = vmatpush1.msra.mxu0 0.0
    %3418 = vmatprep.subr.mxu0 0.0
    %3419 = vmatpush1.msra.mxu0 0.0
    %3420 = vmatprep.subr.mxu0 0.0
    %3421 = vmatpush1.msra.mxu0 0.0
    %3422 = vmatprep.subr.mxu0 0.0
    %3423 = vmatpush1.msra.mxu0 0.0
    %3424 = vmatprep.subr.mxu0 0.0
    %3425 = vmatpush1.msra.mxu0 0.0
    %3426 = vmatprep.subr.mxu0 0.0
    %3427 = vmatpush1.msra.mxu0 0.0
    %3428 = vmatprep.subr.mxu0 0.0
    %3429 = vmatpush1.msra.mxu0 0.0
    %3430 = vmatprep.subr.mxu0 0.0
    %3431 = vmatpush1.msra.mxu0 0.0
    %3432 = vmatprep.subr.mxu0 0.0
    %3433 = vmatpush1.msra.mxu0 0.0
    %3434 = vmatprep.subr.mxu0 0.0
    %3435 = vmatpush1.msra.mxu0 0.0
    %3436 = vmatprep.subr.mxu0 0.0
    %3437 = vmatpush1.msra.mxu0 0.0
    %3438 = vmatprep.subr.mxu0 0.0
    %3439 = vmatpush1.msra.mxu0 0.0
    %3440 = vmatprep.subr.mxu0 0.0
    %3441 = vmatpush1.msra.mxu0 0.0
    %3442 = vmatprep.subr.mxu0 0.0
    %3443 = vmatpush1.msra.mxu0 0.0
    %3444 = vmatprep.subr.mxu0 0.0
    %3445 = vmatpush1.msra.mxu0 0.0
    %3446 = vmatprep.subr.mxu0 0.0
    %3447 = vmatpush1.msra.mxu0 0.0
    %3448 = vmatprep.mubr.f32.mxu0 0.0
    %3449 = vmatmul.mubr.f32.gmra.mrb[0].mxu0 %v2704
    %v3450 = vpop.f32.mrb[0].mxu0
    %v3451 = vadd.f32 %v1770, %v3450
    %v3452 = vpop.f32.mrb[0].mxu0
    %3453 = vdwg.mxu0
    %v3454 = vadd.f32 %v3239, %v3380
    %v3455 = vxor.u32 %v3454, 2147483648
    %v3456 = vmul.f32 %v3455, 1.442695
    %v3457 = vpow.pop %v3456
    %v3458 = vadd.f32 %v3457, 1.0
    %v3459 = vrcp.pop %v3458
    %v3460 = vmul.f32 1.0, %v3459
    %v3461 = vadd.f32 %v3241, %v3382
    %v3462 = vxor.u32 %v3461, 2147483648
    %v3463 = vmul.f32 %v3462, 1.442695
    %v3464 = vpow.pop %v3463
    %v3465 = vadd.f32 %v3464, 1.0
    %v3466 = vrcp.pop %v3465
    %v3467 = vmul.f32 1.0, %v3466
    %v3468 = vmul.f32 %v3460, %v3451
    %v3469 = vadd.f32 %v3310, %v3468
    %v3470 = vtanh.pop %v3469
    %v3471 = vsub.f32 1.0, %v3467
    %v3472 = vmul.f32 %v3471, %v3470
    %v3473 = vmul.f32 %v3467, %v2704
    %v3474 = vadd.f32 %v3472, %v3473
    %s3475 = scalar_lea.vmem %s26, 4
    %3476 = vst [vmem:[%s3475] sm:$0x3] %v3474
    %3477 = vmatprep.subr.mxu0 %v778
    %3478 = vmatpush1.msra.mxu0 %v777
    %3479 = vmatprep.subr.mxu0 %v781
    %3480 = vmatpush1.msra.mxu0 %v780
    %3481 = vmatprep.subr.mxu0 %v784
    %3482 = vmatpush1.msra.mxu0 %v783
    %3483 = vmatprep.subr.mxu0 %v787
    %3484 = vmatpush1.msra.mxu0 %v786
    %3485 = vmatprep.subr.mxu0 %v790
    %3486 = vmatpush1.msra.mxu0 %v789
    %3487 = vmatprep.subr.mxu0 %v793
    %3488 = vmatpush1.msra.mxu0 %v792
    %3489 = vmatprep.subr.mxu0 %v796
    %3490 = vmatpush1.msra.mxu0 %v795
    %3491 = vmatprep.subr.mxu0 %v799
    %3492 = vmatpush1.msra.mxu0 %v798
    %3493 = vmatprep.subr.mxu0 %v802
    %3494 = vmatpush1.msra.mxu0 %v801
    %3495 = vmatprep.subr.mxu0 %v805
    %3496 = vmatpush1.msra.mxu0 %v804
    %3497 = vmatprep.subr.mxu0 %v808
    %3498 = vmatpush1.msra.mxu0 %v807
    %3499 = vmatprep.subr.mxu0 %v811
    %3500 = vmatpush1.msra.mxu0 %v810
    %3501 = vmatprep.subr.mxu0 %v814
    %3502 = vmatpush1.msra.mxu0 %v813
    %3503 = vmatprep.subr.mxu0 %v817
    %3504 = vmatpush1.msra.mxu0 %v816
    %3505 = vmatprep.subr.mxu0 %v820
    %3506 = vmatpush1.msra.mxu0 %v819
    %3507 = vmatprep.subr.mxu0 %v823
    %3508 = vmatpush1.msra.mxu0 %v822
    %3509 = vmatprep.subr.mxu0 0.0
    %3510 = vmatpush1.msra.mxu0 0.0
    %3511 = vmatprep.subr.mxu0 0.0
    %3512 = vmatpush1.msra.mxu0 0.0
    %3513 = vmatprep.subr.mxu0 0.0
    %3514 = vmatpush1.msra.mxu0 0.0
    %3515 = vmatprep.subr.mxu0 0.0
    %3516 = vmatpush1.msra.mxu0 0.0
    %3517 = vmatprep.subr.mxu0 0.0
    %3518 = vmatpush1.msra.mxu0 0.0
    %3519 = vmatprep.subr.mxu0 0.0
    %3520 = vmatpush1.msra.mxu0 0.0
    %3521 = vmatprep.subr.mxu0 0.0
    %3522 = vmatpush1.msra.mxu0 0.0
    %3523 = vmatprep.subr.mxu0 0.0
    %3524 = vmatpush1.msra.mxu0 0.0
    %3525 = vmatprep.subr.mxu0 0.0
    %3526 = vmatpush1.msra.mxu0 0.0
    %3527 = vmatprep.subr.mxu0 0.0
    %3528 = vmatpush1.msra.mxu0 0.0
    %3529 = vmatprep.subr.mxu0 0.0
    %3530 = vmatpush1.msra.mxu0 0.0
    %3531 = vmatprep.subr.mxu0 0.0
    %3532 = vmatpush1.msra.mxu0 0.0
    %3533 = vmatprep.subr.mxu0 0.0
    %3534 = vmatpush1.msra.mxu0 0.0
    %3535 = vmatprep.subr.mxu0 0.0
    %3536 = vmatpush1.msra.mxu0 0.0
    %3537 = vmatprep.subr.mxu0 0.0
    %3538 = vmatpush1.msra.mxu0 0.0
    %3539 = vmatprep.subr.mxu0 0.0
    %3540 = vmatpush1.msra.mxu0 0.0
    %3541 = vmatprep.mubr.f32.mxu0 0.0
    %3542 = vmatmul.mubr.f32.gmra.mrb[0].mxu0 %v2868
    %v3543 = vpop.f32.mrb[0].mxu0
    %v3544 = vadd.f32 %v1092, %v3543
    %v3545 = vpop.f32.mrb[0].mxu0
    %v3546 = vadd.f32 %v1096, %v3545
    %3547 = vdwg.mxu0
    %3548 = vmatprep.subr.mxu0 0.0
    %3549 = vmatpush1.msra.mxu0 %v779
    %3550 = vmatprep.subr.mxu0 0.0
    %3551 = vmatpush1.msra.mxu0 %v782
    %3552 = vmatprep.subr.mxu0 0.0
    %3553 = vmatpush1.msra.mxu0 %v785
    %3554 = vmatprep.subr.mxu0 0.0
    %3555 = vmatpush1.msra.mxu0 %v788
    %3556 = vmatprep.subr.mxu0 0.0
    %3557 = vmatpush1.msra.mxu0 %v791
    %3558 = vmatprep.subr.mxu0 0.0
    %3559 = vmatpush1.msra.mxu0 %v794
    %3560 = vmatprep.subr.mxu0 0.0
    %3561 = vmatpush1.msra.mxu0 %v797
    %3562 = vmatprep.subr.mxu0 0.0
    %3563 = vmatpush1.msra.mxu0 %v800
    %3564 = vmatprep.subr.mxu0 0.0
    %3565 = vmatpush1.msra.mxu0 %v803
    %3566 = vmatprep.subr.mxu0 0.0
    %3567 = vmatpush1.msra.mxu0 %v806
    %3568 = vmatprep.subr.mxu0 0.0
    %3569 = vmatpush1.msra.mxu0 %v809
    %3570 = vmatprep.subr.mxu0 0.0
    %3571 = vmatpush1.msra.mxu0 %v812
    %3572 = vmatprep.subr.mxu0 0.0
    %3573 = vmatpush1.msra.mxu0 %v815
    %3574 = vmatprep.subr.mxu0 0.0
    %3575 = vmatpush1.msra.mxu0 %v818
    %3576 = vmatprep.subr.mxu0 0.0
    %3577 = vmatpush1.msra.mxu0 %v821
    %3578 = vmatprep.subr.mxu0 0.0
    %3579 = vmatpush1.msra.mxu0 %v824
    %3580 = vmatprep.subr.mxu0 0.0
    %3581 = vmatpush1.msra.mxu0 0.0
    %3582 = vmatprep.subr.mxu0 0.0
    %3583 = vmatpush1.msra.mxu0 0.0
    %3584 = vmatprep.subr.mxu0 0.0
    %3585 = vmatpush1.msra.mxu0 0.0
    %3586 = vmatprep.subr.mxu0 0.0
    %3587 = vmatpush1.msra.mxu0 0.0
    %3588 = vmatprep.subr.mxu0 0.0
    %3589 = vmatpush1.msra.mxu0 0.0
    %3590 = vmatprep.subr.mxu0 0.0
    %3591 = vmatpush1.msra.mxu0 0.0
    %3592 = vmatprep.subr.mxu0 0.0
    %3593 = vmatpush1.msra.mxu0 0.0
    %3594 = vmatprep.subr.mxu0 0.0
    %3595 = vmatpush1.msra.mxu0 0.0
    %3596 = vmatprep.subr.mxu0 0.0
    %3597 = vmatpush1.msra.mxu0 0.0
    %3598 = vmatprep.subr.mxu0 0.0
    %3599 = vmatpush1.msra.mxu0 0.0
    %3600 = vmatprep.subr.mxu0 0.0
    %3601 = vmatpush1.msra.mxu0 0.0
    %3602 = vmatprep.subr.mxu0 0.0
    %3603 = vmatpush1.msra.mxu0 0.0
    %3604 = vmatprep.subr.mxu0 0.0
    %3605 = vmatpush1.msra.mxu0 0.0
    %3606 = vmatprep.subr.mxu0 0.0
    %3607 = vmatpush1.msra.mxu0 0.0
    %3608 = vmatprep.subr.mxu0 0.0
    %3609 = vmatpush1.msra.mxu0 0.0
    %3610 = vmatprep.subr.mxu0 0.0
    %3611 = vmatpush1.msra.mxu0 0.0
    %3612 = vmatprep.mubr.f32.mxu0 0.0
    %3613 = vmatmul.mubr.f32.gmra.mrb[0].mxu0 %v2868
    %v3614 = vpop.f32.mrb[0].mxu0
    %v3615 = vadd.f32 %v1100, %v3614
    %v3616 = vpop.f32.mrb[0].mxu0
    %3617 = vdwg.mxu0
    %v3618 = vadd.f32 %v1014, %v3544
    %v3619 = vxor.u32 %v3618, 2147483648
    %v3620 = vmul.f32 %v3619, 1.442695
    %v3621 = vpow.pop %v3620
    %v3622 = vadd.f32 %v3621, 1.0
    %v3623 = vrcp.pop %v3622
    %v3624 = vmul.f32 1.0, %v3623
    %v3625 = vadd.f32 %v1016, %v3546
    %v3626 = vxor.u32 %v3625, 2147483648
    %v3627 = vmul.f32 %v3626, 1.442695
    %v3628 = vpow.pop %v3627
    %v3629 = vadd.f32 %v3628, 1.0
    %v3630 = vrcp.pop %v3629
    %v3631 = vmul.f32 1.0, %v3630
    %v3632 = vmul.f32 %v3624, %v3615
    %v3633 = vadd.f32 %v1085, %v3632
    %v3634 = vtanh.pop %v3633
    %v3635 = vsub.f32 1.0, %v3631
    %v3636 = vmul.f32 %v3635, %v3634
    %v3637 = vmul.f32 %v3631, %v2868
    %v3638 = vadd.f32 %v3636, %v3637
    %3639 = vmatprep.subr.mxu0 %v682
    %3640 = vmatpush1.msra.mxu0 %v681
    %3641 = vmatprep.subr.mxu0 %v685
    %3642 = vmatpush1.msra.mxu0 %v684
    %3643 = vmatprep.subr.mxu0 %v688
    %3644 = vmatpush1.msra.mxu0 %v687
    %3645 = vmatprep.subr.mxu0 %v691
    %3646 = vmatpush1.msra.mxu0 %v690
    %3647 = vmatprep.subr.mxu0 %v694
    %3648 = vmatpush1.msra.mxu0 %v693
    %3649 = vmatprep.subr.mxu0 %v697
    %3650 = vmatpush1.msra.mxu0 %v696
    %3651 = vmatprep.subr.mxu0 %v700
    %3652 = vmatpush1.msra.mxu0 %v699
    %3653 = vmatprep.subr.mxu0 %v703
    %3654 = vmatpush1.msra.mxu0 %v702
    %3655 = vmatprep.subr.mxu0 %v706
    %3656 = vmatpush1.msra.mxu0 %v705
    %3657 = vmatprep.subr.mxu0 %v709
    %3658 = vmatpush1.msra.mxu0 %v708
    %3659 = vmatprep.subr.mxu0 %v712
    %3660 = vmatpush1.msra.mxu0 %v711
    %3661 = vmatprep.subr.mxu0 %v715
    %3662 = vmatpush1.msra.mxu0 %v714
    %3663 = vmatprep.subr.mxu0 %v718
    %3664 = vmatpush1.msra.mxu0 %v717
    %3665 = vmatprep.subr.mxu0 %v721
    %3666 = vmatpush1.msra.mxu0 %v720
    %3667 = vmatprep.subr.mxu0 %v724
    %3668 = vmatpush1.msra.mxu0 %v723
    %3669 = vmatprep.subr.mxu0 %v727
    %3670 = vmatpush1.msra.mxu0 %v726
    %3671 = vmatprep.subr.mxu0 0.0
    %3672 = vmatpush1.msra.mxu0 0.0
    %3673 = vmatprep.subr.mxu0 0.0
    %3674 = vmatpush1.msra.mxu0 0.0
    %3675 = vmatprep.subr.mxu0 0.0
    %3676 = vmatpush1.msra.mxu0 0.0
    %3677 = vmatprep.subr.mxu0 0.0
    %3678 = vmatpush1.msra.mxu0 0.0
    %3679 = vmatprep.subr.mxu0 0.0
    %3680 = vmatpush1.msra.mxu0 0.0
    %3681 = vmatprep.subr.mxu0 0.0
    %3682 = vmatpush1.msra.mxu0 0.0
    %3683 = vmatprep.subr.mxu0 0.0
    %3684 = vmatpush1.msra.mxu0 0.0
    %3685 = vmatprep.subr.mxu0 0.0
    %3686 = vmatpush1.msra.mxu0 0.0
    %3687 = vmatprep.subr.mxu0 0.0
    %3688 = vmatpush1.msra.mxu0 0.0
    %3689 = vmatprep.subr.mxu0 0.0
    %3690 = vmatpush1.msra.mxu0 0.0
    %3691 = vmatprep.subr.mxu0 0.0
    %3692 = vmatpush1.msra.mxu0 0.0
    %3693 = vmatprep.subr.mxu0 0.0
    %3694 = vmatpush1.msra.mxu0 0.0
    %3695 = vmatprep.subr.mxu0 0.0
    %3696 = vmatpush1.msra.mxu0 0.0
    %3697 = vmatprep.subr.mxu0 0.0
    %3698 = vmatpush1.msra.mxu0 0.0
    %3699 = vmatprep.subr.mxu0 0.0
    %3700 = vmatpush1.msra.mxu0 0.0
    %3701 = vmatprep.subr.mxu0 0.0
    %3702 = vmatpush1.msra.mxu0 0.0
    %3703 = vmatprep.mubr.f32.mxu0 0.0
    %3704 = vmatmul.mubr.f32.gmra.mrb[0].mxu0 %v3638
    %v3705 = vpop.f32.mrb[0].mxu0
    %v3706 = vadd.f32 %v1270, %v3705
    %v3707 = vpop.f32.mrb[0].mxu0
    %v3708 = vadd.f32 %v1274, %v3707
    %3709 = vdwg.mxu0
    %3710 = vmatprep.subr.mxu0 0.0
    %3711 = vmatpush1.msra.mxu0 %v683
    %3712 = vmatprep.subr.mxu0 0.0
    %3713 = vmatpush1.msra.mxu0 %v686
    %3714 = vmatprep.subr.mxu0 0.0
    %3715 = vmatpush1.msra.mxu0 %v689
    %3716 = vmatprep.subr.mxu0 0.0
    %3717 = vmatpush1.msra.mxu0 %v692
    %3718 = vmatprep.subr.mxu0 0.0
    %3719 = vmatpush1.msra.mxu0 %v695
    %3720 = vmatprep.subr.mxu0 0.0
    %3721 = vmatpush1.msra.mxu0 %v698
    %3722 = vmatprep.subr.mxu0 0.0
    %3723 = vmatpush1.msra.mxu0 %v701
    %3724 = vmatprep.subr.mxu0 0.0
    %3725 = vmatpush1.msra.mxu0 %v704
    %3726 = vmatprep.subr.mxu0 0.0
    %3727 = vmatpush1.msra.mxu0 %v707
    %3728 = vmatprep.subr.mxu0 0.0
    %3729 = vmatpush1.msra.mxu0 %v710
    %3730 = vmatprep.subr.mxu0 0.0
    %3731 = vmatpush1.msra.mxu0 %v713
    %3732 = vmatprep.subr.mxu0 0.0
    %3733 = vmatpush1.msra.mxu0 %v716
    %3734 = vmatprep.subr.mxu0 0.0
    %3735 = vmatpush1.msra.mxu0 %v719
    %3736 = vmatprep.subr.mxu0 0.0
    %3737 = vmatpush1.msra.mxu0 %v722
    %3738 = vmatprep.subr.mxu0 0.0
    %3739 = vmatpush1.msra.mxu0 %v725
    %3740 = vmatprep.subr.mxu0 0.0
    %3741 = vmatpush1.msra.mxu0 %v728
    %3742 = vmatprep.subr.mxu0 0.0
    %3743 = vmatpush1.msra.mxu0 0.0
    %3744 = vmatprep.subr.mxu0 0.0
    %3745 = vmatpush1.msra.mxu0 0.0
    %3746 = vmatprep.subr.mxu0 0.0
    %3747 = vmatpush1.msra.mxu0 0.0
    %3748 = vmatprep.subr.mxu0 0.0
    %3749 = vmatpush1.msra.mxu0 0.0
    %3750 = vmatprep.subr.mxu0 0.0
    %3751 = vmatpush1.msra.mxu0 0.0
    %3752 = vmatprep.subr.mxu0 0.0
    %3753 = vmatpush1.msra.mxu0 0.0
    %3754 = vmatprep.subr.mxu0 0.0
    %3755 = vmatpush1.msra.mxu0 0.0
    %3756 = vmatprep.subr.mxu0 0.0
    %3757 = vmatpush1.msra.mxu0 0.0
    %3758 = vmatprep.subr.mxu0 0.0
    %3759 = vmatpush1.msra.mxu0 0.0
    %3760 = vmatprep.subr.mxu0 0.0
    %3761 = vmatpush1.msra.mxu0 0.0
    %3762 = vmatprep.subr.mxu0 0.0
    %3763 = vmatpush1.msra.mxu0 0.0
    %3764 = vmatprep.subr.mxu0 0.0
    %3765 = vmatpush1.msra.mxu0 0.0
    %3766 = vmatprep.subr.mxu0 0.0
    %3767 = vmatpush1.msra.mxu0 0.0
    %3768 = vmatprep.subr.mxu0 0.0
    %3769 = vmatpush1.msra.mxu0 0.0
    %3770 = vmatprep.subr.mxu0 0.0
    %3771 = vmatpush1.msra.mxu0 0.0
    %3772 = vmatprep.subr.mxu0 0.0
    %3773 = vmatpush1.msra.mxu0 0.0
    %3774 = vmatprep.mubr.f32.mxu0 0.0
    %3775 = vmatmul.mubr.f32.gmra.mrb[0].mxu0 %v3638
    %v3776 = vpop.f32.mrb[0].mxu0
    %v3777 = vadd.f32 %v1278, %v3776
    %v3778 = vpop.f32.mrb[0].mxu0
    %3779 = vdwg.mxu0
    %3780 = vmatprep.subr.mxu0 %v826
    %3781 = vmatpush1.msra.mxu0 %v825
    %3782 = vmatprep.subr.mxu0 %v829
    %3783 = vmatpush1.msra.mxu0 %v828
    %3784 = vmatprep.subr.mxu0 %v832
    %3785 = vmatpush1.msra.mxu0 %v831
    %3786 = vmatprep.subr.mxu0 %v835
    %3787 = vmatpush1.msra.mxu0 %v834
    %3788 = vmatprep.subr.mxu0 %v838
    %3789 = vmatpush1.msra.mxu0 %v837
    %3790 = vmatprep.subr.mxu0 %v841
    %3791 = vmatpush1.msra.mxu0 %v840
    %3792 = vmatprep.subr.mxu0 %v844
    %3793 = vmatpush1.msra.mxu0 %v843
    %3794 = vmatprep.subr.mxu0 %v847
    %3795 = vmatpush1.msra.mxu0 %v846
    %3796 = vmatprep.subr.mxu0 %v850
    %3797 = vmatpush1.msra.mxu0 %v849
    %3798 = vmatprep.subr.mxu0 %v853
    %3799 = vmatpush1.msra.mxu0 %v852
    %3800 = vmatprep.subr.mxu0 %v856
    %3801 = vmatpush1.msra.mxu0 %v855
    %3802 = vmatprep.subr.mxu0 %v859
    %3803 = vmatpush1.msra.mxu0 %v858
    %3804 = vmatprep.subr.mxu0 %v862
    %3805 = vmatpush1.msra.mxu0 %v861
    %3806 = vmatprep.subr.mxu0 %v865
    %3807 = vmatpush1.msra.mxu0 %v864
    %3808 = vmatprep.subr.mxu0 %v868
    %3809 = vmatpush1.msra.mxu0 %v867
    %3810 = vmatprep.subr.mxu0 %v871
    %3811 = vmatpush1.msra.mxu0 %v870
    %3812 = vmatprep.subr.mxu0 0.0
    %3813 = vmatpush1.msra.mxu0 0.0
    %3814 = vmatprep.subr.mxu0 0.0
    %3815 = vmatpush1.msra.mxu0 0.0
    %3816 = vmatprep.subr.mxu0 0.0
    %3817 = vmatpush1.msra.mxu0 0.0
    %3818 = vmatprep.subr.mxu0 0.0
    %3819 = vmatpush1.msra.mxu0 0.0
    %3820 = vmatprep.subr.mxu0 0.0
    %3821 = vmatpush1.msra.mxu0 0.0
    %3822 = vmatprep.subr.mxu0 0.0
    %3823 = vmatpush1.msra.mxu0 0.0
    %3824 = vmatprep.subr.mxu0 0.0
    %3825 = vmatpush1.msra.mxu0 0.0
    %3826 = vmatprep.subr.mxu0 0.0
    %3827 = vmatpush1.msra.mxu0 0.0
    %3828 = vmatprep.subr.mxu0 0.0
    %3829 = vmatpush1.msra.mxu0 0.0
    %3830 = vmatprep.subr.mxu0 0.0
    %3831 = vmatpush1.msra.mxu0 0.0
    %3832 = vmatprep.subr.mxu0 0.0
    %3833 = vmatpush1.msra.mxu0 0.0
    %3834 = vmatprep.subr.mxu0 0.0
    %3835 = vmatpush1.msra.mxu0 0.0
    %3836 = vmatprep.subr.mxu0 0.0
    %3837 = vmatpush1.msra.mxu0 0.0
    %3838 = vmatprep.subr.mxu0 0.0
    %3839 = vmatpush1.msra.mxu0 0.0
    %3840 = vmatprep.subr.mxu0 0.0
    %3841 = vmatpush1.msra.mxu0 0.0
    %3842 = vmatprep.subr.mxu0 0.0
    %3843 = vmatpush1.msra.mxu0 0.0
    %3844 = vmatprep.mubr.f32.mxu0 0.0
    %3845 = vmatmul.mubr.f32.gmra.mrb[0].mxu0 %v3171
    %v3846 = vpop.f32.mrb[0].mxu0
    %v3847 = vadd.f32 %v1427, %v3846
    %v3848 = vpop.f32.mrb[0].mxu0
    %v3849 = vadd.f32 %v1431, %v3848
    %3850 = vdwg.mxu0
    %3851 = vmatprep.subr.mxu0 0.0
    %3852 = vmatpush1.msra.mxu0 %v827
    %3853 = vmatprep.subr.mxu0 0.0
    %3854 = vmatpush1.msra.mxu0 %v830
    %3855 = vmatprep.subr.mxu0 0.0
    %3856 = vmatpush1.msra.mxu0 %v833
    %3857 = vmatprep.subr.mxu0 0.0
    %3858 = vmatpush1.msra.mxu0 %v836
    %3859 = vmatprep.subr.mxu0 0.0
    %3860 = vmatpush1.msra.mxu0 %v839
    %3861 = vmatprep.subr.mxu0 0.0
    %3862 = vmatpush1.msra.mxu0 %v842
    %3863 = vmatprep.subr.mxu0 0.0
    %3864 = vmatpush1.msra.mxu0 %v845
    %3865 = vmatprep.subr.mxu0 0.0
    %3866 = vmatpush1.msra.mxu0 %v848
    %3867 = vmatprep.subr.mxu0 0.0
    %3868 = vmatpush1.msra.mxu0 %v851
    %3869 = vmatprep.subr.mxu0 0.0
    %3870 = vmatpush1.msra.mxu0 %v854
    %3871 = vmatprep.subr.mxu0 0.0
    %3872 = vmatpush1.msra.mxu0 %v857
    %3873 = vmatprep.subr.mxu0 0.0
    %3874 = vmatpush1.msra.mxu0 %v860
    %3875 = vmatprep.subr.mxu0 0.0
    %3876 = vmatpush1.msra.mxu0 %v863
    %3877 = vmatprep.subr.mxu0 0.0
    %3878 = vmatpush1.msra.mxu0 %v866
    %3879 = vmatprep.subr.mxu0 0.0
    %3880 = vmatpush1.msra.mxu0 %v869
    %3881 = vmatprep.subr.mxu0 0.0
    %3882 = vmatpush1.msra.mxu0 %v872
    %3883 = vmatprep.subr.mxu0 0.0
    %3884 = vmatpush1.msra.mxu0 0.0
    %3885 = vmatprep.subr.mxu0 0.0
    %3886 = vmatpush1.msra.mxu0 0.0
    %3887 = vmatprep.subr.mxu0 0.0
    %3888 = vmatpush1.msra.mxu0 0.0
    %3889 = vmatprep.subr.mxu0 0.0
    %3890 = vmatpush1.msra.mxu0 0.0
    %3891 = vmatprep.subr.mxu0 0.0
    %3892 = vmatpush1.msra.mxu0 0.0
    %3893 = vmatprep.subr.mxu0 0.0
    %3894 = vmatpush1.msra.mxu0 0.0
    %3895 = vmatprep.subr.mxu0 0.0
    %3896 = vmatpush1.msra.mxu0 0.0
    %3897 = vmatprep.subr.mxu0 0.0
    %3898 = vmatpush1.msra.mxu0 0.0
    %3899 = vmatprep.subr.mxu0 0.0
    %3900 = vmatpush1.msra.mxu0 0.0
    %3901 = vmatprep.subr.mxu0 0.0
    %3902 = vmatpush1.msra.mxu0 0.0
    %3903 = vmatprep.subr.mxu0 0.0
    %3904 = vmatpush1.msra.mxu0 0.0
    %3905 = vmatprep.subr.mxu0 0.0
    %3906 = vmatpush1.msra.mxu0 0.0
    %3907 = vmatprep.subr.mxu0 0.0
    %3908 = vmatpush1.msra.mxu0 0.0
    %3909 = vmatprep.subr.mxu0 0.0
    %3910 = vmatpush1.msra.mxu0 0.0
    %3911 = vmatprep.subr.mxu0 0.0
    %3912 = vmatpush1.msra.mxu0 0.0
    %3913 = vmatprep.subr.mxu0 0.0
    %3914 = vmatpush1.msra.mxu0 0.0
    %3915 = vmatprep.mubr.f32.mxu0 0.0
    %3916 = vmatmul.mubr.f32.gmra.mrb[0].mxu0 %v3171
    %v3917 = vpop.f32.mrb[0].mxu0
    %v3918 = vadd.f32 %v1435, %v3917
    %v3919 = vpop.f32.mrb[0].mxu0
    %3920 = vdwg.mxu0
    %v3921 = vadd.f32 %v3706, %v3847
    %v3922 = vxor.u32 %v3921, 2147483648
    %v3923 = vmul.f32 %v3922, 1.442695
    %v3924 = vpow.pop %v3923
    %v3925 = vadd.f32 %v3924, 1.0
    %v3926 = vrcp.pop %v3925
    %v3927 = vmul.f32 1.0, %v3926
    %v3928 = vadd.f32 %v3708, %v3849
    %v3929 = vxor.u32 %v3928, 2147483648
    %v3930 = vmul.f32 %v3929, 1.442695
    %v3931 = vpow.pop %v3930
    %v3932 = vadd.f32 %v3931, 1.0
    %v3933 = vrcp.pop %v3932
    %v3934 = vmul.f32 1.0, %v3933
    %v3935 = vmul.f32 %v3927, %v3918
    %v3936 = vadd.f32 %v3777, %v3935
    %v3937 = vtanh.pop %v3936
    %v3938 = vsub.f32 1.0, %v3934
    %v3939 = vmul.f32 %v3938, %v3937
    %v3940 = vmul.f32 %v3934, %v3171
    %v3941 = vadd.f32 %v3939, %v3940
    %3942 = vmatprep.subr.mxu0 %v730
    %3943 = vmatpush1.msra.mxu0 %v729
    %3944 = vmatprep.subr.mxu0 %v733
    %3945 = vmatpush1.msra.mxu0 %v732
    %3946 = vmatprep.subr.mxu0 %v736
    %3947 = vmatpush1.msra.mxu0 %v735
    %3948 = vmatprep.subr.mxu0 %v739
    %3949 = vmatpush1.msra.mxu0 %v738
    %3950 = vmatprep.subr.mxu0 %v742
    %3951 = vmatpush1.msra.mxu0 %v741
    %3952 = vmatprep.subr.mxu0 %v745
    %3953 = vmatpush1.msra.mxu0 %v744
    %3954 = vmatprep.subr.mxu0 %v748
    %3955 = vmatpush1.msra.mxu0 %v747
    %3956 = vmatprep.subr.mxu0 %v751
    %3957 = vmatpush1.msra.mxu0 %v750
    %3958 = vmatprep.subr.mxu0 %v754
    %3959 = vmatpush1.msra.mxu0 %v753
    %3960 = vmatprep.subr.mxu0 %v757
    %3961 = vmatpush1.msra.mxu0 %v756
    %3962 = vmatprep.subr.mxu0 %v760
    %3963 = vmatpush1.msra.mxu0 %v759
    %3964 = vmatprep.subr.mxu0 %v763
    %3965 = vmatpush1.msra.mxu0 %v762
    %3966 = vmatprep.subr.mxu0 %v766
    %3967 = vmatpush1.msra.mxu0 %v765
    %3968 = vmatprep.subr.mxu0 %v769
    %3969 = vmatpush1.msra.mxu0 %v768
    %3970 = vmatprep.subr.mxu0 %v772
    %3971 = vmatpush1.msra.mxu0 %v771
    %3972 = vmatprep.subr.mxu0 %v775
    %3973 = vmatpush1.msra.mxu0 %v774
    %3974 = vmatprep.subr.mxu0 0.0
    %3975 = vmatpush1.msra.mxu0 0.0
    %3976 = vmatprep.subr.mxu0 0.0
    %3977 = vmatpush1.msra.mxu0 0.0
    %3978 = vmatprep.subr.mxu0 0.0
    %3979 = vmatpush1.msra.mxu0 0.0
    %3980 = vmatprep.subr.mxu0 0.0
    %3981 = vmatpush1.msra.mxu0 0.0
    %3982 = vmatprep.subr.mxu0 0.0
    %3983 = vmatpush1.msra.mxu0 0.0
    %3984 = vmatprep.subr.mxu0 0.0
    %3985 = vmatpush1.msra.mxu0 0.0
    %3986 = vmatprep.subr.mxu0 0.0
    %3987 = vmatpush1.msra.mxu0 0.0
    %3988 = vmatprep.subr.mxu0 0.0
    %3989 = vmatpush1.msra.mxu0 0.0
    %3990 = vmatprep.subr.mxu0 0.0
    %3991 = vmatpush1.msra.mxu0 0.0
    %3992 = vmatprep.subr.mxu0 0.0
    %3993 = vmatpush1.msra.mxu0 0.0
    %3994 = vmatprep.subr.mxu0 0.0
    %3995 = vmatpush1.msra.mxu0 0.0
    %3996 = vmatprep.subr.mxu0 0.0
    %3997 = vmatpush1.msra.mxu0 0.0
    %3998 = vmatprep.subr.mxu0 0.0
    %3999 = vmatpush1.msra.mxu0 0.0
    %4000 = vmatprep.subr.mxu0 0.0
    %4001 = vmatpush1.msra.mxu0 0.0
    %4002 = vmatprep.subr.mxu0 0.0
    %4003 = vmatpush1.msra.mxu0 0.0
    %4004 = vmatprep.subr.mxu0 0.0
    %4005 = vmatpush1.msra.mxu0 0.0
    %4006 = vmatprep.mubr.f32.mxu0 0.0
    %4007 = vmatmul.mubr.f32.gmra.mrb[0].mxu0 %v3941
    %v4008 = vpop.f32.mrb[0].mxu0
    %v4009 = vadd.f32 %v1605, %v4008
    %v4010 = vpop.f32.mrb[0].mxu0
    %v4011 = vadd.f32 %v1609, %v4010
    %4012 = vdwg.mxu0
    %4013 = vmatprep.subr.mxu0 0.0
    %4014 = vmatpush1.msra.mxu0 %v731
    %4015 = vmatprep.subr.mxu0 0.0
    %4016 = vmatpush1.msra.mxu0 %v734
    %4017 = vmatprep.subr.mxu0 0.0
    %4018 = vmatpush1.msra.mxu0 %v737
    %4019 = vmatprep.subr.mxu0 0.0
    %4020 = vmatpush1.msra.mxu0 %v740
    %4021 = vmatprep.subr.mxu0 0.0
    %4022 = vmatpush1.msra.mxu0 %v743
    %4023 = vmatprep.subr.mxu0 0.0
    %4024 = vmatpush1.msra.mxu0 %v746
    %4025 = vmatprep.subr.mxu0 0.0
    %4026 = vmatpush1.msra.mxu0 %v749
    %4027 = vmatprep.subr.mxu0 0.0
    %4028 = vmatpush1.msra.mxu0 %v752
    %4029 = vmatprep.subr.mxu0 0.0
    %4030 = vmatpush1.msra.mxu0 %v755
    %4031 = vmatprep.subr.mxu0 0.0
    %4032 = vmatpush1.msra.mxu0 %v758
    %4033 = vmatprep.subr.mxu0 0.0
    %4034 = vmatpush1.msra.mxu0 %v761
    %4035 = vmatprep.subr.mxu0 0.0
    %4036 = vmatpush1.msra.mxu0 %v764
    %4037 = vmatprep.subr.mxu0 0.0
    %4038 = vmatpush1.msra.mxu0 %v767
    %4039 = vmatprep.subr.mxu0 0.0
    %4040 = vmatpush1.msra.mxu0 %v770
    %4041 = vmatprep.subr.mxu0 0.0
    %4042 = vmatpush1.msra.mxu0 %v773
    %4043 = vmatprep.subr.mxu0 0.0
    %4044 = vmatpush1.msra.mxu0 %v776
    %4045 = vmatprep.subr.mxu0 0.0
    %4046 = vmatpush1.msra.mxu0 0.0
    %4047 = vmatprep.subr.mxu0 0.0
    %4048 = vmatpush1.msra.mxu0 0.0
    %4049 = vmatprep.subr.mxu0 0.0
    %4050 = vmatpush1.msra.mxu0 0.0
    %4051 = vmatprep.subr.mxu0 0.0
    %4052 = vmatpush1.msra.mxu0 0.0
    %4053 = vmatprep.subr.mxu0 0.0
    %4054 = vmatpush1.msra.mxu0 0.0
    %4055 = vmatprep.subr.mxu0 0.0
    %4056 = vmatpush1.msra.mxu0 0.0
    %4057 = vmatprep.subr.mxu0 0.0
    %4058 = vmatpush1.msra.mxu0 0.0
    %4059 = vmatprep.subr.mxu0 0.0
    %4060 = vmatpush1.msra.mxu0 0.0
    %4061 = vmatprep.subr.mxu0 0.0
    %4062 = vmatpush1.msra.mxu0 0.0
    %4063 = vmatprep.subr.mxu0 0.0
    %4064 = vmatpush1.msra.mxu0 0.0
    %4065 = vmatprep.subr.mxu0 0.0
    %4066 = vmatpush1.msra.mxu0 0.0
    %4067 = vmatprep.subr.mxu0 0.0
    %4068 = vmatpush1.msra.mxu0 0.0
    %4069 = vmatprep.subr.mxu0 0.0
    %4070 = vmatpush1.msra.mxu0 0.0
    %4071 = vmatprep.subr.mxu0 0.0
    %4072 = vmatpush1.msra.mxu0 0.0
    %4073 = vmatprep.subr.mxu0 0.0
    %4074 = vmatpush1.msra.mxu0 0.0
    %4075 = vmatprep.subr.mxu0 0.0
    %4076 = vmatpush1.msra.mxu0 0.0
    %4077 = vmatprep.mubr.f32.mxu0 0.0
    %4078 = vmatmul.mubr.f32.gmra.mrb[0].mxu0 %v3941
    %v4079 = vpop.f32.mrb[0].mxu0
    %v4080 = vadd.f32 %v1613, %v4079
    %v4081 = vpop.f32.mrb[0].mxu0
    %4082 = vdwg.mxu0
    %4083 = vmatprep.subr.mxu0 %v874
    %4084 = vmatpush1.msra.mxu0 %v873
    %4085 = vmatprep.subr.mxu0 %v877
    %4086 = vmatpush1.msra.mxu0 %v876
    %4087 = vmatprep.subr.mxu0 %v880
    %4088 = vmatpush1.msra.mxu0 %v879
    %4089 = vmatprep.subr.mxu0 %v883
    %4090 = vmatpush1.msra.mxu0 %v882
    %4091 = vmatprep.subr.mxu0 %v886
    %4092 = vmatpush1.msra.mxu0 %v885
    %4093 = vmatprep.subr.mxu0 %v889
    %4094 = vmatpush1.msra.mxu0 %v888
    %4095 = vmatprep.subr.mxu0 %v892
    %4096 = vmatpush1.msra.mxu0 %v891
    %4097 = vmatprep.subr.mxu0 %v895
    %4098 = vmatpush1.msra.mxu0 %v894
    %4099 = vmatprep.subr.mxu0 %v898
    %4100 = vmatpush1.msra.mxu0 %v897
    %4101 = vmatprep.subr.mxu0 %v901
    %4102 = vmatpush1.msra.mxu0 %v900
    %4103 = vmatprep.subr.mxu0 %v904
    %4104 = vmatpush1.msra.mxu0 %v903
    %4105 = vmatprep.subr.mxu0 %v907
    %4106 = vmatpush1.msra.mxu0 %v906
    %4107 = vmatprep.subr.mxu0 %v910
    %4108 = vmatpush1.msra.mxu0 %v909
    %4109 = vmatprep.subr.mxu0 %v913
    %4110 = vmatpush1.msra.mxu0 %v912
    %4111 = vmatprep.subr.mxu0 %v916
    %4112 = vmatpush1.msra.mxu0 %v915
    %4113 = vmatprep.subr.mxu0 %v919
    %4114 = vmatpush1.msra.mxu0 %v918
    %4115 = vmatprep.subr.mxu0 0.0
    %4116 = vmatpush1.msra.mxu0 0.0
    %4117 = vmatprep.subr.mxu0 0.0
    %4118 = vmatpush1.msra.mxu0 0.0
    %4119 = vmatprep.subr.mxu0 0.0
    %4120 = vmatpush1.msra.mxu0 0.0
    %4121 = vmatprep.subr.mxu0 0.0
    %4122 = vmatpush1.msra.mxu0 0.0
    %4123 = vmatprep.subr.mxu0 0.0
    %4124 = vmatpush1.msra.mxu0 0.0
    %4125 = vmatprep.subr.mxu0 0.0
    %4126 = vmatpush1.msra.mxu0 0.0
    %4127 = vmatprep.subr.mxu0 0.0
    %4128 = vmatpush1.msra.mxu0 0.0
    %4129 = vmatprep.subr.mxu0 0.0
    %4130 = vmatpush1.msra.mxu0 0.0
    %4131 = vmatprep.subr.mxu0 0.0
    %4132 = vmatpush1.msra.mxu0 0.0
    %4133 = vmatprep.subr.mxu0 0.0
    %4134 = vmatpush1.msra.mxu0 0.0
    %4135 = vmatprep.subr.mxu0 0.0
    %4136 = vmatpush1.msra.mxu0 0.0
    %4137 = vmatprep.subr.mxu0 0.0
    %4138 = vmatpush1.msra.mxu0 0.0
    %4139 = vmatprep.subr.mxu0 0.0
    %4140 = vmatpush1.msra.mxu0 0.0
    %4141 = vmatprep.subr.mxu0 0.0
    %4142 = vmatpush1.msra.mxu0 0.0
    %4143 = vmatprep.subr.mxu0 0.0
    %4144 = vmatpush1.msra.mxu0 0.0
    %4145 = vmatprep.subr.mxu0 0.0
    %4146 = vmatpush1.msra.mxu0 0.0
    %4147 = vmatprep.mubr.f32.mxu0 0.0
    %4148 = vmatmul.mubr.f32.gmra.mrb[0].mxu0 %v3474
    %v4149 = vpop.f32.mrb[0].mxu0
    %v4150 = vadd.f32 %v1762, %v4149
    %v4151 = vpop.f32.mrb[0].mxu0
    %v4152 = vadd.f32 %v1766, %v4151
    %4153 = vdwg.mxu0
    %4154 = vmatprep.subr.mxu0 0.0
    %4155 = vmatpush1.msra.mxu0 %v875
    %4156 = vmatprep.subr.mxu0 0.0
    %4157 = vmatpush1.msra.mxu0 %v878
    %4158 = vmatprep.subr.mxu0 0.0
    %4159 = vmatpush1.msra.mxu0 %v881
    %4160 = vmatprep.subr.mxu0 0.0
    %4161 = vmatpush1.msra.mxu0 %v884
    %4162 = vmatprep.subr.mxu0 0.0
    %4163 = vmatpush1.msra.mxu0 %v887
    %4164 = vmatprep.subr.mxu0 0.0
    %4165 = vmatpush1.msra.mxu0 %v890
    %4166 = vmatprep.subr.mxu0 0.0
    %4167 = vmatpush1.msra.mxu0 %v893
    %4168 = vmatprep.subr.mxu0 0.0
    %4169 = vmatpush1.msra.mxu0 %v896
    %4170 = vmatprep.subr.mxu0 0.0
    %4171 = vmatpush1.msra.mxu0 %v899
    %4172 = vmatprep.subr.mxu0 0.0
    %4173 = vmatpush1.msra.mxu0 %v902
    %4174 = vmatprep.subr.mxu0 0.0
    %4175 = vmatpush1.msra.mxu0 %v905
    %4176 = vmatprep.subr.mxu0 0.0
    %4177 = vmatpush1.msra.mxu0 %v908
    %4178 = vmatprep.subr.mxu0 0.0
    %4179 = vmatpush1.msra.mxu0 %v911
    %4180 = vmatprep.subr.mxu0 0.0
    %4181 = vmatpush1.msra.mxu0 %v914
    %4182 = vmatprep.subr.mxu0 0.0
    %4183 = vmatpush1.msra.mxu0 %v917
    %4184 = vmatprep.subr.mxu0 0.0
    %4185 = vmatpush1.msra.mxu0 %v920
    %4186 = vmatprep.subr.mxu0 0.0
    %4187 = vmatpush1.msra.mxu0 0.0
    %4188 = vmatprep.subr.mxu0 0.0
    %4189 = vmatpush1.msra.mxu0 0.0
    %4190 = vmatprep.subr.mxu0 0.0
    %4191 = vmatpush1.msra.mxu0 0.0
    %4192 = vmatprep.subr.mxu0 0.0
    %4193 = vmatpush1.msra.mxu0 0.0
    %4194 = vmatprep.subr.mxu0 0.0
    %4195 = vmatpush1.msra.mxu0 0.0
    %4196 = vmatprep.subr.mxu0 0.0
    %4197 = vmatpush1.msra.mxu0 0.0
    %4198 = vmatprep.subr.mxu0 0.0
    %4199 = vmatpush1.msra.mxu0 0.0
    %4200 = vmatprep.subr.mxu0 0.0
    %4201 = vmatpush1.msra.mxu0 0.0
    %4202 = vmatprep.subr.mxu0 0.0
    %4203 = vmatpush1.msra.mxu0 0.0
    %4204 = vmatprep.subr.mxu0 0.0
    %4205 = vmatpush1.msra.mxu0 0.0
    %4206 = vmatprep.subr.mxu0 0.0
    %4207 = vmatpush1.msra.mxu0 0.0
    %4208 = vmatprep.subr.mxu0 0.0
    %4209 = vmatpush1.msra.mxu0 0.0
    %4210 = vmatprep.subr.mxu0 0.0
    %4211 = vmatpush1.msra.mxu0 0.0
    %4212 = vmatprep.subr.mxu0 0.0
    %4213 = vmatpush1.msra.mxu0 0.0
    %4214 = vmatprep.subr.mxu0 0.0
    %4215 = vmatpush1.msra.mxu0 0.0
    %4216 = vmatprep.subr.mxu0 0.0
    %4217 = vmatpush1.msra.mxu0 0.0
    %4218 = vmatprep.mubr.f32.mxu0 0.0
    %4219 = vmatmul.mubr.f32.gmra.mrb[0].mxu0 %v3474
    %v4220 = vpop.f32.mrb[0].mxu0
    %v4221 = vadd.f32 %v1770, %v4220
    %v4222 = vpop.f32.mrb[0].mxu0
    %4223 = vdwg.mxu0
    %v4224 = vadd.f32 %v4009, %v4150
    %v4225 = vxor.u32 %v4224, 2147483648
    %v4226 = vmul.f32 %v4225, 1.442695
    %v4227 = vpow.pop %v4226
    %v4228 = vadd.f32 %v4227, 1.0
    %v4229 = vrcp.pop %v4228
    %v4230 = vmul.f32 1.0, %v4229
    %v4231 = vadd.f32 %v4011, %v4152
    %v4232 = vxor.u32 %v4231, 2147483648
    %v4233 = vmul.f32 %v4232, 1.442695
    %v4234 = vpow.pop %v4233
    %v4235 = vadd.f32 %v4234, 1.0
    %v4236 = vrcp.pop %v4235
    %v4237 = vmul.f32 1.0, %v4236
    %v4238 = vmul.f32 %v4230, %v4221
    %v4239 = vadd.f32 %v4080, %v4238
    %v4240 = vtanh.pop %v4239
    %v4241 = vsub.f32 1.0, %v4237
    %v4242 = vmul.f32 %v4241, %v4240
    %v4243 = vmul.f32 %v4237, %v3474
    %v4244 = vadd.f32 %v4242, %v4243
    %s4245 = scalar_lea.vmem %s26, 6
    %4246 = vst [vmem:[%s4245] sm:$0x3] %v4244
    %4247 = vmatprep.subr.mxu0 %v778
    %4248 = vmatpush1.msra.mxu0 %v777
    %4249 = vmatprep.subr.mxu0 %v781
    %4250 = vmatpush1.msra.mxu0 %v780
    %4251 = vmatprep.subr.mxu0 %v784
    %4252 = vmatpush1.msra.mxu0 %v783
    %4253 = vmatprep.subr.mxu0 %v787
    %4254 = vmatpush1.msra.mxu0 %v786
    %4255 = vmatprep.subr.mxu0 %v790
    %4256 = vmatpush1.msra.mxu0 %v789
    %4257 = vmatprep.subr.mxu0 %v793
    %4258 = vmatpush1.msra.mxu0 %v792
    %4259 = vmatprep.subr.mxu0 %v796
    %4260 = vmatpush1.msra.mxu0 %v795
    %4261 = vmatprep.subr.mxu0 %v799
    %4262 = vmatpush1.msra.mxu0 %v798
    %4263 = vmatprep.subr.mxu0 %v802
    %4264 = vmatpush1.msra.mxu0 %v801
    %4265 = vmatprep.subr.mxu0 %v805
    %4266 = vmatpush1.msra.mxu0 %v804
    %4267 = vmatprep.subr.mxu0 %v808
    %4268 = vmatpush1.msra.mxu0 %v807
    %4269 = vmatprep.subr.mxu0 %v811
    %4270 = vmatpush1.msra.mxu0 %v810
    %4271 = vmatprep.subr.mxu0 %v814
    %4272 = vmatpush1.msra.mxu0 %v813
    %4273 = vmatprep.subr.mxu0 %v817
    %4274 = vmatpush1.msra.mxu0 %v816
    %4275 = vmatprep.subr.mxu0 %v820
    %4276 = vmatpush1.msra.mxu0 %v819
    %4277 = vmatprep.subr.mxu0 %v823
    %4278 = vmatpush1.msra.mxu0 %v822
    %4279 = vmatprep.subr.mxu0 0.0
    %4280 = vmatpush1.msra.mxu0 0.0
    %4281 = vmatprep.subr.mxu0 0.0
    %4282 = vmatpush1.msra.mxu0 0.0
    %4283 = vmatprep.subr.mxu0 0.0
    %4284 = vmatpush1.msra.mxu0 0.0
    %4285 = vmatprep.subr.mxu0 0.0
    %4286 = vmatpush1.msra.mxu0 0.0
    %4287 = vmatprep.subr.mxu0 0.0
    %4288 = vmatpush1.msra.mxu0 0.0
    %4289 = vmatprep.subr.mxu0 0.0
    %4290 = vmatpush1.msra.mxu0 0.0
    %4291 = vmatprep.subr.mxu0 0.0
    %4292 = vmatpush1.msra.mxu0 0.0
    %4293 = vmatprep.subr.mxu0 0.0
    %4294 = vmatpush1.msra.mxu0 0.0
    %4295 = vmatprep.subr.mxu0 0.0
    %4296 = vmatpush1.msra.mxu0 0.0
    %4297 = vmatprep.subr.mxu0 0.0
    %4298 = vmatpush1.msra.mxu0 0.0
    %4299 = vmatprep.subr.mxu0 0.0
    %4300 = vmatpush1.msra.mxu0 0.0
    %4301 = vmatprep.subr.mxu0 0.0
    %4302 = vmatpush1.msra.mxu0 0.0
    %4303 = vmatprep.subr.mxu0 0.0
    %4304 = vmatpush1.msra.mxu0 0.0
    %4305 = vmatprep.subr.mxu0 0.0
    %4306 = vmatpush1.msra.mxu0 0.0
    %4307 = vmatprep.subr.mxu0 0.0
    %4308 = vmatpush1.msra.mxu0 0.0
    %4309 = vmatprep.subr.mxu0 0.0
    %4310 = vmatpush1.msra.mxu0 0.0
    %4311 = vmatprep.mubr.f32.mxu0 0.0
    %4312 = vmatmul.mubr.f32.gmra.mrb[0].mxu0 %v3638
    %v4313 = vpop.f32.mrb[0].mxu0
    %v4314 = vadd.f32 %v1092, %v4313
    %v4315 = vpop.f32.mrb[0].mxu0
    %v4316 = vadd.f32 %v1096, %v4315
    %4317 = vdwg.mxu0
    %4318 = vmatprep.subr.mxu0 0.0
    %4319 = vmatpush1.msra.mxu0 %v779
    %4320 = vmatprep.subr.mxu0 0.0
    %4321 = vmatpush1.msra.mxu0 %v782
    %4322 = vmatprep.subr.mxu0 0.0
    %4323 = vmatpush1.msra.mxu0 %v785
    %4324 = vmatprep.subr.mxu0 0.0
    %4325 = vmatpush1.msra.mxu0 %v788
    %4326 = vmatprep.subr.mxu0 0.0
    %4327 = vmatpush1.msra.mxu0 %v791
    %4328 = vmatprep.subr.mxu0 0.0
    %4329 = vmatpush1.msra.mxu0 %v794
    %4330 = vmatprep.subr.mxu0 0.0
    %4331 = vmatpush1.msra.mxu0 %v797
    %4332 = vmatprep.subr.mxu0 0.0
    %4333 = vmatpush1.msra.mxu0 %v800
    %4334 = vmatprep.subr.mxu0 0.0
    %4335 = vmatpush1.msra.mxu0 %v803
    %4336 = vmatprep.subr.mxu0 0.0
    %4337 = vmatpush1.msra.mxu0 %v806
    %4338 = vmatprep.subr.mxu0 0.0
    %4339 = vmatpush1.msra.mxu0 %v809
    %4340 = vmatprep.subr.mxu0 0.0
    %4341 = vmatpush1.msra.mxu0 %v812
    %4342 = vmatprep.subr.mxu0 0.0
    %4343 = vmatpush1.msra.mxu0 %v815
    %4344 = vmatprep.subr.mxu0 0.0
    %4345 = vmatpush1.msra.mxu0 %v818
    %4346 = vmatprep.subr.mxu0 0.0
    %4347 = vmatpush1.msra.mxu0 %v821
    %4348 = vmatprep.subr.mxu0 0.0
    %4349 = vmatpush1.msra.mxu0 %v824
    %4350 = vmatprep.subr.mxu0 0.0
    %4351 = vmatpush1.msra.mxu0 0.0
    %4352 = vmatprep.subr.mxu0 0.0
    %4353 = vmatpush1.msra.mxu0 0.0
    %4354 = vmatprep.subr.mxu0 0.0
    %4355 = vmatpush1.msra.mxu0 0.0
    %4356 = vmatprep.subr.mxu0 0.0
    %4357 = vmatpush1.msra.mxu0 0.0
    %4358 = vmatprep.subr.mxu0 0.0
    %4359 = vmatpush1.msra.mxu0 0.0
    %4360 = vmatprep.subr.mxu0 0.0
    %4361 = vmatpush1.msra.mxu0 0.0
    %4362 = vmatprep.subr.mxu0 0.0
    %4363 = vmatpush1.msra.mxu0 0.0
    %4364 = vmatprep.subr.mxu0 0.0
    %4365 = vmatpush1.msra.mxu0 0.0
    %4366 = vmatprep.subr.mxu0 0.0
    %4367 = vmatpush1.msra.mxu0 0.0
    %4368 = vmatprep.subr.mxu0 0.0
    %4369 = vmatpush1.msra.mxu0 0.0
    %4370 = vmatprep.subr.mxu0 0.0
    %4371 = vmatpush1.msra.mxu0 0.0
    %4372 = vmatprep.subr.mxu0 0.0
    %4373 = vmatpush1.msra.mxu0 0.0
    %4374 = vmatprep.subr.mxu0 0.0
    %4375 = vmatpush1.msra.mxu0 0.0
    %4376 = vmatprep.subr.mxu0 0.0
    %4377 = vmatpush1.msra.mxu0 0.0
    %4378 = vmatprep.subr.mxu0 0.0
    %4379 = vmatpush1.msra.mxu0 0.0
    %4380 = vmatprep.subr.mxu0 0.0
    %4381 = vmatpush1.msra.mxu0 0.0
    %4382 = vmatprep.mubr.f32.mxu0 0.0
    %4383 = vmatmul.mubr.f32.gmra.mrb[0].mxu0 %v3638
    %v4384 = vpop.f32.mrb[0].mxu0
    %v4385 = vadd.f32 %v1100, %v4384
    %v4386 = vpop.f32.mrb[0].mxu0
    %4387 = vdwg.mxu0
    %v4388 = vadd.f32 %v1014, %v4314
    %v4389 = vxor.u32 %v4388, 2147483648
    %v4390 = vmul.f32 %v4389, 1.442695
    %v4391 = vpow.pop %v4390
    %v4392 = vadd.f32 %v4391, 1.0
    %v4393 = vrcp.pop %v4392
    %v4394 = vmul.f32 1.0, %v4393
    %v4395 = vadd.f32 %v1016, %v4316
    %v4396 = vxor.u32 %v4395, 2147483648
    %v4397 = vmul.f32 %v4396, 1.442695
    %v4398 = vpow.pop %v4397
    %v4399 = vadd.f32 %v4398, 1.0
    %v4400 = vrcp.pop %v4399
    %v4401 = vmul.f32 1.0, %v4400
    %v4402 = vmul.f32 %v4394, %v4385
    %v4403 = vadd.f32 %v1085, %v4402
    %v4404 = vtanh.pop %v4403
    %v4405 = vsub.f32 1.0, %v4401
    %v4406 = vmul.f32 %v4405, %v4404
    %v4407 = vmul.f32 %v4401, %v3638
    %v4408 = vadd.f32 %v4406, %v4407
    %4409 = vmatprep.subr.mxu0 %v682
    %4410 = vmatpush1.msra.mxu0 %v681
    %4411 = vmatprep.subr.mxu0 %v685
    %4412 = vmatpush1.msra.mxu0 %v684
    %4413 = vmatprep.subr.mxu0 %v688
    %4414 = vmatpush1.msra.mxu0 %v687
    %4415 = vmatprep.subr.mxu0 %v691
    %4416 = vmatpush1.msra.mxu0 %v690
    %4417 = vmatprep.subr.mxu0 %v694
    %4418 = vmatpush1.msra.mxu0 %v693
    %4419 = vmatprep.subr.mxu0 %v697
    %4420 = vmatpush1.msra.mxu0 %v696
    %4421 = vmatprep.subr.mxu0 %v700
    %4422 = vmatpush1.msra.mxu0 %v699
    %4423 = vmatprep.subr.mxu0 %v703
    %4424 = vmatpush1.msra.mxu0 %v702
    %4425 = vmatprep.subr.mxu0 %v706
    %4426 = vmatpush1.msra.mxu0 %v705
    %4427 = vmatprep.subr.mxu0 %v709
    %4428 = vmatpush1.msra.mxu0 %v708
    %4429 = vmatprep.subr.mxu0 %v712
    %4430 = vmatpush1.msra.mxu0 %v711
    %4431 = vmatprep.subr.mxu0 %v715
    %4432 = vmatpush1.msra.mxu0 %v714
    %4433 = vmatprep.subr.mxu0 %v718
    %4434 = vmatpush1.msra.mxu0 %v717
    %4435 = vmatprep.subr.mxu0 %v721
    %4436 = vmatpush1.msra.mxu0 %v720
    %4437 = vmatprep.subr.mxu0 %v724
    %4438 = vmatpush1.msra.mxu0 %v723
    %4439 = vmatprep.subr.mxu0 %v727
    %4440 = vmatpush1.msra.mxu0 %v726
    %4441 = vmatprep.subr.mxu0 0.0
    %4442 = vmatpush1.msra.mxu0 0.0
    %4443 = vmatprep.subr.mxu0 0.0
    %4444 = vmatpush1.msra.mxu0 0.0
    %4445 = vmatprep.subr.mxu0 0.0
    %4446 = vmatpush1.msra.mxu0 0.0
    %4447 = vmatprep.subr.mxu0 0.0
    %4448 = vmatpush1.msra.mxu0 0.0
    %4449 = vmatprep.subr.mxu0 0.0
    %4450 = vmatpush1.msra.mxu0 0.0
    %4451 = vmatprep.subr.mxu0 0.0
    %4452 = vmatpush1.msra.mxu0 0.0
    %4453 = vmatprep.subr.mxu0 0.0
    %4454 = vmatpush1.msra.mxu0 0.0
    %4455 = vmatprep.subr.mxu0 0.0
    %4456 = vmatpush1.msra.mxu0 0.0
    %4457 = vmatprep.subr.mxu0 0.0
    %4458 = vmatpush1.msra.mxu0 0.0
    %4459 = vmatprep.subr.mxu0 0.0
    %4460 = vmatpush1.msra.mxu0 0.0
    %4461 = vmatprep.subr.mxu0 0.0
    %4462 = vmatpush1.msra.mxu0 0.0
    %4463 = vmatprep.subr.mxu0 0.0
    %4464 = vmatpush1.msra.mxu0 0.0
    %4465 = vmatprep.subr.mxu0 0.0
    %4466 = vmatpush1.msra.mxu0 0.0
    %4467 = vmatprep.subr.mxu0 0.0
    %4468 = vmatpush1.msra.mxu0 0.0
    %4469 = vmatprep.subr.mxu0 0.0
    %4470 = vmatpush1.msra.mxu0 0.0
    %4471 = vmatprep.subr.mxu0 0.0
    %4472 = vmatpush1.msra.mxu0 0.0
    %4473 = vmatprep.mubr.f32.mxu0 0.0
    %4474 = vmatmul.mubr.f32.gmra.mrb[0].mxu0 %v4408
    %v4475 = vpop.f32.mrb[0].mxu0
    %v4476 = vadd.f32 %v1270, %v4475
    %v4477 = vpop.f32.mrb[0].mxu0
    %v4478 = vadd.f32 %v1274, %v4477
    %4479 = vdwg.mxu0
    %4480 = vmatprep.subr.mxu0 0.0
    %4481 = vmatpush1.msra.mxu0 %v683
    %4482 = vmatprep.subr.mxu0 0.0
    %4483 = vmatpush1.msra.mxu0 %v686
    %4484 = vmatprep.subr.mxu0 0.0
    %4485 = vmatpush1.msra.mxu0 %v689
    %4486 = vmatprep.subr.mxu0 0.0
    %4487 = vmatpush1.msra.mxu0 %v692
    %4488 = vmatprep.subr.mxu0 0.0
    %4489 = vmatpush1.msra.mxu0 %v695
    %4490 = vmatprep.subr.mxu0 0.0
    %4491 = vmatpush1.msra.mxu0 %v698
    %4492 = vmatprep.subr.mxu0 0.0
    %4493 = vmatpush1.msra.mxu0 %v701
    %4494 = vmatprep.subr.mxu0 0.0
    %4495 = vmatpush1.msra.mxu0 %v704
    %4496 = vmatprep.subr.mxu0 0.0
    %4497 = vmatpush1.msra.mxu0 %v707
    %4498 = vmatprep.subr.mxu0 0.0
    %4499 = vmatpush1.msra.mxu0 %v710
    %4500 = vmatprep.subr.mxu0 0.0
    %4501 = vmatpush1.msra.mxu0 %v713
    %4502 = vmatprep.subr.mxu0 0.0
    %4503 = vmatpush1.msra.mxu0 %v716
    %4504 = vmatprep.subr.mxu0 0.0
    %4505 = vmatpush1.msra.mxu0 %v719
    %4506 = vmatprep.subr.mxu0 0.0
    %4507 = vmatpush1.msra.mxu0 %v722
    %4508 = vmatprep.subr.mxu0 0.0
    %4509 = vmatpush1.msra.mxu0 %v725
    %4510 = vmatprep.subr.mxu0 0.0
    %4511 = vmatpush1.msra.mxu0 %v728
    %4512 = vmatprep.subr.mxu0 0.0
    %4513 = vmatpush1.msra.mxu0 0.0
    %4514 = vmatprep.subr.mxu0 0.0
    %4515 = vmatpush1.msra.mxu0 0.0
    %4516 = vmatprep.subr.mxu0 0.0
    %4517 = vmatpush1.msra.mxu0 0.0
    %4518 = vmatprep.subr.mxu0 0.0
    %4519 = vmatpush1.msra.mxu0 0.0
    %4520 = vmatprep.subr.mxu0 0.0
    %4521 = vmatpush1.msra.mxu0 0.0
    %4522 = vmatprep.subr.mxu0 0.0
    %4523 = vmatpush1.msra.mxu0 0.0
    %4524 = vmatprep.subr.mxu0 0.0
    %4525 = vmatpush1.msra.mxu0 0.0
    %4526 = vmatprep.subr.mxu0 0.0
    %4527 = vmatpush1.msra.mxu0 0.0
    %4528 = vmatprep.subr.mxu0 0.0
    %4529 = vmatpush1.msra.mxu0 0.0
    %4530 = vmatprep.subr.mxu0 0.0
    %4531 = vmatpush1.msra.mxu0 0.0
    %4532 = vmatprep.subr.mxu0 0.0
    %4533 = vmatpush1.msra.mxu0 0.0
    %4534 = vmatprep.subr.mxu0 0.0
    %4535 = vmatpush1.msra.mxu0 0.0
    %4536 = vmatprep.subr.mxu0 0.0
    %4537 = vmatpush1.msra.mxu0 0.0
    %4538 = vmatprep.subr.mxu0 0.0
    %4539 = vmatpush1.msra.mxu0 0.0
    %4540 = vmatprep.subr.mxu0 0.0
    %4541 = vmatpush1.msra.mxu0 0.0
    %4542 = vmatprep.subr.mxu0 0.0
    %4543 = vmatpush1.msra.mxu0 0.0
    %4544 = vmatprep.mubr.f32.mxu0 0.0
    %4545 = vmatmul.mubr.f32.gmra.mrb[0].mxu0 %v4408
    %v4546 = vpop.f32.mrb[0].mxu0
    %v4547 = vadd.f32 %v1278, %v4546
    %v4548 = vpop.f32.mrb[0].mxu0
    %4549 = vdwg.mxu0
    %4550 = vmatprep.subr.mxu0 %v826
    %4551 = vmatpush1.msra.mxu0 %v825
    %4552 = vmatprep.subr.mxu0 %v829
    %4553 = vmatpush1.msra.mxu0 %v828
    %4554 = vmatprep.subr.mxu0 %v832
    %4555 = vmatpush1.msra.mxu0 %v831
    %4556 = vmatprep.subr.mxu0 %v835
    %4557 = vmatpush1.msra.mxu0 %v834
    %4558 = vmatprep.subr.mxu0 %v838
    %4559 = vmatpush1.msra.mxu0 %v837
    %4560 = vmatprep.subr.mxu0 %v841
    %4561 = vmatpush1.msra.mxu0 %v840
    %4562 = vmatprep.subr.mxu0 %v844
    %4563 = vmatpush1.msra.mxu0 %v843
    %4564 = vmatprep.subr.mxu0 %v847
    %4565 = vmatpush1.msra.mxu0 %v846
    %4566 = vmatprep.subr.mxu0 %v850
    %4567 = vmatpush1.msra.mxu0 %v849
    %4568 = vmatprep.subr.mxu0 %v853
    %4569 = vmatpush1.msra.mxu0 %v852
    %4570 = vmatprep.subr.mxu0 %v856
    %4571 = vmatpush1.msra.mxu0 %v855
    %4572 = vmatprep.subr.mxu0 %v859
    %4573 = vmatpush1.msra.mxu0 %v858
    %4574 = vmatprep.subr.mxu0 %v862
    %4575 = vmatpush1.msra.mxu0 %v861
    %4576 = vmatprep.subr.mxu0 %v865
    %4577 = vmatpush1.msra.mxu0 %v864
    %4578 = vmatprep.subr.mxu0 %v868
    %4579 = vmatpush1.msra.mxu0 %v867
    %4580 = vmatprep.subr.mxu0 %v871
    %4581 = vmatpush1.msra.mxu0 %v870
    %4582 = vmatprep.subr.mxu0 0.0
    %4583 = vmatpush1.msra.mxu0 0.0
    %4584 = vmatprep.subr.mxu0 0.0
    %4585 = vmatpush1.msra.mxu0 0.0
    %4586 = vmatprep.subr.mxu0 0.0
    %4587 = vmatpush1.msra.mxu0 0.0
    %4588 = vmatprep.subr.mxu0 0.0
    %4589 = vmatpush1.msra.mxu0 0.0
    %4590 = vmatprep.subr.mxu0 0.0
    %4591 = vmatpush1.msra.mxu0 0.0
    %4592 = vmatprep.subr.mxu0 0.0
    %4593 = vmatpush1.msra.mxu0 0.0
    %4594 = vmatprep.subr.mxu0 0.0
    %4595 = vmatpush1.msra.mxu0 0.0
    %4596 = vmatprep.subr.mxu0 0.0
    %4597 = vmatpush1.msra.mxu0 0.0
    %4598 = vmatprep.subr.mxu0 0.0
    %4599 = vmatpush1.msra.mxu0 0.0
    %4600 = vmatprep.subr.mxu0 0.0
    %4601 = vmatpush1.msra.mxu0 0.0
    %4602 = vmatprep.subr.mxu0 0.0
    %4603 = vmatpush1.msra.mxu0 0.0
    %4604 = vmatprep.subr.mxu0 0.0
    %4605 = vmatpush1.msra.mxu0 0.0
    %4606 = vmatprep.subr.mxu0 0.0
    %4607 = vmatpush1.msra.mxu0 0.0
    %4608 = vmatprep.subr.mxu0 0.0
    %4609 = vmatpush1.msra.mxu0 0.0
    %4610 = vmatprep.subr.mxu0 0.0
    %4611 = vmatpush1.msra.mxu0 0.0
    %4612 = vmatprep.subr.mxu0 0.0
    %4613 = vmatpush1.msra.mxu0 0.0
    %4614 = vmatprep.mubr.f32.mxu0 0.0
    %4615 = vmatmul.mubr.f32.gmra.mrb[0].mxu0 %v3941
    %v4616 = vpop.f32.mrb[0].mxu0
    %v4617 = vadd.f32 %v1427, %v4616
    %v4618 = vpop.f32.mrb[0].mxu0
    %v4619 = vadd.f32 %v1431, %v4618
    %4620 = vdwg.mxu0
    %4621 = vmatprep.subr.mxu0 0.0
    %4622 = vmatpush1.msra.mxu0 %v827
    %4623 = vmatprep.subr.mxu0 0.0
    %4624 = vmatpush1.msra.mxu0 %v830
    %4625 = vmatprep.subr.mxu0 0.0
    %4626 = vmatpush1.msra.mxu0 %v833
    %4627 = vmatprep.subr.mxu0 0.0
    %4628 = vmatpush1.msra.mxu0 %v836
    %4629 = vmatprep.subr.mxu0 0.0
    %4630 = vmatpush1.msra.mxu0 %v839
    %4631 = vmatprep.subr.mxu0 0.0
    %4632 = vmatpush1.msra.mxu0 %v842
    %4633 = vmatprep.subr.mxu0 0.0
    %4634 = vmatpush1.msra.mxu0 %v845
    %4635 = vmatprep.subr.mxu0 0.0
    %4636 = vmatpush1.msra.mxu0 %v848
    %4637 = vmatprep.subr.mxu0 0.0
    %4638 = vmatpush1.msra.mxu0 %v851
    %4639 = vmatprep.subr.mxu0 0.0
    %4640 = vmatpush1.msra.mxu0 %v854
    %4641 = vmatprep.subr.mxu0 0.0
    %4642 = vmatpush1.msra.mxu0 %v857
    %4643 = vmatprep.subr.mxu0 0.0
    %4644 = vmatpush1.msra.mxu0 %v860
    %4645 = vmatprep.subr.mxu0 0.0
    %4646 = vmatpush1.msra.mxu0 %v863
    %4647 = vmatprep.subr.mxu0 0.0
    %4648 = vmatpush1.msra.mxu0 %v866
    %4649 = vmatprep.subr.mxu0 0.0
    %4650 = vmatpush1.msra.mxu0 %v869
    %4651 = vmatprep.subr.mxu0 0.0
    %4652 = vmatpush1.msra.mxu0 %v872
    %4653 = vmatprep.subr.mxu0 0.0
    %4654 = vmatpush1.msra.mxu0 0.0
    %4655 = vmatprep.subr.mxu0 0.0
    %4656 = vmatpush1.msra.mxu0 0.0
    %4657 = vmatprep.subr.mxu0 0.0
    %4658 = vmatpush1.msra.mxu0 0.0
    %4659 = vmatprep.subr.mxu0 0.0
    %4660 = vmatpush1.msra.mxu0 0.0
    %4661 = vmatprep.subr.mxu0 0.0
    %4662 = vmatpush1.msra.mxu0 0.0
    %4663 = vmatprep.subr.mxu0 0.0
    %4664 = vmatpush1.msra.mxu0 0.0
    %4665 = vmatprep.subr.mxu0 0.0
    %4666 = vmatpush1.msra.mxu0 0.0
    %4667 = vmatprep.subr.mxu0 0.0
    %4668 = vmatpush1.msra.mxu0 0.0
    %4669 = vmatprep.subr.mxu0 0.0
    %4670 = vmatpush1.msra.mxu0 0.0
    %4671 = vmatprep.subr.mxu0 0.0
    %4672 = vmatpush1.msra.mxu0 0.0
    %4673 = vmatprep.subr.mxu0 0.0
    %4674 = vmatpush1.msra.mxu0 0.0
    %4675 = vmatprep.subr.mxu0 0.0
    %4676 = vmatpush1.msra.mxu0 0.0
    %4677 = vmatprep.subr.mxu0 0.0
    %4678 = vmatpush1.msra.mxu0 0.0
    %4679 = vmatprep.subr.mxu0 0.0
    %4680 = vmatpush1.msra.mxu0 0.0
    %4681 = vmatprep.subr.mxu0 0.0
    %4682 = vmatpush1.msra.mxu0 0.0
    %4683 = vmatprep.subr.mxu0 0.0
    %4684 = vmatpush1.msra.mxu0 0.0
    %4685 = vmatprep.mubr.f32.mxu0 0.0
    %4686 = vmatmul.mubr.f32.gmra.mrb[0].mxu0 %v3941
    %v4687 = vpop.f32.mrb[0].mxu0
    %v4688 = vadd.f32 %v1435, %v4687
    %v4689 = vpop.f32.mrb[0].mxu0
    %4690 = vdwg.mxu0
    %v4691 = vadd.f32 %v4476, %v4617
    %v4692 = vxor.u32 %v4691, 2147483648
    %v4693 = vmul.f32 %v4692, 1.442695
    %v4694 = vpow.pop %v4693
    %v4695 = vadd.f32 %v4694, 1.0
    %v4696 = vrcp.pop %v4695
    %v4697 = vmul.f32 1.0, %v4696
    %v4698 = vadd.f32 %v4478, %v4619
    %v4699 = vxor.u32 %v4698, 2147483648
    %v4700 = vmul.f32 %v4699, 1.442695
    %v4701 = vpow.pop %v4700
    %v4702 = vadd.f32 %v4701, 1.0
    %v4703 = vrcp.pop %v4702
    %v4704 = vmul.f32 1.0, %v4703
    %v4705 = vmul.f32 %v4697, %v4688
    %v4706 = vadd.f32 %v4547, %v4705
    %v4707 = vtanh.pop %v4706
    %v4708 = vsub.f32 1.0, %v4704
    %v4709 = vmul.f32 %v4708, %v4707
    %v4710 = vmul.f32 %v4704, %v3941
    %v4711 = vadd.f32 %v4709, %v4710
    %4712 = vmatprep.subr.mxu0 %v730
    %4713 = vmatpush1.msra.mxu0 %v729
    %4714 = vmatprep.subr.mxu0 %v733
    %4715 = vmatpush1.msra.mxu0 %v732
    %4716 = vmatprep.subr.mxu0 %v736
    %4717 = vmatpush1.msra.mxu0 %v735
    %4718 = vmatprep.subr.mxu0 %v739
    %4719 = vmatpush1.msra.mxu0 %v738
    %4720 = vmatprep.subr.mxu0 %v742
    %4721 = vmatpush1.msra.mxu0 %v741
    %4722 = vmatprep.subr.mxu0 %v745
    %4723 = vmatpush1.msra.mxu0 %v744
    %4724 = vmatprep.subr.mxu0 %v748
    %4725 = vmatpush1.msra.mxu0 %v747
    %4726 = vmatprep.subr.mxu0 %v751
    %4727 = vmatpush1.msra.mxu0 %v750
    %4728 = vmatprep.subr.mxu0 %v754
    %4729 = vmatpush1.msra.mxu0 %v753
    %4730 = vmatprep.subr.mxu0 %v757
    %4731 = vmatpush1.msra.mxu0 %v756
    %4732 = vmatprep.subr.mxu0 %v760
    %4733 = vmatpush1.msra.mxu0 %v759
    %4734 = vmatprep.subr.mxu0 %v763
    %4735 = vmatpush1.msra.mxu0 %v762
    %4736 = vmatprep.subr.mxu0 %v766
    %4737 = vmatpush1.msra.mxu0 %v765
    %4738 = vmatprep.subr.mxu0 %v769
    %4739 = vmatpush1.msra.mxu0 %v768
    %4740 = vmatprep.subr.mxu0 %v772
    %4741 = vmatpush1.msra.mxu0 %v771
    %4742 = vmatprep.subr.mxu0 %v775
    %4743 = vmatpush1.msra.mxu0 %v774
    %4744 = vmatprep.subr.mxu0 0.0
    %4745 = vmatpush1.msra.mxu0 0.0
    %4746 = vmatprep.subr.mxu0 0.0
    %4747 = vmatpush1.msra.mxu0 0.0
    %4748 = vmatprep.subr.mxu0 0.0
    %4749 = vmatpush1.msra.mxu0 0.0
    %4750 = vmatprep.subr.mxu0 0.0
    %4751 = vmatpush1.msra.mxu0 0.0
    %4752 = vmatprep.subr.mxu0 0.0
    %4753 = vmatpush1.msra.mxu0 0.0
    %4754 = vmatprep.subr.mxu0 0.0
    %4755 = vmatpush1.msra.mxu0 0.0
    %4756 = vmatprep.subr.mxu0 0.0
    %4757 = vmatpush1.msra.mxu0 0.0
    %4758 = vmatprep.subr.mxu0 0.0
    %4759 = vmatpush1.msra.mxu0 0.0
    %4760 = vmatprep.subr.mxu0 0.0
    %4761 = vmatpush1.msra.mxu0 0.0
    %4762 = vmatprep.subr.mxu0 0.0
    %4763 = vmatpush1.msra.mxu0 0.0
    %4764 = vmatprep.subr.mxu0 0.0
    %4765 = vmatpush1.msra.mxu0 0.0
    %4766 = vmatprep.subr.mxu0 0.0
    %4767 = vmatpush1.msra.mxu0 0.0
    %4768 = vmatprep.subr.mxu0 0.0
    %4769 = vmatpush1.msra.mxu0 0.0
    %4770 = vmatprep.subr.mxu0 0.0
    %4771 = vmatpush1.msra.mxu0 0.0
    %4772 = vmatprep.subr.mxu0 0.0
    %4773 = vmatpush1.msra.mxu0 0.0
    %4774 = vmatprep.subr.mxu0 0.0
    %4775 = vmatpush1.msra.mxu0 0.0
    %4776 = vmatprep.mubr.f32.mxu0 0.0
    %4777 = vmatmul.mubr.f32.gmra.mrb[0].mxu0 %v4711
    %v4778 = vpop.f32.mrb[0].mxu0
    %v4779 = vadd.f32 %v1605, %v4778
    %v4780 = vpop.f32.mrb[0].mxu0
    %v4781 = vadd.f32 %v1609, %v4780
    %4782 = vdwg.mxu0
    %4783 = vmatprep.subr.mxu0 0.0
    %4784 = vmatpush1.msra.mxu0 %v731
    %4785 = vmatprep.subr.mxu0 0.0
    %4786 = vmatpush1.msra.mxu0 %v734
    %4787 = vmatprep.subr.mxu0 0.0
    %4788 = vmatpush1.msra.mxu0 %v737
    %4789 = vmatprep.subr.mxu0 0.0
    %4790 = vmatpush1.msra.mxu0 %v740
    %4791 = vmatprep.subr.mxu0 0.0
    %4792 = vmatpush1.msra.mxu0 %v743
    %4793 = vmatprep.subr.mxu0 0.0
    %4794 = vmatpush1.msra.mxu0 %v746
    %4795 = vmatprep.subr.mxu0 0.0
    %4796 = vmatpush1.msra.mxu0 %v749
    %4797 = vmatprep.subr.mxu0 0.0
    %4798 = vmatpush1.msra.mxu0 %v752
    %4799 = vmatprep.subr.mxu0 0.0
    %4800 = vmatpush1.msra.mxu0 %v755
    %4801 = vmatprep.subr.mxu0 0.0
    %4802 = vmatpush1.msra.mxu0 %v758
    %4803 = vmatprep.subr.mxu0 0.0
    %4804 = vmatpush1.msra.mxu0 %v761
    %4805 = vmatprep.subr.mxu0 0.0
    %4806 = vmatpush1.msra.mxu0 %v764
    %4807 = vmatprep.subr.mxu0 0.0
    %4808 = vmatpush1.msra.mxu0 %v767
    %4809 = vmatprep.subr.mxu0 0.0
    %4810 = vmatpush1.msra.mxu0 %v770
    %4811 = vmatprep.subr.mxu0 0.0
    %4812 = vmatpush1.msra.mxu0 %v773
    %4813 = vmatprep.subr.mxu0 0.0
    %4814 = vmatpush1.msra.mxu0 %v776
    %4815 = vmatprep.subr.mxu0 0.0
    %4816 = vmatpush1.msra.mxu0 0.0
    %4817 = vmatprep.subr.mxu0 0.0
    %4818 = vmatpush1.msra.mxu0 0.0
    %4819 = vmatprep.subr.mxu0 0.0
    %4820 = vmatpush1.msra.mxu0 0.0
    %4821 = vmatprep.subr.mxu0 0.0
    %4822 = vmatpush1.msra.mxu0 0.0
    %4823 = vmatprep.subr.mxu0 0.0
    %4824 = vmatpush1.msra.mxu0 0.0
    %4825 = vmatprep.subr.mxu0 0.0
    %4826 = vmatpush1.msra.mxu0 0.0
    %4827 = vmatprep.subr.mxu0 0.0
    %4828 = vmatpush1.msra.mxu0 0.0
    %4829 = vmatprep.subr.mxu0 0.0
    %4830 = vmatpush1.msra.mxu0 0.0
    %4831 = vmatprep.subr.mxu0 0.0
    %4832 = vmatpush1.msra.mxu0 0.0
    %4833 = vmatprep.subr.mxu0 0.0
    %4834 = vmatpush1.msra.mxu0 0.0
    %4835 = vmatprep.subr.mxu0 0.0
    %4836 = vmatpush1.msra.mxu0 0.0
    %4837 = vmatprep.subr.mxu0 0.0
    %4838 = vmatpush1.msra.mxu0 0.0
    %4839 = vmatprep.subr.mxu0 0.0
    %4840 = vmatpush1.msra.mxu0 0.0
    %4841 = vmatprep.subr.mxu0 0.0
    %4842 = vmatpush1.msra.mxu0 0.0
    %4843 = vmatprep.subr.mxu0 0.0
    %4844 = vmatpush1.msra.mxu0 0.0
    %4845 = vmatprep.subr.mxu0 0.0
    %4846 = vmatpush1.msra.mxu0 0.0
    %4847 = vmatprep.mubr.f32.mxu0 0.0
    %4848 = vmatmul.mubr.f32.gmra.mrb[0].mxu0 %v4711
    %v4849 = vpop.f32.mrb[0].mxu0
    %v4850 = vadd.f32 %v1613, %v4849
    %v4851 = vpop.f32.mrb[0].mxu0
    %4852 = vdwg.mxu0
    %4853 = vmatprep.subr.mxu0 %v874
    %4854 = vmatpush1.msra.mxu0 %v873
    %4855 = vmatprep.subr.mxu0 %v877
    %4856 = vmatpush1.msra.mxu0 %v876
    %4857 = vmatprep.subr.mxu0 %v880
    %4858 = vmatpush1.msra.mxu0 %v879
    %4859 = vmatprep.subr.mxu0 %v883
    %4860 = vmatpush1.msra.mxu0 %v882
    %4861 = vmatprep.subr.mxu0 %v886
    %4862 = vmatpush1.msra.mxu0 %v885
    %4863 = vmatprep.subr.mxu0 %v889
    %4864 = vmatpush1.msra.mxu0 %v888
    %4865 = vmatprep.subr.mxu0 %v892
    %4866 = vmatpush1.msra.mxu0 %v891
    %4867 = vmatprep.subr.mxu0 %v895
    %4868 = vmatpush1.msra.mxu0 %v894
    %4869 = vmatprep.subr.mxu0 %v898
    %4870 = vmatpush1.msra.mxu0 %v897
    %4871 = vmatprep.subr.mxu0 %v901
    %4872 = vmatpush1.msra.mxu0 %v900
    %4873 = vmatprep.subr.mxu0 %v904
    %4874 = vmatpush1.msra.mxu0 %v903
    %4875 = vmatprep.subr.mxu0 %v907
    %4876 = vmatpush1.msra.mxu0 %v906
    %4877 = vmatprep.subr.mxu0 %v910
    %4878 = vmatpush1.msra.mxu0 %v909
    %4879 = vmatprep.subr.mxu0 %v913
    %4880 = vmatpush1.msra.mxu0 %v912
    %4881 = vmatprep.subr.mxu0 %v916
    %4882 = vmatpush1.msra.mxu0 %v915
    %4883 = vmatprep.subr.mxu0 %v919
    %4884 = vmatpush1.msra.mxu0 %v918
    %4885 = vmatprep.subr.mxu0 0.0
    %4886 = vmatpush1.msra.mxu0 0.0
    %4887 = vmatprep.subr.mxu0 0.0
    %4888 = vmatpush1.msra.mxu0 0.0
    %4889 = vmatprep.subr.mxu0 0.0
    %4890 = vmatpush1.msra.mxu0 0.0
    %4891 = vmatprep.subr.mxu0 0.0
    %4892 = vmatpush1.msra.mxu0 0.0
    %4893 = vmatprep.subr.mxu0 0.0
    %4894 = vmatpush1.msra.mxu0 0.0
    %4895 = vmatprep.subr.mxu0 0.0
    %4896 = vmatpush1.msra.mxu0 0.0
    %4897 = vmatprep.subr.mxu0 0.0
    %4898 = vmatpush1.msra.mxu0 0.0
    %4899 = vmatprep.subr.mxu0 0.0
    %4900 = vmatpush1.msra.mxu0 0.0
    %4901 = vmatprep.subr.mxu0 0.0
    %4902 = vmatpush1.msra.mxu0 0.0
    %4903 = vmatprep.subr.mxu0 0.0
    %4904 = vmatpush1.msra.mxu0 0.0
    %4905 = vmatprep.subr.mxu0 0.0
    %4906 = vmatpush1.msra.mxu0 0.0
    %4907 = vmatprep.subr.mxu0 0.0
    %4908 = vmatpush1.msra.mxu0 0.0
    %4909 = vmatprep.subr.mxu0 0.0
    %4910 = vmatpush1.msra.mxu0 0.0
    %4911 = vmatprep.subr.mxu0 0.0
    %4912 = vmatpush1.msra.mxu0 0.0
    %4913 = vmatprep.subr.mxu0 0.0
    %4914 = vmatpush1.msra.mxu0 0.0
    %4915 = vmatprep.subr.mxu0 0.0
    %4916 = vmatpush1.msra.mxu0 0.0
    %4917 = vmatprep.mubr.f32.mxu0 0.0
    %4918 = vmatmul.mubr.f32.gmra.mrb[0].mxu0 %v4244
    %v4919 = vpop.f32.mrb[0].mxu0
    %v4920 = vadd.f32 %v1762, %v4919
    %v4921 = vpop.f32.mrb[0].mxu0
    %v4922 = vadd.f32 %v1766, %v4921
    %4923 = vdwg.mxu0
    %4924 = vmatprep.subr.mxu0 0.0
    %4925 = vmatpush1.msra.mxu0 %v875
    %4926 = vmatprep.subr.mxu0 0.0
    %4927 = vmatpush1.msra.mxu0 %v878
    %4928 = vmatprep.subr.mxu0 0.0
    %4929 = vmatpush1.msra.mxu0 %v881
    %4930 = vmatprep.subr.mxu0 0.0
    %4931 = vmatpush1.msra.mxu0 %v884
    %4932 = vmatprep.subr.mxu0 0.0
    %4933 = vmatpush1.msra.mxu0 %v887
    %4934 = vmatprep.subr.mxu0 0.0
    %4935 = vmatpush1.msra.mxu0 %v890
    %4936 = vmatprep.subr.mxu0 0.0
    %4937 = vmatpush1.msra.mxu0 %v893
    %4938 = vmatprep.subr.mxu0 0.0
    %4939 = vmatpush1.msra.mxu0 %v896
    %4940 = vmatprep.subr.mxu0 0.0
    %4941 = vmatpush1.msra.mxu0 %v899
    %4942 = vmatprep.subr.mxu0 0.0
    %4943 = vmatpush1.msra.mxu0 %v902
    %4944 = vmatprep.subr.mxu0 0.0
    %4945 = vmatpush1.msra.mxu0 %v905
    %4946 = vmatprep.subr.mxu0 0.0
    %4947 = vmatpush1.msra.mxu0 %v908
    %4948 = vmatprep.subr.mxu0 0.0
    %4949 = vmatpush1.msra.mxu0 %v911
    %4950 = vmatprep.subr.mxu0 0.0
    %4951 = vmatpush1.msra.mxu0 %v914
    %4952 = vmatprep.subr.mxu0 0.0
    %4953 = vmatpush1.msra.mxu0 %v917
    %4954 = vmatprep.subr.mxu0 0.0
    %4955 = vmatpush1.msra.mxu0 %v920
    %4956 = vmatprep.subr.mxu0 0.0
    %4957 = vmatpush1.msra.mxu0 0.0
    %4958 = vmatprep.subr.mxu0 0.0
    %4959 = vmatpush1.msra.mxu0 0.0
    %4960 = vmatprep.subr.mxu0 0.0
    %4961 = vmatpush1.msra.mxu0 0.0
    %4962 = vmatprep.subr.mxu0 0.0
    %4963 = vmatpush1.msra.mxu0 0.0
    %4964 = vmatprep.subr.mxu0 0.0
    %4965 = vmatpush1.msra.mxu0 0.0
    %4966 = vmatprep.subr.mxu0 0.0
    %4967 = vmatpush1.msra.mxu0 0.0
    %4968 = vmatprep.subr.mxu0 0.0
    %4969 = vmatpush1.msra.mxu0 0.0
    %4970 = vmatprep.subr.mxu0 0.0
    %4971 = vmatpush1.msra.mxu0 0.0
    %4972 = vmatprep.subr.mxu0 0.0
    %4973 = vmatpush1.msra.mxu0 0.0
    %4974 = vmatprep.subr.mxu0 0.0
    %4975 = vmatpush1.msra.mxu0 0.0
    %4976 = vmatprep.subr.mxu0 0.0
    %4977 = vmatpush1.msra.mxu0 0.0
    %4978 = vmatprep.subr.mxu0 0.0
    %4979 = vmatpush1.msra.mxu0 0.0
    %4980 = vmatprep.subr.mxu0 0.0
    %4981 = vmatpush1.msra.mxu0 0.0
    %4982 = vmatprep.subr.mxu0 0.0
    %4983 = vmatpush1.msra.mxu0 0.0
    %4984 = vmatprep.subr.mxu0 0.0
    %4985 = vmatpush1.msra.mxu0 0.0
    %4986 = vmatprep.subr.mxu0 0.0
    %4987 = vmatpush1.msra.mxu0 0.0
    %4988 = vmatprep.mubr.f32.mxu0 0.0
    %4989 = vmatmul.mubr.f32.gmra.mrb[0].mxu0 %v4244
    %v4990 = vpop.f32.mrb[0].mxu0
    %v4991 = vadd.f32 %v1770, %v4990
    %v4992 = vpop.f32.mrb[0].mxu0
    %4993 = vdwg.mxu0
    %v4994 = vadd.f32 %v4779, %v4920
    %v4995 = vxor.u32 %v4994, 2147483648
    %v4996 = vmul.f32 %v4995, 1.442695
    %v4997 = vpow.pop %v4996
    %v4998 = vadd.f32 %v4997, 1.0
    %v4999 = vrcp.pop %v4998
    %v5000 = vmul.f32 1.0, %v4999
    %v5001 = vadd.f32 %v4781, %v4922
    %v5002 = vxor.u32 %v5001, 2147483648
    %v5003 = vmul.f32 %v5002, 1.442695
    %v5004 = vpow.pop %v5003
    %v5005 = vadd.f32 %v5004, 1.0
    %v5006 = vrcp.pop %v5005
    %v5007 = vmul.f32 1.0, %v5006
    %v5008 = vmul.f32 %v5000, %v4991
    %v5009 = vadd.f32 %v4850, %v5008
    %v5010 = vtanh.pop %v5009
    %v5011 = vsub.f32 1.0, %v5007
    %v5012 = vmul.f32 %v5011, %v5010
    %v5013 = vmul.f32 %v5007, %v4244
    %v5014 = vadd.f32 %v5012, %v5013
    %s5015 = scalar_lea.vmem %s26, 8
    %5016 = vst [vmem:[%s5015] sm:$0x3] %v5014
    %5017 = vmatprep.subr.mxu0 %v778
    %5018 = vmatpush1.msra.mxu0 %v777
    %5019 = vmatprep.subr.mxu0 %v781
    %5020 = vmatpush1.msra.mxu0 %v780
    %5021 = vmatprep.subr.mxu0 %v784
    %5022 = vmatpush1.msra.mxu0 %v783
    %5023 = vmatprep.subr.mxu0 %v787
    %5024 = vmatpush1.msra.mxu0 %v786
    %5025 = vmatprep.subr.mxu0 %v790
    %5026 = vmatpush1.msra.mxu0 %v789
    %5027 = vmatprep.subr.mxu0 %v793
    %5028 = vmatpush1.msra.mxu0 %v792
    %5029 = vmatprep.subr.mxu0 %v796
    %5030 = vmatpush1.msra.mxu0 %v795
    %5031 = vmatprep.subr.mxu0 %v799
    %5032 = vmatpush1.msra.mxu0 %v798
    %5033 = vmatprep.subr.mxu0 %v802
    %5034 = vmatpush1.msra.mxu0 %v801
    %5035 = vmatprep.subr.mxu0 %v805
    %5036 = vmatpush1.msra.mxu0 %v804
    %5037 = vmatprep.subr.mxu0 %v808
    %5038 = vmatpush1.msra.mxu0 %v807
    %5039 = vmatprep.subr.mxu0 %v811
    %5040 = vmatpush1.msra.mxu0 %v810
    %5041 = vmatprep.subr.mxu0 %v814
    %5042 = vmatpush1.msra.mxu0 %v813
    %5043 = vmatprep.subr.mxu0 %v817
    %5044 = vmatpush1.msra.mxu0 %v816
    %5045 = vmatprep.subr.mxu0 %v820
    %5046 = vmatpush1.msra.mxu0 %v819
    %5047 = vmatprep.subr.mxu0 %v823
    %5048 = vmatpush1.msra.mxu0 %v822
    %5049 = vmatprep.subr.mxu0 0.0
    %5050 = vmatpush1.msra.mxu0 0.0
    %5051 = vmatprep.subr.mxu0 0.0
    %5052 = vmatpush1.msra.mxu0 0.0
    %5053 = vmatprep.subr.mxu0 0.0
    %5054 = vmatpush1.msra.mxu0 0.0
    %5055 = vmatprep.subr.mxu0 0.0
    %5056 = vmatpush1.msra.mxu0 0.0
    %5057 = vmatprep.subr.mxu0 0.0
    %5058 = vmatpush1.msra.mxu0 0.0
    %5059 = vmatprep.subr.mxu0 0.0
    %5060 = vmatpush1.msra.mxu0 0.0
    %5061 = vmatprep.subr.mxu0 0.0
    %5062 = vmatpush1.msra.mxu0 0.0
    %5063 = vmatprep.subr.mxu0 0.0
    %5064 = vmatpush1.msra.mxu0 0.0
    %5065 = vmatprep.subr.mxu0 0.0
    %5066 = vmatpush1.msra.mxu0 0.0
    %5067 = vmatprep.subr.mxu0 0.0
    %5068 = vmatpush1.msra.mxu0 0.0
    %5069 = vmatprep.subr.mxu0 0.0
    %5070 = vmatpush1.msra.mxu0 0.0
    %5071 = vmatprep.subr.mxu0 0.0
    %5072 = vmatpush1.msra.mxu0 0.0
    %5073 = vmatprep.subr.mxu0 0.0
    %5074 = vmatpush1.msra.mxu0 0.0
    %5075 = vmatprep.subr.mxu0 0.0
    %5076 = vmatpush1.msra.mxu0 0.0
    %5077 = vmatprep.subr.mxu0 0.0
    %5078 = vmatpush1.msra.mxu0 0.0
    %5079 = vmatprep.subr.mxu0 0.0
    %5080 = vmatpush1.msra.mxu0 0.0
    %5081 = vmatprep.mubr.f32.mxu0 0.0
    %5082 = vmatmul.mubr.f32.gmra.mrb[0].mxu0 %v4408
    %v5083 = vpop.f32.mrb[0].mxu0
    %v5084 = vadd.f32 %v1092, %v5083
    %v5085 = vpop.f32.mrb[0].mxu0
    %v5086 = vadd.f32 %v1096, %v5085
    %5087 = vdwg.mxu0
    %5088 = vmatprep.subr.mxu0 0.0
    %5089 = vmatpush1.msra.mxu0 %v779
    %5090 = vmatprep.subr.mxu0 0.0
    %5091 = vmatpush1.msra.mxu0 %v782
    %5092 = vmatprep.subr.mxu0 0.0
    %5093 = vmatpush1.msra.mxu0 %v785
    %5094 = vmatprep.subr.mxu0 0.0
    %5095 = vmatpush1.msra.mxu0 %v788
    %5096 = vmatprep.subr.mxu0 0.0
    %5097 = vmatpush1.msra.mxu0 %v791
    %5098 = vmatprep.subr.mxu0 0.0
    %5099 = vmatpush1.msra.mxu0 %v794
    %5100 = vmatprep.subr.mxu0 0.0
    %5101 = vmatpush1.msra.mxu0 %v797
    %5102 = vmatprep.subr.mxu0 0.0
    %5103 = vmatpush1.msra.mxu0 %v800
    %5104 = vmatprep.subr.mxu0 0.0
    %5105 = vmatpush1.msra.mxu0 %v803
    %5106 = vmatprep.subr.mxu0 0.0
    %5107 = vmatpush1.msra.mxu0 %v806
    %5108 = vmatprep.subr.mxu0 0.0
    %5109 = vmatpush1.msra.mxu0 %v809
    %5110 = vmatprep.subr.mxu0 0.0
    %5111 = vmatpush1.msra.mxu0 %v812
    %5112 = vmatprep.subr.mxu0 0.0
    %5113 = vmatpush1.msra.mxu0 %v815
    %5114 = vmatprep.subr.mxu0 0.0
    %5115 = vmatpush1.msra.mxu0 %v818
    %5116 = vmatprep.subr.mxu0 0.0
    %5117 = vmatpush1.msra.mxu0 %v821
    %5118 = vmatprep.subr.mxu0 0.0
    %5119 = vmatpush1.msra.mxu0 %v824
    %5120 = vmatprep.subr.mxu0 0.0
    %5121 = vmatpush1.msra.mxu0 0.0
    %5122 = vmatprep.subr.mxu0 0.0
    %5123 = vmatpush1.msra.mxu0 0.0
    %5124 = vmatprep.subr.mxu0 0.0
    %5125 = vmatpush1.msra.mxu0 0.0
    %5126 = vmatprep.subr.mxu0 0.0
    %5127 = vmatpush1.msra.mxu0 0.0
    %5128 = vmatprep.subr.mxu0 0.0
    %5129 = vmatpush1.msra.mxu0 0.0
    %5130 = vmatprep.subr.mxu0 0.0
    %5131 = vmatpush1.msra.mxu0 0.0
    %5132 = vmatprep.subr.mxu0 0.0
    %5133 = vmatpush1.msra.mxu0 0.0
    %5134 = vmatprep.subr.mxu0 0.0
    %5135 = vmatpush1.msra.mxu0 0.0
    %5136 = vmatprep.subr.mxu0 0.0
    %5137 = vmatpush1.msra.mxu0 0.0
    %5138 = vmatprep.subr.mxu0 0.0
    %5139 = vmatpush1.msra.mxu0 0.0
    %5140 = vmatprep.subr.mxu0 0.0
    %5141 = vmatpush1.msra.mxu0 0.0
    %5142 = vmatprep.subr.mxu0 0.0
    %5143 = vmatpush1.msra.mxu0 0.0
    %5144 = vmatprep.subr.mxu0 0.0
    %5145 = vmatpush1.msra.mxu0 0.0
    %5146 = vmatprep.subr.mxu0 0.0
    %5147 = vmatpush1.msra.mxu0 0.0
    %5148 = vmatprep.subr.mxu0 0.0
    %5149 = vmatpush1.msra.mxu0 0.0
    %5150 = vmatprep.subr.mxu0 0.0
    %5151 = vmatpush1.msra.mxu0 0.0
    %5152 = vmatprep.mubr.f32.mxu0 0.0
    %5153 = vmatmul.mubr.f32.gmra.mrb[0].mxu0 %v4408
    %v5154 = vpop.f32.mrb[0].mxu0
    %v5155 = vadd.f32 %v1100, %v5154
    %v5156 = vpop.f32.mrb[0].mxu0
    %5157 = vdwg.mxu0
    %v5158 = vadd.f32 %v1014, %v5084
    %v5159 = vxor.u32 %v5158, 2147483648
    %v5160 = vmul.f32 %v5159, 1.442695
    %v5161 = vpow.pop %v5160
    %v5162 = vadd.f32 %v5161, 1.0
    %v5163 = vrcp.pop %v5162
    %v5164 = vmul.f32 1.0, %v5163
    %v5165 = vadd.f32 %v1016, %v5086
    %v5166 = vxor.u32 %v5165, 2147483648
    %v5167 = vmul.f32 %v5166, 1.442695
    %v5168 = vpow.pop %v5167
    %v5169 = vadd.f32 %v5168, 1.0
    %v5170 = vrcp.pop %v5169
    %v5171 = vmul.f32 1.0, %v5170
    %v5172 = vmul.f32 %v5164, %v5155
    %v5173 = vadd.f32 %v1085, %v5172
    %v5174 = vtanh.pop %v5173
    %v5175 = vsub.f32 1.0, %v5171
    %v5176 = vmul.f32 %v5175, %v5174
    %v5177 = vmul.f32 %v5171, %v4408
    %v5178 = vadd.f32 %v5176, %v5177
    %5179 = vmatprep.subr.mxu0 %v682
    %5180 = vmatpush1.msra.mxu0 %v681
    %5181 = vmatprep.subr.mxu0 %v685
    %5182 = vmatpush1.msra.mxu0 %v684
    %5183 = vmatprep.subr.mxu0 %v688
    %5184 = vmatpush1.msra.mxu0 %v687
    %5185 = vmatprep.subr.mxu0 %v691
    %5186 = vmatpush1.msra.mxu0 %v690
    %5187 = vmatprep.subr.mxu0 %v694
    %5188 = vmatpush1.msra.mxu0 %v693
    %5189 = vmatprep.subr.mxu0 %v697
    %5190 = vmatpush1.msra.mxu0 %v696
    %5191 = vmatprep.subr.mxu0 %v700
    %5192 = vmatpush1.msra.mxu0 %v699
    %5193 = vmatprep.subr.mxu0 %v703
    %5194 = vmatpush1.msra.mxu0 %v702
    %5195 = vmatprep.subr.mxu0 %v706
    %5196 = vmatpush1.msra.mxu0 %v705
    %5197 = vmatprep.subr.mxu0 %v709
    %5198 = vmatpush1.msra.mxu0 %v708
    %5199 = vmatprep.subr.mxu0 %v712
    %5200 = vmatpush1.msra.mxu0 %v711
    %5201 = vmatprep.subr.mxu0 %v715
    %5202 = vmatpush1.msra.mxu0 %v714
    %5203 = vmatprep.subr.mxu0 %v718
    %5204 = vmatpush1.msra.mxu0 %v717
    %5205 = vmatprep.subr.mxu0 %v721
    %5206 = vmatpush1.msra.mxu0 %v720
    %5207 = vmatprep.subr.mxu0 %v724
    %5208 = vmatpush1.msra.mxu0 %v723
    %5209 = vmatprep.subr.mxu0 %v727
    %5210 = vmatpush1.msra.mxu0 %v726
    %5211 = vmatprep.subr.mxu0 0.0
    %5212 = vmatpush1.msra.mxu0 0.0
    %5213 = vmatprep.subr.mxu0 0.0
    %5214 = vmatpush1.msra.mxu0 0.0
    %5215 = vmatprep.subr.mxu0 0.0
    %5216 = vmatpush1.msra.mxu0 0.0
    %5217 = vmatprep.subr.mxu0 0.0
    %5218 = vmatpush1.msra.mxu0 0.0
    %5219 = vmatprep.subr.mxu0 0.0
    %5220 = vmatpush1.msra.mxu0 0.0
    %5221 = vmatprep.subr.mxu0 0.0
    %5222 = vmatpush1.msra.mxu0 0.0
    %5223 = vmatprep.subr.mxu0 0.0
    %5224 = vmatpush1.msra.mxu0 0.0
    %5225 = vmatprep.subr.mxu0 0.0
    %5226 = vmatpush1.msra.mxu0 0.0
    %5227 = vmatprep.subr.mxu0 0.0
    %5228 = vmatpush1.msra.mxu0 0.0
    %5229 = vmatprep.subr.mxu0 0.0
    %5230 = vmatpush1.msra.mxu0 0.0
    %5231 = vmatprep.subr.mxu0 0.0
    %5232 = vmatpush1.msra.mxu0 0.0
    %5233 = vmatprep.subr.mxu0 0.0
    %5234 = vmatpush1.msra.mxu0 0.0
    %5235 = vmatprep.subr.mxu0 0.0
    %5236 = vmatpush1.msra.mxu0 0.0
    %5237 = vmatprep.subr.mxu0 0.0
    %5238 = vmatpush1.msra.mxu0 0.0
    %5239 = vmatprep.subr.mxu0 0.0
    %5240 = vmatpush1.msra.mxu0 0.0
    %5241 = vmatprep.subr.mxu0 0.0
    %5242 = vmatpush1.msra.mxu0 0.0
    %5243 = vmatprep.mubr.f32.mxu0 0.0
    %5244 = vmatmul.mubr.f32.gmra.mrb[0].mxu0 %v5178
    %v5245 = vpop.f32.mrb[0].mxu0
    %v5246 = vadd.f32 %v1270, %v5245
    %v5247 = vpop.f32.mrb[0].mxu0
    %v5248 = vadd.f32 %v1274, %v5247
    %5249 = vdwg.mxu0
    %5250 = vmatprep.subr.mxu0 0.0
    %5251 = vmatpush1.msra.mxu0 %v683
    %5252 = vmatprep.subr.mxu0 0.0
    %5253 = vmatpush1.msra.mxu0 %v686
    %5254 = vmatprep.subr.mxu0 0.0
    %5255 = vmatpush1.msra.mxu0 %v689
    %5256 = vmatprep.subr.mxu0 0.0
    %5257 = vmatpush1.msra.mxu0 %v692
    %5258 = vmatprep.subr.mxu0 0.0
    %5259 = vmatpush1.msra.mxu0 %v695
    %5260 = vmatprep.subr.mxu0 0.0
    %5261 = vmatpush1.msra.mxu0 %v698
    %5262 = vmatprep.subr.mxu0 0.0
    %5263 = vmatpush1.msra.mxu0 %v701
    %5264 = vmatprep.subr.mxu0 0.0
    %5265 = vmatpush1.msra.mxu0 %v704
    %5266 = vmatprep.subr.mxu0 0.0
    %5267 = vmatpush1.msra.mxu0 %v707
    %5268 = vmatprep.subr.mxu0 0.0
    %5269 = vmatpush1.msra.mxu0 %v710
    %5270 = vmatprep.subr.mxu0 0.0
    %5271 = vmatpush1.msra.mxu0 %v713
    %5272 = vmatprep.subr.mxu0 0.0
    %5273 = vmatpush1.msra.mxu0 %v716
    %5274 = vmatprep.subr.mxu0 0.0
    %5275 = vmatpush1.msra.mxu0 %v719
    %5276 = vmatprep.subr.mxu0 0.0
    %5277 = vmatpush1.msra.mxu0 %v722
    %5278 = vmatprep.subr.mxu0 0.0
    %5279 = vmatpush1.msra.mxu0 %v725
    %5280 = vmatprep.subr.mxu0 0.0
    %5281 = vmatpush1.msra.mxu0 %v728
    %5282 = vmatprep.subr.mxu0 0.0
    %5283 = vmatpush1.msra.mxu0 0.0
    %5284 = vmatprep.subr.mxu0 0.0
    %5285 = vmatpush1.msra.mxu0 0.0
    %5286 = vmatprep.subr.mxu0 0.0
    %5287 = vmatpush1.msra.mxu0 0.0
    %5288 = vmatprep.subr.mxu0 0.0
    %5289 = vmatpush1.msra.mxu0 0.0
    %5290 = vmatprep.subr.mxu0 0.0
    %5291 = vmatpush1.msra.mxu0 0.0
    %5292 = vmatprep.subr.mxu0 0.0
    %5293 = vmatpush1.msra.mxu0 0.0
    %5294 = vmatprep.subr.mxu0 0.0
    %5295 = vmatpush1.msra.mxu0 0.0
    %5296 = vmatprep.subr.mxu0 0.0
    %5297 = vmatpush1.msra.mxu0 0.0
    %5298 = vmatprep.subr.mxu0 0.0
    %5299 = vmatpush1.msra.mxu0 0.0
    %5300 = vmatprep.subr.mxu0 0.0
    %5301 = vmatpush1.msra.mxu0 0.0
    %5302 = vmatprep.subr.mxu0 0.0
    %5303 = vmatpush1.msra.mxu0 0.0
    %5304 = vmatprep.subr.mxu0 0.0
    %5305 = vmatpush1.msra.mxu0 0.0
    %5306 = vmatprep.subr.mxu0 0.0
    %5307 = vmatpush1.msra.mxu0 0.0
    %5308 = vmatprep.subr.mxu0 0.0
    %5309 = vmatpush1.msra.mxu0 0.0
    %5310 = vmatprep.subr.mxu0 0.0
    %5311 = vmatpush1.msra.mxu0 0.0
    %5312 = vmatprep.subr.mxu0 0.0
    %5313 = vmatpush1.msra.mxu0 0.0
    %5314 = vmatprep.mubr.f32.mxu0 0.0
    %5315 = vmatmul.mubr.f32.gmra.mrb[0].mxu0 %v5178
    %v5316 = vpop.f32.mrb[0].mxu0
    %v5317 = vadd.f32 %v1278, %v5316
    %v5318 = vpop.f32.mrb[0].mxu0
    %5319 = vdwg.mxu0
    %5320 = vmatprep.subr.mxu0 %v826
    %5321 = vmatpush1.msra.mxu0 %v825
    %5322 = vmatprep.subr.mxu0 %v829
    %5323 = vmatpush1.msra.mxu0 %v828
    %5324 = vmatprep.subr.mxu0 %v832
    %5325 = vmatpush1.msra.mxu0 %v831
    %5326 = vmatprep.subr.mxu0 %v835
    %5327 = vmatpush1.msra.mxu0 %v834
    %5328 = vmatprep.subr.mxu0 %v838
    %5329 = vmatpush1.msra.mxu0 %v837
    %5330 = vmatprep.subr.mxu0 %v841
    %5331 = vmatpush1.msra.mxu0 %v840
    %5332 = vmatprep.subr.mxu0 %v844
    %5333 = vmatpush1.msra.mxu0 %v843
    %5334 = vmatprep.subr.mxu0 %v847
    %5335 = vmatpush1.msra.mxu0 %v846
    %5336 = vmatprep.subr.mxu0 %v850
    %5337 = vmatpush1.msra.mxu0 %v849
    %5338 = vmatprep.subr.mxu0 %v853
    %5339 = vmatpush1.msra.mxu0 %v852
    %5340 = vmatprep.subr.mxu0 %v856
    %5341 = vmatpush1.msra.mxu0 %v855
    %5342 = vmatprep.subr.mxu0 %v859
    %5343 = vmatpush1.msra.mxu0 %v858
    %5344 = vmatprep.subr.mxu0 %v862
    %5345 = vmatpush1.msra.mxu0 %v861
    %5346 = vmatprep.subr.mxu0 %v865
    %5347 = vmatpush1.msra.mxu0 %v864
    %5348 = vmatprep.subr.mxu0 %v868
    %5349 = vmatpush1.msra.mxu0 %v867
    %5350 = vmatprep.subr.mxu0 %v871
    %5351 = vmatpush1.msra.mxu0 %v870
    %5352 = vmatprep.subr.mxu0 0.0
    %5353 = vmatpush1.msra.mxu0 0.0
    %5354 = vmatprep.subr.mxu0 0.0
    %5355 = vmatpush1.msra.mxu0 0.0
    %5356 = vmatprep.subr.mxu0 0.0
    %5357 = vmatpush1.msra.mxu0 0.0
    %5358 = vmatprep.subr.mxu0 0.0
    %5359 = vmatpush1.msra.mxu0 0.0
    %5360 = vmatprep.subr.mxu0 0.0
    %5361 = vmatpush1.msra.mxu0 0.0
    %5362 = vmatprep.subr.mxu0 0.0
    %5363 = vmatpush1.msra.mxu0 0.0
    %5364 = vmatprep.subr.mxu0 0.0
    %5365 = vmatpush1.msra.mxu0 0.0
    %5366 = vmatprep.subr.mxu0 0.0
    %5367 = vmatpush1.msra.mxu0 0.0
    %5368 = vmatprep.subr.mxu0 0.0
    %5369 = vmatpush1.msra.mxu0 0.0
    %5370 = vmatprep.subr.mxu0 0.0
    %5371 = vmatpush1.msra.mxu0 0.0
    %5372 = vmatprep.subr.mxu0 0.0
    %5373 = vmatpush1.msra.mxu0 0.0
    %5374 = vmatprep.subr.mxu0 0.0
    %5375 = vmatpush1.msra.mxu0 0.0
    %5376 = vmatprep.subr.mxu0 0.0
    %5377 = vmatpush1.msra.mxu0 0.0
    %5378 = vmatprep.subr.mxu0 0.0
    %5379 = vmatpush1.msra.mxu0 0.0
    %5380 = vmatprep.subr.mxu0 0.0
    %5381 = vmatpush1.msra.mxu0 0.0
    %5382 = vmatprep.subr.mxu0 0.0
    %5383 = vmatpush1.msra.mxu0 0.0
    %5384 = vmatprep.mubr.f32.mxu0 0.0
    %5385 = vmatmul.mubr.f32.gmra.mrb[0].mxu0 %v4711
    %v5386 = vpop.f32.mrb[0].mxu0
    %v5387 = vadd.f32 %v1427, %v5386
    %v5388 = vpop.f32.mrb[0].mxu0
    %v5389 = vadd.f32 %v1431, %v5388
    %5390 = vdwg.mxu0
    %5391 = vmatprep.subr.mxu0 0.0
    %5392 = vmatpush1.msra.mxu0 %v827
    %5393 = vmatprep.subr.mxu0 0.0
    %5394 = vmatpush1.msra.mxu0 %v830
    %5395 = vmatprep.subr.mxu0 0.0
    %5396 = vmatpush1.msra.mxu0 %v833
    %5397 = vmatprep.subr.mxu0 0.0
    %5398 = vmatpush1.msra.mxu0 %v836
    %5399 = vmatprep.subr.mxu0 0.0
    %5400 = vmatpush1.msra.mxu0 %v839
    %5401 = vmatprep.subr.mxu0 0.0
    %5402 = vmatpush1.msra.mxu0 %v842
    %5403 = vmatprep.subr.mxu0 0.0
    %5404 = vmatpush1.msra.mxu0 %v845
    %5405 = vmatprep.subr.mxu0 0.0
    %5406 = vmatpush1.msra.mxu0 %v848
    %5407 = vmatprep.subr.mxu0 0.0
    %5408 = vmatpush1.msra.mxu0 %v851
    %5409 = vmatprep.subr.mxu0 0.0
    %5410 = vmatpush1.msra.mxu0 %v854
    %5411 = vmatprep.subr.mxu0 0.0
    %5412 = vmatpush1.msra.mxu0 %v857
    %5413 = vmatprep.subr.mxu0 0.0
    %5414 = vmatpush1.msra.mxu0 %v860
    %5415 = vmatprep.subr.mxu0 0.0
    %5416 = vmatpush1.msra.mxu0 %v863
    %5417 = vmatprep.subr.mxu0 0.0
    %5418 = vmatpush1.msra.mxu0 %v866
    %5419 = vmatprep.subr.mxu0 0.0
    %5420 = vmatpush1.msra.mxu0 %v869
    %5421 = vmatprep.subr.mxu0 0.0
    %5422 = vmatpush1.msra.mxu0 %v872
    %5423 = vmatprep.subr.mxu0 0.0
    %5424 = vmatpush1.msra.mxu0 0.0
    %5425 = vmatprep.subr.mxu0 0.0
    %5426 = vmatpush1.msra.mxu0 0.0
    %5427 = vmatprep.subr.mxu0 0.0
    %5428 = vmatpush1.msra.mxu0 0.0
    %5429 = vmatprep.subr.mxu0 0.0
    %5430 = vmatpush1.msra.mxu0 0.0
    %5431 = vmatprep.subr.mxu0 0.0
    %5432 = vmatpush1.msra.mxu0 0.0
    %5433 = vmatprep.subr.mxu0 0.0
    %5434 = vmatpush1.msra.mxu0 0.0
    %5435 = vmatprep.subr.mxu0 0.0
    %5436 = vmatpush1.msra.mxu0 0.0
    %5437 = vmatprep.subr.mxu0 0.0
    %5438 = vmatpush1.msra.mxu0 0.0
    %5439 = vmatprep.subr.mxu0 0.0
    %5440 = vmatpush1.msra.mxu0 0.0
    %5441 = vmatprep.subr.mxu0 0.0
    %5442 = vmatpush1.msra.mxu0 0.0
    %5443 = vmatprep.subr.mxu0 0.0
    %5444 = vmatpush1.msra.mxu0 0.0
    %5445 = vmatprep.subr.mxu0 0.0
    %5446 = vmatpush1.msra.mxu0 0.0
    %5447 = vmatprep.subr.mxu0 0.0
    %5448 = vmatpush1.msra.mxu0 0.0
    %5449 = vmatprep.subr.mxu0 0.0
    %5450 = vmatpush1.msra.mxu0 0.0
    %5451 = vmatprep.subr.mxu0 0.0
    %5452 = vmatpush1.msra.mxu0 0.0
    %5453 = vmatprep.subr.mxu0 0.0
    %5454 = vmatpush1.msra.mxu0 0.0
    %5455 = vmatprep.mubr.f32.mxu0 0.0
    %5456 = vmatmul.mubr.f32.gmra.mrb[0].mxu0 %v4711
    %v5457 = vpop.f32.mrb[0].mxu0
    %v5458 = vadd.f32 %v1435, %v5457
    %v5459 = vpop.f32.mrb[0].mxu0
    %5460 = vdwg.mxu0
    %v5461 = vadd.f32 %v5246, %v5387
    %v5462 = vxor.u32 %v5461, 2147483648
    %v5463 = vmul.f32 %v5462, 1.442695
    %v5464 = vpow.pop %v5463
    %v5465 = vadd.f32 %v5464, 1.0
    %v5466 = vrcp.pop %v5465
    %v5467 = vmul.f32 1.0, %v5466
    %v5468 = vadd.f32 %v5248, %v5389
    %v5469 = vxor.u32 %v5468, 2147483648
    %v5470 = vmul.f32 %v5469, 1.442695
    %v5471 = vpow.pop %v5470
    %v5472 = vadd.f32 %v5471, 1.0
    %v5473 = vrcp.pop %v5472
    %v5474 = vmul.f32 1.0, %v5473
    %v5475 = vmul.f32 %v5467, %v5458
    %v5476 = vadd.f32 %v5317, %v5475
    %v5477 = vtanh.pop %v5476
    %v5478 = vsub.f32 1.0, %v5474
    %v5479 = vmul.f32 %v5478, %v5477
    %v5480 = vmul.f32 %v5474, %v4711
    %v5481 = vadd.f32 %v5479, %v5480
    %5482 = vmatprep.subr.mxu0 %v730
    %5483 = vmatpush1.msra.mxu0 %v729
    %5484 = vmatprep.subr.mxu0 %v733
    %5485 = vmatpush1.msra.mxu0 %v732
    %5486 = vmatprep.subr.mxu0 %v736
    %5487 = vmatpush1.msra.mxu0 %v735
    %5488 = vmatprep.subr.mxu0 %v739
    %5489 = vmatpush1.msra.mxu0 %v738
    %5490 = vmatprep.subr.mxu0 %v742
    %5491 = vmatpush1.msra.mxu0 %v741
    %5492 = vmatprep.subr.mxu0 %v745
    %5493 = vmatpush1.msra.mxu0 %v744
    %5494 = vmatprep.subr.mxu0 %v748
    %5495 = vmatpush1.msra.mxu0 %v747
    %5496 = vmatprep.subr.mxu0 %v751
    %5497 = vmatpush1.msra.mxu0 %v750
    %5498 = vmatprep.subr.mxu0 %v754
    %5499 = vmatpush1.msra.mxu0 %v753
    %5500 = vmatprep.subr.mxu0 %v757
    %5501 = vmatpush1.msra.mxu0 %v756
    %5502 = vmatprep.subr.mxu0 %v760
    %5503 = vmatpush1.msra.mxu0 %v759
    %5504 = vmatprep.subr.mxu0 %v763
    %5505 = vmatpush1.msra.mxu0 %v762
    %5506 = vmatprep.subr.mxu0 %v766
    %5507 = vmatpush1.msra.mxu0 %v765
    %5508 = vmatprep.subr.mxu0 %v769
    %5509 = vmatpush1.msra.mxu0 %v768
    %5510 = vmatprep.subr.mxu0 %v772
    %5511 = vmatpush1.msra.mxu0 %v771
    %5512 = vmatprep.subr.mxu0 %v775
    %5513 = vmatpush1.msra.mxu0 %v774
    %5514 = vmatprep.subr.mxu0 0.0
    %5515 = vmatpush1.msra.mxu0 0.0
    %5516 = vmatprep.subr.mxu0 0.0
    %5517 = vmatpush1.msra.mxu0 0.0
    %5518 = vmatprep.subr.mxu0 0.0
    %5519 = vmatpush1.msra.mxu0 0.0
    %5520 = vmatprep.subr.mxu0 0.0
    %5521 = vmatpush1.msra.mxu0 0.0
    %5522 = vmatprep.subr.mxu0 0.0
    %5523 = vmatpush1.msra.mxu0 0.0
    %5524 = vmatprep.subr.mxu0 0.0
    %5525 = vmatpush1.msra.mxu0 0.0
    %5526 = vmatprep.subr.mxu0 0.0
    %5527 = vmatpush1.msra.mxu0 0.0
    %5528 = vmatprep.subr.mxu0 0.0
    %5529 = vmatpush1.msra.mxu0 0.0
    %5530 = vmatprep.subr.mxu0 0.0
    %5531 = vmatpush1.msra.mxu0 0.0
    %5532 = vmatprep.subr.mxu0 0.0
    %5533 = vmatpush1.msra.mxu0 0.0
    %5534 = vmatprep.subr.mxu0 0.0
    %5535 = vmatpush1.msra.mxu0 0.0
    %5536 = vmatprep.subr.mxu0 0.0
    %5537 = vmatpush1.msra.mxu0 0.0
    %5538 = vmatprep.subr.mxu0 0.0
    %5539 = vmatpush1.msra.mxu0 0.0
    %5540 = vmatprep.subr.mxu0 0.0
    %5541 = vmatpush1.msra.mxu0 0.0
    %5542 = vmatprep.subr.mxu0 0.0
    %5543 = vmatpush1.msra.mxu0 0.0
    %5544 = vmatprep.subr.mxu0 0.0
    %5545 = vmatpush1.msra.mxu0 0.0
    %5546 = vmatprep.mubr.f32.mxu0 0.0
    %5547 = vmatmul.mubr.f32.gmra.mrb[0].mxu0 %v5481
    %v5548 = vpop.f32.mrb[0].mxu0
    %v5549 = vadd.f32 %v1605, %v5548
    %v5550 = vpop.f32.mrb[0].mxu0
    %v5551 = vadd.f32 %v1609, %v5550
    %5552 = vdwg.mxu0
    %5553 = vmatprep.subr.mxu0 0.0
    %5554 = vmatpush1.msra.mxu0 %v731
    %5555 = vmatprep.subr.mxu0 0.0
    %5556 = vmatpush1.msra.mxu0 %v734
    %5557 = vmatprep.subr.mxu0 0.0
    %5558 = vmatpush1.msra.mxu0 %v737
    %5559 = vmatprep.subr.mxu0 0.0
    %5560 = vmatpush1.msra.mxu0 %v740
    %5561 = vmatprep.subr.mxu0 0.0
    %5562 = vmatpush1.msra.mxu0 %v743
    %5563 = vmatprep.subr.mxu0 0.0
    %5564 = vmatpush1.msra.mxu0 %v746
    %5565 = vmatprep.subr.mxu0 0.0
    %5566 = vmatpush1.msra.mxu0 %v749
    %5567 = vmatprep.subr.mxu0 0.0
    %5568 = vmatpush1.msra.mxu0 %v752
    %5569 = vmatprep.subr.mxu0 0.0
    %5570 = vmatpush1.msra.mxu0 %v755
    %5571 = vmatprep.subr.mxu0 0.0
    %5572 = vmatpush1.msra.mxu0 %v758
    %5573 = vmatprep.subr.mxu0 0.0
    %5574 = vmatpush1.msra.mxu0 %v761
    %5575 = vmatprep.subr.mxu0 0.0
    %5576 = vmatpush1.msra.mxu0 %v764
    %5577 = vmatprep.subr.mxu0 0.0
    %5578 = vmatpush1.msra.mxu0 %v767
    %5579 = vmatprep.subr.mxu0 0.0
    %5580 = vmatpush1.msra.mxu0 %v770
    %5581 = vmatprep.subr.mxu0 0.0
    %5582 = vmatpush1.msra.mxu0 %v773
    %5583 = vmatprep.subr.mxu0 0.0
    %5584 = vmatpush1.msra.mxu0 %v776
    %5585 = vmatprep.subr.mxu0 0.0
    %5586 = vmatpush1.msra.mxu0 0.0
    %5587 = vmatprep.subr.mxu0 0.0
    %5588 = vmatpush1.msra.mxu0 0.0
    %5589 = vmatprep.subr.mxu0 0.0
    %5590 = vmatpush1.msra.mxu0 0.0
    %5591 = vmatprep.subr.mxu0 0.0
    %5592 = vmatpush1.msra.mxu0 0.0
    %5593 = vmatprep.subr.mxu0 0.0
    %5594 = vmatpush1.msra.mxu0 0.0
    %5595 = vmatprep.subr.mxu0 0.0
    %5596 = vmatpush1.msra.mxu0 0.0
    %5597 = vmatprep.subr.mxu0 0.0
    %5598 = vmatpush1.msra.mxu0 0.0
    %5599 = vmatprep.subr.mxu0 0.0
    %5600 = vmatpush1.msra.mxu0 0.0
    %5601 = vmatprep.subr.mxu0 0.0
    %5602 = vmatpush1.msra.mxu0 0.0
    %5603 = vmatprep.subr.mxu0 0.0
    %5604 = vmatpush1.msra.mxu0 0.0
    %5605 = vmatprep.subr.mxu0 0.0
    %5606 = vmatpush1.msra.mxu0 0.0
    %5607 = vmatprep.subr.mxu0 0.0
    %5608 = vmatpush1.msra.mxu0 0.0
    %5609 = vmatprep.subr.mxu0 0.0
    %5610 = vmatpush1.msra.mxu0 0.0
    %5611 = vmatprep.subr.mxu0 0.0
    %5612 = vmatpush1.msra.mxu0 0.0
    %5613 = vmatprep.subr.mxu0 0.0
    %5614 = vmatpush1.msra.mxu0 0.0
    %5615 = vmatprep.subr.mxu0 0.0
    %5616 = vmatpush1.msra.mxu0 0.0
    %5617 = vmatprep.mubr.f32.mxu0 0.0
    %5618 = vmatmul.mubr.f32.gmra.mrb[0].mxu0 %v5481
    %v5619 = vpop.f32.mrb[0].mxu0
    %v5620 = vadd.f32 %v1613, %v5619
    %v5621 = vpop.f32.mrb[0].mxu0
    %5622 = vdwg.mxu0
    %5623 = vmatprep.subr.mxu0 %v874
    %5624 = vmatpush1.msra.mxu0 %v873
    %5625 = vmatprep.subr.mxu0 %v877
    %5626 = vmatpush1.msra.mxu0 %v876
    %5627 = vmatprep.subr.mxu0 %v880
    %5628 = vmatpush1.msra.mxu0 %v879
    %5629 = vmatprep.subr.mxu0 %v883
    %5630 = vmatpush1.msra.mxu0 %v882
    %5631 = vmatprep.subr.mxu0 %v886
    %5632 = vmatpush1.msra.mxu0 %v885
    %5633 = vmatprep.subr.mxu0 %v889
    %5634 = vmatpush1.msra.mxu0 %v888
    %5635 = vmatprep.subr.mxu0 %v892
    %5636 = vmatpush1.msra.mxu0 %v891
    %5637 = vmatprep.subr.mxu0 %v895
    %5638 = vmatpush1.msra.mxu0 %v894
    %5639 = vmatprep.subr.mxu0 %v898
    %5640 = vmatpush1.msra.mxu0 %v897
    %5641 = vmatprep.subr.mxu0 %v901
    %5642 = vmatpush1.msra.mxu0 %v900
    %5643 = vmatprep.subr.mxu0 %v904
    %5644 = vmatpush1.msra.mxu0 %v903
    %5645 = vmatprep.subr.mxu0 %v907
    %5646 = vmatpush1.msra.mxu0 %v906
    %5647 = vmatprep.subr.mxu0 %v910
    %5648 = vmatpush1.msra.mxu0 %v909
    %5649 = vmatprep.subr.mxu0 %v913
    %5650 = vmatpush1.msra.mxu0 %v912
    %5651 = vmatprep.subr.mxu0 %v916
    %5652 = vmatpush1.msra.mxu0 %v915
    %5653 = vmatprep.subr.mxu0 %v919
    %5654 = vmatpush1.msra.mxu0 %v918
    %5655 = vmatprep.subr.mxu0 0.0
    %5656 = vmatpush1.msra.mxu0 0.0
    %5657 = vmatprep.subr.mxu0 0.0
    %5658 = vmatpush1.msra.mxu0 0.0
    %5659 = vmatprep.subr.mxu0 0.0
    %5660 = vmatpush1.msra.mxu0 0.0
    %5661 = vmatprep.subr.mxu0 0.0
    %5662 = vmatpush1.msra.mxu0 0.0
    %5663 = vmatprep.subr.mxu0 0.0
    %5664 = vmatpush1.msra.mxu0 0.0
    %5665 = vmatprep.subr.mxu0 0.0
    %5666 = vmatpush1.msra.mxu0 0.0
    %5667 = vmatprep.subr.mxu0 0.0
    %5668 = vmatpush1.msra.mxu0 0.0
    %5669 = vmatprep.subr.mxu0 0.0
    %5670 = vmatpush1.msra.mxu0 0.0
    %5671 = vmatprep.subr.mxu0 0.0
    %5672 = vmatpush1.msra.mxu0 0.0
    %5673 = vmatprep.subr.mxu0 0.0
    %5674 = vmatpush1.msra.mxu0 0.0
    %5675 = vmatprep.subr.mxu0 0.0
    %5676 = vmatpush1.msra.mxu0 0.0
    %5677 = vmatprep.subr.mxu0 0.0
    %5678 = vmatpush1.msra.mxu0 0.0
    %5679 = vmatprep.subr.mxu0 0.0
    %5680 = vmatpush1.msra.mxu0 0.0
    %5681 = vmatprep.subr.mxu0 0.0
    %5682 = vmatpush1.msra.mxu0 0.0
    %5683 = vmatprep.subr.mxu0 0.0
    %5684 = vmatpush1.msra.mxu0 0.0
    %5685 = vmatprep.subr.mxu0 0.0
    %5686 = vmatpush1.msra.mxu0 0.0
    %5687 = vmatprep.mubr.f32.mxu0 0.0
    %5688 = vmatmul.mubr.f32.gmra.mrb[0].mxu0 %v5014
    %v5689 = vpop.f32.mrb[0].mxu0
    %v5690 = vadd.f32 %v1762, %v5689
    %v5691 = vpop.f32.mrb[0].mxu0
    %v5692 = vadd.f32 %v1766, %v5691
    %5693 = vdwg.mxu0
    %5694 = vmatprep.subr.mxu0 0.0
    %5695 = vmatpush1.msra.mxu0 %v875
    %5696 = vmatprep.subr.mxu0 0.0
    %5697 = vmatpush1.msra.mxu0 %v878
    %5698 = vmatprep.subr.mxu0 0.0
    %5699 = vmatpush1.msra.mxu0 %v881
    %5700 = vmatprep.subr.mxu0 0.0
    %5701 = vmatpush1.msra.mxu0 %v884
    %5702 = vmatprep.subr.mxu0 0.0
    %5703 = vmatpush1.msra.mxu0 %v887
    %5704 = vmatprep.subr.mxu0 0.0
    %5705 = vmatpush1.msra.mxu0 %v890
    %5706 = vmatprep.subr.mxu0 0.0
    %5707 = vmatpush1.msra.mxu0 %v893
    %5708 = vmatprep.subr.mxu0 0.0
    %5709 = vmatpush1.msra.mxu0 %v896
    %5710 = vmatprep.subr.mxu0 0.0
    %5711 = vmatpush1.msra.mxu0 %v899
    %5712 = vmatprep.subr.mxu0 0.0
    %5713 = vmatpush1.msra.mxu0 %v902
    %5714 = vmatprep.subr.mxu0 0.0
    %5715 = vmatpush1.msra.mxu0 %v905
    %5716 = vmatprep.subr.mxu0 0.0
    %5717 = vmatpush1.msra.mxu0 %v908
    %5718 = vmatprep.subr.mxu0 0.0
    %5719 = vmatpush1.msra.mxu0 %v911
    %5720 = vmatprep.subr.mxu0 0.0
    %5721 = vmatpush1.msra.mxu0 %v914
    %5722 = vmatprep.subr.mxu0 0.0
    %5723 = vmatpush1.msra.mxu0 %v917
    %5724 = vmatprep.subr.mxu0 0.0
    %5725 = vmatpush1.msra.mxu0 %v920
    %5726 = vmatprep.subr.mxu0 0.0
    %5727 = vmatpush1.msra.mxu0 0.0
    %5728 = vmatprep.subr.mxu0 0.0
    %5729 = vmatpush1.msra.mxu0 0.0
    %5730 = vmatprep.subr.mxu0 0.0
    %5731 = vmatpush1.msra.mxu0 0.0
    %5732 = vmatprep.subr.mxu0 0.0
    %5733 = vmatpush1.msra.mxu0 0.0
    %5734 = vmatprep.subr.mxu0 0.0
    %5735 = vmatpush1.msra.mxu0 0.0
    %5736 = vmatprep.subr.mxu0 0.0
    %5737 = vmatpush1.msra.mxu0 0.0
    %5738 = vmatprep.subr.mxu0 0.0
    %5739 = vmatpush1.msra.mxu0 0.0
    %5740 = vmatprep.subr.mxu0 0.0
    %5741 = vmatpush1.msra.mxu0 0.0
    %5742 = vmatprep.subr.mxu0 0.0
    %5743 = vmatpush1.msra.mxu0 0.0
    %5744 = vmatprep.subr.mxu0 0.0
    %5745 = vmatpush1.msra.mxu0 0.0
    %5746 = vmatprep.subr.mxu0 0.0
    %5747 = vmatpush1.msra.mxu0 0.0
    %5748 = vmatprep.subr.mxu0 0.0
    %5749 = vmatpush1.msra.mxu0 0.0
    %5750 = vmatprep.subr.mxu0 0.0
    %5751 = vmatpush1.msra.mxu0 0.0
    %5752 = vmatprep.subr.mxu0 0.0
    %5753 = vmatpush1.msra.mxu0 0.0
    %5754 = vmatprep.subr.mxu0 0.0
    %5755 = vmatpush1.msra.mxu0 0.0
    %5756 = vmatprep.subr.mxu0 0.0
    %5757 = vmatpush1.msra.mxu0 0.0
    %5758 = vmatprep.mubr.f32.mxu0 0.0
    %5759 = vmatmul.mubr.f32.gmra.mrb[0].mxu0 %v5014
    %v5760 = vpop.f32.mrb[0].mxu0
    %v5761 = vadd.f32 %v1770, %v5760
    %v5762 = vpop.f32.mrb[0].mxu0
    %5763 = vdwg.mxu0
    %v5764 = vadd.f32 %v5549, %v5690
    %v5765 = vxor.u32 %v5764, 2147483648
    %v5766 = vmul.f32 %v5765, 1.442695
    %v5767 = vpow.pop %v5766
    %v5768 = vadd.f32 %v5767, 1.0
    %v5769 = vrcp.pop %v5768
    %v5770 = vmul.f32 1.0, %v5769
    %v5771 = vadd.f32 %v5551, %v5692
    %v5772 = vxor.u32 %v5771, 2147483648
    %v5773 = vmul.f32 %v5772, 1.442695
    %v5774 = vpow.pop %v5773
    %v5775 = vadd.f32 %v5774, 1.0
    %v5776 = vrcp.pop %v5775
    %v5777 = vmul.f32 1.0, %v5776
    %v5778 = vmul.f32 %v5770, %v5761
    %v5779 = vadd.f32 %v5620, %v5778
    %v5780 = vtanh.pop %v5779
    %v5781 = vsub.f32 1.0, %v5777
    %v5782 = vmul.f32 %v5781, %v5780
    %v5783 = vmul.f32 %v5777, %v5014
    %v5784 = vadd.f32 %v5782, %v5783
    %s5785 = scalar_lea.vmem %s26, 10
    %5786 = vst [vmem:[%s5785] sm:$0x3] %v5784
    %5787 = vmatprep.subr.mxu0 %v778
    %5788 = vmatpush1.msra.mxu0 %v777
    %5789 = vmatprep.subr.mxu0 %v781
    %5790 = vmatpush1.msra.mxu0 %v780
    %5791 = vmatprep.subr.mxu0 %v784
    %5792 = vmatpush1.msra.mxu0 %v783
    %5793 = vmatprep.subr.mxu0 %v787
    %5794 = vmatpush1.msra.mxu0 %v786
    %5795 = vmatprep.subr.mxu0 %v790
    %5796 = vmatpush1.msra.mxu0 %v789
    %5797 = vmatprep.subr.mxu0 %v793
    %5798 = vmatpush1.msra.mxu0 %v792
    %5799 = vmatprep.subr.mxu0 %v796
    %5800 = vmatpush1.msra.mxu0 %v795
    %5801 = vmatprep.subr.mxu0 %v799
    %5802 = vmatpush1.msra.mxu0 %v798
    %5803 = vmatprep.subr.mxu0 %v802
    %5804 = vmatpush1.msra.mxu0 %v801
    %5805 = vmatprep.subr.mxu0 %v805
    %5806 = vmatpush1.msra.mxu0 %v804
    %5807 = vmatprep.subr.mxu0 %v808
    %5808 = vmatpush1.msra.mxu0 %v807
    %5809 = vmatprep.subr.mxu0 %v811
    %5810 = vmatpush1.msra.mxu0 %v810
    %5811 = vmatprep.subr.mxu0 %v814
    %5812 = vmatpush1.msra.mxu0 %v813
    %5813 = vmatprep.subr.mxu0 %v817
    %5814 = vmatpush1.msra.mxu0 %v816
    %5815 = vmatprep.subr.mxu0 %v820
    %5816 = vmatpush1.msra.mxu0 %v819
    %5817 = vmatprep.subr.mxu0 %v823
    %5818 = vmatpush1.msra.mxu0 %v822
    %5819 = vmatprep.subr.mxu0 0.0
    %5820 = vmatpush1.msra.mxu0 0.0
    %5821 = vmatprep.subr.mxu0 0.0
    %5822 = vmatpush1.msra.mxu0 0.0
    %5823 = vmatprep.subr.mxu0 0.0
    %5824 = vmatpush1.msra.mxu0 0.0
    %5825 = vmatprep.subr.mxu0 0.0
    %5826 = vmatpush1.msra.mxu0 0.0
    %5827 = vmatprep.subr.mxu0 0.0
    %5828 = vmatpush1.msra.mxu0 0.0
    %5829 = vmatprep.subr.mxu0 0.0
    %5830 = vmatpush1.msra.mxu0 0.0
    %5831 = vmatprep.subr.mxu0 0.0
    %5832 = vmatpush1.msra.mxu0 0.0
    %5833 = vmatprep.subr.mxu0 0.0
    %5834 = vmatpush1.msra.mxu0 0.0
    %5835 = vmatprep.subr.mxu0 0.0
    %5836 = vmatpush1.msra.mxu0 0.0
    %5837 = vmatprep.subr.mxu0 0.0
    %5838 = vmatpush1.msra.mxu0 0.0
    %5839 = vmatprep.subr.mxu0 0.0
    %5840 = vmatpush1.msra.mxu0 0.0
    %5841 = vmatprep.subr.mxu0 0.0
    %5842 = vmatpush1.msra.mxu0 0.0
    %5843 = vmatprep.subr.mxu0 0.0
    %5844 = vmatpush1.msra.mxu0 0.0
    %5845 = vmatprep.subr.mxu0 0.0
    %5846 = vmatpush1.msra.mxu0 0.0
    %5847 = vmatprep.subr.mxu0 0.0
    %5848 = vmatpush1.msra.mxu0 0.0
    %5849 = vmatprep.subr.mxu0 0.0
    %5850 = vmatpush1.msra.mxu0 0.0
    %5851 = vmatprep.mubr.f32.mxu0 0.0
    %5852 = vmatmul.mubr.f32.gmra.mrb[0].mxu0 %v5178
    %v5853 = vpop.f32.mrb[0].mxu0
    %v5854 = vadd.f32 %v1092, %v5853
    %v5855 = vpop.f32.mrb[0].mxu0
    %v5856 = vadd.f32 %v1096, %v5855
    %5857 = vdwg.mxu0
    %5858 = vmatprep.subr.mxu0 0.0
    %5859 = vmatpush1.msra.mxu0 %v779
    %5860 = vmatprep.subr.mxu0 0.0
    %5861 = vmatpush1.msra.mxu0 %v782
    %5862 = vmatprep.subr.mxu0 0.0
    %5863 = vmatpush1.msra.mxu0 %v785
    %5864 = vmatprep.subr.mxu0 0.0
    %5865 = vmatpush1.msra.mxu0 %v788
    %5866 = vmatprep.subr.mxu0 0.0
    %5867 = vmatpush1.msra.mxu0 %v791
    %5868 = vmatprep.subr.mxu0 0.0
    %5869 = vmatpush1.msra.mxu0 %v794
    %5870 = vmatprep.subr.mxu0 0.0
    %5871 = vmatpush1.msra.mxu0 %v797
    %5872 = vmatprep.subr.mxu0 0.0
    %5873 = vmatpush1.msra.mxu0 %v800
    %5874 = vmatprep.subr.mxu0 0.0
    %5875 = vmatpush1.msra.mxu0 %v803
    %5876 = vmatprep.subr.mxu0 0.0
    %5877 = vmatpush1.msra.mxu0 %v806
    %5878 = vmatprep.subr.mxu0 0.0
    %5879 = vmatpush1.msra.mxu0 %v809
    %5880 = vmatprep.subr.mxu0 0.0
    %5881 = vmatpush1.msra.mxu0 %v812
    %5882 = vmatprep.subr.mxu0 0.0
    %5883 = vmatpush1.msra.mxu0 %v815
    %5884 = vmatprep.subr.mxu0 0.0
    %5885 = vmatpush1.msra.mxu0 %v818
    %5886 = vmatprep.subr.mxu0 0.0
    %5887 = vmatpush1.msra.mxu0 %v821
    %5888 = vmatprep.subr.mxu0 0.0
    %5889 = vmatpush1.msra.mxu0 %v824
    %5890 = vmatprep.subr.mxu0 0.0
    %5891 = vmatpush1.msra.mxu0 0.0
    %5892 = vmatprep.subr.mxu0 0.0
    %5893 = vmatpush1.msra.mxu0 0.0
    %5894 = vmatprep.subr.mxu0 0.0
    %5895 = vmatpush1.msra.mxu0 0.0
    %5896 = vmatprep.subr.mxu0 0.0
    %5897 = vmatpush1.msra.mxu0 0.0
    %5898 = vmatprep.subr.mxu0 0.0
    %5899 = vmatpush1.msra.mxu0 0.0
    %5900 = vmatprep.subr.mxu0 0.0
    %5901 = vmatpush1.msra.mxu0 0.0
    %5902 = vmatprep.subr.mxu0 0.0
    %5903 = vmatpush1.msra.mxu0 0.0
    %5904 = vmatprep.subr.mxu0 0.0
    %5905 = vmatpush1.msra.mxu0 0.0
    %5906 = vmatprep.subr.mxu0 0.0
    %5907 = vmatpush1.msra.mxu0 0.0
    %5908 = vmatprep.subr.mxu0 0.0
    %5909 = vmatpush1.msra.mxu0 0.0
    %5910 = vmatprep.subr.mxu0 0.0
    %5911 = vmatpush1.msra.mxu0 0.0
    %5912 = vmatprep.subr.mxu0 0.0
    %5913 = vmatpush1.msra.mxu0 0.0
    %5914 = vmatprep.subr.mxu0 0.0
    %5915 = vmatpush1.msra.mxu0 0.0
    %5916 = vmatprep.subr.mxu0 0.0
    %5917 = vmatpush1.msra.mxu0 0.0
    %5918 = vmatprep.subr.mxu0 0.0
    %5919 = vmatpush1.msra.mxu0 0.0
    %5920 = vmatprep.subr.mxu0 0.0
    %5921 = vmatpush1.msra.mxu0 0.0
    %5922 = vmatprep.mubr.f32.mxu0 0.0
    %5923 = vmatmul.mubr.f32.gmra.mrb[0].mxu0 %v5178
    %v5924 = vpop.f32.mrb[0].mxu0
    %v5925 = vadd.f32 %v1100, %v5924
    %v5926 = vpop.f32.mrb[0].mxu0
    %5927 = vdwg.mxu0
    %v5928 = vadd.f32 %v1014, %v5854
    %v5929 = vxor.u32 %v5928, 2147483648
    %v5930 = vmul.f32 %v5929, 1.442695
    %v5931 = vpow.pop %v5930
    %v5932 = vadd.f32 %v5931, 1.0
    %v5933 = vrcp.pop %v5932
    %v5934 = vmul.f32 1.0, %v5933
    %v5935 = vadd.f32 %v1016, %v5856
    %v5936 = vxor.u32 %v5935, 2147483648
    %v5937 = vmul.f32 %v5936, 1.442695
    %v5938 = vpow.pop %v5937
    %v5939 = vadd.f32 %v5938, 1.0
    %v5940 = vrcp.pop %v5939
    %v5941 = vmul.f32 1.0, %v5940
    %v5942 = vmul.f32 %v5934, %v5925
    %v5943 = vadd.f32 %v1085, %v5942
    %v5944 = vtanh.pop %v5943
    %v5945 = vsub.f32 1.0, %v5941
    %v5946 = vmul.f32 %v5945, %v5944
    %v5947 = vmul.f32 %v5941, %v5178
    %v5948 = vadd.f32 %v5946, %v5947
    %5949 = vmatprep.subr.mxu0 %v682
    %5950 = vmatpush1.msra.mxu0 %v681
    %5951 = vmatprep.subr.mxu0 %v685
    %5952 = vmatpush1.msra.mxu0 %v684
    %5953 = vmatprep.subr.mxu0 %v688
    %5954 = vmatpush1.msra.mxu0 %v687
    %5955 = vmatprep.subr.mxu0 %v691
    %5956 = vmatpush1.msra.mxu0 %v690
    %5957 = vmatprep.subr.mxu0 %v694
    %5958 = vmatpush1.msra.mxu0 %v693
    %5959 = vmatprep.subr.mxu0 %v697
    %5960 = vmatpush1.msra.mxu0 %v696
    %5961 = vmatprep.subr.mxu0 %v700
    %5962 = vmatpush1.msra.mxu0 %v699
    %5963 = vmatprep.subr.mxu0 %v703
    %5964 = vmatpush1.msra.mxu0 %v702
    %5965 = vmatprep.subr.mxu0 %v706
    %5966 = vmatpush1.msra.mxu0 %v705
    %5967 = vmatprep.subr.mxu0 %v709
    %5968 = vmatpush1.msra.mxu0 %v708
    %5969 = vmatprep.subr.mxu0 %v712
    %5970 = vmatpush1.msra.mxu0 %v711
    %5971 = vmatprep.subr.mxu0 %v715
    %5972 = vmatpush1.msra.mxu0 %v714
    %5973 = vmatprep.subr.mxu0 %v718
    %5974 = vmatpush1.msra.mxu0 %v717
    %5975 = vmatprep.subr.mxu0 %v721
    %5976 = vmatpush1.msra.mxu0 %v720
    %5977 = vmatprep.subr.mxu0 %v724
    %5978 = vmatpush1.msra.mxu0 %v723
    %5979 = vmatprep.subr.mxu0 %v727
    %5980 = vmatpush1.msra.mxu0 %v726
    %5981 = vmatprep.subr.mxu0 0.0
    %5982 = vmatpush1.msra.mxu0 0.0
    %5983 = vmatprep.subr.mxu0 0.0
    %5984 = vmatpush1.msra.mxu0 0.0
    %5985 = vmatprep.subr.mxu0 0.0
    %5986 = vmatpush1.msra.mxu0 0.0
    %5987 = vmatprep.subr.mxu0 0.0
    %5988 = vmatpush1.msra.mxu0 0.0
    %5989 = vmatprep.subr.mxu0 0.0
    %5990 = vmatpush1.msra.mxu0 0.0
    %5991 = vmatprep.subr.mxu0 0.0
    %5992 = vmatpush1.msra.mxu0 0.0
    %5993 = vmatprep.subr.mxu0 0.0
    %5994 = vmatpush1.msra.mxu0 0.0
    %5995 = vmatprep.subr.mxu0 0.0
    %5996 = vmatpush1.msra.mxu0 0.0
    %5997 = vmatprep.subr.mxu0 0.0
    %5998 = vmatpush1.msra.mxu0 0.0
    %5999 = vmatprep.subr.mxu0 0.0
    %6000 = vmatpush1.msra.mxu0 0.0
    %6001 = vmatprep.subr.mxu0 0.0
    %6002 = vmatpush1.msra.mxu0 0.0
    %6003 = vmatprep.subr.mxu0 0.0
    %6004 = vmatpush1.msra.mxu0 0.0
    %6005 = vmatprep.subr.mxu0 0.0
    %6006 = vmatpush1.msra.mxu0 0.0
    %6007 = vmatprep.subr.mxu0 0.0
    %6008 = vmatpush1.msra.mxu0 0.0
    %6009 = vmatprep.subr.mxu0 0.0
    %6010 = vmatpush1.msra.mxu0 0.0
    %6011 = vmatprep.subr.mxu0 0.0
    %6012 = vmatpush1.msra.mxu0 0.0
    %6013 = vmatprep.mubr.f32.mxu0 0.0
    %6014 = vmatmul.mubr.f32.gmra.mrb[0].mxu0 %v5948
    %v6015 = vpop.f32.mrb[0].mxu0
    %v6016 = vadd.f32 %v1270, %v6015
    %v6017 = vpop.f32.mrb[0].mxu0
    %v6018 = vadd.f32 %v1274, %v6017
    %6019 = vdwg.mxu0
    %6020 = vmatprep.subr.mxu0 0.0
    %6021 = vmatpush1.msra.mxu0 %v683
    %6022 = vmatprep.subr.mxu0 0.0
    %6023 = vmatpush1.msra.mxu0 %v686
    %6024 = vmatprep.subr.mxu0 0.0
    %6025 = vmatpush1.msra.mxu0 %v689
    %6026 = vmatprep.subr.mxu0 0.0
    %6027 = vmatpush1.msra.mxu0 %v692
    %6028 = vmatprep.subr.mxu0 0.0
    %6029 = vmatpush1.msra.mxu0 %v695
    %6030 = vmatprep.subr.mxu0 0.0
    %6031 = vmatpush1.msra.mxu0 %v698
    %6032 = vmatprep.subr.mxu0 0.0
    %6033 = vmatpush1.msra.mxu0 %v701
    %6034 = vmatprep.subr.mxu0 0.0
    %6035 = vmatpush1.msra.mxu0 %v704
    %6036 = vmatprep.subr.mxu0 0.0
    %6037 = vmatpush1.msra.mxu0 %v707
    %6038 = vmatprep.subr.mxu0 0.0
    %6039 = vmatpush1.msra.mxu0 %v710
    %6040 = vmatprep.subr.mxu0 0.0
    %6041 = vmatpush1.msra.mxu0 %v713
    %6042 = vmatprep.subr.mxu0 0.0
    %6043 = vmatpush1.msra.mxu0 %v716
    %6044 = vmatprep.subr.mxu0 0.0
    %6045 = vmatpush1.msra.mxu0 %v719
    %6046 = vmatprep.subr.mxu0 0.0
    %6047 = vmatpush1.msra.mxu0 %v722
    %6048 = vmatprep.subr.mxu0 0.0
    %6049 = vmatpush1.msra.mxu0 %v725
    %6050 = vmatprep.subr.mxu0 0.0
    %6051 = vmatpush1.msra.mxu0 %v728
    %6052 = vmatprep.subr.mxu0 0.0
    %6053 = vmatpush1.msra.mxu0 0.0
    %6054 = vmatprep.subr.mxu0 0.0
    %6055 = vmatpush1.msra.mxu0 0.0
    %6056 = vmatprep.subr.mxu0 0.0
    %6057 = vmatpush1.msra.mxu0 0.0
    %6058 = vmatprep.subr.mxu0 0.0
    %6059 = vmatpush1.msra.mxu0 0.0
    %6060 = vmatprep.subr.mxu0 0.0
    %6061 = vmatpush1.msra.mxu0 0.0
    %6062 = vmatprep.subr.mxu0 0.0
    %6063 = vmatpush1.msra.mxu0 0.0
    %6064 = vmatprep.subr.mxu0 0.0
    %6065 = vmatpush1.msra.mxu0 0.0
    %6066 = vmatprep.subr.mxu0 0.0
    %6067 = vmatpush1.msra.mxu0 0.0
    %6068 = vmatprep.subr.mxu0 0.0
    %6069 = vmatpush1.msra.mxu0 0.0
    %6070 = vmatprep.subr.mxu0 0.0
    %6071 = vmatpush1.msra.mxu0 0.0
    %6072 = vmatprep.subr.mxu0 0.0
    %6073 = vmatpush1.msra.mxu0 0.0
    %6074 = vmatprep.subr.mxu0 0.0
    %6075 = vmatpush1.msra.mxu0 0.0
    %6076 = vmatprep.subr.mxu0 0.0
    %6077 = vmatpush1.msra.mxu0 0.0
    %6078 = vmatprep.subr.mxu0 0.0
    %6079 = vmatpush1.msra.mxu0 0.0
    %6080 = vmatprep.subr.mxu0 0.0
    %6081 = vmatpush1.msra.mxu0 0.0
    %6082 = vmatprep.subr.mxu0 0.0
    %6083 = vmatpush1.msra.mxu0 0.0
    %6084 = vmatprep.mubr.f32.mxu0 0.0
    %6085 = vmatmul.mubr.f32.gmra.mrb[0].mxu0 %v5948
    %v6086 = vpop.f32.mrb[0].mxu0
    %v6087 = vadd.f32 %v1278, %v6086
    %v6088 = vpop.f32.mrb[0].mxu0
    %6089 = vdwg.mxu0
    %6090 = vmatprep.subr.mxu0 %v826
    %6091 = vmatpush1.msra.mxu0 %v825
    %6092 = vmatprep.subr.mxu0 %v829
    %6093 = vmatpush1.msra.mxu0 %v828
    %6094 = vmatprep.subr.mxu0 %v832
    %6095 = vmatpush1.msra.mxu0 %v831
    %6096 = vmatprep.subr.mxu0 %v835
    %6097 = vmatpush1.msra.mxu0 %v834
    %6098 = vmatprep.subr.mxu0 %v838
    %6099 = vmatpush1.msra.mxu0 %v837
    %6100 = vmatprep.subr.mxu0 %v841
    %6101 = vmatpush1.msra.mxu0 %v840
    %6102 = vmatprep.subr.mxu0 %v844
    %6103 = vmatpush1.msra.mxu0 %v843
    %6104 = vmatprep.subr.mxu0 %v847
    %6105 = vmatpush1.msra.mxu0 %v846
    %6106 = vmatprep.subr.mxu0 %v850
    %6107 = vmatpush1.msra.mxu0 %v849
    %6108 = vmatprep.subr.mxu0 %v853
    %6109 = vmatpush1.msra.mxu0 %v852
    %6110 = vmatprep.subr.mxu0 %v856
    %6111 = vmatpush1.msra.mxu0 %v855
    %6112 = vmatprep.subr.mxu0 %v859
    %6113 = vmatpush1.msra.mxu0 %v858
    %6114 = vmatprep.subr.mxu0 %v862
    %6115 = vmatpush1.msra.mxu0 %v861
    %6116 = vmatprep.subr.mxu0 %v865
    %6117 = vmatpush1.msra.mxu0 %v864
    %6118 = vmatprep.subr.mxu0 %v868
    %6119 = vmatpush1.msra.mxu0 %v867
    %6120 = vmatprep.subr.mxu0 %v871
    %6121 = vmatpush1.msra.mxu0 %v870
    %6122 = vmatprep.subr.mxu0 0.0
    %6123 = vmatpush1.msra.mxu0 0.0
    %6124 = vmatprep.subr.mxu0 0.0
    %6125 = vmatpush1.msra.mxu0 0.0
    %6126 = vmatprep.subr.mxu0 0.0
    %6127 = vmatpush1.msra.mxu0 0.0
    %6128 = vmatprep.subr.mxu0 0.0
    %6129 = vmatpush1.msra.mxu0 0.0
    %6130 = vmatprep.subr.mxu0 0.0
    %6131 = vmatpush1.msra.mxu0 0.0
    %6132 = vmatprep.subr.mxu0 0.0
    %6133 = vmatpush1.msra.mxu0 0.0
    %6134 = vmatprep.subr.mxu0 0.0
    %6135 = vmatpush1.msra.mxu0 0.0
    %6136 = vmatprep.subr.mxu0 0.0
    %6137 = vmatpush1.msra.mxu0 0.0
    %6138 = vmatprep.subr.mxu0 0.0
    %6139 = vmatpush1.msra.mxu0 0.0
    %6140 = vmatprep.subr.mxu0 0.0
    %6141 = vmatpush1.msra.mxu0 0.0
    %6142 = vmatprep.subr.mxu0 0.0
    %6143 = vmatpush1.msra.mxu0 0.0
    %6144 = vmatprep.subr.mxu0 0.0
    %6145 = vmatpush1.msra.mxu0 0.0
    %6146 = vmatprep.subr.mxu0 0.0
    %6147 = vmatpush1.msra.mxu0 0.0
    %6148 = vmatprep.subr.mxu0 0.0
    %6149 = vmatpush1.msra.mxu0 0.0
    %6150 = vmatprep.subr.mxu0 0.0
    %6151 = vmatpush1.msra.mxu0 0.0
    %6152 = vmatprep.subr.mxu0 0.0
    %6153 = vmatpush1.msra.mxu0 0.0
    %6154 = vmatprep.mubr.f32.mxu0 0.0
    %6155 = vmatmul.mubr.f32.gmra.mrb[0].mxu0 %v5481
    %v6156 = vpop.f32.mrb[0].mxu0
    %v6157 = vadd.f32 %v1427, %v6156
    %v6158 = vpop.f32.mrb[0].mxu0
    %v6159 = vadd.f32 %v1431, %v6158
    %6160 = vdwg.mxu0
    %6161 = vmatprep.subr.mxu0 0.0
    %6162 = vmatpush1.msra.mxu0 %v827
    %6163 = vmatprep.subr.mxu0 0.0
    %6164 = vmatpush1.msra.mxu0 %v830
    %6165 = vmatprep.subr.mxu0 0.0
    %6166 = vmatpush1.msra.mxu0 %v833
    %6167 = vmatprep.subr.mxu0 0.0
    %6168 = vmatpush1.msra.mxu0 %v836
    %6169 = vmatprep.subr.mxu0 0.0
    %6170 = vmatpush1.msra.mxu0 %v839
    %6171 = vmatprep.subr.mxu0 0.0
    %6172 = vmatpush1.msra.mxu0 %v842
    %6173 = vmatprep.subr.mxu0 0.0
    %6174 = vmatpush1.msra.mxu0 %v845
    %6175 = vmatprep.subr.mxu0 0.0
    %6176 = vmatpush1.msra.mxu0 %v848
    %6177 = vmatprep.subr.mxu0 0.0
    %6178 = vmatpush1.msra.mxu0 %v851
    %6179 = vmatprep.subr.mxu0 0.0
    %6180 = vmatpush1.msra.mxu0 %v854
    %6181 = vmatprep.subr.mxu0 0.0
    %6182 = vmatpush1.msra.mxu0 %v857
    %6183 = vmatprep.subr.mxu0 0.0
    %6184 = vmatpush1.msra.mxu0 %v860
    %6185 = vmatprep.subr.mxu0 0.0
    %6186 = vmatpush1.msra.mxu0 %v863
    %6187 = vmatprep.subr.mxu0 0.0
    %6188 = vmatpush1.msra.mxu0 %v866
    %6189 = vmatprep.subr.mxu0 0.0
    %6190 = vmatpush1.msra.mxu0 %v869
    %6191 = vmatprep.subr.mxu0 0.0
    %6192 = vmatpush1.msra.mxu0 %v872
    %6193 = vmatprep.subr.mxu0 0.0
    %6194 = vmatpush1.msra.mxu0 0.0
    %6195 = vmatprep.subr.mxu0 0.0
    %6196 = vmatpush1.msra.mxu0 0.0
    %6197 = vmatprep.subr.mxu0 0.0
    %6198 = vmatpush1.msra.mxu0 0.0
    %6199 = vmatprep.subr.mxu0 0.0
    %6200 = vmatpush1.msra.mxu0 0.0
    %6201 = vmatprep.subr.mxu0 0.0
    %6202 = vmatpush1.msra.mxu0 0.0
    %6203 = vmatprep.subr.mxu0 0.0
    %6204 = vmatpush1.msra.mxu0 0.0
    %6205 = vmatprep.subr.mxu0 0.0
    %6206 = vmatpush1.msra.mxu0 0.0
    %6207 = vmatprep.subr.mxu0 0.0
    %6208 = vmatpush1.msra.mxu0 0.0
    %6209 = vmatprep.subr.mxu0 0.0
    %6210 = vmatpush1.msra.mxu0 0.0
    %6211 = vmatprep.subr.mxu0 0.0
    %6212 = vmatpush1.msra.mxu0 0.0
    %6213 = vmatprep.subr.mxu0 0.0
    %6214 = vmatpush1.msra.mxu0 0.0
    %6215 = vmatprep.subr.mxu0 0.0
    %6216 = vmatpush1.msra.mxu0 0.0
    %6217 = vmatprep.subr.mxu0 0.0
    %6218 = vmatpush1.msra.mxu0 0.0
    %6219 = vmatprep.subr.mxu0 0.0
    %6220 = vmatpush1.msra.mxu0 0.0
    %6221 = vmatprep.subr.mxu0 0.0
    %6222 = vmatpush1.msra.mxu0 0.0
    %6223 = vmatprep.subr.mxu0 0.0
    %6224 = vmatpush1.msra.mxu0 0.0
    %6225 = vmatprep.mubr.f32.mxu0 0.0
    %6226 = vmatmul.mubr.f32.gmra.mrb[0].mxu0 %v5481
    %v6227 = vpop.f32.mrb[0].mxu0
    %v6228 = vadd.f32 %v1435, %v6227
    %v6229 = vpop.f32.mrb[0].mxu0
    %6230 = vdwg.mxu0
    %v6231 = vadd.f32 %v6016, %v6157
    %v6232 = vxor.u32 %v6231, 2147483648
    %v6233 = vmul.f32 %v6232, 1.442695
    %v6234 = vpow.pop %v6233
    %v6235 = vadd.f32 %v6234, 1.0
    %v6236 = vrcp.pop %v6235
    %v6237 = vmul.f32 1.0, %v6236
    %v6238 = vadd.f32 %v6018, %v6159
    %v6239 = vxor.u32 %v6238, 2147483648
    %v6240 = vmul.f32 %v6239, 1.442695
    %v6241 = vpow.pop %v6240
    %v6242 = vadd.f32 %v6241, 1.0
    %v6243 = vrcp.pop %v6242
    %v6244 = vmul.f32 1.0, %v6243
    %v6245 = vmul.f32 %v6237, %v6228
    %v6246 = vadd.f32 %v6087, %v6245
    %v6247 = vtanh.pop %v6246
    %v6248 = vsub.f32 1.0, %v6244
    %v6249 = vmul.f32 %v6248, %v6247
    %v6250 = vmul.f32 %v6244, %v5481
    %v6251 = vadd.f32 %v6249, %v6250
    %6252 = vmatprep.subr.mxu0 %v730
    %6253 = vmatpush1.msra.mxu0 %v729
    %6254 = vmatprep.subr.mxu0 %v733
    %6255 = vmatpush1.msra.mxu0 %v732
    %6256 = vmatprep.subr.mxu0 %v736
    %6257 = vmatpush1.msra.mxu0 %v735
    %6258 = vmatprep.subr.mxu0 %v739
    %6259 = vmatpush1.msra.mxu0 %v738
    %6260 = vmatprep.subr.mxu0 %v742
    %6261 = vmatpush1.msra.mxu0 %v741
    %6262 = vmatprep.subr.mxu0 %v745
    %6263 = vmatpush1.msra.mxu0 %v744
    %6264 = vmatprep.subr.mxu0 %v748
    %6265 = vmatpush1.msra.mxu0 %v747
    %6266 = vmatprep.subr.mxu0 %v751
    %6267 = vmatpush1.msra.mxu0 %v750
    %6268 = vmatprep.subr.mxu0 %v754
    %6269 = vmatpush1.msra.mxu0 %v753
    %6270 = vmatprep.subr.mxu0 %v757
    %6271 = vmatpush1.msra.mxu0 %v756
    %6272 = vmatprep.subr.mxu0 %v760
    %6273 = vmatpush1.msra.mxu0 %v759
    %6274 = vmatprep.subr.mxu0 %v763
    %6275 = vmatpush1.msra.mxu0 %v762
    %6276 = vmatprep.subr.mxu0 %v766
    %6277 = vmatpush1.msra.mxu0 %v765
    %6278 = vmatprep.subr.mxu0 %v769
    %6279 = vmatpush1.msra.mxu0 %v768
    %6280 = vmatprep.subr.mxu0 %v772
    %6281 = vmatpush1.msra.mxu0 %v771
    %6282 = vmatprep.subr.mxu0 %v775
    %6283 = vmatpush1.msra.mxu0 %v774
    %6284 = vmatprep.subr.mxu0 0.0
    %6285 = vmatpush1.msra.mxu0 0.0
    %6286 = vmatprep.subr.mxu0 0.0
    %6287 = vmatpush1.msra.mxu0 0.0
    %6288 = vmatprep.subr.mxu0 0.0
    %6289 = vmatpush1.msra.mxu0 0.0
    %6290 = vmatprep.subr.mxu0 0.0
    %6291 = vmatpush1.msra.mxu0 0.0
    %6292 = vmatprep.subr.mxu0 0.0
    %6293 = vmatpush1.msra.mxu0 0.0
    %6294 = vmatprep.subr.mxu0 0.0
    %6295 = vmatpush1.msra.mxu0 0.0
    %6296 = vmatprep.subr.mxu0 0.0
    %6297 = vmatpush1.msra.mxu0 0.0
    %6298 = vmatprep.subr.mxu0 0.0
    %6299 = vmatpush1.msra.mxu0 0.0
    %6300 = vmatprep.subr.mxu0 0.0
    %6301 = vmatpush1.msra.mxu0 0.0
    %6302 = vmatprep.subr.mxu0 0.0
    %6303 = vmatpush1.msra.mxu0 0.0
    %6304 = vmatprep.subr.mxu0 0.0
    %6305 = vmatpush1.msra.mxu0 0.0
    %6306 = vmatprep.subr.mxu0 0.0
    %6307 = vmatpush1.msra.mxu0 0.0
    %6308 = vmatprep.subr.mxu0 0.0
    %6309 = vmatpush1.msra.mxu0 0.0
    %6310 = vmatprep.subr.mxu0 0.0
    %6311 = vmatpush1.msra.mxu0 0.0
    %6312 = vmatprep.subr.mxu0 0.0
    %6313 = vmatpush1.msra.mxu0 0.0
    %6314 = vmatprep.subr.mxu0 0.0
    %6315 = vmatpush1.msra.mxu0 0.0
    %6316 = vmatprep.mubr.f32.mxu0 0.0
    %6317 = vmatmul.mubr.f32.gmra.mrb[0].mxu0 %v6251
    %v6318 = vpop.f32.mrb[0].mxu0
    %v6319 = vadd.f32 %v1605, %v6318
    %v6320 = vpop.f32.mrb[0].mxu0
    %v6321 = vadd.f32 %v1609, %v6320
    %6322 = vdwg.mxu0
    %6323 = vmatprep.subr.mxu0 0.0
    %6324 = vmatpush1.msra.mxu0 %v731
    %6325 = vmatprep.subr.mxu0 0.0
    %6326 = vmatpush1.msra.mxu0 %v734
    %6327 = vmatprep.subr.mxu0 0.0
    %6328 = vmatpush1.msra.mxu0 %v737
    %6329 = vmatprep.subr.mxu0 0.0
    %6330 = vmatpush1.msra.mxu0 %v740
    %6331 = vmatprep.subr.mxu0 0.0
    %6332 = vmatpush1.msra.mxu0 %v743
    %6333 = vmatprep.subr.mxu0 0.0
    %6334 = vmatpush1.msra.mxu0 %v746
    %6335 = vmatprep.subr.mxu0 0.0
    %6336 = vmatpush1.msra.mxu0 %v749
    %6337 = vmatprep.subr.mxu0 0.0
    %6338 = vmatpush1.msra.mxu0 %v752
    %6339 = vmatprep.subr.mxu0 0.0
    %6340 = vmatpush1.msra.mxu0 %v755
    %6341 = vmatprep.subr.mxu0 0.0
    %6342 = vmatpush1.msra.mxu0 %v758
    %6343 = vmatprep.subr.mxu0 0.0
    %6344 = vmatpush1.msra.mxu0 %v761
    %6345 = vmatprep.subr.mxu0 0.0
    %6346 = vmatpush1.msra.mxu0 %v764
    %6347 = vmatprep.subr.mxu0 0.0
    %6348 = vmatpush1.msra.mxu0 %v767
    %6349 = vmatprep.subr.mxu0 0.0
    %6350 = vmatpush1.msra.mxu0 %v770
    %6351 = vmatprep.subr.mxu0 0.0
    %6352 = vmatpush1.msra.mxu0 %v773
    %6353 = vmatprep.subr.mxu0 0.0
    %6354 = vmatpush1.msra.mxu0 %v776
    %6355 = vmatprep.subr.mxu0 0.0
    %6356 = vmatpush1.msra.mxu0 0.0
    %6357 = vmatprep.subr.mxu0 0.0
    %6358 = vmatpush1.msra.mxu0 0.0
    %6359 = vmatprep.subr.mxu0 0.0
    %6360 = vmatpush1.msra.mxu0 0.0
    %6361 = vmatprep.subr.mxu0 0.0
    %6362 = vmatpush1.msra.mxu0 0.0
    %6363 = vmatprep.subr.mxu0 0.0
    %6364 = vmatpush1.msra.mxu0 0.0
    %6365 = vmatprep.subr.mxu0 0.0
    %6366 = vmatpush1.msra.mxu0 0.0
    %6367 = vmatprep.subr.mxu0 0.0
    %6368 = vmatpush1.msra.mxu0 0.0
    %6369 = vmatprep.subr.mxu0 0.0
    %6370 = vmatpush1.msra.mxu0 0.0
    %6371 = vmatprep.subr.mxu0 0.0
    %6372 = vmatpush1.msra.mxu0 0.0
    %6373 = vmatprep.subr.mxu0 0.0
    %6374 = vmatpush1.msra.mxu0 0.0
    %6375 = vmatprep.subr.mxu0 0.0
    %6376 = vmatpush1.msra.mxu0 0.0
    %6377 = vmatprep.subr.mxu0 0.0
    %6378 = vmatpush1.msra.mxu0 0.0
    %6379 = vmatprep.subr.mxu0 0.0
    %6380 = vmatpush1.msra.mxu0 0.0
    %6381 = vmatprep.subr.mxu0 0.0
    %6382 = vmatpush1.msra.mxu0 0.0
    %6383 = vmatprep.subr.mxu0 0.0
    %6384 = vmatpush1.msra.mxu0 0.0
    %6385 = vmatprep.subr.mxu0 0.0
    %6386 = vmatpush1.msra.mxu0 0.0
    %6387 = vmatprep.mubr.f32.mxu0 0.0
    %6388 = vmatmul.mubr.f32.gmra.mrb[0].mxu0 %v6251
    %v6389 = vpop.f32.mrb[0].mxu0
    %v6390 = vadd.f32 %v1613, %v6389
    %v6391 = vpop.f32.mrb[0].mxu0
    %6392 = vdwg.mxu0
    %6393 = vmatprep.subr.mxu0 %v874
    %6394 = vmatpush1.msra.mxu0 %v873
    %6395 = vmatprep.subr.mxu0 %v877
    %6396 = vmatpush1.msra.mxu0 %v876
    %6397 = vmatprep.subr.mxu0 %v880
    %6398 = vmatpush1.msra.mxu0 %v879
    %6399 = vmatprep.subr.mxu0 %v883
    %6400 = vmatpush1.msra.mxu0 %v882
    %6401 = vmatprep.subr.mxu0 %v886
    %6402 = vmatpush1.msra.mxu0 %v885
    %6403 = vmatprep.subr.mxu0 %v889
    %6404 = vmatpush1.msra.mxu0 %v888
    %6405 = vmatprep.subr.mxu0 %v892
    %6406 = vmatpush1.msra.mxu0 %v891
    %6407 = vmatprep.subr.mxu0 %v895
    %6408 = vmatpush1.msra.mxu0 %v894
    %6409 = vmatprep.subr.mxu0 %v898
    %6410 = vmatpush1.msra.mxu0 %v897
    %6411 = vmatprep.subr.mxu0 %v901
    %6412 = vmatpush1.msra.mxu0 %v900
    %6413 = vmatprep.subr.mxu0 %v904
    %6414 = vmatpush1.msra.mxu0 %v903
    %6415 = vmatprep.subr.mxu0 %v907
    %6416 = vmatpush1.msra.mxu0 %v906
    %6417 = vmatprep.subr.mxu0 %v910
    %6418 = vmatpush1.msra.mxu0 %v909
    %6419 = vmatprep.subr.mxu0 %v913
    %6420 = vmatpush1.msra.mxu0 %v912
    %6421 = vmatprep.subr.mxu0 %v916
    %6422 = vmatpush1.msra.mxu0 %v915
    %6423 = vmatprep.subr.mxu0 %v919
    %6424 = vmatpush1.msra.mxu0 %v918
    %6425 = vmatprep.subr.mxu0 0.0
    %6426 = vmatpush1.msra.mxu0 0.0
    %6427 = vmatprep.subr.mxu0 0.0
    %6428 = vmatpush1.msra.mxu0 0.0
    %6429 = vmatprep.subr.mxu0 0.0
    %6430 = vmatpush1.msra.mxu0 0.0
    %6431 = vmatprep.subr.mxu0 0.0
    %6432 = vmatpush1.msra.mxu0 0.0
    %6433 = vmatprep.subr.mxu0 0.0
    %6434 = vmatpush1.msra.mxu0 0.0
    %6435 = vmatprep.subr.mxu0 0.0
    %6436 = vmatpush1.msra.mxu0 0.0
    %6437 = vmatprep.subr.mxu0 0.0
    %6438 = vmatpush1.msra.mxu0 0.0
    %6439 = vmatprep.subr.mxu0 0.0
    %6440 = vmatpush1.msra.mxu0 0.0
    %6441 = vmatprep.subr.mxu0 0.0
    %6442 = vmatpush1.msra.mxu0 0.0
    %6443 = vmatprep.subr.mxu0 0.0
    %6444 = vmatpush1.msra.mxu0 0.0
    %6445 = vmatprep.subr.mxu0 0.0
    %6446 = vmatpush1.msra.mxu0 0.0
    %6447 = vmatprep.subr.mxu0 0.0
    %6448 = vmatpush1.msra.mxu0 0.0
    %6449 = vmatprep.subr.mxu0 0.0
    %6450 = vmatpush1.msra.mxu0 0.0
    %6451 = vmatprep.subr.mxu0 0.0
    %6452 = vmatpush1.msra.mxu0 0.0
    %6453 = vmatprep.subr.mxu0 0.0
    %6454 = vmatpush1.msra.mxu0 0.0
    %6455 = vmatprep.subr.mxu0 0.0
    %6456 = vmatpush1.msra.mxu0 0.0
    %6457 = vmatprep.mubr.f32.mxu0 0.0
    %6458 = vmatmul.mubr.f32.gmra.mrb[0].mxu0 %v5784
    %v6459 = vpop.f32.mrb[0].mxu0
    %v6460 = vadd.f32 %v1762, %v6459
    %v6461 = vpop.f32.mrb[0].mxu0
    %v6462 = vadd.f32 %v1766, %v6461
    %6463 = vdwg.mxu0
    %6464 = vmatprep.subr.mxu0 0.0
    %6465 = vmatpush1.msra.mxu0 %v875
    %6466 = vmatprep.subr.mxu0 0.0
    %6467 = vmatpush1.msra.mxu0 %v878
    %6468 = vmatprep.subr.mxu0 0.0
    %6469 = vmatpush1.msra.mxu0 %v881
    %6470 = vmatprep.subr.mxu0 0.0
    %6471 = vmatpush1.msra.mxu0 %v884
    %6472 = vmatprep.subr.mxu0 0.0
    %6473 = vmatpush1.msra.mxu0 %v887
    %6474 = vmatprep.subr.mxu0 0.0
    %6475 = vmatpush1.msra.mxu0 %v890
    %6476 = vmatprep.subr.mxu0 0.0
    %6477 = vmatpush1.msra.mxu0 %v893
    %6478 = vmatprep.subr.mxu0 0.0
    %6479 = vmatpush1.msra.mxu0 %v896
    %6480 = vmatprep.subr.mxu0 0.0
    %6481 = vmatpush1.msra.mxu0 %v899
    %6482 = vmatprep.subr.mxu0 0.0
    %6483 = vmatpush1.msra.mxu0 %v902
    %6484 = vmatprep.subr.mxu0 0.0
    %6485 = vmatpush1.msra.mxu0 %v905
    %6486 = vmatprep.subr.mxu0 0.0
    %6487 = vmatpush1.msra.mxu0 %v908
    %6488 = vmatprep.subr.mxu0 0.0
    %6489 = vmatpush1.msra.mxu0 %v911
    %6490 = vmatprep.subr.mxu0 0.0
    %6491 = vmatpush1.msra.mxu0 %v914
    %6492 = vmatprep.subr.mxu0 0.0
    %6493 = vmatpush1.msra.mxu0 %v917
    %6494 = vmatprep.subr.mxu0 0.0
    %6495 = vmatpush1.msra.mxu0 %v920
    %6496 = vmatprep.subr.mxu0 0.0
    %6497 = vmatpush1.msra.mxu0 0.0
    %6498 = vmatprep.subr.mxu0 0.0
    %6499 = vmatpush1.msra.mxu0 0.0
    %6500 = vmatprep.subr.mxu0 0.0
    %6501 = vmatpush1.msra.mxu0 0.0
    %6502 = vmatprep.subr.mxu0 0.0
    %6503 = vmatpush1.msra.mxu0 0.0
    %6504 = vmatprep.subr.mxu0 0.0
    %6505 = vmatpush1.msra.mxu0 0.0
    %6506 = vmatprep.subr.mxu0 0.0
    %6507 = vmatpush1.msra.mxu0 0.0
    %6508 = vmatprep.subr.mxu0 0.0
    %6509 = vmatpush1.msra.mxu0 0.0
    %6510 = vmatprep.subr.mxu0 0.0
    %6511 = vmatpush1.msra.mxu0 0.0
    %6512 = vmatprep.subr.mxu0 0.0
    %6513 = vmatpush1.msra.mxu0 0.0
    %6514 = vmatprep.subr.mxu0 0.0
    %6515 = vmatpush1.msra.mxu0 0.0
    %6516 = vmatprep.subr.mxu0 0.0
    %6517 = vmatpush1.msra.mxu0 0.0
    %6518 = vmatprep.subr.mxu0 0.0
    %6519 = vmatpush1.msra.mxu0 0.0
    %6520 = vmatprep.subr.mxu0 0.0
    %6521 = vmatpush1.msra.mxu0 0.0
    %6522 = vmatprep.subr.mxu0 0.0
    %6523 = vmatpush1.msra.mxu0 0.0
    %6524 = vmatprep.subr.mxu0 0.0
    %6525 = vmatpush1.msra.mxu0 0.0
    %6526 = vmatprep.subr.mxu0 0.0
    %6527 = vmatpush1.msra.mxu0 0.0
    %6528 = vmatprep.mubr.f32.mxu0 0.0
    %6529 = vmatmul.mubr.f32.gmra.mrb[0].mxu0 %v5784
    %v6530 = vpop.f32.mrb[0].mxu0
    %v6531 = vadd.f32 %v1770, %v6530
    %v6532 = vpop.f32.mrb[0].mxu0
    %6533 = vdwg.mxu0
    %v6534 = vadd.f32 %v6319, %v6460
    %v6535 = vxor.u32 %v6534, 2147483648
    %v6536 = vmul.f32 %v6535, 1.442695
    %v6537 = vpow.pop %v6536
    %v6538 = vadd.f32 %v6537, 1.0
    %v6539 = vrcp.pop %v6538
    %v6540 = vmul.f32 1.0, %v6539
    %v6541 = vadd.f32 %v6321, %v6462
    %v6542 = vxor.u32 %v6541, 2147483648
    %v6543 = vmul.f32 %v6542, 1.442695
    %v6544 = vpow.pop %v6543
    %v6545 = vadd.f32 %v6544, 1.0
    %v6546 = vrcp.pop %v6545
    %v6547 = vmul.f32 1.0, %v6546
    %v6548 = vmul.f32 %v6540, %v6531
    %v6549 = vadd.f32 %v6390, %v6548
    %v6550 = vtanh.pop %v6549
    %v6551 = vsub.f32 1.0, %v6547
    %v6552 = vmul.f32 %v6551, %v6550
    %v6553 = vmul.f32 %v6547, %v5784
    %v6554 = vadd.f32 %v6552, %v6553
    %s6555 = scalar_lea.vmem %s26, 12
    %6556 = vst [vmem:[%s6555] sm:$0x3] %v6554
    %6557 = vmatprep.subr.mxu0 %v778
    %6558 = vmatpush1.msra.mxu0 %v777
    %6559 = vmatprep.subr.mxu0 %v781
    %6560 = vmatpush1.msra.mxu0 %v780
    %6561 = vmatprep.subr.mxu0 %v784
    %6562 = vmatpush1.msra.mxu0 %v783
    %6563 = vmatprep.subr.mxu0 %v787
    %6564 = vmatpush1.msra.mxu0 %v786
    %6565 = vmatprep.subr.mxu0 %v790
    %6566 = vmatpush1.msra.mxu0 %v789
    %6567 = vmatprep.subr.mxu0 %v793
    %6568 = vmatpush1.msra.mxu0 %v792
    %6569 = vmatprep.subr.mxu0 %v796
    %6570 = vmatpush1.msra.mxu0 %v795
    %6571 = vmatprep.subr.mxu0 %v799
    %6572 = vmatpush1.msra.mxu0 %v798
    %6573 = vmatprep.subr.mxu0 %v802
    %6574 = vmatpush1.msra.mxu0 %v801
    %6575 = vmatprep.subr.mxu0 %v805
    %6576 = vmatpush1.msra.mxu0 %v804
    %6577 = vmatprep.subr.mxu0 %v808
    %6578 = vmatpush1.msra.mxu0 %v807
    %6579 = vmatprep.subr.mxu0 %v811
    %6580 = vmatpush1.msra.mxu0 %v810
    %6581 = vmatprep.subr.mxu0 %v814
    %6582 = vmatpush1.msra.mxu0 %v813
    %6583 = vmatprep.subr.mxu0 %v817
    %6584 = vmatpush1.msra.mxu0 %v816
    %6585 = vmatprep.subr.mxu0 %v820
    %6586 = vmatpush1.msra.mxu0 %v819
    %6587 = vmatprep.subr.mxu0 %v823
    %6588 = vmatpush1.msra.mxu0 %v822
    %6589 = vmatprep.subr.mxu0 0.0
    %6590 = vmatpush1.msra.mxu0 0.0
    %6591 = vmatprep.subr.mxu0 0.0
    %6592 = vmatpush1.msra.mxu0 0.0
    %6593 = vmatprep.subr.mxu0 0.0
    %6594 = vmatpush1.msra.mxu0 0.0
    %6595 = vmatprep.subr.mxu0 0.0
    %6596 = vmatpush1.msra.mxu0 0.0
    %6597 = vmatprep.subr.mxu0 0.0
    %6598 = vmatpush1.msra.mxu0 0.0
    %6599 = vmatprep.subr.mxu0 0.0
    %6600 = vmatpush1.msra.mxu0 0.0
    %6601 = vmatprep.subr.mxu0 0.0
    %6602 = vmatpush1.msra.mxu0 0.0
    %6603 = vmatprep.subr.mxu0 0.0
    %6604 = vmatpush1.msra.mxu0 0.0
    %6605 = vmatprep.subr.mxu0 0.0
    %6606 = vmatpush1.msra.mxu0 0.0
    %6607 = vmatprep.subr.mxu0 0.0
    %6608 = vmatpush1.msra.mxu0 0.0
    %6609 = vmatprep.subr.mxu0 0.0
    %6610 = vmatpush1.msra.mxu0 0.0
    %6611 = vmatprep.subr.mxu0 0.0
    %6612 = vmatpush1.msra.mxu0 0.0
    %6613 = vmatprep.subr.mxu0 0.0
    %6614 = vmatpush1.msra.mxu0 0.0
    %6615 = vmatprep.subr.mxu0 0.0
    %6616 = vmatpush1.msra.mxu0 0.0
    %6617 = vmatprep.subr.mxu0 0.0
    %6618 = vmatpush1.msra.mxu0 0.0
    %6619 = vmatprep.subr.mxu0 0.0
    %6620 = vmatpush1.msra.mxu0 0.0
    %6621 = vmatprep.mubr.f32.mxu0 0.0
    %6622 = vmatmul.mubr.f32.gmra.mrb[0].mxu0 %v5948
    %v6623 = vpop.f32.mrb[0].mxu0
    %v6624 = vadd.f32 %v1092, %v6623
    %v6625 = vpop.f32.mrb[0].mxu0
    %v6626 = vadd.f32 %v1096, %v6625
    %6627 = vdwg.mxu0
    %6628 = vmatprep.subr.mxu0 0.0
    %6629 = vmatpush1.msra.mxu0 %v779
    %6630 = vmatprep.subr.mxu0 0.0
    %6631 = vmatpush1.msra.mxu0 %v782
    %6632 = vmatprep.subr.mxu0 0.0
    %6633 = vmatpush1.msra.mxu0 %v785
    %6634 = vmatprep.subr.mxu0 0.0
    %6635 = vmatpush1.msra.mxu0 %v788
    %6636 = vmatprep.subr.mxu0 0.0
    %6637 = vmatpush1.msra.mxu0 %v791
    %6638 = vmatprep.subr.mxu0 0.0
    %6639 = vmatpush1.msra.mxu0 %v794
    %6640 = vmatprep.subr.mxu0 0.0
    %6641 = vmatpush1.msra.mxu0 %v797
    %6642 = vmatprep.subr.mxu0 0.0
    %6643 = vmatpush1.msra.mxu0 %v800
    %6644 = vmatprep.subr.mxu0 0.0
    %6645 = vmatpush1.msra.mxu0 %v803
    %6646 = vmatprep.subr.mxu0 0.0
    %6647 = vmatpush1.msra.mxu0 %v806
    %6648 = vmatprep.subr.mxu0 0.0
    %6649 = vmatpush1.msra.mxu0 %v809
    %6650 = vmatprep.subr.mxu0 0.0
    %6651 = vmatpush1.msra.mxu0 %v812
    %6652 = vmatprep.subr.mxu0 0.0
    %6653 = vmatpush1.msra.mxu0 %v815
    %6654 = vmatprep.subr.mxu0 0.0
    %6655 = vmatpush1.msra.mxu0 %v818
    %6656 = vmatprep.subr.mxu0 0.0
    %6657 = vmatpush1.msra.mxu0 %v821
    %6658 = vmatprep.subr.mxu0 0.0
    %6659 = vmatpush1.msra.mxu0 %v824
    %6660 = vmatprep.subr.mxu0 0.0
    %6661 = vmatpush1.msra.mxu0 0.0
    %6662 = vmatprep.subr.mxu0 0.0
    %6663 = vmatpush1.msra.mxu0 0.0
    %6664 = vmatprep.subr.mxu0 0.0
    %6665 = vmatpush1.msra.mxu0 0.0
    %6666 = vmatprep.subr.mxu0 0.0
    %6667 = vmatpush1.msra.mxu0 0.0
    %6668 = vmatprep.subr.mxu0 0.0
    %6669 = vmatpush1.msra.mxu0 0.0
    %6670 = vmatprep.subr.mxu0 0.0
    %6671 = vmatpush1.msra.mxu0 0.0
    %6672 = vmatprep.subr.mxu0 0.0
    %6673 = vmatpush1.msra.mxu0 0.0
    %6674 = vmatprep.subr.mxu0 0.0
    %6675 = vmatpush1.msra.mxu0 0.0
    %6676 = vmatprep.subr.mxu0 0.0
    %6677 = vmatpush1.msra.mxu0 0.0
    %6678 = vmatprep.subr.mxu0 0.0
    %6679 = vmatpush1.msra.mxu0 0.0
    %6680 = vmatprep.subr.mxu0 0.0
    %6681 = vmatpush1.msra.mxu0 0.0
    %6682 = vmatprep.subr.mxu0 0.0
    %6683 = vmatpush1.msra.mxu0 0.0
    %6684 = vmatprep.subr.mxu0 0.0
    %6685 = vmatpush1.msra.mxu0 0.0
    %6686 = vmatprep.subr.mxu0 0.0
    %6687 = vmatpush1.msra.mxu0 0.0
    %6688 = vmatprep.subr.mxu0 0.0
    %6689 = vmatpush1.msra.mxu0 0.0
    %6690 = vmatprep.subr.mxu0 0.0
    %6691 = vmatpush1.msra.mxu0 0.0
    %6692 = vmatprep.mubr.f32.mxu0 0.0
    %6693 = vmatmul.mubr.f32.gmra.mrb[0].mxu0 %v5948
    %v6694 = vpop.f32.mrb[0].mxu0
    %v6695 = vadd.f32 %v1100, %v6694
    %v6696 = vpop.f32.mrb[0].mxu0
    %6697 = vdwg.mxu0
    %v6698 = vadd.f32 %v1014, %v6624
    %v6699 = vxor.u32 %v6698, 2147483648
    %v6700 = vmul.f32 %v6699, 1.442695
    %v6701 = vpow.pop %v6700
    %v6702 = vadd.f32 %v6701, 1.0
    %v6703 = vrcp.pop %v6702
    %v6704 = vmul.f32 1.0, %v6703
    %v6705 = vadd.f32 %v1016, %v6626
    %v6706 = vxor.u32 %v6705, 2147483648
    %v6707 = vmul.f32 %v6706, 1.442695
    %v6708 = vpow.pop %v6707
    %v6709 = vadd.f32 %v6708, 1.0
    %v6710 = vrcp.pop %v6709
    %v6711 = vmul.f32 1.0, %v6710
    %v6712 = vmul.f32 %v6704, %v6695
    %v6713 = vadd.f32 %v1085, %v6712
    %v6714 = vtanh.pop %v6713
    %v6715 = vsub.f32 1.0, %v6711
    %v6716 = vmul.f32 %v6715, %v6714
    %v6717 = vmul.f32 %v6711, %v5948
    %v6718 = vadd.f32 %v6716, %v6717
    %6719 = vmatprep.subr.mxu0 %v682
    %6720 = vmatpush1.msra.mxu0 %v681
    %6721 = vmatprep.subr.mxu0 %v685
    %6722 = vmatpush1.msra.mxu0 %v684
    %6723 = vmatprep.subr.mxu0 %v688
    %6724 = vmatpush1.msra.mxu0 %v687
    %6725 = vmatprep.subr.mxu0 %v691
    %6726 = vmatpush1.msra.mxu0 %v690
    %6727 = vmatprep.subr.mxu0 %v694
    %6728 = vmatpush1.msra.mxu0 %v693
    %6729 = vmatprep.subr.mxu0 %v697
    %6730 = vmatpush1.msra.mxu0 %v696
    %6731 = vmatprep.subr.mxu0 %v700
    %6732 = vmatpush1.msra.mxu0 %v699
    %6733 = vmatprep.subr.mxu0 %v703
    %6734 = vmatpush1.msra.mxu0 %v702
    %6735 = vmatprep.subr.mxu0 %v706
    %6736 = vmatpush1.msra.mxu0 %v705
    %6737 = vmatprep.subr.mxu0 %v709
    %6738 = vmatpush1.msra.mxu0 %v708
    %6739 = vmatprep.subr.mxu0 %v712
    %6740 = vmatpush1.msra.mxu0 %v711
    %6741 = vmatprep.subr.mxu0 %v715
    %6742 = vmatpush1.msra.mxu0 %v714
    %6743 = vmatprep.subr.mxu0 %v718
    %6744 = vmatpush1.msra.mxu0 %v717
    %6745 = vmatprep.subr.mxu0 %v721
    %6746 = vmatpush1.msra.mxu0 %v720
    %6747 = vmatprep.subr.mxu0 %v724
    %6748 = vmatpush1.msra.mxu0 %v723
    %6749 = vmatprep.subr.mxu0 %v727
    %6750 = vmatpush1.msra.mxu0 %v726
    %6751 = vmatprep.subr.mxu0 0.0
    %6752 = vmatpush1.msra.mxu0 0.0
    %6753 = vmatprep.subr.mxu0 0.0
    %6754 = vmatpush1.msra.mxu0 0.0
    %6755 = vmatprep.subr.mxu0 0.0
    %6756 = vmatpush1.msra.mxu0 0.0
    %6757 = vmatprep.subr.mxu0 0.0
    %6758 = vmatpush1.msra.mxu0 0.0
    %6759 = vmatprep.subr.mxu0 0.0
    %6760 = vmatpush1.msra.mxu0 0.0
    %6761 = vmatprep.subr.mxu0 0.0
    %6762 = vmatpush1.msra.mxu0 0.0
    %6763 = vmatprep.subr.mxu0 0.0
    %6764 = vmatpush1.msra.mxu0 0.0
    %6765 = vmatprep.subr.mxu0 0.0
    %6766 = vmatpush1.msra.mxu0 0.0
    %6767 = vmatprep.subr.mxu0 0.0
    %6768 = vmatpush1.msra.mxu0 0.0
    %6769 = vmatprep.subr.mxu0 0.0
    %6770 = vmatpush1.msra.mxu0 0.0
    %6771 = vmatprep.subr.mxu0 0.0
    %6772 = vmatpush1.msra.mxu0 0.0
    %6773 = vmatprep.subr.mxu0 0.0
    %6774 = vmatpush1.msra.mxu0 0.0
    %6775 = vmatprep.subr.mxu0 0.0
    %6776 = vmatpush1.msra.mxu0 0.0
    %6777 = vmatprep.subr.mxu0 0.0
    %6778 = vmatpush1.msra.mxu0 0.0
    %6779 = vmatprep.subr.mxu0 0.0
    %6780 = vmatpush1.msra.mxu0 0.0
    %6781 = vmatprep.subr.mxu0 0.0
    %6782 = vmatpush1.msra.mxu0 0.0
    %6783 = vmatprep.mubr.f32.mxu0 0.0
    %6784 = vmatmul.mubr.f32.gmra.mrb[0].mxu0 %v6718
    %v6785 = vpop.f32.mrb[0].mxu0
    %v6786 = vadd.f32 %v1270, %v6785
    %v6787 = vpop.f32.mrb[0].mxu0
    %v6788 = vadd.f32 %v1274, %v6787
    %6789 = vdwg.mxu0
    %6790 = vmatprep.subr.mxu0 0.0
    %6791 = vmatpush1.msra.mxu0 %v683
    %6792 = vmatprep.subr.mxu0 0.0
    %6793 = vmatpush1.msra.mxu0 %v686
    %6794 = vmatprep.subr.mxu0 0.0
    %6795 = vmatpush1.msra.mxu0 %v689
    %6796 = vmatprep.subr.mxu0 0.0
    %6797 = vmatpush1.msra.mxu0 %v692
    %6798 = vmatprep.subr.mxu0 0.0
    %6799 = vmatpush1.msra.mxu0 %v695
    %6800 = vmatprep.subr.mxu0 0.0
    %6801 = vmatpush1.msra.mxu0 %v698
    %6802 = vmatprep.subr.mxu0 0.0
    %6803 = vmatpush1.msra.mxu0 %v701
    %6804 = vmatprep.subr.mxu0 0.0
    %6805 = vmatpush1.msra.mxu0 %v704
    %6806 = vmatprep.subr.mxu0 0.0
    %6807 = vmatpush1.msra.mxu0 %v707
    %6808 = vmatprep.subr.mxu0 0.0
    %6809 = vmatpush1.msra.mxu0 %v710
    %6810 = vmatprep.subr.mxu0 0.0
    %6811 = vmatpush1.msra.mxu0 %v713
    %6812 = vmatprep.subr.mxu0 0.0
    %6813 = vmatpush1.msra.mxu0 %v716
    %6814 = vmatprep.subr.mxu0 0.0
    %6815 = vmatpush1.msra.mxu0 %v719
    %6816 = vmatprep.subr.mxu0 0.0
    %6817 = vmatpush1.msra.mxu0 %v722
    %6818 = vmatprep.subr.mxu0 0.0
    %6819 = vmatpush1.msra.mxu0 %v725
    %6820 = vmatprep.subr.mxu0 0.0
    %6821 = vmatpush1.msra.mxu0 %v728
    %6822 = vmatprep.subr.mxu0 0.0
    %6823 = vmatpush1.msra.mxu0 0.0
    %6824 = vmatprep.subr.mxu0 0.0
    %6825 = vmatpush1.msra.mxu0 0.0
    %6826 = vmatprep.subr.mxu0 0.0
    %6827 = vmatpush1.msra.mxu0 0.0
    %6828 = vmatprep.subr.mxu0 0.0
    %6829 = vmatpush1.msra.mxu0 0.0
    %6830 = vmatprep.subr.mxu0 0.0
    %6831 = vmatpush1.msra.mxu0 0.0
    %6832 = vmatprep.subr.mxu0 0.0
    %6833 = vmatpush1.msra.mxu0 0.0
    %6834 = vmatprep.subr.mxu0 0.0
    %6835 = vmatpush1.msra.mxu0 0.0
    %6836 = vmatprep.subr.mxu0 0.0
    %6837 = vmatpush1.msra.mxu0 0.0
    %6838 = vmatprep.subr.mxu0 0.0
    %6839 = vmatpush1.msra.mxu0 0.0
    %6840 = vmatprep.subr.mxu0 0.0
    %6841 = vmatpush1.msra.mxu0 0.0
    %6842 = vmatprep.subr.mxu0 0.0
    %6843 = vmatpush1.msra.mxu0 0.0
    %6844 = vmatprep.subr.mxu0 0.0
    %6845 = vmatpush1.msra.mxu0 0.0
    %6846 = vmatprep.subr.mxu0 0.0
    %6847 = vmatpush1.msra.mxu0 0.0
    %6848 = vmatprep.subr.mxu0 0.0
    %6849 = vmatpush1.msra.mxu0 0.0
    %6850 = vmatprep.subr.mxu0 0.0
    %6851 = vmatpush1.msra.mxu0 0.0
    %6852 = vmatprep.subr.mxu0 0.0
    %6853 = vmatpush1.msra.mxu0 0.0
    %6854 = vmatprep.mubr.f32.mxu0 0.0
    %6855 = vmatmul.mubr.f32.gmra.mrb[0].mxu0 %v6718
    %v6856 = vpop.f32.mrb[0].mxu0
    %v6857 = vadd.f32 %v1278, %v6856
    %v6858 = vpop.f32.mrb[0].mxu0
    %6859 = vdwg.mxu0
    %6860 = vmatprep.subr.mxu0 %v826
    %6861 = vmatpush1.msra.mxu0 %v825
    %6862 = vmatprep.subr.mxu0 %v829
    %6863 = vmatpush1.msra.mxu0 %v828
    %6864 = vmatprep.subr.mxu0 %v832
    %6865 = vmatpush1.msra.mxu0 %v831
    %6866 = vmatprep.subr.mxu0 %v835
    %6867 = vmatpush1.msra.mxu0 %v834
    %6868 = vmatprep.subr.mxu0 %v838
    %6869 = vmatpush1.msra.mxu0 %v837
    %6870 = vmatprep.subr.mxu0 %v841
    %6871 = vmatpush1.msra.mxu0 %v840
    %6872 = vmatprep.subr.mxu0 %v844
    %6873 = vmatpush1.msra.mxu0 %v843
    %6874 = vmatprep.subr.mxu0 %v847
    %6875 = vmatpush1.msra.mxu0 %v846
    %6876 = vmatprep.subr.mxu0 %v850
    %6877 = vmatpush1.msra.mxu0 %v849
    %6878 = vmatprep.subr.mxu0 %v853
    %6879 = vmatpush1.msra.mxu0 %v852
    %6880 = vmatprep.subr.mxu0 %v856
    %6881 = vmatpush1.msra.mxu0 %v855
    %6882 = vmatprep.subr.mxu0 %v859
    %6883 = vmatpush1.msra.mxu0 %v858
    %6884 = vmatprep.subr.mxu0 %v862
    %6885 = vmatpush1.msra.mxu0 %v861
    %6886 = vmatprep.subr.mxu0 %v865
    %6887 = vmatpush1.msra.mxu0 %v864
    %6888 = vmatprep.subr.mxu0 %v868
    %6889 = vmatpush1.msra.mxu0 %v867
    %6890 = vmatprep.subr.mxu0 %v871
    %6891 = vmatpush1.msra.mxu0 %v870
    %6892 = vmatprep.subr.mxu0 0.0
    %6893 = vmatpush1.msra.mxu0 0.0
    %6894 = vmatprep.subr.mxu0 0.0
    %6895 = vmatpush1.msra.mxu0 0.0
    %6896 = vmatprep.subr.mxu0 0.0
    %6897 = vmatpush1.msra.mxu0 0.0
    %6898 = vmatprep.subr.mxu0 0.0
    %6899 = vmatpush1.msra.mxu0 0.0
    %6900 = vmatprep.subr.mxu0 0.0
    %6901 = vmatpush1.msra.mxu0 0.0
    %6902 = vmatprep.subr.mxu0 0.0
    %6903 = vmatpush1.msra.mxu0 0.0
    %6904 = vmatprep.subr.mxu0 0.0
    %6905 = vmatpush1.msra.mxu0 0.0
    %6906 = vmatprep.subr.mxu0 0.0
    %6907 = vmatpush1.msra.mxu0 0.0
    %6908 = vmatprep.subr.mxu0 0.0
    %6909 = vmatpush1.msra.mxu0 0.0
    %6910 = vmatprep.subr.mxu0 0.0
    %6911 = vmatpush1.msra.mxu0 0.0
    %6912 = vmatprep.subr.mxu0 0.0
    %6913 = vmatpush1.msra.mxu0 0.0
    %6914 = vmatprep.subr.mxu0 0.0
    %6915 = vmatpush1.msra.mxu0 0.0
    %6916 = vmatprep.subr.mxu0 0.0
    %6917 = vmatpush1.msra.mxu0 0.0
    %6918 = vmatprep.subr.mxu0 0.0
    %6919 = vmatpush1.msra.mxu0 0.0
    %6920 = vmatprep.subr.mxu0 0.0
    %6921 = vmatpush1.msra.mxu0 0.0
    %6922 = vmatprep.subr.mxu0 0.0
    %6923 = vmatpush1.msra.mxu0 0.0
    %6924 = vmatprep.mubr.f32.mxu0 0.0
    %6925 = vmatmul.mubr.f32.gmra.mrb[0].mxu0 %v6251
    %v6926 = vpop.f32.mrb[0].mxu0
    %v6927 = vadd.f32 %v1427, %v6926
    %v6928 = vpop.f32.mrb[0].mxu0
    %v6929 = vadd.f32 %v1431, %v6928
    %6930 = vdwg.mxu0
    %6931 = vmatprep.subr.mxu0 0.0
    %6932 = vmatpush1.msra.mxu0 %v827
    %6933 = vmatprep.subr.mxu0 0.0
    %6934 = vmatpush1.msra.mxu0 %v830
    %6935 = vmatprep.subr.mxu0 0.0
    %6936 = vmatpush1.msra.mxu0 %v833
    %6937 = vmatprep.subr.mxu0 0.0
    %6938 = vmatpush1.msra.mxu0 %v836
    %6939 = vmatprep.subr.mxu0 0.0
    %6940 = vmatpush1.msra.mxu0 %v839
    %6941 = vmatprep.subr.mxu0 0.0
    %6942 = vmatpush1.msra.mxu0 %v842
    %6943 = vmatprep.subr.mxu0 0.0
    %6944 = vmatpush1.msra.mxu0 %v845
    %6945 = vmatprep.subr.mxu0 0.0
    %6946 = vmatpush1.msra.mxu0 %v848
    %6947 = vmatprep.subr.mxu0 0.0
    %6948 = vmatpush1.msra.mxu0 %v851
    %6949 = vmatprep.subr.mxu0 0.0
    %6950 = vmatpush1.msra.mxu0 %v854
    %6951 = vmatprep.subr.mxu0 0.0
    %6952 = vmatpush1.msra.mxu0 %v857
    %6953 = vmatprep.subr.mxu0 0.0
    %6954 = vmatpush1.msra.mxu0 %v860
    %6955 = vmatprep.subr.mxu0 0.0
    %6956 = vmatpush1.msra.mxu0 %v863
    %6957 = vmatprep.subr.mxu0 0.0
    %6958 = vmatpush1.msra.mxu0 %v866
    %6959 = vmatprep.subr.mxu0 0.0
    %6960 = vmatpush1.msra.mxu0 %v869
    %6961 = vmatprep.subr.mxu0 0.0
    %6962 = vmatpush1.msra.mxu0 %v872
    %6963 = vmatprep.subr.mxu0 0.0
    %6964 = vmatpush1.msra.mxu0 0.0
    %6965 = vmatprep.subr.mxu0 0.0
    %6966 = vmatpush1.msra.mxu0 0.0
    %6967 = vmatprep.subr.mxu0 0.0
    %6968 = vmatpush1.msra.mxu0 0.0
    %6969 = vmatprep.subr.mxu0 0.0
    %6970 = vmatpush1.msra.mxu0 0.0
    %6971 = vmatprep.subr.mxu0 0.0
    %6972 = vmatpush1.msra.mxu0 0.0
    %6973 = vmatprep.subr.mxu0 0.0
    %6974 = vmatpush1.msra.mxu0 0.0
    %6975 = vmatprep.subr.mxu0 0.0
    %6976 = vmatpush1.msra.mxu0 0.0
    %6977 = vmatprep.subr.mxu0 0.0
    %6978 = vmatpush1.msra.mxu0 0.0
    %6979 = vmatprep.subr.mxu0 0.0
    %6980 = vmatpush1.msra.mxu0 0.0
    %6981 = vmatprep.subr.mxu0 0.0
    %6982 = vmatpush1.msra.mxu0 0.0
    %6983 = vmatprep.subr.mxu0 0.0
    %6984 = vmatpush1.msra.mxu0 0.0
    %6985 = vmatprep.subr.mxu0 0.0
    %6986 = vmatpush1.msra.mxu0 0.0
    %6987 = vmatprep.subr.mxu0 0.0
    %6988 = vmatpush1.msra.mxu0 0.0
    %6989 = vmatprep.subr.mxu0 0.0
    %6990 = vmatpush1.msra.mxu0 0.0
    %6991 = vmatprep.subr.mxu0 0.0
    %6992 = vmatpush1.msra.mxu0 0.0
    %6993 = vmatprep.subr.mxu0 0.0
    %6994 = vmatpush1.msra.mxu0 0.0
    %6995 = vmatprep.mubr.f32.mxu0 0.0
    %6996 = vmatmul.mubr.f32.gmra.mrb[0].mxu0 %v6251
    %v6997 = vpop.f32.mrb[0].mxu0
    %v6998 = vadd.f32 %v1435, %v6997
    %v6999 = vpop.f32.mrb[0].mxu0
    %7000 = vdwg.mxu0
    %v7001 = vadd.f32 %v6786, %v6927
    %v7002 = vxor.u32 %v7001, 2147483648
    %v7003 = vmul.f32 %v7002, 1.442695
    %v7004 = vpow.pop %v7003
    %v7005 = vadd.f32 %v7004, 1.0
    %v7006 = vrcp.pop %v7005
    %v7007 = vmul.f32 1.0, %v7006
    %v7008 = vadd.f32 %v6788, %v6929
    %v7009 = vxor.u32 %v7008, 2147483648
    %v7010 = vmul.f32 %v7009, 1.442695
    %v7011 = vpow.pop %v7010
    %v7012 = vadd.f32 %v7011, 1.0
    %v7013 = vrcp.pop %v7012
    %v7014 = vmul.f32 1.0, %v7013
    %v7015 = vmul.f32 %v7007, %v6998
    %v7016 = vadd.f32 %v6857, %v7015
    %v7017 = vtanh.pop %v7016
    %v7018 = vsub.f32 1.0, %v7014
    %v7019 = vmul.f32 %v7018, %v7017
    %v7020 = vmul.f32 %v7014, %v6251
    %v7021 = vadd.f32 %v7019, %v7020
    %7022 = vmatprep.subr.mxu0 %v730
    %7023 = vmatpush1.msra.mxu0 %v729
    %7024 = vmatprep.subr.mxu0 %v733
    %7025 = vmatpush1.msra.mxu0 %v732
    %7026 = vmatprep.subr.mxu0 %v736
    %7027 = vmatpush1.msra.mxu0 %v735
    %7028 = vmatprep.subr.mxu0 %v739
    %7029 = vmatpush1.msra.mxu0 %v738
    %7030 = vmatprep.subr.mxu0 %v742
    %7031 = vmatpush1.msra.mxu0 %v741
    %7032 = vmatprep.subr.mxu0 %v745
    %7033 = vmatpush1.msra.mxu0 %v744
    %7034 = vmatprep.subr.mxu0 %v748
    %7035 = vmatpush1.msra.mxu0 %v747
    %7036 = vmatprep.subr.mxu0 %v751
    %7037 = vmatpush1.msra.mxu0 %v750
    %7038 = vmatprep.subr.mxu0 %v754
    %7039 = vmatpush1.msra.mxu0 %v753
    %7040 = vmatprep.subr.mxu0 %v757
    %7041 = vmatpush1.msra.mxu0 %v756
    %7042 = vmatprep.subr.mxu0 %v760
    %7043 = vmatpush1.msra.mxu0 %v759
    %7044 = vmatprep.subr.mxu0 %v763
    %7045 = vmatpush1.msra.mxu0 %v762
    %7046 = vmatprep.subr.mxu0 %v766
    %7047 = vmatpush1.msra.mxu0 %v765
    %7048 = vmatprep.subr.mxu0 %v769
    %7049 = vmatpush1.msra.mxu0 %v768
    %7050 = vmatprep.subr.mxu0 %v772
    %7051 = vmatpush1.msra.mxu0 %v771
    %7052 = vmatprep.subr.mxu0 %v775
    %7053 = vmatpush1.msra.mxu0 %v774
    %7054 = vmatprep.subr.mxu0 0.0
    %7055 = vmatpush1.msra.mxu0 0.0
    %7056 = vmatprep.subr.mxu0 0.0
    %7057 = vmatpush1.msra.mxu0 0.0
    %7058 = vmatprep.subr.mxu0 0.0
    %7059 = vmatpush1.msra.mxu0 0.0
    %7060 = vmatprep.subr.mxu0 0.0
    %7061 = vmatpush1.msra.mxu0 0.0
    %7062 = vmatprep.subr.mxu0 0.0
    %7063 = vmatpush1.msra.mxu0 0.0
    %7064 = vmatprep.subr.mxu0 0.0
    %7065 = vmatpush1.msra.mxu0 0.0
    %7066 = vmatprep.subr.mxu0 0.0
    %7067 = vmatpush1.msra.mxu0 0.0
    %7068 = vmatprep.subr.mxu0 0.0
    %7069 = vmatpush1.msra.mxu0 0.0
    %7070 = vmatprep.subr.mxu0 0.0
    %7071 = vmatpush1.msra.mxu0 0.0
    %7072 = vmatprep.subr.mxu0 0.0
    %7073 = vmatpush1.msra.mxu0 0.0
    %7074 = vmatprep.subr.mxu0 0.0
    %7075 = vmatpush1.msra.mxu0 0.0
    %7076 = vmatprep.subr.mxu0 0.0
    %7077 = vmatpush1.msra.mxu0 0.0
    %7078 = vmatprep.subr.mxu0 0.0
    %7079 = vmatpush1.msra.mxu0 0.0
    %7080 = vmatprep.subr.mxu0 0.0
    %7081 = vmatpush1.msra.mxu0 0.0
    %7082 = vmatprep.subr.mxu0 0.0
    %7083 = vmatpush1.msra.mxu0 0.0
    %7084 = vmatprep.subr.mxu0 0.0
    %7085 = vmatpush1.msra.mxu0 0.0
    %7086 = vmatprep.mubr.f32.mxu0 0.0
    %7087 = vmatmul.mubr.f32.gmra.mrb[0].mxu0 %v7021
    %v7088 = vpop.f32.mrb[0].mxu0
    %v7089 = vadd.f32 %v1605, %v7088
    %v7090 = vpop.f32.mrb[0].mxu0
    %v7091 = vadd.f32 %v1609, %v7090
    %7092 = vdwg.mxu0
    %7093 = vmatprep.subr.mxu0 0.0
    %7094 = vmatpush1.msra.mxu0 %v731
    %7095 = vmatprep.subr.mxu0 0.0
    %7096 = vmatpush1.msra.mxu0 %v734
    %7097 = vmatprep.subr.mxu0 0.0
    %7098 = vmatpush1.msra.mxu0 %v737
    %7099 = vmatprep.subr.mxu0 0.0
    %7100 = vmatpush1.msra.mxu0 %v740
    %7101 = vmatprep.subr.mxu0 0.0
    %7102 = vmatpush1.msra.mxu0 %v743
    %7103 = vmatprep.subr.mxu0 0.0
    %7104 = vmatpush1.msra.mxu0 %v746
    %7105 = vmatprep.subr.mxu0 0.0
    %7106 = vmatpush1.msra.mxu0 %v749
    %7107 = vmatprep.subr.mxu0 0.0
    %7108 = vmatpush1.msra.mxu0 %v752
    %7109 = vmatprep.subr.mxu0 0.0
    %7110 = vmatpush1.msra.mxu0 %v755
    %7111 = vmatprep.subr.mxu0 0.0
    %7112 = vmatpush1.msra.mxu0 %v758
    %7113 = vmatprep.subr.mxu0 0.0
    %7114 = vmatpush1.msra.mxu0 %v761
    %7115 = vmatprep.subr.mxu0 0.0
    %7116 = vmatpush1.msra.mxu0 %v764
    %7117 = vmatprep.subr.mxu0 0.0
    %7118 = vmatpush1.msra.mxu0 %v767
    %7119 = vmatprep.subr.mxu0 0.0
    %7120 = vmatpush1.msra.mxu0 %v770
    %7121 = vmatprep.subr.mxu0 0.0
    %7122 = vmatpush1.msra.mxu0 %v773
    %7123 = vmatprep.subr.mxu0 0.0
    %7124 = vmatpush1.msra.mxu0 %v776
    %7125 = vmatprep.subr.mxu0 0.0
    %7126 = vmatpush1.msra.mxu0 0.0
    %7127 = vmatprep.subr.mxu0 0.0
    %7128 = vmatpush1.msra.mxu0 0.0
    %7129 = vmatprep.subr.mxu0 0.0
    %7130 = vmatpush1.msra.mxu0 0.0
    %7131 = vmatprep.subr.mxu0 0.0
    %7132 = vmatpush1.msra.mxu0 0.0
    %7133 = vmatprep.subr.mxu0 0.0
    %7134 = vmatpush1.msra.mxu0 0.0
    %7135 = vmatprep.subr.mxu0 0.0
    %7136 = vmatpush1.msra.mxu0 0.0
    %7137 = vmatprep.subr.mxu0 0.0
    %7138 = vmatpush1.msra.mxu0 0.0
    %7139 = vmatprep.subr.mxu0 0.0
    %7140 = vmatpush1.msra.mxu0 0.0
    %7141 = vmatprep.subr.mxu0 0.0
    %7142 = vmatpush1.msra.mxu0 0.0
    %7143 = vmatprep.subr.mxu0 0.0
    %7144 = vmatpush1.msra.mxu0 0.0
    %7145 = vmatprep.subr.mxu0 0.0
    %7146 = vmatpush1.msra.mxu0 0.0
    %7147 = vmatprep.subr.mxu0 0.0
    %7148 = vmatpush1.msra.mxu0 0.0
    %7149 = vmatprep.subr.mxu0 0.0
    %7150 = vmatpush1.msra.mxu0 0.0
    %7151 = vmatprep.subr.mxu0 0.0
    %7152 = vmatpush1.msra.mxu0 0.0
    %7153 = vmatprep.subr.mxu0 0.0
    %7154 = vmatpush1.msra.mxu0 0.0
    %7155 = vmatprep.subr.mxu0 0.0
    %7156 = vmatpush1.msra.mxu0 0.0
    %7157 = vmatprep.mubr.f32.mxu0 0.0
    %7158 = vmatmul.mubr.f32.gmra.mrb[0].mxu0 %v7021
    %v7159 = vpop.f32.mrb[0].mxu0
    %v7160 = vadd.f32 %v1613, %v7159
    %v7161 = vpop.f32.mrb[0].mxu0
    %7162 = vdwg.mxu0
    %7163 = vmatprep.subr.mxu0 %v874
    %7164 = vmatpush1.msra.mxu0 %v873
    %7165 = vmatprep.subr.mxu0 %v877
    %7166 = vmatpush1.msra.mxu0 %v876
    %7167 = vmatprep.subr.mxu0 %v880
    %7168 = vmatpush1.msra.mxu0 %v879
    %7169 = vmatprep.subr.mxu0 %v883
    %7170 = vmatpush1.msra.mxu0 %v882
    %7171 = vmatprep.subr.mxu0 %v886
    %7172 = vmatpush1.msra.mxu0 %v885
    %7173 = vmatprep.subr.mxu0 %v889
    %7174 = vmatpush1.msra.mxu0 %v888
    %7175 = vmatprep.subr.mxu0 %v892
    %7176 = vmatpush1.msra.mxu0 %v891
    %7177 = vmatprep.subr.mxu0 %v895
    %7178 = vmatpush1.msra.mxu0 %v894
    %7179 = vmatprep.subr.mxu0 %v898
    %7180 = vmatpush1.msra.mxu0 %v897
    %7181 = vmatprep.subr.mxu0 %v901
    %7182 = vmatpush1.msra.mxu0 %v900
    %7183 = vmatprep.subr.mxu0 %v904
    %7184 = vmatpush1.msra.mxu0 %v903
    %7185 = vmatprep.subr.mxu0 %v907
    %7186 = vmatpush1.msra.mxu0 %v906
    %7187 = vmatprep.subr.mxu0 %v910
    %7188 = vmatpush1.msra.mxu0 %v909
    %7189 = vmatprep.subr.mxu0 %v913
    %7190 = vmatpush1.msra.mxu0 %v912
    %7191 = vmatprep.subr.mxu0 %v916
    %7192 = vmatpush1.msra.mxu0 %v915
    %7193 = vmatprep.subr.mxu0 %v919
    %7194 = vmatpush1.msra.mxu0 %v918
    %7195 = vmatprep.subr.mxu0 0.0
    %7196 = vmatpush1.msra.mxu0 0.0
    %7197 = vmatprep.subr.mxu0 0.0
    %7198 = vmatpush1.msra.mxu0 0.0
    %7199 = vmatprep.subr.mxu0 0.0
    %7200 = vmatpush1.msra.mxu0 0.0
    %7201 = vmatprep.subr.mxu0 0.0
    %7202 = vmatpush1.msra.mxu0 0.0
    %7203 = vmatprep.subr.mxu0 0.0
    %7204 = vmatpush1.msra.mxu0 0.0
    %7205 = vmatprep.subr.mxu0 0.0
    %7206 = vmatpush1.msra.mxu0 0.0
    %7207 = vmatprep.subr.mxu0 0.0
    %7208 = vmatpush1.msra.mxu0 0.0
    %7209 = vmatprep.subr.mxu0 0.0
    %7210 = vmatpush1.msra.mxu0 0.0
    %7211 = vmatprep.subr.mxu0 0.0
    %7212 = vmatpush1.msra.mxu0 0.0
    %7213 = vmatprep.subr.mxu0 0.0
    %7214 = vmatpush1.msra.mxu0 0.0
    %7215 = vmatprep.subr.mxu0 0.0
    %7216 = vmatpush1.msra.mxu0 0.0
    %7217 = vmatprep.subr.mxu0 0.0
    %7218 = vmatpush1.msra.mxu0 0.0
    %7219 = vmatprep.subr.mxu0 0.0
    %7220 = vmatpush1.msra.mxu0 0.0
    %7221 = vmatprep.subr.mxu0 0.0
    %7222 = vmatpush1.msra.mxu0 0.0
    %7223 = vmatprep.subr.mxu0 0.0
    %7224 = vmatpush1.msra.mxu0 0.0
    %7225 = vmatprep.subr.mxu0 0.0
    %7226 = vmatpush1.msra.mxu0 0.0
    %7227 = vmatprep.mubr.f32.mxu0 0.0
    %7228 = vmatmul.mubr.f32.gmra.mrb[0].mxu0 %v6554
    %v7229 = vpop.f32.mrb[0].mxu0
    %v7230 = vadd.f32 %v1762, %v7229
    %v7231 = vpop.f32.mrb[0].mxu0
    %v7232 = vadd.f32 %v1766, %v7231
    %7233 = vdwg.mxu0
    %7234 = vmatprep.subr.mxu0 0.0
    %7235 = vmatpush1.msra.mxu0 %v875
    %7236 = vmatprep.subr.mxu0 0.0
    %7237 = vmatpush1.msra.mxu0 %v878
    %7238 = vmatprep.subr.mxu0 0.0
    %7239 = vmatpush1.msra.mxu0 %v881
    %7240 = vmatprep.subr.mxu0 0.0
    %7241 = vmatpush1.msra.mxu0 %v884
    %7242 = vmatprep.subr.mxu0 0.0
    %7243 = vmatpush1.msra.mxu0 %v887
    %7244 = vmatprep.subr.mxu0 0.0
    %7245 = vmatpush1.msra.mxu0 %v890
    %7246 = vmatprep.subr.mxu0 0.0
    %7247 = vmatpush1.msra.mxu0 %v893
    %7248 = vmatprep.subr.mxu0 0.0
    %7249 = vmatpush1.msra.mxu0 %v896
    %7250 = vmatprep.subr.mxu0 0.0
    %7251 = vmatpush1.msra.mxu0 %v899
    %7252 = vmatprep.subr.mxu0 0.0
    %7253 = vmatpush1.msra.mxu0 %v902
    %7254 = vmatprep.subr.mxu0 0.0
    %7255 = vmatpush1.msra.mxu0 %v905
    %7256 = vmatprep.subr.mxu0 0.0
    %7257 = vmatpush1.msra.mxu0 %v908
    %7258 = vmatprep.subr.mxu0 0.0
    %7259 = vmatpush1.msra.mxu0 %v911
    %7260 = vmatprep.subr.mxu0 0.0
    %7261 = vmatpush1.msra.mxu0 %v914
    %7262 = vmatprep.subr.mxu0 0.0
    %7263 = vmatpush1.msra.mxu0 %v917
    %7264 = vmatprep.subr.mxu0 0.0
    %7265 = vmatpush1.msra.mxu0 %v920
    %7266 = vmatprep.subr.mxu0 0.0
    %7267 = vmatpush1.msra.mxu0 0.0
    %7268 = vmatprep.subr.mxu0 0.0
    %7269 = vmatpush1.msra.mxu0 0.0
    %7270 = vmatprep.subr.mxu0 0.0
    %7271 = vmatpush1.msra.mxu0 0.0
    %7272 = vmatprep.subr.mxu0 0.0
    %7273 = vmatpush1.msra.mxu0 0.0
    %7274 = vmatprep.subr.mxu0 0.0
    %7275 = vmatpush1.msra.mxu0 0.0
    %7276 = vmatprep.subr.mxu0 0.0
    %7277 = vmatpush1.msra.mxu0 0.0
    %7278 = vmatprep.subr.mxu0 0.0
    %7279 = vmatpush1.msra.mxu0 0.0
    %7280 = vmatprep.subr.mxu0 0.0
    %7281 = vmatpush1.msra.mxu0 0.0
    %7282 = vmatprep.subr.mxu0 0.0
    %7283 = vmatpush1.msra.mxu0 0.0
    %7284 = vmatprep.subr.mxu0 0.0
    %7285 = vmatpush1.msra.mxu0 0.0
    %7286 = vmatprep.subr.mxu0 0.0
    %7287 = vmatpush1.msra.mxu0 0.0
    %7288 = vmatprep.subr.mxu0 0.0
    %7289 = vmatpush1.msra.mxu0 0.0
    %7290 = vmatprep.subr.mxu0 0.0
    %7291 = vmatpush1.msra.mxu0 0.0
    %7292 = vmatprep.subr.mxu0 0.0
    %7293 = vmatpush1.msra.mxu0 0.0
    %7294 = vmatprep.subr.mxu0 0.0
    %7295 = vmatpush1.msra.mxu0 0.0
    %7296 = vmatprep.subr.mxu0 0.0
    %7297 = vmatpush1.msra.mxu0 0.0
    %7298 = vmatprep.mubr.f32.mxu0 0.0
    %7299 = vmatmul.mubr.f32.gmra.mrb[0].mxu0 %v6554
    %v7300 = vpop.f32.mrb[0].mxu0
    %v7301 = vadd.f32 %v1770, %v7300
    %v7302 = vpop.f32.mrb[0].mxu0
    %7303 = vdwg.mxu0
    %v7304 = vadd.f32 %v7089, %v7230
    %v7305 = vxor.u32 %v7304, 2147483648
    %v7306 = vmul.f32 %v7305, 1.442695
    %v7307 = vpow.pop %v7306
    %v7308 = vadd.f32 %v7307, 1.0
    %v7309 = vrcp.pop %v7308
    %v7310 = vmul.f32 1.0, %v7309
    %v7311 = vadd.f32 %v7091, %v7232
    %v7312 = vxor.u32 %v7311, 2147483648
    %v7313 = vmul.f32 %v7312, 1.442695
    %v7314 = vpow.pop %v7313
    %v7315 = vadd.f32 %v7314, 1.0
    %v7316 = vrcp.pop %v7315
    %v7317 = vmul.f32 1.0, %v7316
    %v7318 = vmul.f32 %v7310, %v7301
    %v7319 = vadd.f32 %v7160, %v7318
    %v7320 = vtanh.pop %v7319
    %v7321 = vsub.f32 1.0, %v7317
    %v7322 = vmul.f32 %v7321, %v7320
    %v7323 = vmul.f32 %v7317, %v6554
    %v7324 = vadd.f32 %v7322, %v7323
    %s7325 = scalar_lea.vmem %s26, 14
    %7326 = vst [vmem:[%s7325] sm:$0x3] %v7324
    // Predicated region
    $region166: #{mvae_forward.4} parent=1 // pred_check
      _
    $region167: #{mvae_forward.4} parent=1 // pred_check_branch
      %7328 = sbr.rel (0) target = $region169
    $region168: #{mvae_forward.4} parent=1 // pred_region
      %s7330 = ssub.s32 32, 32
      %7331 = vsyncadd [#allocation4], %s7330
      %s7333 = sshll.u32 [#allocation29], 4
      %s7334 = int_to_ptr.vmem [resolvable:$true] %s7333
      %7336 = dma.vmem_to_hbm [thread:$0]  %s7334, 32, %s24, [#allocation4]
    $region169: #{mvae_forward.4} parent=1 // pred_fallthru
      _
    // Predicated region
    $region170: #{mvae_forward.4} parent=1 // pred_check
      _
    $region171: #{mvae_forward.4} parent=1 // pred_check_branch
      %7338 = sbr.rel (0) target = $region173
    $region172: #{mvae_forward.4} parent=1 // pred_region
      %s7340 = ssub.s32 32, 32
      %7341 = vsyncadd [#allocation31], %s7340
      %s7343 = sshll.u32 [#allocation30], 4
      %s7344 = int_to_ptr.vmem [resolvable:$true] %s7343
      %7346 = dma.vmem_to_hbm [thread:$0]  %s7344, 32, %s25, [#allocation31]
    $region173: #{mvae_forward.4} parent=1 // pred_fallthru
      _
    // Predicated region
    $region174: #{mvae_forward.4} parent=1 // pred_check
      _
    $region175: #{mvae_forward.4} parent=1 // pred_check_branch
      %7348 = sbr.rel (0) target = $region177
    $region176: #{mvae_forward.4} parent=1 // pred_region
      _
    $region177: #{mvae_forward.4} parent=1 // pred_fallthru
      _
    // Predicated region
    $region178: #{mvae_forward.4} parent=1 // pred_check
      _
    $region179: #{mvae_forward.4} parent=1 // pred_check_branch
      %7350 = sbr.rel (0) target = $region181
    $region180: #{mvae_forward.4} parent=1 // pred_region
      %7351 = dma.done [#allocation4], 32
    $region181: #{mvae_forward.4} parent=1 // pred_fallthru
      _
    // Predicated region
    $region182: #{mvae_forward.4} parent=1 // pred_check
      _
    $region183: #{mvae_forward.4} parent=1 // pred_check_branch
      %7353 = sbr.rel (0) target = $region185
    $region184: #{mvae_forward.4} parent=1 // pred_region
      %7354 = dma.done [#allocation31], 32
    $region185: #{mvae_forward.4} parent=1 // pred_fallthru
      _
    // Predicated region
    $region186: #{mvae_forward.4} parent=1 // pred_check
      _
    $region187: #{mvae_forward.4} parent=1 // pred_check_branch
      %7356 = sbr.rel (0) target = $region189
    $region188: #{mvae_forward.4} parent=1 // pred_region
      _
    $region189: #{mvae_forward.4} parent=1 // pred_fallthru
      _
    %7357 = vsyncpa [#allocation3], 1
    %7358 = vsyncpa [#allocation6], 1
    %7359 = vsyncpa [#allocation9], 1
    %7360 = vsyncpa [#allocation12], 1
    %7361 = vsyncpa [#allocation15], 1
    %7362 = vsyncpa [#allocation18], 1
    %7363 = vsyncpa [#allocation21], 1
    %7364 = vsyncpa [#allocation24], 1
    %7365 = vsyncpa [#allocation27], 1
    %7366 = vsyncpa [#allocation4], 1
    %7367 = vsyncpa [#allocation31], 1

</llo_original>
